<compile_context>
chip_gen: v6e
topology: v6e:2x2x1
jax: 0.10.0
libtpu: 0.0.40
codegen_flags: <defaults>
</compile_context>

<pallas_src>
import jax
import jax.numpy as jnp
from jax.experimental import pallas as pl
from jax.experimental.pallas import tpu as pltpu

NHEAD = 8
LN_EPS = 1e-5


# ----------------------------- kernel helpers ------------------------------

def _layer_norm(y, g, b):
    mu = jnp.mean(y, axis=-1, keepdims=True)
    var = jnp.mean((y - mu) ** 2, axis=-1, keepdims=True)
    return (y - mu) * jax.lax.rsqrt(var + LN_EPS) * g + b


def _attn_core(q, k, v, wo):
    """Head-batched attention.  q:(Tq,D) f32, k/v:(Tk,D) f32, wo:(D,D) bf16.

    Returns (Tq, D) f32 = concat_heads(softmax(qk^T/sqrt(hd)) v) @ wo  (no bias).
    """
    tq, d = q.shape
    tk = k.shape[0]
    hd = d // NHEAD
    scale = 1.0 / float(hd) ** 0.5

    qh = (q * scale).reshape(tq, NHEAD, hd)          # fold scale into q
    kh = k.reshape(tk, NHEAD, hd)
    vh = v.reshape(tk, NHEAD, hd)

    # One batched score matmul + ONE softmax over all heads.
    s = jnp.einsum("qhd,khd->hqk", qh, kh,
                   preferred_element_type=jnp.float32)          # (H, Tq, Tk)
    m = jnp.max(s, axis=-1, keepdims=True)
    p = jnp.exp(s - m)
    p = p * pl.reciprocal(jnp.sum(p, axis=-1, keepdims=True), approx=True)

    ctx = jnp.einsum("hqk,khd->qhd", p, vh,
                     preferred_element_type=jnp.float32)        # (Tq, H, hd)
    ctx = ctx.reshape(tq, d)                                    # head concat
    return jnp.dot(ctx.astype(jnp.bfloat16), wo,
                   preferred_element_type=jnp.float32)


# ----------------------------- fused layer kernel ------------------------------

def _decoder_layer_kernel(
        x_ref, mem_ref,
        # self-attention (packed Q|K|V weight)
        wqkv_s_ref, bqkv_s_ref, wo_s_ref, bo_s_ref, g1_ref, be1_ref,
        # cross-attention (Q separate, packed K|V weight)
        wq_c_ref, bq_c_ref, wkv_c_ref, bkv_c_ref, wo_c_ref, bo_c_ref, g2_ref, be2_ref,
        # FFN
        w1_ref, b1_ref, w2_ref, b2_ref, g3_ref, be3_ref,
        o_ref):
    x = x_ref[0]                          # (Tq, D) f32
    mem = mem_ref[0]                      # (Tm, D) f32
    d = x.shape[-1]

    # ---- self-attention: one packed QKV projection, head-batched attention ----
    qkv = jnp.dot(x.astype(jnp.bfloat16), wqkv_s_ref[...],
                  preferred_element_type=jnp.float32) + bqkv_s_ref[...]
    sa = _attn_core(qkv[:, :d], qkv[:, d:2 * d], qkv[:, 2 * d:], wo_s_ref[...])
    x = _layer_norm(x + sa + bo_s_ref[...], g1_ref[...], be1_ref[...])

    # ---- cross-attention against memory (hidden) ----
    qc = jnp.dot(x.astype(jnp.bfloat16), wq_c_ref[...],
                 preferred_element_type=jnp.float32) + bq_c_ref[...]
    kv = jnp.dot(mem.astype(jnp.bfloat16), wkv_c_ref[...],
                 preferred_element_type=jnp.float32) + bkv_c_ref[...]
    ca = _attn_core(qc, kv[:, :d], kv[:, d:], wo_c_ref[...])
    x = _layer_norm(x + ca + bo_c_ref[...], g2_ref[...], be2_ref[...])

    # ---- FFN (untiled: full d_ff resident, single MXU pass each way) ----
    h = jnp.dot(x.astype(jnp.bfloat16), w1_ref[...],
                preferred_element_type=jnp.float32) + b1_ref[...]
    h = jnp.maximum(h, 0.0)
    f = jnp.dot(h.astype(jnp.bfloat16), w2_ref[...],
                preferred_element_type=jnp.float32) + b2_ref[...]
    x = _layer_norm(x + f, g3_ref[...], be3_ref[...])

    o_ref[0] = x


# ----------------------------- kernel wrapper ------------------------------

def decoder_layer(x, hidden, p):
    """Fused post-norm TransformerDecoderLayer (eval).  x:(B,Tq,D), hidden:(B,Tm,D)."""
    B, Tq, D = x.shape
    Tm = hidden.shape[1]
    d_ff = p["w1"].shape[1]

    def _w(shape):
        n = len(shape)
        return pl.BlockSpec(shape, lambda b, _n=n: (0,) * _n)   # weights: resident

    flops = 2 * B * (
        Tq * D * 3 * D + 2 * Tq * Tq * D + Tq * D * D            # self-attn
        + Tq * D * D + Tm * D * 2 * D + 2 * Tq * Tm * D + Tq * D * D  # cross-attn
        + 2 * Tq * D * d_ff)                                     # FFN
    bytes_accessed = (4 * B * (2 * Tq * D + Tm * D)
                      + 2 * (8 * D * D + 2 * D * d_ff)
                      + 4 * (13 * D + d_ff))

    return pl.pallas_call(
        _decoder_layer_kernel,
        out_shape=jax.ShapeDtypeStruct((B, Tq, D), jnp.float32),
        grid_spec=pltpu.PrefetchScalarGridSpec(
            num_scalar_prefetch=0,
            grid=(B,),
            in_specs=[
                pl.BlockSpec((1, Tq, D), lambda b: (b, 0, 0)),    # x
                pl.BlockSpec((1, Tm, D), lambda b: (b, 0, 0)),    # hidden
                _w((D, 3 * D)), _w((1, 3 * D)), _w((D, D)), _w((1, D)),
                _w((1, D)), _w((1, D)),
                _w((D, D)), _w((1, D)), _w((D, 2 * D)), _w((1, 2 * D)),
                _w((D, D)), _w((1, D)), _w((1, D)), _w((1, D)),
                _w((D, d_ff)), _w((1, d_ff)), _w((d_ff, D)), _w((1, D)),
                _w((1, D)), _w((1, D)),
            ],
            out_specs=pl.BlockSpec((1, Tq, D), lambda b: (b, 0, 0)),
        ),
        compiler_params=pltpu.CompilerParams(
            dimension_semantics=("parallel",),      # B>=2 -> both v7x TCs busy
            vmem_limit_bytes=16 * 1024 * 1024,
        ),
        cost_estimate=pl.CostEstimate(
            flops=flops,
            transcendentals=B * NHEAD * Tq * (Tq + Tm),
            bytes_accessed=bytes_accessed),
    )(x, hidden,
      p["sa_wqkv"], p["sa_bqkv"], p["sa_wo"], p["sa_bo"], p["sa_ln_g"], p["sa_ln_b"],
      p["ca_wq"], p["ca_bq"], p["ca_wkv"], p["ca_bkv"], p["ca_wo"], p["ca_bo"],
      p["ca_ln_g"], p["ca_ln_b"],
      p["w1"], p["b1"], p["w2"], p["b2"], p["ffn_ln_g"], p["ffn_ln_b"])


# ----------------------------- model forward ------------------------------

def decoder_forward(params, decoder_input, hidden):
    # nn.Embedding + nn.Linear constant-folded into one (corpus_len, D) table:
    # a single lane-dense gather replaces the gather + fc matmul.
    x = jnp.take(params["emb_fc"], decoder_input, axis=0)         # (B, T, D) f32
    # TransformerDecoderLayer, post-norm, no masks, eval (dropout = identity):
    return decoder_layer(x, hidden, params["layer"])


# ----------------------------- parameter init ------------------------------

def init_params(key, corpus_len, emb_dim, d_model, d_ff=2048):
    ks = jax.random.split(key, 9)
    s = 0.05

    emb = s * jax.random.normal(ks[0], (corpus_len, emb_dim), jnp.float32)
    fc_w = s * jax.random.normal(ks[1], (emb_dim, d_model), jnp.float32)
    fc_b = jnp.zeros((d_model,), jnp.float32)
    emb_fc = emb @ fc_w + fc_b            # folded Embedding -> Linear table (f32)

    def nrm(k, shape):
        return (s * jax.random.normal(k, shape, jnp.float32)).astype(jnp.bfloat16)

    layer = {
        # self-attention (packed Q|K|V, column-concatenated, stored (in, out))
        "sa_wqkv": nrm(ks[2], (d_model, 3 * d_model)),
        "sa_bqkv": jnp.zeros((1, 3 * d_model), jnp.float32),
        "sa_wo": nrm(ks[3], (d_model, d_model)),
        "sa_bo": jnp.zeros((1, d_model), jnp.float32),
        "sa_ln_g": jnp.ones((1, d_model), jnp.float32),
        "sa_ln_b": jnp.zeros((1, d_model), jnp.float32),
        # cross-attention (Q separate, packed K|V)
        "ca_wq": nrm(ks[4], (d_model, d_model)),
        "ca_bq": jnp.zeros((1, d_model), jnp.float32),
        "ca_wkv": nrm(ks[5], (d_model, 2 * d_model)),
        "ca_bkv": jnp.zeros((1, 2 * d_model), jnp.float32),
        "ca_wo": nrm(ks[6], (d_model, d_model)),
        "ca_bo": jnp.zeros((1, d_model), jnp.float32),
        "ca_ln_g": jnp.ones((1, d_model), jnp.float32),
        "ca_ln_b": jnp.zeros((1, d_model), jnp.float32),
        # FFN
        "w1": nrm(ks[7], (d_model, d_ff)),
        "b1": jnp.zeros((1, d_ff), jnp.float32),
        "w2": nrm(ks[8], (d_ff, d_model)),
        "b2": jnp.zeros((1, d_model), jnp.float32),
        "ffn_ln_g": jnp.ones((1, d_model), jnp.float32),
        "ffn_ln_b": jnp.zeros((1, d_model), jnp.float32),
    }
    return {"emb_fc": emb_fc, "layer": layer}


# ----------------------------- main ------------------------------

if __name__ == "__main__":
    B = 2            # batch
    T_TGT = 8        # decoder_input sequence length
    T_MEM = 8        # memory (hidden) sequence length
    CORPUS_LEN = 50  # corpus_len
    EMB_DIM = 32     # decoder_embedding_num
    D_MODEL = 128    # decoder_hidden_num (nhead=8 -> head_dim=16, lane-dense)
    D_FF = 2048      # PyTorch TransformerDecoderLayer default dim_feedforward

    root = jax.random.PRNGKey(0)
    kp, ki, kh = jax.random.split(root, 3)

    params = init_params(kp, CORPUS_LEN, EMB_DIM, D_MODEL, D_FF)
    decoder_input = jax.random.randint(ki, (B, T_TGT), 0, CORPUS_LEN, dtype=jnp.int32)
    hidden = jax.random.normal(kh, (B, T_MEM, D_MODEL), jnp.float32)

    fwd = jax.jit(decoder_forward)
    out = jax.block_until_ready(fwd(params, decoder_input, hidden))

    assert out.shape == (B, T_TGT, D_MODEL), out.shape
    assert bool(jnp.all(jnp.isfinite(out))), "non-finite output"
    # TODO(synk): dropout (p=0.1) inside TransformerDecoderLayer is stochastic;
    # eval-mode (identity) semantics are implemented, matching model.eval().
    print("KERNEL_OK")
</pallas_src>

<mosaic_0001>
module attributes {stable_mosaic.version = 11 : i64} {
  func.func @_decoder_layer_kernel(%arg0: i32, %arg1: memref<1x8x128xf32, #tpu.memory_space<vmem>>, %arg2: memref<1x8x128xf32, #tpu.memory_space<vmem>>, %arg3: memref<128x384xbf16, #tpu.memory_space<vmem>>, %arg4: memref<1x384xf32, #tpu.memory_space<vmem>>, %arg5: memref<128x128xbf16, #tpu.memory_space<vmem>>, %arg6: memref<1x128xf32, #tpu.memory_space<vmem>>, %arg7: memref<1x128xf32, #tpu.memory_space<vmem>>, %arg8: memref<1x128xf32, #tpu.memory_space<vmem>>, %arg9: memref<128x128xbf16, #tpu.memory_space<vmem>>, %arg10: memref<1x128xf32, #tpu.memory_space<vmem>>, %arg11: memref<128x256xbf16, #tpu.memory_space<vmem>>, %arg12: memref<1x256xf32, #tpu.memory_space<vmem>>, %arg13: memref<128x128xbf16, #tpu.memory_space<vmem>>, %arg14: memref<1x128xf32, #tpu.memory_space<vmem>>, %arg15: memref<1x128xf32, #tpu.memory_space<vmem>>, %arg16: memref<1x128xf32, #tpu.memory_space<vmem>>, %arg17: memref<128x2048xbf16, #tpu.memory_space<vmem>>, %arg18: memref<1x2048xf32, #tpu.memory_space<vmem>>, %arg19: memref<2048x128xbf16, #tpu.memory_space<vmem>>, %arg20: memref<1x128xf32, #tpu.memory_space<vmem>>, %arg21: memref<1x128xf32, #tpu.memory_space<vmem>>, %arg22: memref<1x128xf32, #tpu.memory_space<vmem>>, %arg23: memref<1x8x128xf32, #tpu.memory_space<vmem>>) attributes {dimension_semantics = [#tpu.dimension_semantics<parallel>], iteration_bounds = array<i64: 2>, scalar_prefetch = 0 : i64, scratch_operands = 0 : i64, tpu.core_type = #tpu.core_type<tc>, window_params = [{transform_indices = @transform_0, window_bounds = array<i64: 1, 8, 128>}, {transform_indices = @transform_1, window_bounds = array<i64: 1, 8, 128>}, {pipeline_mode = #tpu.pipeline_mode<synchronous>, transform_indices = @transform_2, window_bounds = array<i64: 128, 384>}, {pipeline_mode = #tpu.pipeline_mode<synchronous>, transform_indices = @transform_3, window_bounds = array<i64: 1, 384>}, {pipeline_mode = #tpu.pipeline_mode<synchronous>, transform_indices = @transform_4, window_bounds = array<i64: 128, 128>}, {pipeline_mode = #tpu.pipeline_mode<synchronous>, transform_indices = @transform_5, window_bounds = array<i64: 1, 128>}, {pipeline_mode = #tpu.pipeline_mode<synchronous>, transform_indices = @transform_6, window_bounds = array<i64: 1, 128>}, {pipeline_mode = #tpu.pipeline_mode<synchronous>, transform_indices = @transform_7, window_bounds = array<i64: 1, 128>}, {pipeline_mode = #tpu.pipeline_mode<synchronous>, transform_indices = @transform_8, window_bounds = array<i64: 128, 128>}, {pipeline_mode = #tpu.pipeline_mode<synchronous>, transform_indices = @transform_9, window_bounds = array<i64: 1, 128>}, {pipeline_mode = #tpu.pipeline_mode<synchronous>, transform_indices = @transform_10, window_bounds = array<i64: 128, 256>}, {pipeline_mode = #tpu.pipeline_mode<synchronous>, transform_indices = @transform_11, window_bounds = array<i64: 1, 256>}, {pipeline_mode = #tpu.pipeline_mode<synchronous>, transform_indices = @transform_12, window_bounds = array<i64: 128, 128>}, {pipeline_mode = #tpu.pipeline_mode<synchronous>, transform_indices = @transform_13, window_bounds = array<i64: 1, 128>}, {pipeline_mode = #tpu.pipeline_mode<synchronous>, transform_indices = @transform_14, window_bounds = array<i64: 1, 128>}, {pipeline_mode = #tpu.pipeline_mode<synchronous>, transform_indices = @transform_15, window_bounds = array<i64: 1, 128>}, {pipeline_mode = #tpu.pipeline_mode<synchronous>, transform_indices = @transform_16, window_bounds = array<i64: 128, 2048>}, {pipeline_mode = #tpu.pipeline_mode<synchronous>, transform_indices = @transform_17, window_bounds = array<i64: 1, 2048>}, {pipeline_mode = #tpu.pipeline_mode<synchronous>, transform_indices = @transform_18, window_bounds = array<i64: 2048, 128>}, {pipeline_mode = #tpu.pipeline_mode<synchronous>, transform_indices = @transform_19, window_bounds = array<i64: 1, 128>}, {pipeline_mode = #tpu.pipeline_mode<synchronous>, transform_indices = @transform_20, window_bounds = array<i64: 1, 128>}, {pipeline_mode = #tpu.pipeline_mode<synchronous>, transform_indices = @transform_21, window_bounds = array<i64: 1, 128>}, {transform_indices = @transform_22, window_bounds = array<i64: 1, 8, 128>}]} {
    %c0 = arith.constant 0 : index
    %c0_0 = arith.constant 0 : index
    %c0_1 = arith.constant 0 : index
    %0 = vector.load %arg1[%c0, %c0_0, %c0_1] : memref<1x8x128xf32, #tpu.memory_space<vmem>>, vector<1x8x128xf32>
    %1 = vector.shape_cast %0 : vector<1x8x128xf32> to vector<8x128xf32>
    %c0_2 = arith.constant 0 : index
    %c0_3 = arith.constant 0 : index
    %c0_4 = arith.constant 0 : index
    %2 = vector.load %arg2[%c0_2, %c0_3, %c0_4] : memref<1x8x128xf32, #tpu.memory_space<vmem>>, vector<1x8x128xf32>
    %3 = vector.shape_cast %2 : vector<1x8x128xf32> to vector<8x128xf32>
    %4 = arith.truncf %1 : vector<8x128xf32> to vector<8x128xbf16>
    %c0_5 = arith.constant 0 : index
    %c0_6 = arith.constant 0 : index
    %5 = vector.load %arg3[%c0_5, %c0_6] : memref<128x384xbf16, #tpu.memory_space<vmem>>, vector<128x384xbf16>
    %cst = arith.constant dense<0.000000e+00> : vector<8x384xf32>
    %6 = tpu.matmul %4, %5, %cst {dimension_numbers = #tpu.dot_dimension_numbers<[1], [0], [0], [1], [0, 0, 1, 1], [], []>} : vector<8x128xbf16>, vector<128x384xbf16>, vector<8x384xf32> -> vector<8x384xf32>
    %c0_7 = arith.constant 0 : index
    %c0_8 = arith.constant 0 : index
    %7 = vector.load %arg4[%c0_7, %c0_8] : memref<1x384xf32, #tpu.memory_space<vmem>>, vector<1x384xf32>
    %8 = vector.broadcast %7 : vector<1x384xf32> to vector<8x384xf32>
    %9 = arith.addf %6, %8 : vector<8x384xf32>
    %10 = vector.extract_strided_slice %9 {offsets = [0, 0], sizes = [8, 128], strides = [1, 1]} : vector<8x384xf32> to vector<8x128xf32>
    %11 = vector.extract_strided_slice %9 {offsets = [0, 128], sizes = [8, 128], strides = [1, 1]} : vector<8x384xf32> to vector<8x128xf32>
    %12 = vector.extract_strided_slice %9 {offsets = [0, 256], sizes = [8, 128], strides = [1, 1]} : vector<8x384xf32> to vector<8x128xf32>
    %c0_9 = arith.constant 0 : index
    %c0_10 = arith.constant 0 : index
    %13 = vector.load %arg5[%c0_9, %c0_10] : memref<128x128xbf16, #tpu.memory_space<vmem>>, vector<128x128xbf16>
    %cst_11 = arith.constant 2.500000e-01 : f32
    %14 = vector.broadcast %cst_11 : f32 to vector<8x128xf32>
    %15 = arith.mulf %10, %14 : vector<8x128xf32>
    %16 = vector.shape_cast %15 : vector<8x128xf32> to vector<8x8x16xf32>
    %17 = vector.shape_cast %11 : vector<8x128xf32> to vector<8x8x16xf32>
    %18 = vector.shape_cast %12 : vector<8x128xf32> to vector<8x8x16xf32>
    "tpu.trace_start"() <{level = 10 : i32, message = "qhd,khd->hqk"}> : () -> ()
    %cst_12 = arith.constant dense<0.000000e+00> : vector<8x8x8xf32>
    %19 = tpu.matmul %16, %17, %cst_12 {dimension_numbers = #tpu.dot_dimension_numbers<[2], [2], [0], [0], [0, 1, 0, 0, 1, 0], [1], [1]>} : vector<8x8x16xf32>, vector<8x8x16xf32>, vector<8x8x8xf32> -> vector<8x8x8xf32>
    "tpu.trace_stop"() : () -> ()
    %cst_13 = arith.constant dense<0xFF800000> : vector<8x8xf32>
    %20 = vector.multi_reduction <maximumf>, %19, %cst_13 [2] : vector<8x8x8xf32> to vector<8x8xf32>
    %21 = vector.shape_cast %20 : vector<8x8xf32> to vector<8x8x1xf32>
    %22 = vector.broadcast %21 : vector<8x8x1xf32> to vector<8x8x8xf32>
    %23 = arith.subf %19, %22 : vector<8x8x8xf32>
    %24 = math.exp %23 : vector<8x8x8xf32>
    %cst_14 = arith.constant dense<0.000000e+00> : vector<8x8xf32>
    %25 = vector.multi_reduction <add>, %24, %cst_14 [2] : vector<8x8x8xf32> to vector<8x8xf32>
    %26 = vector.shape_cast %25 : vector<8x8xf32> to vector<8x8x1xf32>
    %27 = tpu.reciprocal %26 {approx = true} : vector<8x8x1xf32> -> vector<8x8x1xf32>
    %28 = vector.broadcast %27 : vector<8x8x1xf32> to vector<8x8x8xf32>
    %29 = arith.mulf %24, %28 : vector<8x8x8xf32>
    "tpu.trace_start"() <{level = 10 : i32, message = "hqk,khd->qhd"}> : () -> ()
    %cst_15 = arith.constant dense<0.000000e+00> : vector<8x16x8xf32>
    %30 = tpu.matmul %18, %29, %cst_15 {dimension_numbers = #tpu.dot_dimension_numbers<[0], [2], [2], [1], [0, 1, 0, 2, 1, 1], [1], [0]>} : vector<8x8x16xf32>, vector<8x8x8xf32>, vector<8x16x8xf32> -> vector<8x16x8xf32>
    %31 = tpu.transpose %30, [2, 0, 1] : vector<8x16x8xf32> -> vector<8x8x16xf32>
    "tpu.trace_stop"() : () -> ()
    %32 = vector.shape_cast %31 : vector<8x8x16xf32> to vector<8x128xf32>
    %33 = arith.truncf %32 : vector<8x128xf32> to vector<8x128xbf16>
    %cst_16 = arith.constant dense<0.000000e+00> : vector<8x128xf32>
    %34 = tpu.matmul %33, %13, %cst_16 {dimension_numbers = #tpu.dot_dimension_numbers<[1], [0], [0], [1], [0, 0, 1, 1], [], []>} : vector<8x128xbf16>, vector<128x128xbf16>, vector<8x128xf32> -> vector<8x128xf32>
    %35 = arith.addf %1, %34 : vector<8x128xf32>
    %c0_17 = arith.constant 0 : index
    %c0_18 = arith.constant 0 : index
    %36 = vector.load %arg6[%c0_17, %c0_18] : memref<1x128xf32, #tpu.memory_space<vmem>>, vector<1x128xf32>
    %37 = vector.broadcast %36 : vector<1x128xf32> to vector<8x128xf32>
    %38 = arith.addf %35, %37 : vector<8x128xf32>
    %c0_19 = arith.constant 0 : index
    %c0_20 = arith.constant 0 : index
    %39 = vector.load %arg7[%c0_19, %c0_20] : memref<1x128xf32, #tpu.memory_space<vmem>>, vector<1x128xf32>
    %c0_21 = arith.constant 0 : index
    %c0_22 = arith.constant 0 : index
    %40 = vector.load %arg8[%c0_21, %c0_22] : memref<1x128xf32, #tpu.memory_space<vmem>>, vector<1x128xf32>
    %cst_23 = arith.constant dense<0.000000e+00> : vector<8xf32>
    %41 = vector.multi_reduction <add>, %38, %cst_23 [1] : vector<8x128xf32> to vector<8xf32>
    %42 = vector.shape_cast %41 : vector<8xf32> to vector<8x1xf32>
    %cst_24 = arith.constant 1.280000e+02 : f32
    %43 = vector.broadcast %cst_24 : f32 to vector<8x1xf32>
    %44 = arith.divf %42, %43 : vector<8x1xf32>
    %45 = vector.broadcast %44 : vector<8x1xf32> to vector<8x128xf32>
    %46 = arith.subf %38, %45 : vector<8x128xf32>
    %47 = arith.mulf %46, %46 : vector<8x128xf32>
    %cst_25 = arith.constant dense<0.000000e+00> : vector<8xf32>
    %48 = vector.multi_reduction <add>, %47, %cst_25 [1] : vector<8x128xf32> to vector<8xf32>
    %49 = vector.shape_cast %48 : vector<8xf32> to vector<8x1xf32>
    %cst_26 = arith.constant 1.280000e+02 : f32
    %50 = vector.broadcast %cst_26 : f32 to vector<8x1xf32>
    %51 = arith.divf %49, %50 : vector<8x1xf32>
    %52 = vector.broadcast %44 : vector<8x1xf32> to vector<8x128xf32>
    %53 = arith.subf %38, %52 : vector<8x128xf32>
    %cst_27 = arith.constant 9.99999974E-6 : f32
    %54 = vector.broadcast %cst_27 : f32 to vector<8x1xf32>
    %55 = arith.addf %51, %54 : vector<8x1xf32>
    %56 = math.rsqrt %55 : vector<8x1xf32>
    %57 = vector.broadcast %56 : vector<8x1xf32> to vector<8x128xf32>
    %58 = arith.mulf %53, %57 : vector<8x128xf32>
    %59 = vector.broadcast %39 : vector<1x128xf32> to vector<8x128xf32>
    %60 = arith.mulf %58, %59 : vector<8x128xf32>
    %61 = vector.broadcast %40 : vector<1x128xf32> to vector<8x128xf32>
    %62 = arith.addf %60, %61 : vector<8x128xf32>
    %63 = arith.truncf %62 : vector<8x128xf32> to vector<8x128xbf16>
    %c0_28 = arith.constant 0 : index
    %c0_29 = arith.constant 0 : index
    %64 = vector.load %arg9[%c0_28, %c0_29] : memref<128x128xbf16, #tpu.memory_space<vmem>>, vector<128x128xbf16>
    %cst_30 = arith.constant dense<0.000000e+00> : vector<8x128xf32>
    %65 = tpu.matmul %63, %64, %cst_30 {dimension_numbers = #tpu.dot_dimension_numbers<[1], [0], [0], [1], [0, 0, 1, 1], [], []>} : vector<8x128xbf16>, vector<128x128xbf16>, vector<8x128xf32> -> vector<8x128xf32>
    %c0_31 = arith.constant 0 : index
    %c0_32 = arith.constant 0 : index
    %66 = vector.load %arg10[%c0_31, %c0_32] : memref<1x128xf32, #tpu.memory_space<vmem>>, vector<1x128xf32>
    %67 = vector.broadcast %66 : vector<1x128xf32> to vector<8x128xf32>
    %68 = arith.addf %65, %67 : vector<8x128xf32>
    %69 = arith.truncf %3 : vector<8x128xf32> to vector<8x128xbf16>
    %c0_33 = arith.constant 0 : index
    %c0_34 = arith.constant 0 : index
    %70 = vector.load %arg11[%c0_33, %c0_34] : memref<128x256xbf16, #tpu.memory_space<vmem>>, vector<128x256xbf16>
    %cst_35 = arith.constant dense<0.000000e+00> : vector<8x256xf32>
    %71 = tpu.matmul %69, %70, %cst_35 {dimension_numbers = #tpu.dot_dimension_numbers<[1], [0], [0], [1], [0, 0, 1, 1], [], []>} : vector<8x128xbf16>, vector<128x256xbf16>, vector<8x256xf32> -> vector<8x256xf32>
    %c0_36 = arith.constant 0 : index
    %c0_37 = arith.constant 0 : index
    %72 = vector.load %arg12[%c0_36, %c0_37] : memref<1x256xf32, #tpu.memory_space<vmem>>, vector<1x256xf32>
    %73 = vector.broadcast %72 : vector<1x256xf32> to vector<8x256xf32>
    %74 = arith.addf %71, %73 : vector<8x256xf32>
    %75 = vector.extract_strided_slice %74 {offsets = [0, 0], sizes = [8, 128], strides = [1, 1]} : vector<8x256xf32> to vector<8x128xf32>
    %76 = vector.extract_strided_slice %74 {offsets = [0, 128], sizes = [8, 128], strides = [1, 1]} : vector<8x256xf32> to vector<8x128xf32>
    %c0_38 = arith.constant 0 : index
    %c0_39 = arith.constant 0 : index
    %77 = vector.load %arg13[%c0_38, %c0_39] : memref<128x128xbf16, #tpu.memory_space<vmem>>, vector<128x128xbf16>
    %cst_40 = arith.constant 2.500000e-01 : f32
    %78 = vector.broadcast %cst_40 : f32 to vector<8x128xf32>
    %79 = arith.mulf %68, %78 : vector<8x128xf32>
    %80 = vector.shape_cast %79 : vector<8x128xf32> to vector<8x8x16xf32>
    %81 = vector.shape_cast %75 : vector<8x128xf32> to vector<8x8x16xf32>
    %82 = vector.shape_cast %76 : vector<8x128xf32> to vector<8x8x16xf32>
    "tpu.trace_start"() <{level = 10 : i32, message = "qhd,khd->hqk"}> : () -> ()
    %cst_41 = arith.constant dense<0.000000e+00> : vector<8x8x8xf32>
    %83 = tpu.matmul %80, %81, %cst_41 {dimension_numbers = #tpu.dot_dimension_numbers<[2], [2], [0], [0], [0, 1, 0, 0, 1, 0], [1], [1]>} : vector<8x8x16xf32>, vector<8x8x16xf32>, vector<8x8x8xf32> -> vector<8x8x8xf32>
    "tpu.trace_stop"() : () -> ()
    %cst_42 = arith.constant dense<0xFF800000> : vector<8x8xf32>
    %84 = vector.multi_reduction <maximumf>, %83, %cst_42 [2] : vector<8x8x8xf32> to vector<8x8xf32>
    %85 = vector.shape_cast %84 : vector<8x8xf32> to vector<8x8x1xf32>
    %86 = vector.broadcast %85 : vector<8x8x1xf32> to vector<8x8x8xf32>
    %87 = arith.subf %83, %86 : vector<8x8x8xf32>
    %88 = math.exp %87 : vector<8x8x8xf32>
    %cst_43 = arith.constant dense<0.000000e+00> : vector<8x8xf32>
    %89 = vector.multi_reduction <add>, %88, %cst_43 [2] : vector<8x8x8xf32> to vector<8x8xf32>
    %90 = vector.shape_cast %89 : vector<8x8xf32> to vector<8x8x1xf32>
    %91 = tpu.reciprocal %90 {approx = true} : vector<8x8x1xf32> -> vector<8x8x1xf32>
    %92 = vector.broadcast %91 : vector<8x8x1xf32> to vector<8x8x8xf32>
    %93 = arith.mulf %88, %92 : vector<8x8x8xf32>
    "tpu.trace_start"() <{level = 10 : i32, message = "hqk,khd->qhd"}> : () -> ()
    %cst_44 = arith.constant dense<0.000000e+00> : vector<8x16x8xf32>
    %94 = tpu.matmul %82, %93, %cst_44 {dimension_numbers = #tpu.dot_dimension_numbers<[0], [2], [2], [1], [0, 1, 0, 2, 1, 1], [1], [0]>} : vector<8x8x16xf32>, vector<8x8x8xf32>, vector<8x16x8xf32> -> vector<8x16x8xf32>
    %95 = tpu.transpose %94, [2, 0, 1] : vector<8x16x8xf32> -> vector<8x8x16xf32>
    "tpu.trace_stop"() : () -> ()
    %96 = vector.shape_cast %95 : vector<8x8x16xf32> to vector<8x128xf32>
    %97 = arith.truncf %96 : vector<8x128xf32> to vector<8x128xbf16>
    %cst_45 = arith.constant dense<0.000000e+00> : vector<8x128xf32>
    %98 = tpu.matmul %97, %77, %cst_45 {dimension_numbers = #tpu.dot_dimension_numbers<[1], [0], [0], [1], [0, 0, 1, 1], [], []>} : vector<8x128xbf16>, vector<128x128xbf16>, vector<8x128xf32> -> vector<8x128xf32>
    %99 = arith.addf %62, %98 : vector<8x128xf32>
    %c0_46 = arith.constant 0 : index
    %c0_47 = arith.constant 0 : index
    %100 = vector.load %arg14[%c0_46, %c0_47] : memref<1x128xf32, #tpu.memory_space<vmem>>, vector<1x128xf32>
    %101 = vector.broadcast %100 : vector<1x128xf32> to vector<8x128xf32>
    %102 = arith.addf %99, %101 : vector<8x128xf32>
    %c0_48 = arith.constant 0 : index
    %c0_49 = arith.constant 0 : index
    %103 = vector.load %arg15[%c0_48, %c0_49] : memref<1x128xf32, #tpu.memory_space<vmem>>, vector<1x128xf32>
    %c0_50 = arith.constant 0 : index
    %c0_51 = arith.constant 0 : index
    %104 = vector.load %arg16[%c0_50, %c0_51] : memref<1x128xf32, #tpu.memory_space<vmem>>, vector<1x128xf32>
    %cst_52 = arith.constant dense<0.000000e+00> : vector<8xf32>
    %105 = vector.multi_reduction <add>, %102, %cst_52 [1] : vector<8x128xf32> to vector<8xf32>
    %106 = vector.shape_cast %105 : vector<8xf32> to vector<8x1xf32>
    %cst_53 = arith.constant 1.280000e+02 : f32
    %107 = vector.broadcast %cst_53 : f32 to vector<8x1xf32>
    %108 = arith.divf %106, %107 : vector<8x1xf32>
    %109 = vector.broadcast %108 : vector<8x1xf32> to vector<8x128xf32>
    %110 = arith.subf %102, %109 : vector<8x128xf32>
    %111 = arith.mulf %110, %110 : vector<8x128xf32>
    %cst_54 = arith.constant dense<0.000000e+00> : vector<8xf32>
    %112 = vector.multi_reduction <add>, %111, %cst_54 [1] : vector<8x128xf32> to vector<8xf32>
    %113 = vector.shape_cast %112 : vector<8xf32> to vector<8x1xf32>
    %cst_55 = arith.constant 1.280000e+02 : f32
    %114 = vector.broadcast %cst_55 : f32 to vector<8x1xf32>
    %115 = arith.divf %113, %114 : vector<8x1xf32>
    %116 = vector.broadcast %108 : vector<8x1xf32> to vector<8x128xf32>
    %117 = arith.subf %102, %116 : vector<8x128xf32>
    %cst_56 = arith.constant 9.99999974E-6 : f32
    %118 = vector.broadcast %cst_56 : f32 to vector<8x1xf32>
    %119 = arith.addf %115, %118 : vector<8x1xf32>
    %120 = math.rsqrt %119 : vector<8x1xf32>
    %121 = vector.broadcast %120 : vector<8x1xf32> to vector<8x128xf32>
    %122 = arith.mulf %117, %121 : vector<8x128xf32>
    %123 = vector.broadcast %103 : vector<1x128xf32> to vector<8x128xf32>
    %124 = arith.mulf %122, %123 : vector<8x128xf32>
    %125 = vector.broadcast %104 : vector<1x128xf32> to vector<8x128xf32>
    %126 = arith.addf %124, %125 : vector<8x128xf32>
    %127 = arith.truncf %126 : vector<8x128xf32> to vector<8x128xbf16>
    %c0_57 = arith.constant 0 : index
    %c0_58 = arith.constant 0 : index
    %128 = vector.load %arg17[%c0_57, %c0_58] : memref<128x2048xbf16, #tpu.memory_space<vmem>>, vector<128x2048xbf16>
    %cst_59 = arith.constant dense<0.000000e+00> : vector<8x2048xf32>
    %129 = tpu.matmul %127, %128, %cst_59 {dimension_numbers = #tpu.dot_dimension_numbers<[1], [0], [0], [1], [0, 0, 1, 1], [], []>} : vector<8x128xbf16>, vector<128x2048xbf16>, vector<8x2048xf32> -> vector<8x2048xf32>
    %c0_60 = arith.constant 0 : index
    %c0_61 = arith.constant 0 : index
    %130 = vector.load %arg18[%c0_60, %c0_61] : memref<1x2048xf32, #tpu.memory_space<vmem>>, vector<1x2048xf32>
    %131 = vector.broadcast %130 : vector<1x2048xf32> to vector<8x2048xf32>
    %132 = arith.addf %129, %131 : vector<8x2048xf32>
    %cst_62 = arith.constant 0.000000e+00 : f32
    %133 = vector.broadcast %cst_62 : f32 to vector<8x2048xf32>
    %134 = arith.maximumf %132, %133 : vector<8x2048xf32>
    %135 = arith.truncf %134 : vector<8x2048xf32> to vector<8x2048xbf16>
    %c0_63 = arith.constant 0 : index
    %c0_64 = arith.constant 0 : index
    %136 = vector.load %arg19[%c0_63, %c0_64] : memref<2048x128xbf16, #tpu.memory_space<vmem>>, vector<2048x128xbf16>
    %cst_65 = arith.constant dense<0.000000e+00> : vector<8x128xf32>
    %137 = tpu.matmul %135, %136, %cst_65 {dimension_numbers = #tpu.dot_dimension_numbers<[1], [0], [0], [1], [0, 0, 1, 1], [], []>} : vector<8x2048xbf16>, vector<2048x128xbf16>, vector<8x128xf32> -> vector<8x128xf32>
    %c0_66 = arith.constant 0 : index
    %c0_67 = arith.constant 0 : index
    %138 = vector.load %arg20[%c0_66, %c0_67] : memref<1x128xf32, #tpu.memory_space<vmem>>, vector<1x128xf32>
    %139 = vector.broadcast %138 : vector<1x128xf32> to vector<8x128xf32>
    %140 = arith.addf %137, %139 : vector<8x128xf32>
    %141 = arith.addf %126, %140 : vector<8x128xf32>
    %c0_68 = arith.constant 0 : index
    %c0_69 = arith.constant 0 : index
    %142 = vector.load %arg21[%c0_68, %c0_69] : memref<1x128xf32, #tpu.memory_space<vmem>>, vector<1x128xf32>
    %c0_70 = arith.constant 0 : index
    %c0_71 = arith.constant 0 : index
    %143 = vector.load %arg22[%c0_70, %c0_71] : memref<1x128xf32, #tpu.memory_space<vmem>>, vector<1x128xf32>
    %cst_72 = arith.constant dense<0.000000e+00> : vector<8xf32>
    %144 = vector.multi_reduction <add>, %141, %cst_72 [1] : vector<8x128xf32> to vector<8xf32>
    %145 = vector.shape_cast %144 : vector<8xf32> to vector<8x1xf32>
    %cst_73 = arith.constant 1.280000e+02 : f32
    %146 = vector.broadcast %cst_73 : f32 to vector<8x1xf32>
    %147 = arith.divf %145, %146 : vector<8x1xf32>
    %148 = vector.broadcast %147 : vector<8x1xf32> to vector<8x128xf32>
    %149 = arith.subf %141, %148 : vector<8x128xf32>
    %150 = arith.mulf %149, %149 : vector<8x128xf32>
    %cst_74 = arith.constant dense<0.000000e+00> : vector<8xf32>
    %151 = vector.multi_reduction <add>, %150, %cst_74 [1] : vector<8x128xf32> to vector<8xf32>
    %152 = vector.shape_cast %151 : vector<8xf32> to vector<8x1xf32>
    %cst_75 = arith.constant 1.280000e+02 : f32
    %153 = vector.broadcast %cst_75 : f32 to vector<8x1xf32>
    %154 = arith.divf %152, %153 : vector<8x1xf32>
    %155 = vector.broadcast %147 : vector<8x1xf32> to vector<8x128xf32>
    %156 = arith.subf %141, %155 : vector<8x128xf32>
    %cst_76 = arith.constant 9.99999974E-6 : f32
    %157 = vector.broadcast %cst_76 : f32 to vector<8x1xf32>
    %158 = arith.addf %154, %157 : vector<8x1xf32>
    %159 = math.rsqrt %158 : vector<8x1xf32>
    %160 = vector.broadcast %159 : vector<8x1xf32> to vector<8x128xf32>
    %161 = arith.mulf %156, %160 : vector<8x128xf32>
    %162 = vector.broadcast %142 : vector<1x128xf32> to vector<8x128xf32>
    %163 = arith.mulf %161, %162 : vector<8x128xf32>
    %164 = vector.broadcast %143 : vector<1x128xf32> to vector<8x128xf32>
    %165 = arith.addf %163, %164 : vector<8x128xf32>
    %c0_77 = arith.constant 0 : index
    %c0_78 = arith.constant 0 : index
    %c0_79 = arith.constant 0 : index
    %166 = vector.load %arg23[%c0_77, %c0_78, %c0_79] : memref<1x8x128xf32, #tpu.memory_space<vmem>>, vector<1x8x128xf32>
    %167 = vector.shape_cast %166 : vector<1x8x128xf32> to vector<8x128xf32>
    %168 = vector.shape_cast %165 : vector<8x128xf32> to vector<1x8x128xf32>
    tpu.vector_store %arg23[%c0_77, %c0_78, %c0_79], %168 {strides = array<i32>} : memref<1x8x128xf32, #tpu.memory_space<vmem>>, vector<1x8x128xf32>,
    return
  }
  func.func @transform_0(%arg0: i32) -> (i32, i32, i32) {
    %c0_i32 = arith.constant 0 : i32
    %c0_i32_0 = arith.constant 0 : i32
    %c0_i32_1 = arith.constant 0 : i32
    return %arg0, %c0_i32, %c0_i32_0 : i32, i32, i32
  }
  func.func @transform_1(%arg0: i32) -> (i32, i32, i32) {
    %c0_i32 = arith.constant 0 : i32
    %c0_i32_0 = arith.constant 0 : i32
    %c0_i32_1 = arith.constant 0 : i32
    return %arg0, %c0_i32, %c0_i32_0 : i32, i32, i32
  }
  func.func @transform_2(%arg0: i32) -> (i32, i32) {
    %c0_i32 = arith.constant 0 : i32
    %c0_i32_0 = arith.constant 0 : i32
    %c0_i32_1 = arith.constant 0 : i32
    return %c0_i32, %c0_i32_0 : i32, i32
  }
  func.func @transform_3(%arg0: i32) -> (i32, i32) {
    %c0_i32 = arith.constant 0 : i32
    %c0_i32_0 = arith.constant 0 : i32
    %c0_i32_1 = arith.constant 0 : i32
    return %c0_i32, %c0_i32_0 : i32, i32
  }
  func.func @transform_4(%arg0: i32) -> (i32, i32) {
    %c0_i32 = arith.constant 0 : i32
    %c0_i32_0 = arith.constant 0 : i32
    %c0_i32_1 = arith.constant 0 : i32
    return %c0_i32, %c0_i32_0 : i32, i32
  }
  func.func @transform_5(%arg0: i32) -> (i32, i32) {
    %c0_i32 = arith.constant 0 : i32
    %c0_i32_0 = arith.constant 0 : i32
    %c0_i32_1 = arith.constant 0 : i32
    return %c0_i32, %c0_i32_0 : i32, i32
  }
  func.func @transform_6(%arg0: i32) -> (i32, i32) {
    %c0_i32 = arith.constant 0 : i32
    %c0_i32_0 = arith.constant 0 : i32
    %c0_i32_1 = arith.constant 0 : i32
    return %c0_i32, %c0_i32_0 : i32, i32
  }
  func.func @transform_7(%arg0: i32) -> (i32, i32) {
    %c0_i32 = arith.constant 0 : i32
    %c0_i32_0 = arith.constant 0 : i32
    %c0_i32_1 = arith.constant 0 : i32
    return %c0_i32, %c0_i32_0 : i32, i32
  }
  func.func @transform_8(%arg0: i32) -> (i32, i32) {
    %c0_i32 = arith.constant 0 : i32
    %c0_i32_0 = arith.constant 0 : i32
    %c0_i32_1 = arith.constant 0 : i32
    return %c0_i32, %c0_i32_0 : i32, i32
  }
  func.func @transform_9(%arg0: i32) -> (i32, i32) {
    %c0_i32 = arith.constant 0 : i32
    %c0_i32_0 = arith.constant 0 : i32
    %c0_i32_1 = arith.constant 0 : i32
    return %c0_i32, %c0_i32_0 : i32, i32
  }
  func.func @transform_10(%arg0: i32) -> (i32, i32) {
    %c0_i32 = arith.constant 0 : i32
    %c0_i32_0 = arith.constant 0 : i32
    %c0_i32_1 = arith.constant 0 : i32
    return %c0_i32, %c0_i32_0 : i32, i32
  }
  func.func @transform_11(%arg0: i32) -> (i32, i32) {
    %c0_i32 = arith.constant 0 : i32
    %c0_i32_0 = arith.constant 0 : i32
    %c0_i32_1 = arith.constant 0 : i32
    return %c0_i32, %c0_i32_0 : i32, i32
  }
  func.func @transform_12(%arg0: i32) -> (i32, i32) {
    %c0_i32 = arith.constant 0 : i32
    %c0_i32_0 = arith.constant 0 : i32
    %c0_i32_1 = arith.constant 0 : i32
    return %c0_i32, %c0_i32_0 : i32, i32
  }
  func.func @transform_13(%arg0: i32) -> (i32, i32) {
    %c0_i32 = arith.constant 0 : i32
    %c0_i32_0 = arith.constant 0 : i32
    %c0_i32_1 = arith.constant 0 : i32
    return %c0_i32, %c0_i32_0 : i32, i32
  }
  func.func @transform_14(%arg0: i32) -> (i32, i32) {
    %c0_i32 = arith.constant 0 : i32
    %c0_i32_0 = arith.constant 0 : i32
    %c0_i32_1 = arith.constant 0 : i32
    return %c0_i32, %c0_i32_0 : i32, i32
  }
  func.func @transform_15(%arg0: i32) -> (i32, i32) {
    %c0_i32 = arith.constant 0 : i32
    %c0_i32_0 = arith.constant 0 : i32
    %c0_i32_1 = arith.constant 0 : i32
    return %c0_i32, %c0_i32_0 : i32, i32
  }
  func.func @transform_16(%arg0: i32) -> (i32, i32) {
    %c0_i32 = arith.constant 0 : i32
    %c0_i32_0 = arith.constant 0 : i32
    %c0_i32_1 = arith.constant 0 : i32
    return %c0_i32, %c0_i32_0 : i32, i32
  }
  func.func @transform_17(%arg0: i32) -> (i32, i32) {
    %c0_i32 = arith.constant 0 : i32
    %c0_i32_0 = arith.constant 0 : i32
    %c0_i32_1 = arith.constant 0 : i32
    return %c0_i32, %c0_i32_0 : i32, i32
  }
  func.func @transform_18(%arg0: i32) -> (i32, i32) {
    %c0_i32 = arith.constant 0 : i32
    %c0_i32_0 = arith.constant 0 : i32
    %c0_i32_1 = arith.constant 0 : i32
    return %c0_i32, %c0_i32_0 : i32, i32
  }
  func.func @transform_19(%arg0: i32) -> (i32, i32) {
    %c0_i32 = arith.constant 0 : i32
    %c0_i32_0 = arith.constant 0 : i32
    %c0_i32_1 = arith.constant 0 : i32
    return %c0_i32, %c0_i32_0 : i32, i32
  }
  func.func @transform_20(%arg0: i32) -> (i32, i32) {
    %c0_i32 = arith.constant 0 : i32
    %c0_i32_0 = arith.constant 0 : i32
    %c0_i32_1 = arith.constant 0 : i32
    return %c0_i32, %c0_i32_0 : i32, i32
  }
  func.func @transform_21(%arg0: i32) -> (i32, i32) {
    %c0_i32 = arith.constant 0 : i32
    %c0_i32_0 = arith.constant 0 : i32
    %c0_i32_1 = arith.constant 0 : i32
    return %c0_i32, %c0_i32_0 : i32, i32
  }
  func.func @transform_22(%arg0: i32) -> (i32, i32, i32) {
    %c0_i32 = arith.constant 0 : i32
    %c0_i32_0 = arith.constant 0 : i32
    %c0_i32_1 = arith.constant 0 : i32
    return %arg0, %c0_i32, %c0_i32_0 : i32, i32, i32
  }
}

</mosaic_0001>

<llo_original>
// kernel: decoder_forward.1
$region0: #{decoder_forward.1}
  #allocation0 [shape = 'u32[]', space=smem, size = 0x4, offset = 0x4, fixed_abs, tag = 'smem constant byte address 0x4 - core index']
  #allocation1 [shape = 'u32[144,128]{1,0:T(1,128)}', space=vmem, size = 0x12000, scoped, tag = 'internal scratch']
  %s0 = inlined_call_operand.vmem [shape: f32[2,8,128], index: 0, kind: input, shape index: {}]
  %s1 = inlined_call_operand.vmem [shape: f32[2,8,128], index: 1, kind: input, shape index: {}]
  %s2 = inlined_call_operand.vmem [shape: bf16[128,384], index: 2, kind: input, shape index: {}]
  %s3 = inlined_call_operand.vmem [shape: f32[1,384], index: 3, kind: input, shape index: {}]
  %s4 = inlined_call_operand.hbm [shape: bf16[128,128], index: 4, kind: input, shape index: {}]
  %s5 = inlined_call_operand.vmem [shape: f32[1,128], index: 5, kind: input, shape index: {}]
  %s6 = inlined_call_operand.hbm [shape: f32[1,128], index: 6, kind: input, shape index: {}]
  %s7 = inlined_call_operand.hbm [shape: f32[1,128], index: 7, kind: input, shape index: {}]
  %s8 = inlined_call_operand.hbm [shape: bf16[128,128], index: 8, kind: input, shape index: {}]
  %s9 = inlined_call_operand.hbm [shape: f32[1,128], index: 9, kind: input, shape index: {}]
  %s10 = inlined_call_operand.hbm [shape: bf16[128,256], index: 10, kind: input, shape index: {}]
  %s11 = inlined_call_operand.vmem [shape: f32[1,256], index: 11, kind: input, shape index: {}]
  %s12 = inlined_call_operand.hbm [shape: bf16[128,128], index: 12, kind: input, shape index: {}]
  %s13 = inlined_call_operand.hbm [shape: f32[1,128], index: 13, kind: input, shape index: {}]
  %s14 = inlined_call_operand.hbm [shape: f32[1,128], index: 14, kind: input, shape index: {}]
  %s15 = inlined_call_operand.hbm [shape: f32[1,128], index: 15, kind: input, shape index: {}]
  %s16 = inlined_call_operand.hbm [shape: bf16[128,2048], index: 16, kind: input, shape index: {}]
  %s17 = inlined_call_operand.vmem [shape: f32[1,2048], index: 17, kind: input, shape index: {}]
  %s18 = inlined_call_operand.hbm [shape: bf16[2048,128], index: 18, kind: input, shape index: {}]
  %s19 = inlined_call_operand.hbm [shape: f32[1,128], index: 19, kind: input, shape index: {}]
  %s20 = inlined_call_operand.hbm [shape: f32[1,128], index: 20, kind: input, shape index: {}]
  %s21 = inlined_call_operand.hbm [shape: f32[1,128], index: 21, kind: input, shape index: {}]
  %s22 = inlined_call_operand.hbm [shape: f32[2,8,128], index: 22, kind: output, shape index: {}]
  %s23 = sld [smem:[#allocation0]]
  $region181: #{decoder_forward.1} parent=0
    _
  %s25 = ssub.s32 1, %s23
  %s26 = scalar_select 0, %s25, %s23
  $region1: #{decoder_forward.1} parent=0
    #allocation2 [shape = 'u8[32768]{0}', space=vmem, size = 0x8000, scoped, tag = 'input window, operand 4, single buffered']
    #allocation3 [shape = 's32[2]{0}', space=sflag, size = 0x8, scoped, tag = 'scoped memory for decoder_forward.1']
    #allocation4 [shape = 's32[2]{0}', space=sflag, size = 0x8, scoped, tag = 'scoped memory for decoder_forward.1']
    #allocation5 [shape = 'u8[512]{0}', space=vmem, size = 0x400, scoped, tag = 'input window, operand 6, single buffered']
    #allocation6 [shape = 's32[1]{0}', space=sflag, size = 0x4, scoped, tag = 'scoped memory for decoder_forward.1']
    #allocation7 [shape = 'u8[512]{0}', space=vmem, size = 0x400, scoped, tag = 'input window, operand 7, single buffered']
    #allocation8 [shape = 'u8[32768]{0}', space=vmem, size = 0x8000, scoped, tag = 'input window, operand 8, single buffered']
    #allocation9 [shape = 's32[1]{0}', space=sflag, size = 0x4, scoped, tag = 'scoped memory for decoder_forward.1']
    #allocation10 [shape = 'u8[512]{0}', space=vmem, size = 0x400, scoped, tag = 'input window, operand 9, single buffered']
    #allocation11 [shape = 'u8[65536]{0}', space=vmem, size = 0x10000, scoped, tag = 'input window, operand 10, single buffered']
    #allocation12 [shape = 's32[1]{0}', space=sflag, size = 0x4, scoped, tag = 'scoped memory for decoder_forward.1']
    #allocation13 [shape = 'u8[32768]{0}', space=vmem, size = 0x8000, scoped, tag = 'input window, operand 12, single buffered']
    #allocation14 [shape = 'u8[512]{0}', space=vmem, size = 0x400, scoped, tag = 'input window, operand 13, single buffered']
    #allocation15 [shape = 's32[1]{0}', space=sflag, size = 0x4, scoped, tag = 'scoped memory for decoder_forward.1']
    #allocation16 [shape = 'u8[512]{0}', space=vmem, size = 0x400, scoped, tag = 'input window, operand 14, single buffered']
    #allocation17 [shape = 'u8[512]{0}', space=vmem, size = 0x400, scoped, tag = 'input window, operand 15, single buffered']
    #allocation18 [shape = 's32[1]{0}', space=sflag, size = 0x4, scoped, tag = 'scoped memory for decoder_forward.1']
    #allocation19 [shape = 'u8[524288]{0}', space=vmem, size = 0x80000, scoped, tag = 'input window, operand 16, single buffered']
    #allocation20 [shape = 'u8[524288]{0}', space=vmem, size = 0x80000, scoped, tag = 'input window, operand 18, single buffered']
    #allocation21 [shape = 's32[1]{0}', space=sflag, size = 0x4, scoped, tag = 'scoped memory for decoder_forward.1']
    #allocation22 [shape = 'u8[512]{0}', space=vmem, size = 0x400, scoped, tag = 'input window, operand 19, single buffered']
    #allocation23 [shape = 'u8[512]{0}', space=vmem, size = 0x400, scoped, tag = 'input window, operand 20, single buffered']
    #allocation24 [shape = 's32[1]{0}', space=sflag, size = 0x4, scoped, tag = 'scoped memory for decoder_forward.1']
    #allocation25 [shape = 'u8[512]{0}', space=vmem, size = 0x400, scoped, tag = 'input window, operand 21, single buffered']
    #allocation26 [shape = 'u8[8192]{0}', space=vmem, size = 0x2000, scoped, tag = 'output window, operand 0']
    %27 = vsyncpa [#allocation3], 0
    %28 = vsyncpa [#allocation6], 0
    %29 = vsyncpa [#allocation9], 0
    %30 = vsyncpa [#allocation12], 0
    %31 = vsyncpa [#allocation15], 0
    %32 = vsyncpa [#allocation18], 0
    %33 = vsyncpa [#allocation21], 0
    %34 = vsyncpa [#allocation24], 0
    %35 = vsyncpa [#allocation4], 0
    %s36 = scalar_lea.sflag [#allocation4], 1
    %37 = vsyncpa %s36, 0
    loop: start=0, step=1, limit=4
    $region2: #{decoder_forward.1} parent=1 // loop_pre_header
      _
    $region3: #{decoder_forward.1} parent=1 // loop_header
      %s39 = sphi 0, %s43
      %p40 = scmp.ge.s32.totalorder %s39, 4
      %s49 = sphi 0, %s51
      %s52 = sphi 0, %s49
      %s53 = sphi 0, %s52
      %s69 = sphi 0, %s53
      %s75 = sphi 0, %s77
      %s78 = sphi 0, %s75
      %s79 = sphi 0, %s78
      %s95 = sphi 0, %s79
      %s99 = sphi 0, %s99
      %s101 = sphi 0, %s99
      %s102 = sphi 0, %s101
      %s116 = sphi 0, %s102
      %s120 = sphi 0, %s120
      %s122 = sphi 0, %s120
      %s123 = sphi 0, %s122
      %s137 = sphi 0, %s123
      %s141 = sphi 0, %s141
      %s143 = sphi 0, %s141
      %s144 = sphi 0, %s143
      %s158 = sphi 0, %s144
      %s162 = sphi 0, %s162
      %s164 = sphi 0, %s162
      %s165 = sphi 0, %s164
      %s179 = sphi 0, %s165
      %s183 = sphi 0, %s183
      %s185 = sphi 0, %s183
      %s186 = sphi 0, %s185
      %s200 = sphi 0, %s186
      %s204 = sphi 0, %s204
      %s206 = sphi 0, %s204
      %s207 = sphi 0, %s206
      %s221 = sphi 0, %s207
      %s225 = sphi 0, %s225
      %s227 = sphi 0, %s225
      %s228 = sphi 0, %s227
      %s242 = sphi 0, %s228
      %s246 = sphi 0, %s246
      %s248 = sphi 0, %s246
      %s249 = sphi 0, %s248
      %s263 = sphi 0, %s249
      %s267 = sphi 0, %s267
      %s269 = sphi 0, %s267
      %s270 = sphi 0, %s269
      %s284 = sphi 0, %s270
      %s288 = sphi 0, %s288
      %s290 = sphi 0, %s288
      %s291 = sphi 0, %s290
      %s305 = sphi 0, %s291
      %s309 = sphi 0, %s309
      %s311 = sphi 0, %s309
      %s312 = sphi 0, %s311
      %s326 = sphi 0, %s312
      %s330 = sphi 0, %s330
      %s332 = sphi 0, %s330
      %s333 = sphi 0, %s332
      %s347 = sphi 0, %s333
      %s351 = sphi 0, %s351
      %s353 = sphi 0, %s351
      %s354 = sphi 0, %s353
      %s368 = sphi 0, %s354
      %s372 = sphi 0, %s372
      %s374 = sphi 0, %s372
      %s375 = sphi 0, %s374
      %s389 = sphi 0, %s375
      %s393 = sphi 0, %s393
      %s395 = sphi 0, %s393
      %s396 = sphi 0, %s395
      %s410 = sphi 0, %s396
      %s414 = sphi 0, %s414
      %s416 = sphi 0, %s414
      %s417 = sphi 0, %s416
      %s431 = sphi 0, %s417
      %s435 = sphi 0, %s435
      %s437 = sphi 0, %s435
      %s438 = sphi 0, %s437
      %s452 = sphi 0, %s438
      %s456 = sphi 0, %s456
      %s458 = sphi 0, %s456
      %s459 = sphi 0, %s458
      %s473 = sphi 0, %s459
      %s477 = sphi 0, %s477
      %s479 = sphi 0, %s477
      %s480 = sphi 0, %s479
      %s494 = sphi 0, %s480
      %s498 = sphi 0, %s498
      %s500 = sphi 0, %s498
      %s501 = sphi 0, %s500
      %s515 = sphi 0, %s501
      %s521 = sphi 0, %s523
      %s524 = sphi 0, %s521
      %s525 = sphi 0, %s524
      %s541 = sphi 0, %s525
    $region4: #{decoder_forward.1} parent=1 // loop_header_branch
      %42 = sbr.rel (%p40) target = $region8
    $region5: #{decoder_forward.1} parent=1 // loop_body
      %s44 = ssub.s32 %s39, 1
      %s45 = ssub.s32 %s39, 2
      %s46 = sadd.s32 %s39, 1
      %s47 = ssub.s32 %s39, %s46
      %p48 = scmp.eq.s32.totalorder %s47, 0
      %s50 = sadd.s32 %s49, 1
      %s51 = scalar_select %p48, %s49, %s50
      %p54 = pneg %p48
      %p55 = scmp.eq.s32.totalorder %s39, 1
      %p56 = por %p54, %p55
      %p57 = scmp.ne.s32.totalorder %s49, %s52
      %p58 = scmp.eq.s32.totalorder %s39, 0
      %p59 = por %p57, %p58
      %p60 = scmp.ne.s32.totalorder %s49, %s52
      %p61 = scmp.eq.s32.totalorder %s44, 1
      %p62 = por %p60, %p61
      %p63 = scmp.ne.s32.totalorder %s52, %s53
      %p64 = scmp.eq.s32.totalorder %s44, 0
      %p65 = por %p63, %p64
      %p66 = scmp.ne.s32.totalorder %s52, %s53
      %p67 = scmp.eq.s32.totalorder %s45, 1
      %p68 = por %p66, %p67
      %p70 = scmp.ne.s32.totalorder %s53, %s69
      %p71 = scmp.eq.s32.totalorder %s45, 0
      %p72 = por %p70, %p71
      %s73 = ssub.s32 %s39, %s46
      %p74 = scmp.eq.s32.totalorder %s73, 0
      %s76 = sadd.s32 %s75, 1
      %s77 = scalar_select %p74, %s75, %s76
      %p80 = pneg %p74
      %p81 = scmp.eq.s32.totalorder %s39, 1
      %p82 = por %p80, %p81
      %p83 = scmp.ne.s32.totalorder %s75, %s78
      %p84 = scmp.eq.s32.totalorder %s39, 0
      %p85 = por %p83, %p84
      %p86 = scmp.ne.s32.totalorder %s75, %s78
      %p87 = scmp.eq.s32.totalorder %s44, 1
      %p88 = por %p86, %p87
      %p89 = scmp.ne.s32.totalorder %s78, %s79
      %p90 = scmp.eq.s32.totalorder %s44, 0
      %p91 = por %p89, %p90
      %p92 = scmp.ne.s32.totalorder %s78, %s79
      %p93 = scmp.eq.s32.totalorder %s45, 1
      %p94 = por %p92, %p93
      %p96 = scmp.ne.s32.totalorder %s79, %s95
      %p97 = scmp.eq.s32.totalorder %s45, 0
      %p98 = por %p96, %p97
      %s100 = sadd.s32 %s99, 1
      %p103 = scmp.eq.s32.totalorder %s39, 1
      %p104 = scmp.ne.s32.totalorder %s99, %s101
      %p105 = scmp.eq.s32.totalorder %s39, 0
      %p106 = por %p104, %p105
      %p107 = scmp.ne.s32.totalorder %s99, %s101
      %p108 = scmp.eq.s32.totalorder %s44, 1
      %p109 = por %p107, %p108
      %p110 = scmp.ne.s32.totalorder %s101, %s102
      %p111 = scmp.eq.s32.totalorder %s44, 0
      %p112 = por %p110, %p111
      %p113 = scmp.ne.s32.totalorder %s101, %s102
      %p114 = scmp.eq.s32.totalorder %s45, 1
      %p115 = por %p113, %p114
      %p117 = scmp.ne.s32.totalorder %s102, %s116
      %p118 = scmp.eq.s32.totalorder %s45, 0
      %p119 = por %p117, %p118
      %s121 = sadd.s32 %s120, 1
      %p124 = scmp.eq.s32.totalorder %s39, 1
      %p125 = scmp.ne.s32.totalorder %s120, %s122
      %p126 = scmp.eq.s32.totalorder %s39, 0
      %p127 = por %p125, %p126
      %p128 = scmp.ne.s32.totalorder %s120, %s122
      %p129 = scmp.eq.s32.totalorder %s44, 1
      %p130 = por %p128, %p129
      %p131 = scmp.ne.s32.totalorder %s122, %s123
      %p132 = scmp.eq.s32.totalorder %s44, 0
      %p133 = por %p131, %p132
      %p134 = scmp.ne.s32.totalorder %s122, %s123
      %p135 = scmp.eq.s32.totalorder %s45, 1
      %p136 = por %p134, %p135
      %p138 = scmp.ne.s32.totalorder %s123, %s137
      %p139 = scmp.eq.s32.totalorder %s45, 0
      %p140 = por %p138, %p139
      %s142 = sadd.s32 %s141, 1
      %p145 = scmp.eq.s32.totalorder %s39, 1
      %p146 = scmp.ne.s32.totalorder %s141, %s143
      %p147 = scmp.eq.s32.totalorder %s39, 0
      %p148 = por %p146, %p147
      %p149 = scmp.ne.s32.totalorder %s141, %s143
      %p150 = scmp.eq.s32.totalorder %s44, 1
      %p151 = por %p149, %p150
      %p152 = scmp.ne.s32.totalorder %s143, %s144
      %p153 = scmp.eq.s32.totalorder %s44, 0
      %p154 = por %p152, %p153
      %p155 = scmp.ne.s32.totalorder %s143, %s144
      %p156 = scmp.eq.s32.totalorder %s45, 1
      %p157 = por %p155, %p156
      %p159 = scmp.ne.s32.totalorder %s144, %s158
      %p160 = scmp.eq.s32.totalorder %s45, 0
      %p161 = por %p159, %p160
      %s163 = sadd.s32 %s162, 1
      %p166 = scmp.eq.s32.totalorder %s39, 1
      %p167 = scmp.ne.s32.totalorder %s162, %s164
      %p168 = scmp.eq.s32.totalorder %s39, 0
      %p169 = por %p167, %p168
      %p170 = scmp.ne.s32.totalorder %s162, %s164
      %p171 = scmp.eq.s32.totalorder %s44, 1
      %p172 = por %p170, %p171
      %p173 = scmp.ne.s32.totalorder %s164, %s165
      %p174 = scmp.eq.s32.totalorder %s44, 0
      %p175 = por %p173, %p174
      %p176 = scmp.ne.s32.totalorder %s164, %s165
      %p177 = scmp.eq.s32.totalorder %s45, 1
      %p178 = por %p176, %p177
      %p180 = scmp.ne.s32.totalorder %s165, %s179
      %p181 = scmp.eq.s32.totalorder %s45, 0
      %p182 = por %p180, %p181
      %s184 = sadd.s32 %s183, 1
      %p187 = scmp.eq.s32.totalorder %s39, 1
      %p188 = scmp.ne.s32.totalorder %s183, %s185
      %p189 = scmp.eq.s32.totalorder %s39, 0
      %p190 = por %p188, %p189
      %p191 = scmp.ne.s32.totalorder %s183, %s185
      %p192 = scmp.eq.s32.totalorder %s44, 1
      %p193 = por %p191, %p192
      %p194 = scmp.ne.s32.totalorder %s185, %s186
      %p195 = scmp.eq.s32.totalorder %s44, 0
      %p196 = por %p194, %p195
      %p197 = scmp.ne.s32.totalorder %s185, %s186
      %p198 = scmp.eq.s32.totalorder %s45, 1
      %p199 = por %p197, %p198
      %p201 = scmp.ne.s32.totalorder %s186, %s200
      %p202 = scmp.eq.s32.totalorder %s45, 0
      %p203 = por %p201, %p202
      %s205 = sadd.s32 %s204, 1
      %p208 = scmp.eq.s32.totalorder %s39, 1
      %p209 = scmp.ne.s32.totalorder %s204, %s206
      %p210 = scmp.eq.s32.totalorder %s39, 0
      %p211 = por %p209, %p210
      %p212 = scmp.ne.s32.totalorder %s204, %s206
      %p213 = scmp.eq.s32.totalorder %s44, 1
      %p214 = por %p212, %p213
      %p215 = scmp.ne.s32.totalorder %s206, %s207
      %p216 = scmp.eq.s32.totalorder %s44, 0
      %p217 = por %p215, %p216
      %p218 = scmp.ne.s32.totalorder %s206, %s207
      %p219 = scmp.eq.s32.totalorder %s45, 1
      %p220 = por %p218, %p219
      %p222 = scmp.ne.s32.totalorder %s207, %s221
      %p223 = scmp.eq.s32.totalorder %s45, 0
      %p224 = por %p222, %p223
      %s226 = sadd.s32 %s225, 1
      %p229 = scmp.eq.s32.totalorder %s39, 1
      %p230 = scmp.ne.s32.totalorder %s225, %s227
      %p231 = scmp.eq.s32.totalorder %s39, 0
      %p232 = por %p230, %p231
      %p233 = scmp.ne.s32.totalorder %s225, %s227
      %p234 = scmp.eq.s32.totalorder %s44, 1
      %p235 = por %p233, %p234
      %p236 = scmp.ne.s32.totalorder %s227, %s228
      %p237 = scmp.eq.s32.totalorder %s44, 0
      %p238 = por %p236, %p237
      %p239 = scmp.ne.s32.totalorder %s227, %s228
      %p240 = scmp.eq.s32.totalorder %s45, 1
      %p241 = por %p239, %p240
      %p243 = scmp.ne.s32.totalorder %s228, %s242
      %p244 = scmp.eq.s32.totalorder %s45, 0
      %p245 = por %p243, %p244
      %s247 = sadd.s32 %s246, 1
      %p250 = scmp.eq.s32.totalorder %s39, 1
      %p251 = scmp.ne.s32.totalorder %s246, %s248
      %p252 = scmp.eq.s32.totalorder %s39, 0
      %p253 = por %p251, %p252
      %p254 = scmp.ne.s32.totalorder %s246, %s248
      %p255 = scmp.eq.s32.totalorder %s44, 1
      %p256 = por %p254, %p255
      %p257 = scmp.ne.s32.totalorder %s248, %s249
      %p258 = scmp.eq.s32.totalorder %s44, 0
      %p259 = por %p257, %p258
      %p260 = scmp.ne.s32.totalorder %s248, %s249
      %p261 = scmp.eq.s32.totalorder %s45, 1
      %p262 = por %p260, %p261
      %p264 = scmp.ne.s32.totalorder %s249, %s263
      %p265 = scmp.eq.s32.totalorder %s45, 0
      %p266 = por %p264, %p265
      %s268 = sadd.s32 %s267, 1
      %p271 = scmp.eq.s32.totalorder %s39, 1
      %p272 = scmp.ne.s32.totalorder %s267, %s269
      %p273 = scmp.eq.s32.totalorder %s39, 0
      %p274 = por %p272, %p273
      %p275 = scmp.ne.s32.totalorder %s267, %s269
      %p276 = scmp.eq.s32.totalorder %s44, 1
      %p277 = por %p275, %p276
      %p278 = scmp.ne.s32.totalorder %s269, %s270
      %p279 = scmp.eq.s32.totalorder %s44, 0
      %p280 = por %p278, %p279
      %p281 = scmp.ne.s32.totalorder %s269, %s270
      %p282 = scmp.eq.s32.totalorder %s45, 1
      %p283 = por %p281, %p282
      %p285 = scmp.ne.s32.totalorder %s270, %s284
      %p286 = scmp.eq.s32.totalorder %s45, 0
      %p287 = por %p285, %p286
      %s289 = sadd.s32 %s288, 1
      %p292 = scmp.eq.s32.totalorder %s39, 1
      %p293 = scmp.ne.s32.totalorder %s288, %s290
      %p294 = scmp.eq.s32.totalorder %s39, 0
      %p295 = por %p293, %p294
      %p296 = scmp.ne.s32.totalorder %s288, %s290
      %p297 = scmp.eq.s32.totalorder %s44, 1
      %p298 = por %p296, %p297
      %p299 = scmp.ne.s32.totalorder %s290, %s291
      %p300 = scmp.eq.s32.totalorder %s44, 0
      %p301 = por %p299, %p300
      %p302 = scmp.ne.s32.totalorder %s290, %s291
      %p303 = scmp.eq.s32.totalorder %s45, 1
      %p304 = por %p302, %p303
      %p306 = scmp.ne.s32.totalorder %s291, %s305
      %p307 = scmp.eq.s32.totalorder %s45, 0
      %p308 = por %p306, %p307
      %s310 = sadd.s32 %s309, 1
      %p313 = scmp.eq.s32.totalorder %s39, 1
      %p314 = scmp.ne.s32.totalorder %s309, %s311
      %p315 = scmp.eq.s32.totalorder %s39, 0
      %p316 = por %p314, %p315
      %p317 = scmp.ne.s32.totalorder %s309, %s311
      %p318 = scmp.eq.s32.totalorder %s44, 1
      %p319 = por %p317, %p318
      %p320 = scmp.ne.s32.totalorder %s311, %s312
      %p321 = scmp.eq.s32.totalorder %s44, 0
      %p322 = por %p320, %p321
      %p323 = scmp.ne.s32.totalorder %s311, %s312
      %p324 = scmp.eq.s32.totalorder %s45, 1
      %p325 = por %p323, %p324
      %p327 = scmp.ne.s32.totalorder %s312, %s326
      %p328 = scmp.eq.s32.totalorder %s45, 0
      %p329 = por %p327, %p328
      %s331 = sadd.s32 %s330, 1
      %p334 = scmp.eq.s32.totalorder %s39, 1
      %p335 = scmp.ne.s32.totalorder %s330, %s332
      %p336 = scmp.eq.s32.totalorder %s39, 0
      %p337 = por %p335, %p336
      %p338 = scmp.ne.s32.totalorder %s330, %s332
      %p339 = scmp.eq.s32.totalorder %s44, 1
      %p340 = por %p338, %p339
      %p341 = scmp.ne.s32.totalorder %s332, %s333
      %p342 = scmp.eq.s32.totalorder %s44, 0
      %p343 = por %p341, %p342
      %p344 = scmp.ne.s32.totalorder %s332, %s333
      %p345 = scmp.eq.s32.totalorder %s45, 1
      %p346 = por %p344, %p345
      %p348 = scmp.ne.s32.totalorder %s333, %s347
      %p349 = scmp.eq.s32.totalorder %s45, 0
      %p350 = por %p348, %p349
      %s352 = sadd.s32 %s351, 1
      %p355 = scmp.eq.s32.totalorder %s39, 1
      %p356 = scmp.ne.s32.totalorder %s351, %s353
      %p357 = scmp.eq.s32.totalorder %s39, 0
      %p358 = por %p356, %p357
      %p359 = scmp.ne.s32.totalorder %s351, %s353
      %p360 = scmp.eq.s32.totalorder %s44, 1
      %p361 = por %p359, %p360
      %p362 = scmp.ne.s32.totalorder %s353, %s354
      %p363 = scmp.eq.s32.totalorder %s44, 0
      %p364 = por %p362, %p363
      %p365 = scmp.ne.s32.totalorder %s353, %s354
      %p366 = scmp.eq.s32.totalorder %s45, 1
      %p367 = por %p365, %p366
      %p369 = scmp.ne.s32.totalorder %s354, %s368
      %p370 = scmp.eq.s32.totalorder %s45, 0
      %p371 = por %p369, %p370
      %s373 = sadd.s32 %s372, 1
      %p376 = scmp.eq.s32.totalorder %s39, 1
      %p377 = scmp.ne.s32.totalorder %s372, %s374
      %p378 = scmp.eq.s32.totalorder %s39, 0
      %p379 = por %p377, %p378
      %p380 = scmp.ne.s32.totalorder %s372, %s374
      %p381 = scmp.eq.s32.totalorder %s44, 1
      %p382 = por %p380, %p381
      %p383 = scmp.ne.s32.totalorder %s374, %s375
      %p384 = scmp.eq.s32.totalorder %s44, 0
      %p385 = por %p383, %p384
      %p386 = scmp.ne.s32.totalorder %s374, %s375
      %p387 = scmp.eq.s32.totalorder %s45, 1
      %p388 = por %p386, %p387
      %p390 = scmp.ne.s32.totalorder %s375, %s389
      %p391 = scmp.eq.s32.totalorder %s45, 0
      %p392 = por %p390, %p391
      %s394 = sadd.s32 %s393, 1
      %p397 = scmp.eq.s32.totalorder %s39, 1
      %p398 = scmp.ne.s32.totalorder %s393, %s395
      %p399 = scmp.eq.s32.totalorder %s39, 0
      %p400 = por %p398, %p399
      %p401 = scmp.ne.s32.totalorder %s393, %s395
      %p402 = scmp.eq.s32.totalorder %s44, 1
      %p403 = por %p401, %p402
      %p404 = scmp.ne.s32.totalorder %s395, %s396
      %p405 = scmp.eq.s32.totalorder %s44, 0
      %p406 = por %p404, %p405
      %p407 = scmp.ne.s32.totalorder %s395, %s396
      %p408 = scmp.eq.s32.totalorder %s45, 1
      %p409 = por %p407, %p408
      %p411 = scmp.ne.s32.totalorder %s396, %s410
      %p412 = scmp.eq.s32.totalorder %s45, 0
      %p413 = por %p411, %p412
      %s415 = sadd.s32 %s414, 1
      %p418 = scmp.eq.s32.totalorder %s39, 1
      %p419 = scmp.ne.s32.totalorder %s414, %s416
      %p420 = scmp.eq.s32.totalorder %s39, 0
      %p421 = por %p419, %p420
      %p422 = scmp.ne.s32.totalorder %s414, %s416
      %p423 = scmp.eq.s32.totalorder %s44, 1
      %p424 = por %p422, %p423
      %p425 = scmp.ne.s32.totalorder %s416, %s417
      %p426 = scmp.eq.s32.totalorder %s44, 0
      %p427 = por %p425, %p426
      %p428 = scmp.ne.s32.totalorder %s416, %s417
      %p429 = scmp.eq.s32.totalorder %s45, 1
      %p430 = por %p428, %p429
      %p432 = scmp.ne.s32.totalorder %s417, %s431
      %p433 = scmp.eq.s32.totalorder %s45, 0
      %p434 = por %p432, %p433
      %s436 = sadd.s32 %s435, 1
      %p439 = scmp.eq.s32.totalorder %s39, 1
      %p440 = scmp.ne.s32.totalorder %s435, %s437
      %p441 = scmp.eq.s32.totalorder %s39, 0
      %p442 = por %p440, %p441
      %p443 = scmp.ne.s32.totalorder %s435, %s437
      %p444 = scmp.eq.s32.totalorder %s44, 1
      %p445 = por %p443, %p444
      %p446 = scmp.ne.s32.totalorder %s437, %s438
      %p447 = scmp.eq.s32.totalorder %s44, 0
      %p448 = por %p446, %p447
      %p449 = scmp.ne.s32.totalorder %s437, %s438
      %p450 = scmp.eq.s32.totalorder %s45, 1
      %p451 = por %p449, %p450
      %p453 = scmp.ne.s32.totalorder %s438, %s452
      %p454 = scmp.eq.s32.totalorder %s45, 0
      %p455 = por %p453, %p454
      %s457 = sadd.s32 %s456, 1
      %p460 = scmp.eq.s32.totalorder %s39, 1
      %p461 = scmp.ne.s32.totalorder %s456, %s458
      %p462 = scmp.eq.s32.totalorder %s39, 0
      %p463 = por %p461, %p462
      %p464 = scmp.ne.s32.totalorder %s456, %s458
      %p465 = scmp.eq.s32.totalorder %s44, 1
      %p466 = por %p464, %p465
      %p467 = scmp.ne.s32.totalorder %s458, %s459
      %p468 = scmp.eq.s32.totalorder %s44, 0
      %p469 = por %p467, %p468
      %p470 = scmp.ne.s32.totalorder %s458, %s459
      %p471 = scmp.eq.s32.totalorder %s45, 1
      %p472 = por %p470, %p471
      %p474 = scmp.ne.s32.totalorder %s459, %s473
      %p475 = scmp.eq.s32.totalorder %s45, 0
      %p476 = por %p474, %p475
      %s478 = sadd.s32 %s477, 1
      %p481 = scmp.eq.s32.totalorder %s39, 1
      %p482 = scmp.ne.s32.totalorder %s477, %s479
      %p483 = scmp.eq.s32.totalorder %s39, 0
      %p484 = por %p482, %p483
      %p485 = scmp.ne.s32.totalorder %s477, %s479
      %p486 = scmp.eq.s32.totalorder %s44, 1
      %p487 = por %p485, %p486
      %p488 = scmp.ne.s32.totalorder %s479, %s480
      %p489 = scmp.eq.s32.totalorder %s44, 0
      %p490 = por %p488, %p489
      %p491 = scmp.ne.s32.totalorder %s479, %s480
      %p492 = scmp.eq.s32.totalorder %s45, 1
      %p493 = por %p491, %p492
      %p495 = scmp.ne.s32.totalorder %s480, %s494
      %p496 = scmp.eq.s32.totalorder %s45, 0
      %p497 = por %p495, %p496
      %s499 = sadd.s32 %s498, 1
      %p502 = scmp.eq.s32.totalorder %s39, 1
      %p503 = scmp.ne.s32.totalorder %s498, %s500
      %p504 = scmp.eq.s32.totalorder %s39, 0
      %p505 = por %p503, %p504
      %p506 = scmp.ne.s32.totalorder %s498, %s500
      %p507 = scmp.eq.s32.totalorder %s44, 1
      %p508 = por %p506, %p507
      %p509 = scmp.ne.s32.totalorder %s500, %s501
      %p510 = scmp.eq.s32.totalorder %s44, 0
      %p511 = por %p509, %p510
      %p512 = scmp.ne.s32.totalorder %s500, %s501
      %p513 = scmp.eq.s32.totalorder %s45, 1
      %p514 = por %p512, %p513
      %p516 = scmp.ne.s32.totalorder %s501, %s515
      %p517 = scmp.eq.s32.totalorder %s45, 0
      %p518 = por %p516, %p517
      %s519 = ssub.s32 %s39, %s46
      %p520 = scmp.eq.s32.totalorder %s519, 0
      %s522 = sadd.s32 %s521, 1
      %s523 = scalar_select %p520, %s521, %s522
      %p526 = pneg %p520
      %p527 = scmp.eq.s32.totalorder %s39, 1
      %p528 = por %p526, %p527
      %p529 = scmp.ne.s32.totalorder %s521, %s524
      %p530 = scmp.eq.s32.totalorder %s39, 0
      %p531 = por %p529, %p530
      %p532 = scmp.ne.s32.totalorder %s521, %s524
      %p533 = scmp.eq.s32.totalorder %s44, 1
      %p534 = por %p532, %p533
      %p535 = scmp.ne.s32.totalorder %s524, %s525
      %p536 = scmp.eq.s32.totalorder %s44, 0
      %p537 = por %p535, %p536
      %p538 = scmp.ne.s32.totalorder %s524, %s525
      %p539 = scmp.eq.s32.totalorder %s45, 1
      %p540 = por %p538, %p539
      %p542 = scmp.ne.s32.totalorder %s525, %s541
      %p543 = scmp.eq.s32.totalorder %s45, 0
      %p544 = por %p542, %p543
      %p545 = scmp.le.s32.totalorder 1, %s39
      %p546 = scmp.lt.s32.totalorder %s39, 3
      %p547 = pnand %p545, %p546
      %p548 = pneg %p547
      // Predicated region
      $region9: #{decoder_forward.1} parent=5 // pred_check
        _
      $region10: #{decoder_forward.1} parent=5 // pred_check_branch
        %550 = sbr.rel (%p547) target = $region12
      $region11: #{decoder_forward.1} parent=5 // pred_region
        %s551 = ssub.s32 %s39, 1
        // Predicated region
        $region13: #{decoder_forward.1} parent=11 // pred_check
          %p552 = pneg %p112
        $region14: #{decoder_forward.1} parent=11 // pred_check_branch
          %554 = sbr.rel (%p552) target = $region16
        $region15: #{decoder_forward.1} parent=11 // pred_region
          _
        $region16: #{decoder_forward.1} parent=11 // pred_fallthru
          _
        // Predicated region
        $region17: #{decoder_forward.1} parent=11 // pred_check
          %p555 = pneg %p133
        $region18: #{decoder_forward.1} parent=11 // pred_check_branch
          %557 = sbr.rel (%p555) target = $region20
        $region19: #{decoder_forward.1} parent=11 // pred_region
          _
        $region20: #{decoder_forward.1} parent=11 // pred_fallthru
          _
        // Predicated region
        $region21: #{decoder_forward.1} parent=11 // pred_check
          %p558 = pneg %p154
        $region22: #{decoder_forward.1} parent=11 // pred_check_branch
          %560 = sbr.rel (%p558) target = $region24
        $region23: #{decoder_forward.1} parent=11 // pred_region
          %s562 = ssub.s32 1024, 1024
          %563 = vsyncadd [#allocation3], %s562
          %s564 = sshll.u32 [#allocation2], 4
          %s565 = int_to_ptr.vmem [resolvable:$true] %s564
          %570 = dma.hbm_to_vmem [thread:$0]  %s4, 1024, %s565, [#allocation3], 64, 64, 4
        $region24: #{decoder_forward.1} parent=11 // pred_fallthru
          _
        // Predicated region
        $region25: #{decoder_forward.1} parent=11 // pred_check
          %p571 = pneg %p175
        $region26: #{decoder_forward.1} parent=11 // pred_check_branch
          %573 = sbr.rel (%p571) target = $region28
        $region27: #{decoder_forward.1} parent=11 // pred_region
          _
        $region28: #{decoder_forward.1} parent=11 // pred_fallthru
          _
        // Predicated region
        $region29: #{decoder_forward.1} parent=11 // pred_check
          %p574 = pneg %p196
        $region30: #{decoder_forward.1} parent=11 // pred_check_branch
          %576 = sbr.rel (%p574) target = $region32
        $region31: #{decoder_forward.1} parent=11 // pred_region
          %s578 = ssub.s32 16, 16
          %579 = vsyncadd [#allocation6], %s578
          %s581 = sshll.u32 [#allocation5], 4
          %s582 = int_to_ptr.vmem [resolvable:$true] %s581
          %584 = dma.hbm_to_vmem [thread:$0]  %s6, 16, %s582, [#allocation6]
        $region32: #{decoder_forward.1} parent=11 // pred_fallthru
          _
        // Predicated region
        $region33: #{decoder_forward.1} parent=11 // pred_check
          %p585 = pneg %p217
        $region34: #{decoder_forward.1} parent=11 // pred_check_branch
          %587 = sbr.rel (%p585) target = $region36
        $region35: #{decoder_forward.1} parent=11 // pred_region
          %s589 = ssub.s32 16, 16
          %590 = vsyncadd [#allocation6], %s589
          %s592 = sshll.u32 [#allocation7], 4
          %s593 = int_to_ptr.vmem [resolvable:$true] %s592
          %595 = dma.hbm_to_vmem [thread:$0]  %s7, 16, %s593, [#allocation6]
        $region36: #{decoder_forward.1} parent=11 // pred_fallthru
          _
        // Predicated region
        $region37: #{decoder_forward.1} parent=11 // pred_check
          %p596 = pneg %p238
        $region38: #{decoder_forward.1} parent=11 // pred_check_branch
          %598 = sbr.rel (%p596) target = $region40
        $region39: #{decoder_forward.1} parent=11 // pred_region
          %s600 = ssub.s32 1024, 1024
          %601 = vsyncadd [#allocation9], %s600
          %s602 = sshll.u32 [#allocation8], 4
          %s603 = int_to_ptr.vmem [resolvable:$true] %s602
          %608 = dma.hbm_to_vmem [thread:$0]  %s8, 1024, %s603, [#allocation9], 64, 64, 4
        $region40: #{decoder_forward.1} parent=11 // pred_fallthru
          _
        // Predicated region
        $region41: #{decoder_forward.1} parent=11 // pred_check
          %p609 = pneg %p259
        $region42: #{decoder_forward.1} parent=11 // pred_check_branch
          %611 = sbr.rel (%p609) target = $region44
        $region43: #{decoder_forward.1} parent=11 // pred_region
          %s613 = ssub.s32 16, 16
          %614 = vsyncadd [#allocation9], %s613
          %s616 = sshll.u32 [#allocation10], 4
          %s617 = int_to_ptr.vmem [resolvable:$true] %s616
          %619 = dma.hbm_to_vmem [thread:$0]  %s9, 16, %s617, [#allocation9]
        $region44: #{decoder_forward.1} parent=11 // pred_fallthru
          _
        // Predicated region
        $region45: #{decoder_forward.1} parent=11 // pred_check
          %p620 = pneg %p280
        $region46: #{decoder_forward.1} parent=11 // pred_check_branch
          %622 = sbr.rel (%p620) target = $region48
        $region47: #{decoder_forward.1} parent=11 // pred_region
          %s624 = ssub.s32 2048, 2048
          %625 = vsyncadd [#allocation12], %s624
          %s626 = sshll.u32 [#allocation11], 4
          %s627 = int_to_ptr.vmem [resolvable:$true] %s626
          %632 = dma.hbm_to_vmem [thread:$0]  %s10, 2048, %s627, [#allocation12], 128, 128, 8
        $region48: #{decoder_forward.1} parent=11 // pred_fallthru
          _
        // Predicated region
        $region49: #{decoder_forward.1} parent=11 // pred_check
          %p633 = pneg %p301
        $region50: #{decoder_forward.1} parent=11 // pred_check_branch
          %635 = sbr.rel (%p633) target = $region52
        $region51: #{decoder_forward.1} parent=11 // pred_region
          _
        $region52: #{decoder_forward.1} parent=11 // pred_fallthru
          _
        // Predicated region
        $region53: #{decoder_forward.1} parent=11 // pred_check
          %p636 = pneg %p322
        $region54: #{decoder_forward.1} parent=11 // pred_check_branch
          %638 = sbr.rel (%p636) target = $region56
        $region55: #{decoder_forward.1} parent=11 // pred_region
          %s640 = ssub.s32 1024, 1024
          %641 = vsyncadd [#allocation12], %s640
          %s642 = sshll.u32 [#allocation13], 4
          %s643 = int_to_ptr.vmem [resolvable:$true] %s642
          %648 = dma.hbm_to_vmem [thread:$0]  %s12, 1024, %s643, [#allocation12], 64, 64, 4
        $region56: #{decoder_forward.1} parent=11 // pred_fallthru
          _
        // Predicated region
        $region57: #{decoder_forward.1} parent=11 // pred_check
          %p649 = pneg %p343
        $region58: #{decoder_forward.1} parent=11 // pred_check_branch
          %651 = sbr.rel (%p649) target = $region60
        $region59: #{decoder_forward.1} parent=11 // pred_region
          %s653 = ssub.s32 16, 16
          %654 = vsyncadd [#allocation15], %s653
          %s656 = sshll.u32 [#allocation14], 4
          %s657 = int_to_ptr.vmem [resolvable:$true] %s656
          %659 = dma.hbm_to_vmem [thread:$0]  %s13, 16, %s657, [#allocation15]
        $region60: #{decoder_forward.1} parent=11 // pred_fallthru
          _
        // Predicated region
        $region61: #{decoder_forward.1} parent=11 // pred_check
          %p660 = pneg %p364
        $region62: #{decoder_forward.1} parent=11 // pred_check_branch
          %662 = sbr.rel (%p660) target = $region64
        $region63: #{decoder_forward.1} parent=11 // pred_region
          %s664 = ssub.s32 16, 16
          %665 = vsyncadd [#allocation15], %s664
          %s667 = sshll.u32 [#allocation16], 4
          %s668 = int_to_ptr.vmem [resolvable:$true] %s667
          %670 = dma.hbm_to_vmem [thread:$0]  %s14, 16, %s668, [#allocation15]
        $region64: #{decoder_forward.1} parent=11 // pred_fallthru
          _
        // Predicated region
        $region65: #{decoder_forward.1} parent=11 // pred_check
          %p671 = pneg %p385
        $region66: #{decoder_forward.1} parent=11 // pred_check_branch
          %673 = sbr.rel (%p671) target = $region68
        $region67: #{decoder_forward.1} parent=11 // pred_region
          %s675 = ssub.s32 16, 16
          %676 = vsyncadd [#allocation18], %s675
          %s678 = sshll.u32 [#allocation17], 4
          %s679 = int_to_ptr.vmem [resolvable:$true] %s678
          %681 = dma.hbm_to_vmem [thread:$0]  %s15, 16, %s679, [#allocation18]
        $region68: #{decoder_forward.1} parent=11 // pred_fallthru
          _
        // Predicated region
        $region69: #{decoder_forward.1} parent=11 // pred_check
          %p682 = pneg %p406
        $region70: #{decoder_forward.1} parent=11 // pred_check_branch
          %684 = sbr.rel (%p682) target = $region72
        $region71: #{decoder_forward.1} parent=11 // pred_region
          %s686 = ssub.s32 16384, 16384
          %687 = vsyncadd [#allocation18], %s686
          %s688 = sshll.u32 [#allocation19], 4
          %s689 = int_to_ptr.vmem [resolvable:$true] %s688
          %694 = dma.hbm_to_vmem [thread:$0]  %s16, 16384, %s689, [#allocation18], 1024, 1024, 64
        $region72: #{decoder_forward.1} parent=11 // pred_fallthru
          _
        // Predicated region
        $region73: #{decoder_forward.1} parent=11 // pred_check
          %p695 = pneg %p427
        $region74: #{decoder_forward.1} parent=11 // pred_check_branch
          %697 = sbr.rel (%p695) target = $region76
        $region75: #{decoder_forward.1} parent=11 // pred_region
          _
        $region76: #{decoder_forward.1} parent=11 // pred_fallthru
          _
        // Predicated region
        $region77: #{decoder_forward.1} parent=11 // pred_check
          %p698 = pneg %p448
        $region78: #{decoder_forward.1} parent=11 // pred_check_branch
          %700 = sbr.rel (%p698) target = $region80
        $region79: #{decoder_forward.1} parent=11 // pred_region
          %s702 = ssub.s32 16384, 16384
          %703 = vsyncadd [#allocation21], %s702
          %s704 = sshll.u32 [#allocation20], 4
          %s705 = int_to_ptr.vmem [resolvable:$true] %s704
          %710 = dma.hbm_to_vmem [thread:$0]  %s18, 16384, %s705, [#allocation21], 64, 64, 4
        $region80: #{decoder_forward.1} parent=11 // pred_fallthru
          _
        // Predicated region
        $region81: #{decoder_forward.1} parent=11 // pred_check
          %p711 = pneg %p469
        $region82: #{decoder_forward.1} parent=11 // pred_check_branch
          %713 = sbr.rel (%p711) target = $region84
        $region83: #{decoder_forward.1} parent=11 // pred_region
          %s715 = ssub.s32 16, 16
          %716 = vsyncadd [#allocation21], %s715
          %s718 = sshll.u32 [#allocation22], 4
          %s719 = int_to_ptr.vmem [resolvable:$true] %s718
          %721 = dma.hbm_to_vmem [thread:$0]  %s19, 16, %s719, [#allocation21]
        $region84: #{decoder_forward.1} parent=11 // pred_fallthru
          _
        // Predicated region
        $region85: #{decoder_forward.1} parent=11 // pred_check
          %p722 = pneg %p490
        $region86: #{decoder_forward.1} parent=11 // pred_check_branch
          %724 = sbr.rel (%p722) target = $region88
        $region87: #{decoder_forward.1} parent=11 // pred_region
          %s726 = ssub.s32 16, 16
          %727 = vsyncadd [#allocation24], %s726
          %s729 = sshll.u32 [#allocation23], 4
          %s730 = int_to_ptr.vmem [resolvable:$true] %s729
          %732 = dma.hbm_to_vmem [thread:$0]  %s20, 16, %s730, [#allocation24]
        $region88: #{decoder_forward.1} parent=11 // pred_fallthru
          _
        // Predicated region
        $region89: #{decoder_forward.1} parent=11 // pred_check
          %p733 = pneg %p511
        $region90: #{decoder_forward.1} parent=11 // pred_check_branch
          %735 = sbr.rel (%p733) target = $region92
        $region91: #{decoder_forward.1} parent=11 // pred_region
          %s737 = ssub.s32 16, 16
          %738 = vsyncadd [#allocation24], %s737
          %s740 = sshll.u32 [#allocation25], 4
          %s741 = int_to_ptr.vmem [resolvable:$true] %s740
          %743 = dma.hbm_to_vmem [thread:$0]  %s21, 16, %s741, [#allocation24]
        $region92: #{decoder_forward.1} parent=11 // pred_fallthru
          _
      $region12: #{decoder_forward.1} parent=5 // pred_fallthru
        _
      %p744 = scmp.lt.s32.totalorder %s39, 2
      // Predicated region
      $region93: #{decoder_forward.1} parent=5 // pred_check
        %p745 = pneg %p744
      $region94: #{decoder_forward.1} parent=5 // pred_check_branch
        %747 = sbr.rel (%p745) target = $region96
      $region95: #{decoder_forward.1} parent=5 // pred_region
        // Predicated region
        $region97: #{decoder_forward.1} parent=95 // pred_check
          %p748 = pneg %p59
        $region98: #{decoder_forward.1} parent=95 // pred_check_branch
          %750 = sbr.rel (%p748) target = $region100
        $region99: #{decoder_forward.1} parent=95 // pred_region
          %p751 = scmp.lt.s32.totalorder %s39, 1
          %s752 = scalar_select %p751, %s39, 1
          %s753 = smul.addr %s752, 8
          %s754 = scalar_lea.vmem %s0, %s753
        $region100: #{decoder_forward.1} parent=95 // pred_fallthru
          _
        // Predicated region
        $region101: #{decoder_forward.1} parent=95 // pred_check
          %p755 = pneg %p85
        $region102: #{decoder_forward.1} parent=95 // pred_check_branch
          %757 = sbr.rel (%p755) target = $region104
        $region103: #{decoder_forward.1} parent=95 // pred_region
          %p758 = scmp.lt.s32.totalorder %s39, 1
          %s759 = scalar_select %p758, %s39, 1
          %s760 = smul.addr %s759, 8
          %s761 = scalar_lea.vmem %s1, %s760
        $region104: #{decoder_forward.1} parent=95 // pred_fallthru
          _
      $region96: #{decoder_forward.1} parent=5 // pred_fallthru
        _
      %p762 = scmp.le.s32.totalorder 1, %s39
      %p763 = scmp.lt.s32.totalorder %s39, 3
      %p764 = pnand %p762, %p763
      %p765 = pneg %p764
      // Predicated region
      $region105: #{decoder_forward.1} parent=5 // pred_check
        _
      $region106: #{decoder_forward.1} parent=5 // pred_check_branch
        %767 = sbr.rel (%p764) target = $region108
      $region107: #{decoder_forward.1} parent=5 // pred_region
        %s768 = ssub.s32 %s39, 1
        // Predicated region
        $region109: #{decoder_forward.1} parent=107 // pred_check
          %p769 = pneg %p154
        $region110: #{decoder_forward.1} parent=107 // pred_check_branch
          %771 = sbr.rel (%p769) target = $region112
        $region111: #{decoder_forward.1} parent=107 // pred_region
          %772 = dma.done [#allocation3], 1024
        $region112: #{decoder_forward.1} parent=107 // pred_fallthru
          _
        // Predicated region
        $region113: #{decoder_forward.1} parent=107 // pred_check
          %p773 = pneg %p196
        $region114: #{decoder_forward.1} parent=107 // pred_check_branch
          %775 = sbr.rel (%p773) target = $region116
        $region115: #{decoder_forward.1} parent=107 // pred_region
          %776 = dma.done [#allocation6], 16
        $region116: #{decoder_forward.1} parent=107 // pred_fallthru
          _
        // Predicated region
        $region117: #{decoder_forward.1} parent=107 // pred_check
          %p777 = pneg %p217
        $region118: #{decoder_forward.1} parent=107 // pred_check_branch
          %779 = sbr.rel (%p777) target = $region120
        $region119: #{decoder_forward.1} parent=107 // pred_region
          %780 = dma.done [#allocation6], 16
        $region120: #{decoder_forward.1} parent=107 // pred_fallthru
          _
        // Predicated region
        $region121: #{decoder_forward.1} parent=107 // pred_check
          %p781 = pneg %p238
        $region122: #{decoder_forward.1} parent=107 // pred_check_branch
          %783 = sbr.rel (%p781) target = $region124
        $region123: #{decoder_forward.1} parent=107 // pred_region
          %784 = dma.done [#allocation9], 1024
        $region124: #{decoder_forward.1} parent=107 // pred_fallthru
          _
        // Predicated region
        $region125: #{decoder_forward.1} parent=107 // pred_check
          %p785 = pneg %p259
        $region126: #{decoder_forward.1} parent=107 // pred_check_branch
          %787 = sbr.rel (%p785) target = $region128
        $region127: #{decoder_forward.1} parent=107 // pred_region
          %788 = dma.done [#allocation9], 16
        $region128: #{decoder_forward.1} parent=107 // pred_fallthru
          _
        // Predicated region
        $region129: #{decoder_forward.1} parent=107 // pred_check
          %p789 = pneg %p280
        $region130: #{decoder_forward.1} parent=107 // pred_check_branch
          %791 = sbr.rel (%p789) target = $region132
        $region131: #{decoder_forward.1} parent=107 // pred_region
          %792 = dma.done [#allocation12], 2048
        $region132: #{decoder_forward.1} parent=107 // pred_fallthru
          _
        // Predicated region
        $region133: #{decoder_forward.1} parent=107 // pred_check
          %p793 = pneg %p322
        $region134: #{decoder_forward.1} parent=107 // pred_check_branch
          %795 = sbr.rel (%p793) target = $region136
        $region135: #{decoder_forward.1} parent=107 // pred_region
          %796 = dma.done [#allocation12], 1024
        $region136: #{decoder_forward.1} parent=107 // pred_fallthru
          _
        // Predicated region
        $region137: #{decoder_forward.1} parent=107 // pred_check
          %p797 = pneg %p343
        $region138: #{decoder_forward.1} parent=107 // pred_check_branch
          %799 = sbr.rel (%p797) target = $region140
        $region139: #{decoder_forward.1} parent=107 // pred_region
          %800 = dma.done [#allocation15], 16
        $region140: #{decoder_forward.1} parent=107 // pred_fallthru
          _
        // Predicated region
        $region141: #{decoder_forward.1} parent=107 // pred_check
          %p801 = pneg %p364
        $region142: #{decoder_forward.1} parent=107 // pred_check_branch
          %803 = sbr.rel (%p801) target = $region144
        $region143: #{decoder_forward.1} parent=107 // pred_region
          %804 = dma.done [#allocation15], 16
        $region144: #{decoder_forward.1} parent=107 // pred_fallthru
          _
        // Predicated region
        $region145: #{decoder_forward.1} parent=107 // pred_check
          %p805 = pneg %p385
        $region146: #{decoder_forward.1} parent=107 // pred_check_branch
          %807 = sbr.rel (%p805) target = $region148
        $region147: #{decoder_forward.1} parent=107 // pred_region
          %808 = dma.done [#allocation18], 16
        $region148: #{decoder_forward.1} parent=107 // pred_fallthru
          _
        // Predicated region
        $region149: #{decoder_forward.1} parent=107 // pred_check
          %p809 = pneg %p406
        $region150: #{decoder_forward.1} parent=107 // pred_check_branch
          %811 = sbr.rel (%p809) target = $region152
        $region151: #{decoder_forward.1} parent=107 // pred_region
          %812 = dma.done [#allocation18], 16384
        $region152: #{decoder_forward.1} parent=107 // pred_fallthru
          _
        // Predicated region
        $region153: #{decoder_forward.1} parent=107 // pred_check
          %p813 = pneg %p448
        $region154: #{decoder_forward.1} parent=107 // pred_check_branch
          %815 = sbr.rel (%p813) target = $region156
        $region155: #{decoder_forward.1} parent=107 // pred_region
          %816 = dma.done [#allocation21], 16384
        $region156: #{decoder_forward.1} parent=107 // pred_fallthru
          _
        // Predicated region
        $region157: #{decoder_forward.1} parent=107 // pred_check
          %p817 = pneg %p469
        $region158: #{decoder_forward.1} parent=107 // pred_check_branch
          %819 = sbr.rel (%p817) target = $region160
        $region159: #{decoder_forward.1} parent=107 // pred_region
          %820 = dma.done [#allocation21], 16
        $region160: #{decoder_forward.1} parent=107 // pred_fallthru
          _
        // Predicated region
        $region161: #{decoder_forward.1} parent=107 // pred_check
          %p821 = pneg %p490
        $region162: #{decoder_forward.1} parent=107 // pred_check_branch
          %823 = sbr.rel (%p821) target = $region164
        $region163: #{decoder_forward.1} parent=107 // pred_region
          %824 = dma.done [#allocation24], 16
        $region164: #{decoder_forward.1} parent=107 // pred_fallthru
          _
        // Predicated region
        $region165: #{decoder_forward.1} parent=107 // pred_check
          %p825 = pneg %p511
        $region166: #{decoder_forward.1} parent=107 // pred_check_branch
          %827 = sbr.rel (%p825) target = $region168
        $region167: #{decoder_forward.1} parent=107 // pred_region
          %828 = dma.done [#allocation24], 16
        $region168: #{decoder_forward.1} parent=107 // pred_fallthru
          _
        %p829 = scmp.lt.s32.totalorder %s44, 1
        %s830 = scalar_select %p829, %s44, 1
        %s831 = smul.addr %s830, 8
        %s832 = scalar_lea.vmem %s0, %s831
        %p833 = pneg %p65
        %p834 = pneg %p62
        %p835 = scmp.lt.s32.totalorder %s44, 1
        %s836 = scalar_select %p835, %s44, 1
        %s837 = smul.addr %s836, 8
        %s838 = scalar_lea.vmem %s1, %s837
        %p839 = pneg %p91
        %p840 = pneg %p88
        %p841 = pneg %p112
        %p842 = pneg %p109
        %p843 = pneg %p133
        %p844 = pneg %p130
        %p845 = pneg %p154
        %p846 = pneg %p151
        %p847 = pneg %p175
        %p848 = pneg %p172
        %p849 = pneg %p196
        %p850 = pneg %p193
        %p851 = pneg %p217
        %p852 = pneg %p214
        %p853 = pneg %p238
        %p854 = pneg %p235
        %p855 = pneg %p259
        %p856 = pneg %p256
        %p857 = pneg %p280
        %p858 = pneg %p277
        %p859 = pneg %p301
        %p860 = pneg %p298
        %p861 = pneg %p322
        %p862 = pneg %p319
        %p863 = pneg %p343
        %p864 = pneg %p340
        %p865 = pneg %p364
        %p866 = pneg %p361
        %p867 = pneg %p385
        %p868 = pneg %p382
        %p869 = pneg %p406
        %p870 = pneg %p403
        %p871 = pneg %p427
        %p872 = pneg %p424
        %p873 = pneg %p448
        %p874 = pneg %p445
        %p875 = pneg %p469
        %p876 = pneg %p466
        %p877 = pneg %p490
        %p878 = pneg %p487
        %p879 = pneg %p511
        %p880 = pneg %p508
        %p881 = pneg %p537
        %p882 = pneg %p534
        %s883 = sand.u32 %s524, 1
        %s884 = scalar_lea.sflag [#allocation4], %s883
        %s885 = sand.u32 %s524, 1
        %s886 = smul.addr %s885, 8
        %s887 = scalar_lea.vmem [#allocation26], %s886
        %p888 = scmp.lt.s32.totalorder %s44, 1
        %s889 = scalar_select %p888, %s44, 1
        %s890 = smul.addr %s889, 8
        %s891 = scalar_lea.vmem %s0, %s890
        %p892 = scmp.lt.s32.totalorder %s44, 1
        %s893 = scalar_select %p892, %s44, 1
        %s894 = smul.addr %s893, 8
        %s895 = scalar_lea.vmem %s1, %s894
        %v897 = vld [vmem:[%s891] sm:$0xff]
        %v898 = vld [vmem:[%s895] sm:$0xff]
        %v899 = vpack.c.bf16 %v897, %v897
        %v900 = vld [vmem:[%s2] sm:$0xff]
        %v901 = vld [vmem:[%s2 + $0x8] sm:$0xf]
        %v902 = vld [vmem:[%s2 + $0xc] sm:$0xff]
        %v903 = vld [vmem:[%s2 + $0x14] sm:$0xf]
        %v904 = vld [vmem:[%s2 + $0x18] sm:$0xff]
        %v905 = vld [vmem:[%s2 + $0x20] sm:$0xf]
        %v906 = vld [vmem:[%s2 + $0x24] sm:$0xff]
        %v907 = vld [vmem:[%s2 + $0x2c] sm:$0xf]
        %v908 = vld [vmem:[%s2 + $0x30] sm:$0xff]
        %v909 = vld [vmem:[%s2 + $0x38] sm:$0xf]
        %v910 = vld [vmem:[%s2 + $0x3c] sm:$0xff]
        %v911 = vld [vmem:[%s2 + $0x44] sm:$0xf]
        %v912 = vld [vmem:[%s2 + $0x48] sm:$0xff]
        %v913 = vld [vmem:[%s2 + $0x50] sm:$0xf]
        %v914 = vld [vmem:[%s2 + $0x54] sm:$0xff]
        %v915 = vld [vmem:[%s2 + $0x5c] sm:$0xf]
        %v916 = vld [vmem:[%s2 + $0x60] sm:$0xff]
        %v917 = vld [vmem:[%s2 + $0x68] sm:$0xf]
        %v918 = vld [vmem:[%s2 + $0x6c] sm:$0xff]
        %v919 = vld [vmem:[%s2 + $0x74] sm:$0xf]
        %v920 = vld [vmem:[%s2 + $0x78] sm:$0xff]
        %v921 = vld [vmem:[%s2 + $0x80] sm:$0xf]
        %v922 = vld [vmem:[%s2 + $0x84] sm:$0xff]
        %v923 = vld [vmem:[%s2 + $0x8c] sm:$0xf]
        %v924 = vld [vmem:[%s2 + $0x90] sm:$0xff]
        %v925 = vld [vmem:[%s2 + $0x98] sm:$0xf]
        %v926 = vld [vmem:[%s2 + $0x9c] sm:$0xff]
        %v927 = vld [vmem:[%s2 + $0xa4] sm:$0xf]
        %v928 = vld [vmem:[%s2 + $0xa8] sm:$0xff]
        %v929 = vld [vmem:[%s2 + $0xb0] sm:$0xf]
        %v930 = vld [vmem:[%s2 + $0xb4] sm:$0xff]
        %v931 = vld [vmem:[%s2 + $0xbc] sm:$0xf]
        %v932 = vld [vmem:[%s3] sm:$0x7]
        %v934 = vlaneseq
        %v935 = vshrl.u32 %v934, 7
        %v936 = vsub.s32 0, %v935
        %v937 = vrot.slane %v932, %v936
        %v938 = vlaneseq
        %v939 = vshrl.u32 %v938, 7
        %v940 = vsub.s32 1, %v939
        %v941 = vrot.slane %v932, %v940
        %v942 = vlaneseq
        %v943 = vshrl.u32 %v942, 7
        %v944 = vsub.s32 2, %v943
        %v945 = vrot.slane %v932, %v944
        %v981 = vunpack.c.l.b16 %v900
        %v982 = vunpack.c.h.b16 %v900
        %v983 = vunpack.c.l.b16 %v901
        %v984 = vunpack.c.l.b16 %v902
        %v985 = vunpack.c.h.b16 %v902
        %v986 = vunpack.c.l.b16 %v903
        %v987 = vunpack.c.l.b16 %v904
        %v988 = vunpack.c.h.b16 %v904
        %v989 = vunpack.c.l.b16 %v905
        %v990 = vunpack.c.l.b16 %v906
        %v991 = vunpack.c.h.b16 %v906
        %v992 = vunpack.c.l.b16 %v907
        %v993 = vunpack.c.l.b16 %v908
        %v994 = vunpack.c.h.b16 %v908
        %v995 = vunpack.c.l.b16 %v909
        %v996 = vunpack.c.l.b16 %v910
        %v997 = vunpack.c.h.b16 %v910
        %v998 = vunpack.c.l.b16 %v911
        %v999 = vunpack.c.l.b16 %v912
        %v1000 = vunpack.c.h.b16 %v912
        %v1001 = vunpack.c.l.b16 %v913
        %v1002 = vunpack.c.l.b16 %v914
        %v1003 = vunpack.c.h.b16 %v914
        %v1004 = vunpack.c.l.b16 %v915
        %v1005 = vunpack.c.l.b16 %v916
        %v1006 = vunpack.c.h.b16 %v916
        %v1007 = vunpack.c.l.b16 %v917
        %v1008 = vunpack.c.l.b16 %v918
        %v1009 = vunpack.c.h.b16 %v918
        %v1010 = vunpack.c.l.b16 %v919
        %v1011 = vunpack.c.l.b16 %v920
        %v1012 = vunpack.c.h.b16 %v920
        %v1013 = vunpack.c.l.b16 %v921
        %v1014 = vunpack.c.l.b16 %v922
        %v1015 = vunpack.c.h.b16 %v922
        %v1016 = vunpack.c.l.b16 %v923
        %v1017 = vunpack.c.l.b16 %v924
        %v1018 = vunpack.c.h.b16 %v924
        %v1019 = vunpack.c.l.b16 %v925
        %v1020 = vunpack.c.l.b16 %v926
        %v1021 = vunpack.c.h.b16 %v926
        %v1022 = vunpack.c.l.b16 %v927
        %v1023 = vunpack.c.l.b16 %v928
        %v1024 = vunpack.c.h.b16 %v928
        %v1025 = vunpack.c.l.b16 %v929
        %v1026 = vunpack.c.l.b16 %v930
        %v1027 = vunpack.c.h.b16 %v930
        %v1028 = vunpack.c.l.b16 %v931
        %v1029 = vpack.c.b16 %v984, %v981
        %v1030 = vpack.c.b16 %v985, %v982
        %v1031 = vpack.c.b16 %v986, %v983
        %v1032 = vpack.c.b16 %v990, %v987
        %v1033 = vpack.c.b16 %v991, %v988
        %v1034 = vpack.c.b16 %v992, %v989
        %v1035 = vpack.c.b16 %v996, %v993
        %v1036 = vpack.c.b16 %v997, %v994
        %v1037 = vpack.c.b16 %v998, %v995
        %v1038 = vpack.c.b16 %v1002, %v999
        %v1039 = vpack.c.b16 %v1003, %v1000
        %v1040 = vpack.c.b16 %v1004, %v1001
        %v1041 = vpack.c.b16 %v1008, %v1005
        %v1042 = vpack.c.b16 %v1009, %v1006
        %v1043 = vpack.c.b16 %v1010, %v1007
        %v1044 = vpack.c.b16 %v1014, %v1011
        %v1045 = vpack.c.b16 %v1015, %v1012
        %v1046 = vpack.c.b16 %v1016, %v1013
        %v1047 = vpack.c.b16 %v1020, %v1017
        %v1048 = vpack.c.b16 %v1021, %v1018
        %v1049 = vpack.c.b16 %v1022, %v1019
        %v1050 = vpack.c.b16 %v1026, %v1023
        %v1051 = vpack.c.b16 %v1027, %v1024
        %v1052 = vpack.c.b16 %v1028, %v1025
        %1077 = vmatprep.subr.bf16.mxu0 %v1051
        %1078 = vmatpush1.bf16.msra.mxu0 %v1050
        %1079 = vmatprep.subr.bf16.mxu0 %v1048
        %1080 = vmatpush1.bf16.msra.mxu0 %v1047
        %1081 = vmatprep.subr.bf16.mxu0 %v1045
        %1082 = vmatpush1.bf16.msra.mxu0 %v1044
        %1083 = vmatprep.subr.bf16.mxu0 %v1042
        %1084 = vmatpush1.bf16.msra.mxu0 %v1041
        %1085 = vmatprep.subr.bf16.mxu0 %v1039
        %1086 = vmatpush1.bf16.msra.mxu0 %v1038
        %1087 = vmatprep.subr.bf16.mxu0 %v1036
        %1088 = vmatpush1.bf16.msra.mxu0 %v1035
        %1089 = vmatprep.subr.bf16.mxu0 %v1033
        %1090 = vmatpush1.bf16.msra.mxu0 %v1032
        %1091 = vmatprep.subr.bf16.mxu0 %v1030
        %1092 = vmatpush1.bf16.msra.mxu0 %v1029
        %1093 = vmatprep.subr.bf16.mxu0 0
        %1094 = vmatpush2.bf16.msra.mxu0 0
        %1095 = vmatprep.subr.bf16.mxu0 0
        %1096 = vmatpush2.bf16.msra.mxu0 0
        %1097 = vmatprep.subr.bf16.mxu0 0
        %1098 = vmatpush2.bf16.msra.mxu0 0
        %1099 = vmatprep.subr.bf16.mxu0 0
        %1100 = vmatpush2.bf16.msra.mxu0 0
        %1101 = vmatprep.subr.bf16.mxu0 0
        %1102 = vmatpush2.bf16.msra.mxu0 0
        %1103 = vmatprep.subr.bf16.mxu0 0
        %1104 = vmatpush2.bf16.msra.mxu0 0
        %1105 = vmatprep.subr.bf16.mxu0 0
        %1106 = vmatpush2.bf16.msra.mxu0 0
        %1107 = vmatprep.subr.bf16.mxu0 0
        %1108 = vmatpush2.bf16.msra.mxu0 0
        %1109 = vmatprep.mubr.bf16.mxu0 0
        %1110 = vmatmul.mubr.bf16.gmra.mxu0 %v899
        %v1111 = vpop.f32.mrf.mxu0
        %v1112 = vadd.f32 %v937, %v1111
        %v1113 = vpop.f32.mrf.mxu0
        %v1114 = vadd.f32 %v941, %v1113
        %v1115 = vpop.f32.mrf.mxu0
        %v1116 = vpop.f32.mrf.mxu0
        %1117 = vdwg.mxu0
        %1118 = vmatprep.subr.bf16.mxu0 0
        %1119 = vmatpush1.bf16.msra.mxu0 %v1052
        %1120 = vmatprep.subr.bf16.mxu0 0
        %1121 = vmatpush1.bf16.msra.mxu0 %v1049
        %1122 = vmatprep.subr.bf16.mxu0 0
        %1123 = vmatpush1.bf16.msra.mxu0 %v1046
        %1124 = vmatprep.subr.bf16.mxu0 0
        %1125 = vmatpush1.bf16.msra.mxu0 %v1043
        %1126 = vmatprep.subr.bf16.mxu0 0
        %1127 = vmatpush1.bf16.msra.mxu0 %v1040
        %1128 = vmatprep.subr.bf16.mxu0 0
        %1129 = vmatpush1.bf16.msra.mxu0 %v1037
        %1130 = vmatprep.subr.bf16.mxu0 0
        %1131 = vmatpush1.bf16.msra.mxu0 %v1034
        %1132 = vmatprep.subr.bf16.mxu0 0
        %1133 = vmatpush1.bf16.msra.mxu0 %v1031
        %1134 = vmatprep.subr.bf16.mxu0 0
        %1135 = vmatpush2.bf16.msra.mxu0 0
        %1136 = vmatprep.subr.bf16.mxu0 0
        %1137 = vmatpush2.bf16.msra.mxu0 0
        %1138 = vmatprep.subr.bf16.mxu0 0
        %1139 = vmatpush2.bf16.msra.mxu0 0
        %1140 = vmatprep.subr.bf16.mxu0 0
        %1141 = vmatpush2.bf16.msra.mxu0 0
        %1142 = vmatprep.subr.bf16.mxu0 0
        %1143 = vmatpush2.bf16.msra.mxu0 0
        %1144 = vmatprep.subr.bf16.mxu0 0
        %1145 = vmatpush2.bf16.msra.mxu0 0
        %1146 = vmatprep.subr.bf16.mxu0 0
        %1147 = vmatpush2.bf16.msra.mxu0 0
        %1148 = vmatprep.subr.bf16.mxu0 0
        %1149 = vmatpush2.bf16.msra.mxu0 0
        %1150 = vmatprep.mubr.bf16.mxu0 0
        %1151 = vmatmul.mubr.bf16.gmra.mxu0 %v899
        %v1152 = vpop.f32.mrf.mxu0
        %v1153 = vadd.f32 %v945, %v1152
        %v1154 = vpop.f32.mrf.mxu0
        %v1155 = vpop.f32.mrf.mxu0
        %v1156 = vpop.f32.mrf.mxu0
        %1157 = vdwg.mxu0
        %v1158 = vld [vmem:[#allocation2] sm:$0xf]
        %v1159 = vld [vmem:[#allocation2 + $0x4] sm:$0xf]
        %v1160 = vld [vmem:[#allocation2 + $0x8] sm:$0xf]
        %v1161 = vld [vmem:[#allocation2 + $0xc] sm:$0xf]
        %v1162 = vld [vmem:[#allocation2 + $0x10] sm:$0xf]
        %v1163 = vld [vmem:[#allocation2 + $0x14] sm:$0xf]
        %v1164 = vld [vmem:[#allocation2 + $0x18] sm:$0xf]
        %v1165 = vld [vmem:[#allocation2 + $0x1c] sm:$0xf]
        %v1166 = vld [vmem:[#allocation2 + $0x20] sm:$0xf]
        %v1167 = vld [vmem:[#allocation2 + $0x24] sm:$0xf]
        %v1168 = vld [vmem:[#allocation2 + $0x28] sm:$0xf]
        %v1169 = vld [vmem:[#allocation2 + $0x2c] sm:$0xf]
        %v1170 = vld [vmem:[#allocation2 + $0x30] sm:$0xf]
        %v1171 = vld [vmem:[#allocation2 + $0x34] sm:$0xf]
        %v1172 = vld [vmem:[#allocation2 + $0x38] sm:$0xf]
        %v1173 = vld [vmem:[#allocation2 + $0x3c] sm:$0xf]
        %v1174 = vmul.f32 %v1112, 0.25
        %1176 = vrot.lane.b32.xlu0 %v1174, 112
        %v1177 = vpop.permute.xlu0 %1176
        %1178 = vrot.lane.b32.xlu0 %v1174, 96
        %v1179 = vpop.permute.xlu0 %1178
        %1180 = vrot.lane.b32.xlu0 %v1174, 80
        %v1181 = vpop.permute.xlu0 %1180
        %1182 = vrot.lane.b32.xlu0 %v1174, 64
        %v1183 = vpop.permute.xlu0 %1182
        %1184 = vrot.lane.b32.xlu0 %v1174, 48
        %v1185 = vpop.permute.xlu0 %1184
        %1186 = vrot.lane.b32.xlu0 %v1174, 32
        %v1187 = vpop.permute.xlu0 %1186
        %1188 = vrot.lane.b32.xlu0 %v1174, 16
        %v1189 = vpop.permute.xlu0 %1188
        %1191 = vrot.lane.b32.xlu0 %v1114, 112
        %v1192 = vpop.permute.xlu0 %1191
        %1194 = vrot.lane.b32.xlu0 %v1114, 96
        %v1195 = vpop.permute.xlu0 %1194
        %1197 = vrot.lane.b32.xlu0 %v1114, 80
        %v1198 = vpop.permute.xlu0 %1197
        %1200 = vrot.lane.b32.xlu0 %v1114, 64
        %v1201 = vpop.permute.xlu0 %1200
        %1203 = vrot.lane.b32.xlu0 %v1114, 48
        %v1204 = vpop.permute.xlu0 %1203
        %1206 = vrot.lane.b32.xlu0 %v1114, 32
        %v1207 = vpop.permute.xlu0 %1206
        %1209 = vrot.lane.b32.xlu0 %v1114, 16
        %v1210 = vpop.permute.xlu0 %1209
        %1213 = vrot.lane.b32.xlu0 %v1153, 112
        %v1214 = vpop.permute.xlu0 %1213
        %1216 = vrot.lane.b32.xlu0 %v1153, 96
        %v1217 = vpop.permute.xlu0 %1216
        %1219 = vrot.lane.b32.xlu0 %v1153, 80
        %v1220 = vpop.permute.xlu0 %1219
        %1222 = vrot.lane.b32.xlu0 %v1153, 64
        %v1223 = vpop.permute.xlu0 %1222
        %1225 = vrot.lane.b32.xlu0 %v1153, 48
        %v1226 = vpop.permute.xlu0 %1225
        %1228 = vrot.lane.b32.xlu0 %v1153, 32
        %v1229 = vpop.permute.xlu0 %1228
        %1231 = vrot.lane.b32.xlu0 %v1153, 16
        %v1232 = vpop.permute.xlu0 %1231
        %1234 = vxpose.xlu0.b32.start [1/16] %v1114, 128
        %1235 = vxpose.xlu0.b32.cont [2/16] 0.0, 128
        %1236 = vxpose.xlu0.b32.cont [3/16] 0.0, 128
        %1237 = vxpose.xlu0.b32.cont [4/16] 0.0, 128
        %1238 = vxpose.xlu0.b32.cont [5/16] 0.0, 128
        %1239 = vxpose.xlu0.b32.cont [6/16] 0.0, 128
        %1240 = vxpose.xlu0.b32.cont [7/16] 0.0, 128
        %1241 = vxpose.xlu0.b32.cont [8/16] 0.0, 128
        %1242 = vxpose.xlu0.b32.cont [9/16] 0.0, 128
        %1243 = vxpose.xlu0.b32.cont [10/16] 0.0, 128
        %1244 = vxpose.xlu0.b32.cont [11/16] 0.0, 128
        %1245 = vxpose.xlu0.b32.cont [12/16] 0.0, 128
        %1246 = vxpose.xlu0.b32.cont [13/16] 0.0, 128
        %1247 = vxpose.xlu0.b32.cont [14/16] 0.0, 128
        %1248 = vxpose.xlu0.b32.cont [15/16] 0.0, 128
        %1249 = vxpose.xlu0.b32.end [16/16] 0.0, 128
        %v1250 = vpop.trf.xlu0
        %v1251 = vpop.trf.xlu0
        %v1252 = vpop.trf.xlu0
        %v1253 = vpop.trf.xlu0
        %v1254 = vpop.trf.xlu0
        %v1255 = vpop.trf.xlu0
        %v1256 = vpop.trf.xlu0
        %v1257 = vpop.trf.xlu0
        %v1258 = vpop.trf.xlu0
        %v1259 = vpop.trf.xlu0
        %v1260 = vpop.trf.xlu0
        %v1261 = vpop.trf.xlu0
        %v1262 = vpop.trf.xlu0
        %v1263 = vpop.trf.xlu0
        %v1264 = vpop.trf.xlu0
        %v1265 = vpop.trf.xlu0
        %1266 = vxpose.xlu0.b32.start [1/16] %v1192, 128
        %1267 = vxpose.xlu0.b32.cont [2/16] 0.0, 128
        %1268 = vxpose.xlu0.b32.cont [3/16] 0.0, 128
        %1269 = vxpose.xlu0.b32.cont [4/16] 0.0, 128
        %1270 = vxpose.xlu0.b32.cont [5/16] 0.0, 128
        %1271 = vxpose.xlu0.b32.cont [6/16] 0.0, 128
        %1272 = vxpose.xlu0.b32.cont [7/16] 0.0, 128
        %1273 = vxpose.xlu0.b32.cont [8/16] 0.0, 128
        %1274 = vxpose.xlu0.b32.cont [9/16] 0.0, 128
        %1275 = vxpose.xlu0.b32.cont [10/16] 0.0, 128
        %1276 = vxpose.xlu0.b32.cont [11/16] 0.0, 128
        %1277 = vxpose.xlu0.b32.cont [12/16] 0.0, 128
        %1278 = vxpose.xlu0.b32.cont [13/16] 0.0, 128
        %1279 = vxpose.xlu0.b32.cont [14/16] 0.0, 128
        %1280 = vxpose.xlu0.b32.cont [15/16] 0.0, 128
        %1281 = vxpose.xlu0.b32.end [16/16] 0.0, 128
        %v1282 = vpop.trf.xlu0
        %v1283 = vpop.trf.xlu0
        %v1284 = vpop.trf.xlu0
        %v1285 = vpop.trf.xlu0
        %v1286 = vpop.trf.xlu0
        %v1287 = vpop.trf.xlu0
        %v1288 = vpop.trf.xlu0
        %v1289 = vpop.trf.xlu0
        %v1290 = vpop.trf.xlu0
        %v1291 = vpop.trf.xlu0
        %v1292 = vpop.trf.xlu0
        %v1293 = vpop.trf.xlu0
        %v1294 = vpop.trf.xlu0
        %v1295 = vpop.trf.xlu0
        %v1296 = vpop.trf.xlu0
        %v1297 = vpop.trf.xlu0
        %1298 = vxpose.xlu0.b32.start [1/16] %v1195, 128
        %1299 = vxpose.xlu0.b32.cont [2/16] 0.0, 128
        %1300 = vxpose.xlu0.b32.cont [3/16] 0.0, 128
        %1301 = vxpose.xlu0.b32.cont [4/16] 0.0, 128
        %1302 = vxpose.xlu0.b32.cont [5/16] 0.0, 128
        %1303 = vxpose.xlu0.b32.cont [6/16] 0.0, 128
        %1304 = vxpose.xlu0.b32.cont [7/16] 0.0, 128
        %1305 = vxpose.xlu0.b32.cont [8/16] 0.0, 128
        %1306 = vxpose.xlu0.b32.cont [9/16] 0.0, 128
        %1307 = vxpose.xlu0.b32.cont [10/16] 0.0, 128
        %1308 = vxpose.xlu0.b32.cont [11/16] 0.0, 128
        %1309 = vxpose.xlu0.b32.cont [12/16] 0.0, 128
        %1310 = vxpose.xlu0.b32.cont [13/16] 0.0, 128
        %1311 = vxpose.xlu0.b32.cont [14/16] 0.0, 128
        %1312 = vxpose.xlu0.b32.cont [15/16] 0.0, 128
        %1313 = vxpose.xlu0.b32.end [16/16] 0.0, 128
        %v1314 = vpop.trf.xlu0
        %v1315 = vpop.trf.xlu0
        %v1316 = vpop.trf.xlu0
        %v1317 = vpop.trf.xlu0
        %v1318 = vpop.trf.xlu0
        %v1319 = vpop.trf.xlu0
        %v1320 = vpop.trf.xlu0
        %v1321 = vpop.trf.xlu0
        %v1322 = vpop.trf.xlu0
        %v1323 = vpop.trf.xlu0
        %v1324 = vpop.trf.xlu0
        %v1325 = vpop.trf.xlu0
        %v1326 = vpop.trf.xlu0
        %v1327 = vpop.trf.xlu0
        %v1328 = vpop.trf.xlu0
        %v1329 = vpop.trf.xlu0
        %1330 = vxpose.xlu0.b32.start [1/16] %v1198, 128
        %1331 = vxpose.xlu0.b32.cont [2/16] 0.0, 128
        %1332 = vxpose.xlu0.b32.cont [3/16] 0.0, 128
        %1333 = vxpose.xlu0.b32.cont [4/16] 0.0, 128
        %1334 = vxpose.xlu0.b32.cont [5/16] 0.0, 128
        %1335 = vxpose.xlu0.b32.cont [6/16] 0.0, 128
        %1336 = vxpose.xlu0.b32.cont [7/16] 0.0, 128
        %1337 = vxpose.xlu0.b32.cont [8/16] 0.0, 128
        %1338 = vxpose.xlu0.b32.cont [9/16] 0.0, 128
        %1339 = vxpose.xlu0.b32.cont [10/16] 0.0, 128
        %1340 = vxpose.xlu0.b32.cont [11/16] 0.0, 128
        %1341 = vxpose.xlu0.b32.cont [12/16] 0.0, 128
        %1342 = vxpose.xlu0.b32.cont [13/16] 0.0, 128
        %1343 = vxpose.xlu0.b32.cont [14/16] 0.0, 128
        %1344 = vxpose.xlu0.b32.cont [15/16] 0.0, 128
        %1345 = vxpose.xlu0.b32.end [16/16] 0.0, 128
        %v1346 = vpop.trf.xlu0
        %v1347 = vpop.trf.xlu0
        %v1348 = vpop.trf.xlu0
        %v1349 = vpop.trf.xlu0
        %v1350 = vpop.trf.xlu0
        %v1351 = vpop.trf.xlu0
        %v1352 = vpop.trf.xlu0
        %v1353 = vpop.trf.xlu0
        %v1354 = vpop.trf.xlu0
        %v1355 = vpop.trf.xlu0
        %v1356 = vpop.trf.xlu0
        %v1357 = vpop.trf.xlu0
        %v1358 = vpop.trf.xlu0
        %v1359 = vpop.trf.xlu0
        %v1360 = vpop.trf.xlu0
        %v1361 = vpop.trf.xlu0
        %1362 = vxpose.xlu0.b32.start [1/16] %v1201, 128
        %1363 = vxpose.xlu0.b32.cont [2/16] 0.0, 128
        %1364 = vxpose.xlu0.b32.cont [3/16] 0.0, 128
        %1365 = vxpose.xlu0.b32.cont [4/16] 0.0, 128
        %1366 = vxpose.xlu0.b32.cont [5/16] 0.0, 128
        %1367 = vxpose.xlu0.b32.cont [6/16] 0.0, 128
        %1368 = vxpose.xlu0.b32.cont [7/16] 0.0, 128
        %1369 = vxpose.xlu0.b32.cont [8/16] 0.0, 128
        %1370 = vxpose.xlu0.b32.cont [9/16] 0.0, 128
        %1371 = vxpose.xlu0.b32.cont [10/16] 0.0, 128
        %1372 = vxpose.xlu0.b32.cont [11/16] 0.0, 128
        %1373 = vxpose.xlu0.b32.cont [12/16] 0.0, 128
        %1374 = vxpose.xlu0.b32.cont [13/16] 0.0, 128
        %1375 = vxpose.xlu0.b32.cont [14/16] 0.0, 128
        %1376 = vxpose.xlu0.b32.cont [15/16] 0.0, 128
        %1377 = vxpose.xlu0.b32.end [16/16] 0.0, 128
        %v1378 = vpop.trf.xlu0
        %v1379 = vpop.trf.xlu0
        %v1380 = vpop.trf.xlu0
        %v1381 = vpop.trf.xlu0
        %v1382 = vpop.trf.xlu0
        %v1383 = vpop.trf.xlu0
        %v1384 = vpop.trf.xlu0
        %v1385 = vpop.trf.xlu0
        %v1386 = vpop.trf.xlu0
        %v1387 = vpop.trf.xlu0
        %v1388 = vpop.trf.xlu0
        %v1389 = vpop.trf.xlu0
        %v1390 = vpop.trf.xlu0
        %v1391 = vpop.trf.xlu0
        %v1392 = vpop.trf.xlu0
        %v1393 = vpop.trf.xlu0
        %1394 = vxpose.xlu0.b32.start [1/16] %v1204, 128
        %1395 = vxpose.xlu0.b32.cont [2/16] 0.0, 128
        %1396 = vxpose.xlu0.b32.cont [3/16] 0.0, 128
        %1397 = vxpose.xlu0.b32.cont [4/16] 0.0, 128
        %1398 = vxpose.xlu0.b32.cont [5/16] 0.0, 128
        %1399 = vxpose.xlu0.b32.cont [6/16] 0.0, 128
        %1400 = vxpose.xlu0.b32.cont [7/16] 0.0, 128
        %1401 = vxpose.xlu0.b32.cont [8/16] 0.0, 128
        %1402 = vxpose.xlu0.b32.cont [9/16] 0.0, 128
        %1403 = vxpose.xlu0.b32.cont [10/16] 0.0, 128
        %1404 = vxpose.xlu0.b32.cont [11/16] 0.0, 128
        %1405 = vxpose.xlu0.b32.cont [12/16] 0.0, 128
        %1406 = vxpose.xlu0.b32.cont [13/16] 0.0, 128
        %1407 = vxpose.xlu0.b32.cont [14/16] 0.0, 128
        %1408 = vxpose.xlu0.b32.cont [15/16] 0.0, 128
        %1409 = vxpose.xlu0.b32.end [16/16] 0.0, 128
        %v1410 = vpop.trf.xlu0
        %v1411 = vpop.trf.xlu0
        %v1412 = vpop.trf.xlu0
        %v1413 = vpop.trf.xlu0
        %v1414 = vpop.trf.xlu0
        %v1415 = vpop.trf.xlu0
        %v1416 = vpop.trf.xlu0
        %v1417 = vpop.trf.xlu0
        %v1418 = vpop.trf.xlu0
        %v1419 = vpop.trf.xlu0
        %v1420 = vpop.trf.xlu0
        %v1421 = vpop.trf.xlu0
        %v1422 = vpop.trf.xlu0
        %v1423 = vpop.trf.xlu0
        %v1424 = vpop.trf.xlu0
        %v1425 = vpop.trf.xlu0
        %1426 = vxpose.xlu0.b32.start [1/16] %v1207, 128
        %1427 = vxpose.xlu0.b32.cont [2/16] 0.0, 128
        %1428 = vxpose.xlu0.b32.cont [3/16] 0.0, 128
        %1429 = vxpose.xlu0.b32.cont [4/16] 0.0, 128
        %1430 = vxpose.xlu0.b32.cont [5/16] 0.0, 128
        %1431 = vxpose.xlu0.b32.cont [6/16] 0.0, 128
        %1432 = vxpose.xlu0.b32.cont [7/16] 0.0, 128
        %1433 = vxpose.xlu0.b32.cont [8/16] 0.0, 128
        %1434 = vxpose.xlu0.b32.cont [9/16] 0.0, 128
        %1435 = vxpose.xlu0.b32.cont [10/16] 0.0, 128
        %1436 = vxpose.xlu0.b32.cont [11/16] 0.0, 128
        %1437 = vxpose.xlu0.b32.cont [12/16] 0.0, 128
        %1438 = vxpose.xlu0.b32.cont [13/16] 0.0, 128
        %1439 = vxpose.xlu0.b32.cont [14/16] 0.0, 128
        %1440 = vxpose.xlu0.b32.cont [15/16] 0.0, 128
        %1441 = vxpose.xlu0.b32.end [16/16] 0.0, 128
        %v1442 = vpop.trf.xlu0
        %v1443 = vpop.trf.xlu0
        %v1444 = vpop.trf.xlu0
        %v1445 = vpop.trf.xlu0
        %v1446 = vpop.trf.xlu0
        %v1447 = vpop.trf.xlu0
        %v1448 = vpop.trf.xlu0
        %v1449 = vpop.trf.xlu0
        %v1450 = vpop.trf.xlu0
        %v1451 = vpop.trf.xlu0
        %v1452 = vpop.trf.xlu0
        %v1453 = vpop.trf.xlu0
        %v1454 = vpop.trf.xlu0
        %v1455 = vpop.trf.xlu0
        %v1456 = vpop.trf.xlu0
        %v1457 = vpop.trf.xlu0
        %1458 = vxpose.xlu0.b32.start [1/16] %v1210, 128
        %1459 = vxpose.xlu0.b32.cont [2/16] 0.0, 128
        %1460 = vxpose.xlu0.b32.cont [3/16] 0.0, 128
        %1461 = vxpose.xlu0.b32.cont [4/16] 0.0, 128
        %1462 = vxpose.xlu0.b32.cont [5/16] 0.0, 128
        %1463 = vxpose.xlu0.b32.cont [6/16] 0.0, 128
        %1464 = vxpose.xlu0.b32.cont [7/16] 0.0, 128
        %1465 = vxpose.xlu0.b32.cont [8/16] 0.0, 128
        %1466 = vxpose.xlu0.b32.cont [9/16] 0.0, 128
        %1467 = vxpose.xlu0.b32.cont [10/16] 0.0, 128
        %1468 = vxpose.xlu0.b32.cont [11/16] 0.0, 128
        %1469 = vxpose.xlu0.b32.cont [12/16] 0.0, 128
        %1470 = vxpose.xlu0.b32.cont [13/16] 0.0, 128
        %1471 = vxpose.xlu0.b32.cont [14/16] 0.0, 128
        %1472 = vxpose.xlu0.b32.cont [15/16] 0.0, 128
        %1473 = vxpose.xlu0.b32.end [16/16] 0.0, 128
        %v1474 = vpop.trf.xlu0
        %v1475 = vpop.trf.xlu0
        %v1476 = vpop.trf.xlu0
        %v1477 = vpop.trf.xlu0
        %v1478 = vpop.trf.xlu0
        %v1479 = vpop.trf.xlu0
        %v1480 = vpop.trf.xlu0
        %v1481 = vpop.trf.xlu0
        %v1482 = vpop.trf.xlu0
        %v1483 = vpop.trf.xlu0
        %v1484 = vpop.trf.xlu0
        %v1485 = vpop.trf.xlu0
        %v1486 = vpop.trf.xlu0
        %v1487 = vpop.trf.xlu0
        %v1488 = vpop.trf.xlu0
        %v1489 = vpop.trf.xlu0
        %vm1490 = vcmask 130048
        %v1491 = vsel %vm1490, %v1174, 0
        %1493 = vmatprep.subr.mxu0 0.0
        %1494 = vmatpush1.msra.mxu0 0.0
        %1495 = vmatprep.subr.mxu0 0.0
        %1496 = vmatpush1.msra.mxu0 0.0
        %1497 = vmatprep.subr.mxu0 0.0
        %1498 = vmatpush1.msra.mxu0 0.0
        %1499 = vmatprep.subr.mxu0 0.0
        %1500 = vmatpush1.msra.mxu0 0.0
        %1501 = vmatprep.subr.mxu0 0.0
        %1502 = vmatpush1.msra.mxu0 0.0
        %1503 = vmatprep.subr.mxu0 0.0
        %1504 = vmatpush1.msra.mxu0 0.0
        %1505 = vmatprep.subr.mxu0 0.0
        %1506 = vmatpush1.msra.mxu0 0.0
        %1507 = vmatprep.subr.mxu0 0.0
        %1508 = vmatpush1.msra.mxu0 0.0
        %1509 = vmatprep.subr.mxu0 0.0
        %1510 = vmatpush1.msra.mxu0 0.0
        %1511 = vmatprep.subr.mxu0 0.0
        %1512 = vmatpush1.msra.mxu0 0.0
        %1513 = vmatprep.subr.mxu0 0.0
        %1514 = vmatpush1.msra.mxu0 0.0
        %1515 = vmatprep.subr.mxu0 0.0
        %1516 = vmatpush1.msra.mxu0 0.0
        %1517 = vmatprep.subr.mxu0 0.0
        %1518 = vmatpush1.msra.mxu0 0.0
        %1519 = vmatprep.subr.mxu0 0.0
        %1520 = vmatpush1.msra.mxu0 0.0
        %1521 = vmatprep.subr.mxu0 0.0
        %1522 = vmatpush1.msra.mxu0 %v1251
        %1523 = vmatprep.subr.mxu0 0.0
        %1524 = vmatpush1.msra.mxu0 %v1250
        %1525 = vmatprep.subr.mxu0 0.0
        %1526 = vmatpush2.msra.mxu0 0.0
        %1527 = vmatprep.subr.mxu0 0.0
        %1528 = vmatpush2.msra.mxu0 0.0
        %1529 = vmatprep.subr.mxu0 0.0
        %1530 = vmatpush2.msra.mxu0 0.0
        %1531 = vmatprep.subr.mxu0 0.0
        %1532 = vmatpush2.msra.mxu0 0.0
        %1533 = vmatprep.subr.mxu0 0.0
        %1534 = vmatpush2.msra.mxu0 0.0
        %1535 = vmatprep.subr.mxu0 0.0
        %1536 = vmatpush2.msra.mxu0 0.0
        %1537 = vmatprep.subr.mxu0 0.0
        %1538 = vmatpush2.msra.mxu0 0.0
        %1539 = vmatprep.subr.mxu0 0.0
        %1540 = vmatpush2.msra.mxu0 0.0
        %1541 = vmatprep.subr.mxu0 0.0
        %1542 = vmatpush2.msra.mxu0 0.0
        %1543 = vmatprep.subr.mxu0 0.0
        %1544 = vmatpush2.msra.mxu0 0.0
        %1545 = vmatprep.subr.mxu0 0.0
        %1546 = vmatpush2.msra.mxu0 0.0
        %1547 = vmatprep.subr.mxu0 0.0
        %1548 = vmatpush2.msra.mxu0 0.0
        %1549 = vmatprep.subr.mxu0 0.0
        %1550 = vmatpush2.msra.mxu0 0.0
        %1551 = vmatprep.subr.mxu0 0.0
        %1552 = vmatpush2.msra.mxu0 0.0
        %1553 = vmatprep.subr.mxu0 0.0
        %1554 = vmatpush2.msra.mxu0 0.0
        %1555 = vmatprep.subr.mxu0 0.0
        %1556 = vmatpush2.msra.mxu0 0.0
        %1557 = vmatprep.mubr.f32.mxu0 0.0
        %1558 = vmatmul.mubr.f32.gmra.mxu0 %v1491
        %v1559 = vpop.f32.mrf.mxu0
        %v1560 = vadd.f32 0.0, %v1559
        %v1561 = vpop.f32.mrf.mxu0
        %1562 = vdwg.mxu0
        %v1563 = vsel %vm1490, %v1177, 0
        %1565 = vmatprep.subr.mxu0 0.0
        %1566 = vmatpush1.msra.mxu0 0.0
        %1567 = vmatprep.subr.mxu0 0.0
        %1568 = vmatpush1.msra.mxu0 0.0
        %1569 = vmatprep.subr.mxu0 0.0
        %1570 = vmatpush1.msra.mxu0 0.0
        %1571 = vmatprep.subr.mxu0 0.0
        %1572 = vmatpush1.msra.mxu0 0.0
        %1573 = vmatprep.subr.mxu0 0.0
        %1574 = vmatpush1.msra.mxu0 0.0
        %1575 = vmatprep.subr.mxu0 0.0
        %1576 = vmatpush1.msra.mxu0 0.0
        %1577 = vmatprep.subr.mxu0 0.0
        %1578 = vmatpush1.msra.mxu0 0.0
        %1579 = vmatprep.subr.mxu0 0.0
        %1580 = vmatpush1.msra.mxu0 0.0
        %1581 = vmatprep.subr.mxu0 0.0
        %1582 = vmatpush1.msra.mxu0 0.0
        %1583 = vmatprep.subr.mxu0 0.0
        %1584 = vmatpush1.msra.mxu0 0.0
        %1585 = vmatprep.subr.mxu0 0.0
        %1586 = vmatpush1.msra.mxu0 0.0
        %1587 = vmatprep.subr.mxu0 0.0
        %1588 = vmatpush1.msra.mxu0 0.0
        %1589 = vmatprep.subr.mxu0 0.0
        %1590 = vmatpush1.msra.mxu0 0.0
        %1591 = vmatprep.subr.mxu0 0.0
        %1592 = vmatpush1.msra.mxu0 0.0
        %1593 = vmatprep.subr.mxu0 0.0
        %1594 = vmatpush1.msra.mxu0 %v1283
        %1595 = vmatprep.subr.mxu0 0.0
        %1596 = vmatpush1.msra.mxu0 %v1282
        %1597 = vmatprep.subr.mxu0 0.0
        %1598 = vmatpush2.msra.mxu0 0.0
        %1599 = vmatprep.subr.mxu0 0.0
        %1600 = vmatpush2.msra.mxu0 0.0
        %1601 = vmatprep.subr.mxu0 0.0
        %1602 = vmatpush2.msra.mxu0 0.0
        %1603 = vmatprep.subr.mxu0 0.0
        %1604 = vmatpush2.msra.mxu0 0.0
        %1605 = vmatprep.subr.mxu0 0.0
        %1606 = vmatpush2.msra.mxu0 0.0
        %1607 = vmatprep.subr.mxu0 0.0
        %1608 = vmatpush2.msra.mxu0 0.0
        %1609 = vmatprep.subr.mxu0 0.0
        %1610 = vmatpush2.msra.mxu0 0.0
        %1611 = vmatprep.subr.mxu0 0.0
        %1612 = vmatpush2.msra.mxu0 0.0
        %1613 = vmatprep.subr.mxu0 0.0
        %1614 = vmatpush2.msra.mxu0 0.0
        %1615 = vmatprep.subr.mxu0 0.0
        %1616 = vmatpush2.msra.mxu0 0.0
        %1617 = vmatprep.subr.mxu0 0.0
        %1618 = vmatpush2.msra.mxu0 0.0
        %1619 = vmatprep.subr.mxu0 0.0
        %1620 = vmatpush2.msra.mxu0 0.0
        %1621 = vmatprep.subr.mxu0 0.0
        %1622 = vmatpush2.msra.mxu0 0.0
        %1623 = vmatprep.subr.mxu0 0.0
        %1624 = vmatpush2.msra.mxu0 0.0
        %1625 = vmatprep.subr.mxu0 0.0
        %1626 = vmatpush2.msra.mxu0 0.0
        %1627 = vmatprep.subr.mxu0 0.0
        %1628 = vmatpush2.msra.mxu0 0.0
        %1629 = vmatprep.mubr.f32.mxu0 0.0
        %1630 = vmatmul.mubr.f32.gmra.mxu0 %v1563
        %v1631 = vpop.f32.mrf.mxu0
        %v1632 = vadd.f32 0.0, %v1631
        %v1633 = vpop.f32.mrf.mxu0
        %1634 = vdwg.mxu0
        %v1635 = vsel %vm1490, %v1179, 0
        %1637 = vmatprep.subr.mxu0 0.0
        %1638 = vmatpush1.msra.mxu0 0.0
        %1639 = vmatprep.subr.mxu0 0.0
        %1640 = vmatpush1.msra.mxu0 0.0
        %1641 = vmatprep.subr.mxu0 0.0
        %1642 = vmatpush1.msra.mxu0 0.0
        %1643 = vmatprep.subr.mxu0 0.0
        %1644 = vmatpush1.msra.mxu0 0.0
        %1645 = vmatprep.subr.mxu0 0.0
        %1646 = vmatpush1.msra.mxu0 0.0
        %1647 = vmatprep.subr.mxu0 0.0
        %1648 = vmatpush1.msra.mxu0 0.0
        %1649 = vmatprep.subr.mxu0 0.0
        %1650 = vmatpush1.msra.mxu0 0.0
        %1651 = vmatprep.subr.mxu0 0.0
        %1652 = vmatpush1.msra.mxu0 0.0
        %1653 = vmatprep.subr.mxu0 0.0
        %1654 = vmatpush1.msra.mxu0 0.0
        %1655 = vmatprep.subr.mxu0 0.0
        %1656 = vmatpush1.msra.mxu0 0.0
        %1657 = vmatprep.subr.mxu0 0.0
        %1658 = vmatpush1.msra.mxu0 0.0
        %1659 = vmatprep.subr.mxu0 0.0
        %1660 = vmatpush1.msra.mxu0 0.0
        %1661 = vmatprep.subr.mxu0 0.0
        %1662 = vmatpush1.msra.mxu0 0.0
        %1663 = vmatprep.subr.mxu0 0.0
        %1664 = vmatpush1.msra.mxu0 0.0
        %1665 = vmatprep.subr.mxu0 0.0
        %1666 = vmatpush1.msra.mxu0 %v1315
        %1667 = vmatprep.subr.mxu0 0.0
        %1668 = vmatpush1.msra.mxu0 %v1314
        %1669 = vmatprep.subr.mxu0 0.0
        %1670 = vmatpush2.msra.mxu0 0.0
        %1671 = vmatprep.subr.mxu0 0.0
        %1672 = vmatpush2.msra.mxu0 0.0
        %1673 = vmatprep.subr.mxu0 0.0
        %1674 = vmatpush2.msra.mxu0 0.0
        %1675 = vmatprep.subr.mxu0 0.0
        %1676 = vmatpush2.msra.mxu0 0.0
        %1677 = vmatprep.subr.mxu0 0.0
        %1678 = vmatpush2.msra.mxu0 0.0
        %1679 = vmatprep.subr.mxu0 0.0
        %1680 = vmatpush2.msra.mxu0 0.0
        %1681 = vmatprep.subr.mxu0 0.0
        %1682 = vmatpush2.msra.mxu0 0.0
        %1683 = vmatprep.subr.mxu0 0.0
        %1684 = vmatpush2.msra.mxu0 0.0
        %1685 = vmatprep.subr.mxu0 0.0
        %1686 = vmatpush2.msra.mxu0 0.0
        %1687 = vmatprep.subr.mxu0 0.0
        %1688 = vmatpush2.msra.mxu0 0.0
        %1689 = vmatprep.subr.mxu0 0.0
        %1690 = vmatpush2.msra.mxu0 0.0
        %1691 = vmatprep.subr.mxu0 0.0
        %1692 = vmatpush2.msra.mxu0 0.0
        %1693 = vmatprep.subr.mxu0 0.0
        %1694 = vmatpush2.msra.mxu0 0.0
        %1695 = vmatprep.subr.mxu0 0.0
        %1696 = vmatpush2.msra.mxu0 0.0
        %1697 = vmatprep.subr.mxu0 0.0
        %1698 = vmatpush2.msra.mxu0 0.0
        %1699 = vmatprep.subr.mxu0 0.0
        %1700 = vmatpush2.msra.mxu0 0.0
        %1701 = vmatprep.mubr.f32.mxu0 0.0
        %1702 = vmatmul.mubr.f32.gmra.mxu0 %v1635
        %v1703 = vpop.f32.mrf.mxu0
        %v1704 = vadd.f32 0.0, %v1703
        %v1705 = vpop.f32.mrf.mxu0
        %1706 = vdwg.mxu0
        %v1707 = vsel %vm1490, %v1181, 0
        %1709 = vmatprep.subr.mxu0 0.0
        %1710 = vmatpush1.msra.mxu0 0.0
        %1711 = vmatprep.subr.mxu0 0.0
        %1712 = vmatpush1.msra.mxu0 0.0
        %1713 = vmatprep.subr.mxu0 0.0
        %1714 = vmatpush1.msra.mxu0 0.0
        %1715 = vmatprep.subr.mxu0 0.0
        %1716 = vmatpush1.msra.mxu0 0.0
        %1717 = vmatprep.subr.mxu0 0.0
        %1718 = vmatpush1.msra.mxu0 0.0
        %1719 = vmatprep.subr.mxu0 0.0
        %1720 = vmatpush1.msra.mxu0 0.0
        %1721 = vmatprep.subr.mxu0 0.0
        %1722 = vmatpush1.msra.mxu0 0.0
        %1723 = vmatprep.subr.mxu0 0.0
        %1724 = vmatpush1.msra.mxu0 0.0
        %1725 = vmatprep.subr.mxu0 0.0
        %1726 = vmatpush1.msra.mxu0 0.0
        %1727 = vmatprep.subr.mxu0 0.0
        %1728 = vmatpush1.msra.mxu0 0.0
        %1729 = vmatprep.subr.mxu0 0.0
        %1730 = vmatpush1.msra.mxu0 0.0
        %1731 = vmatprep.subr.mxu0 0.0
        %1732 = vmatpush1.msra.mxu0 0.0
        %1733 = vmatprep.subr.mxu0 0.0
        %1734 = vmatpush1.msra.mxu0 0.0
        %1735 = vmatprep.subr.mxu0 0.0
        %1736 = vmatpush1.msra.mxu0 0.0
        %1737 = vmatprep.subr.mxu0 0.0
        %1738 = vmatpush1.msra.mxu0 %v1347
        %1739 = vmatprep.subr.mxu0 0.0
        %1740 = vmatpush1.msra.mxu0 %v1346
        %1741 = vmatprep.subr.mxu0 0.0
        %1742 = vmatpush2.msra.mxu0 0.0
        %1743 = vmatprep.subr.mxu0 0.0
        %1744 = vmatpush2.msra.mxu0 0.0
        %1745 = vmatprep.subr.mxu0 0.0
        %1746 = vmatpush2.msra.mxu0 0.0
        %1747 = vmatprep.subr.mxu0 0.0
        %1748 = vmatpush2.msra.mxu0 0.0
        %1749 = vmatprep.subr.mxu0 0.0
        %1750 = vmatpush2.msra.mxu0 0.0
        %1751 = vmatprep.subr.mxu0 0.0
        %1752 = vmatpush2.msra.mxu0 0.0
        %1753 = vmatprep.subr.mxu0 0.0
        %1754 = vmatpush2.msra.mxu0 0.0
        %1755 = vmatprep.subr.mxu0 0.0
        %1756 = vmatpush2.msra.mxu0 0.0
        %1757 = vmatprep.subr.mxu0 0.0
        %1758 = vmatpush2.msra.mxu0 0.0
        %1759 = vmatprep.subr.mxu0 0.0
        %1760 = vmatpush2.msra.mxu0 0.0
        %1761 = vmatprep.subr.mxu0 0.0
        %1762 = vmatpush2.msra.mxu0 0.0
        %1763 = vmatprep.subr.mxu0 0.0
        %1764 = vmatpush2.msra.mxu0 0.0
        %1765 = vmatprep.subr.mxu0 0.0
        %1766 = vmatpush2.msra.mxu0 0.0
        %1767 = vmatprep.subr.mxu0 0.0
        %1768 = vmatpush2.msra.mxu0 0.0
        %1769 = vmatprep.subr.mxu0 0.0
        %1770 = vmatpush2.msra.mxu0 0.0
        %1771 = vmatprep.subr.mxu0 0.0
        %1772 = vmatpush2.msra.mxu0 0.0
        %1773 = vmatprep.mubr.f32.mxu0 0.0
        %1774 = vmatmul.mubr.f32.gmra.mxu0 %v1707
        %v1775 = vpop.f32.mrf.mxu0
        %v1776 = vadd.f32 0.0, %v1775
        %v1777 = vpop.f32.mrf.mxu0
        %1778 = vdwg.mxu0
        %v1779 = vsel %vm1490, %v1183, 0
        %1781 = vmatprep.subr.mxu0 0.0
        %1782 = vmatpush1.msra.mxu0 0.0
        %1783 = vmatprep.subr.mxu0 0.0
        %1784 = vmatpush1.msra.mxu0 0.0
        %1785 = vmatprep.subr.mxu0 0.0
        %1786 = vmatpush1.msra.mxu0 0.0
        %1787 = vmatprep.subr.mxu0 0.0
        %1788 = vmatpush1.msra.mxu0 0.0
        %1789 = vmatprep.subr.mxu0 0.0
        %1790 = vmatpush1.msra.mxu0 0.0
        %1791 = vmatprep.subr.mxu0 0.0
        %1792 = vmatpush1.msra.mxu0 0.0
        %1793 = vmatprep.subr.mxu0 0.0
        %1794 = vmatpush1.msra.mxu0 0.0
        %1795 = vmatprep.subr.mxu0 0.0
        %1796 = vmatpush1.msra.mxu0 0.0
        %1797 = vmatprep.subr.mxu0 0.0
        %1798 = vmatpush1.msra.mxu0 0.0
        %1799 = vmatprep.subr.mxu0 0.0
        %1800 = vmatpush1.msra.mxu0 0.0
        %1801 = vmatprep.subr.mxu0 0.0
        %1802 = vmatpush1.msra.mxu0 0.0
        %1803 = vmatprep.subr.mxu0 0.0
        %1804 = vmatpush1.msra.mxu0 0.0
        %1805 = vmatprep.subr.mxu0 0.0
        %1806 = vmatpush1.msra.mxu0 0.0
        %1807 = vmatprep.subr.mxu0 0.0
        %1808 = vmatpush1.msra.mxu0 0.0
        %1809 = vmatprep.subr.mxu0 0.0
        %1810 = vmatpush1.msra.mxu0 %v1379
        %1811 = vmatprep.subr.mxu0 0.0
        %1812 = vmatpush1.msra.mxu0 %v1378
        %1813 = vmatprep.subr.mxu0 0.0
        %1814 = vmatpush2.msra.mxu0 0.0
        %1815 = vmatprep.subr.mxu0 0.0
        %1816 = vmatpush2.msra.mxu0 0.0
        %1817 = vmatprep.subr.mxu0 0.0
        %1818 = vmatpush2.msra.mxu0 0.0
        %1819 = vmatprep.subr.mxu0 0.0
        %1820 = vmatpush2.msra.mxu0 0.0
        %1821 = vmatprep.subr.mxu0 0.0
        %1822 = vmatpush2.msra.mxu0 0.0
        %1823 = vmatprep.subr.mxu0 0.0
        %1824 = vmatpush2.msra.mxu0 0.0
        %1825 = vmatprep.subr.mxu0 0.0
        %1826 = vmatpush2.msra.mxu0 0.0
        %1827 = vmatprep.subr.mxu0 0.0
        %1828 = vmatpush2.msra.mxu0 0.0
        %1829 = vmatprep.subr.mxu0 0.0
        %1830 = vmatpush2.msra.mxu0 0.0
        %1831 = vmatprep.subr.mxu0 0.0
        %1832 = vmatpush2.msra.mxu0 0.0
        %1833 = vmatprep.subr.mxu0 0.0
        %1834 = vmatpush2.msra.mxu0 0.0
        %1835 = vmatprep.subr.mxu0 0.0
        %1836 = vmatpush2.msra.mxu0 0.0
        %1837 = vmatprep.subr.mxu0 0.0
        %1838 = vmatpush2.msra.mxu0 0.0
        %1839 = vmatprep.subr.mxu0 0.0
        %1840 = vmatpush2.msra.mxu0 0.0
        %1841 = vmatprep.subr.mxu0 0.0
        %1842 = vmatpush2.msra.mxu0 0.0
        %1843 = vmatprep.subr.mxu0 0.0
        %1844 = vmatpush2.msra.mxu0 0.0
        %1845 = vmatprep.mubr.f32.mxu0 0.0
        %1846 = vmatmul.mubr.f32.gmra.mxu0 %v1779
        %v1847 = vpop.f32.mrf.mxu0
        %v1848 = vadd.f32 0.0, %v1847
        %v1849 = vpop.f32.mrf.mxu0
        %1850 = vdwg.mxu0
        %v1851 = vsel %vm1490, %v1185, 0
        %1853 = vmatprep.subr.mxu0 0.0
        %1854 = vmatpush1.msra.mxu0 0.0
        %1855 = vmatprep.subr.mxu0 0.0
        %1856 = vmatpush1.msra.mxu0 0.0
        %1857 = vmatprep.subr.mxu0 0.0
        %1858 = vmatpush1.msra.mxu0 0.0
        %1859 = vmatprep.subr.mxu0 0.0
        %1860 = vmatpush1.msra.mxu0 0.0
        %1861 = vmatprep.subr.mxu0 0.0
        %1862 = vmatpush1.msra.mxu0 0.0
        %1863 = vmatprep.subr.mxu0 0.0
        %1864 = vmatpush1.msra.mxu0 0.0
        %1865 = vmatprep.subr.mxu0 0.0
        %1866 = vmatpush1.msra.mxu0 0.0
        %1867 = vmatprep.subr.mxu0 0.0
        %1868 = vmatpush1.msra.mxu0 0.0
        %1869 = vmatprep.subr.mxu0 0.0
        %1870 = vmatpush1.msra.mxu0 0.0
        %1871 = vmatprep.subr.mxu0 0.0
        %1872 = vmatpush1.msra.mxu0 0.0
        %1873 = vmatprep.subr.mxu0 0.0
        %1874 = vmatpush1.msra.mxu0 0.0
        %1875 = vmatprep.subr.mxu0 0.0
        %1876 = vmatpush1.msra.mxu0 0.0
        %1877 = vmatprep.subr.mxu0 0.0
        %1878 = vmatpush1.msra.mxu0 0.0
        %1879 = vmatprep.subr.mxu0 0.0
        %1880 = vmatpush1.msra.mxu0 0.0
        %1881 = vmatprep.subr.mxu0 0.0
        %1882 = vmatpush1.msra.mxu0 %v1411
        %1883 = vmatprep.subr.mxu0 0.0
        %1884 = vmatpush1.msra.mxu0 %v1410
        %1885 = vmatprep.subr.mxu0 0.0
        %1886 = vmatpush2.msra.mxu0 0.0
        %1887 = vmatprep.subr.mxu0 0.0
        %1888 = vmatpush2.msra.mxu0 0.0
        %1889 = vmatprep.subr.mxu0 0.0
        %1890 = vmatpush2.msra.mxu0 0.0
        %1891 = vmatprep.subr.mxu0 0.0
        %1892 = vmatpush2.msra.mxu0 0.0
        %1893 = vmatprep.subr.mxu0 0.0
        %1894 = vmatpush2.msra.mxu0 0.0
        %1895 = vmatprep.subr.mxu0 0.0
        %1896 = vmatpush2.msra.mxu0 0.0
        %1897 = vmatprep.subr.mxu0 0.0
        %1898 = vmatpush2.msra.mxu0 0.0
        %1899 = vmatprep.subr.mxu0 0.0
        %1900 = vmatpush2.msra.mxu0 0.0
        %1901 = vmatprep.subr.mxu0 0.0
        %1902 = vmatpush2.msra.mxu0 0.0
        %1903 = vmatprep.subr.mxu0 0.0
        %1904 = vmatpush2.msra.mxu0 0.0
        %1905 = vmatprep.subr.mxu0 0.0
        %1906 = vmatpush2.msra.mxu0 0.0
        %1907 = vmatprep.subr.mxu0 0.0
        %1908 = vmatpush2.msra.mxu0 0.0
        %1909 = vmatprep.subr.mxu0 0.0
        %1910 = vmatpush2.msra.mxu0 0.0
        %1911 = vmatprep.subr.mxu0 0.0
        %1912 = vmatpush2.msra.mxu0 0.0
        %1913 = vmatprep.subr.mxu0 0.0
        %1914 = vmatpush2.msra.mxu0 0.0
        %1915 = vmatprep.subr.mxu0 0.0
        %1916 = vmatpush2.msra.mxu0 0.0
        %1917 = vmatprep.mubr.f32.mxu0 0.0
        %1918 = vmatmul.mubr.f32.gmra.mxu0 %v1851
        %v1919 = vpop.f32.mrf.mxu0
        %v1920 = vadd.f32 0.0, %v1919
        %v1921 = vpop.f32.mrf.mxu0
        %1922 = vdwg.mxu0
        %v1923 = vsel %vm1490, %v1187, 0
        %1925 = vmatprep.subr.mxu0 0.0
        %1926 = vmatpush1.msra.mxu0 0.0
        %1927 = vmatprep.subr.mxu0 0.0
        %1928 = vmatpush1.msra.mxu0 0.0
        %1929 = vmatprep.subr.mxu0 0.0
        %1930 = vmatpush1.msra.mxu0 0.0
        %1931 = vmatprep.subr.mxu0 0.0
        %1932 = vmatpush1.msra.mxu0 0.0
        %1933 = vmatprep.subr.mxu0 0.0
        %1934 = vmatpush1.msra.mxu0 0.0
        %1935 = vmatprep.subr.mxu0 0.0
        %1936 = vmatpush1.msra.mxu0 0.0
        %1937 = vmatprep.subr.mxu0 0.0
        %1938 = vmatpush1.msra.mxu0 0.0
        %1939 = vmatprep.subr.mxu0 0.0
        %1940 = vmatpush1.msra.mxu0 0.0
        %1941 = vmatprep.subr.mxu0 0.0
        %1942 = vmatpush1.msra.mxu0 0.0
        %1943 = vmatprep.subr.mxu0 0.0
        %1944 = vmatpush1.msra.mxu0 0.0
        %1945 = vmatprep.subr.mxu0 0.0
        %1946 = vmatpush1.msra.mxu0 0.0
        %1947 = vmatprep.subr.mxu0 0.0
        %1948 = vmatpush1.msra.mxu0 0.0
        %1949 = vmatprep.subr.mxu0 0.0
        %1950 = vmatpush1.msra.mxu0 0.0
        %1951 = vmatprep.subr.mxu0 0.0
        %1952 = vmatpush1.msra.mxu0 0.0
        %1953 = vmatprep.subr.mxu0 0.0
        %1954 = vmatpush1.msra.mxu0 %v1443
        %1955 = vmatprep.subr.mxu0 0.0
        %1956 = vmatpush1.msra.mxu0 %v1442
        %1957 = vmatprep.subr.mxu0 0.0
        %1958 = vmatpush2.msra.mxu0 0.0
        %1959 = vmatprep.subr.mxu0 0.0
        %1960 = vmatpush2.msra.mxu0 0.0
        %1961 = vmatprep.subr.mxu0 0.0
        %1962 = vmatpush2.msra.mxu0 0.0
        %1963 = vmatprep.subr.mxu0 0.0
        %1964 = vmatpush2.msra.mxu0 0.0
        %1965 = vmatprep.subr.mxu0 0.0
        %1966 = vmatpush2.msra.mxu0 0.0
        %1967 = vmatprep.subr.mxu0 0.0
        %1968 = vmatpush2.msra.mxu0 0.0
        %1969 = vmatprep.subr.mxu0 0.0
        %1970 = vmatpush2.msra.mxu0 0.0
        %1971 = vmatprep.subr.mxu0 0.0
        %1972 = vmatpush2.msra.mxu0 0.0
        %1973 = vmatprep.subr.mxu0 0.0
        %1974 = vmatpush2.msra.mxu0 0.0
        %1975 = vmatprep.subr.mxu0 0.0
        %1976 = vmatpush2.msra.mxu0 0.0
        %1977 = vmatprep.subr.mxu0 0.0
        %1978 = vmatpush2.msra.mxu0 0.0
        %1979 = vmatprep.subr.mxu0 0.0
        %1980 = vmatpush2.msra.mxu0 0.0
        %1981 = vmatprep.subr.mxu0 0.0
        %1982 = vmatpush2.msra.mxu0 0.0
        %1983 = vmatprep.subr.mxu0 0.0
        %1984 = vmatpush2.msra.mxu0 0.0
        %1985 = vmatprep.subr.mxu0 0.0
        %1986 = vmatpush2.msra.mxu0 0.0
        %1987 = vmatprep.subr.mxu0 0.0
        %1988 = vmatpush2.msra.mxu0 0.0
        %1989 = vmatprep.mubr.f32.mxu0 0.0
        %1990 = vmatmul.mubr.f32.gmra.mxu0 %v1923
        %v1991 = vpop.f32.mrf.mxu0
        %v1992 = vadd.f32 0.0, %v1991
        %v1993 = vpop.f32.mrf.mxu0
        %1994 = vdwg.mxu0
        %v1995 = vsel %vm1490, %v1189, 0
        %1997 = vmatprep.subr.mxu0 0.0
        %1998 = vmatpush1.msra.mxu0 0.0
        %1999 = vmatprep.subr.mxu0 0.0
        %2000 = vmatpush1.msra.mxu0 0.0
        %2001 = vmatprep.subr.mxu0 0.0
        %2002 = vmatpush1.msra.mxu0 0.0
        %2003 = vmatprep.subr.mxu0 0.0
        %2004 = vmatpush1.msra.mxu0 0.0
        %2005 = vmatprep.subr.mxu0 0.0
        %2006 = vmatpush1.msra.mxu0 0.0
        %2007 = vmatprep.subr.mxu0 0.0
        %2008 = vmatpush1.msra.mxu0 0.0
        %2009 = vmatprep.subr.mxu0 0.0
        %2010 = vmatpush1.msra.mxu0 0.0
        %2011 = vmatprep.subr.mxu0 0.0
        %2012 = vmatpush1.msra.mxu0 0.0
        %2013 = vmatprep.subr.mxu0 0.0
        %2014 = vmatpush1.msra.mxu0 0.0
        %2015 = vmatprep.subr.mxu0 0.0
        %2016 = vmatpush1.msra.mxu0 0.0
        %2017 = vmatprep.subr.mxu0 0.0
        %2018 = vmatpush1.msra.mxu0 0.0
        %2019 = vmatprep.subr.mxu0 0.0
        %2020 = vmatpush1.msra.mxu0 0.0
        %2021 = vmatprep.subr.mxu0 0.0
        %2022 = vmatpush1.msra.mxu0 0.0
        %2023 = vmatprep.subr.mxu0 0.0
        %2024 = vmatpush1.msra.mxu0 0.0
        %2025 = vmatprep.subr.mxu0 0.0
        %2026 = vmatpush1.msra.mxu0 %v1475
        %2027 = vmatprep.subr.mxu0 0.0
        %2028 = vmatpush1.msra.mxu0 %v1474
        %2029 = vmatprep.subr.mxu0 0.0
        %2030 = vmatpush2.msra.mxu0 0.0
        %2031 = vmatprep.subr.mxu0 0.0
        %2032 = vmatpush2.msra.mxu0 0.0
        %2033 = vmatprep.subr.mxu0 0.0
        %2034 = vmatpush2.msra.mxu0 0.0
        %2035 = vmatprep.subr.mxu0 0.0
        %2036 = vmatpush2.msra.mxu0 0.0
        %2037 = vmatprep.subr.mxu0 0.0
        %2038 = vmatpush2.msra.mxu0 0.0
        %2039 = vmatprep.subr.mxu0 0.0
        %2040 = vmatpush2.msra.mxu0 0.0
        %2041 = vmatprep.subr.mxu0 0.0
        %2042 = vmatpush2.msra.mxu0 0.0
        %2043 = vmatprep.subr.mxu0 0.0
        %2044 = vmatpush2.msra.mxu0 0.0
        %2045 = vmatprep.subr.mxu0 0.0
        %2046 = vmatpush2.msra.mxu0 0.0
        %2047 = vmatprep.subr.mxu0 0.0
        %2048 = vmatpush2.msra.mxu0 0.0
        %2049 = vmatprep.subr.mxu0 0.0
        %2050 = vmatpush2.msra.mxu0 0.0
        %2051 = vmatprep.subr.mxu0 0.0
        %2052 = vmatpush2.msra.mxu0 0.0
        %2053 = vmatprep.subr.mxu0 0.0
        %2054 = vmatpush2.msra.mxu0 0.0
        %2055 = vmatprep.subr.mxu0 0.0
        %2056 = vmatpush2.msra.mxu0 0.0
        %2057 = vmatprep.subr.mxu0 0.0
        %2058 = vmatpush2.msra.mxu0 0.0
        %2059 = vmatprep.subr.mxu0 0.0
        %2060 = vmatpush2.msra.mxu0 0.0
        %2061 = vmatprep.mubr.f32.mxu0 0.0
        %2062 = vmatmul.mubr.f32.gmra.mxu0 %v1995
        %v2063 = vpop.f32.mrf.mxu0
        %v2064 = vadd.f32 0.0, %v2063
        %v2065 = vpop.f32.mrf.mxu0
        %2066 = vdwg.mxu0
        %vm2067 = vcmask 64512
        %v2068 = vsel %vm2067, %v1560, -inf
        %2069 = vmax.xlane.f32.xlu0 %v2068
        %v2070 = vpop.xlane.xlu0 %2069
        %v2071 = vsel %vm2067, %v1632, -inf
        %2072 = vmax.xlane.f32.xlu0 %v2071
        %v2073 = vpop.xlane.xlu0 %2072
        %v2074 = vsel %vm2067, %v1704, -inf
        %2075 = vmax.xlane.f32.xlu0 %v2074
        %v2076 = vpop.xlane.xlu0 %2075
        %v2077 = vsel %vm2067, %v1776, -inf
        %2078 = vmax.xlane.f32.xlu0 %v2077
        %v2079 = vpop.xlane.xlu0 %2078
        %v2080 = vsel %vm2067, %v1848, -inf
        %2081 = vmax.xlane.f32.xlu0 %v2080
        %v2082 = vpop.xlane.xlu0 %2081
        %v2083 = vsel %vm2067, %v1920, -inf
        %2084 = vmax.xlane.f32.xlu0 %v2083
        %v2085 = vpop.xlane.xlu0 %2084
        %v2086 = vsel %vm2067, %v1992, -inf
        %2087 = vmax.xlane.f32.xlu0 %v2086
        %v2088 = vpop.xlane.xlu0 %2087
        %v2089 = vsel %vm2067, %v2064, -inf
        %2090 = vmax.xlane.f32.xlu0 %v2089
        %v2091 = vpop.xlane.xlu0 %2090
        %v2092 = vsub.f32 %v1560, %v2070
        %v2093 = vsub.f32 %v1632, %v2073
        %v2094 = vsub.f32 %v1704, %v2076
        %v2095 = vsub.f32 %v1776, %v2079
        %v2096 = vsub.f32 %v1848, %v2082
        %v2097 = vsub.f32 %v1920, %v2085
        %v2098 = vsub.f32 %v1992, %v2088
        %v2099 = vsub.f32 %v2064, %v2091
        %v2100 = vmul.f32 %v2092, 1.442695
        %v2101 = vpow.pop %v2100
        %v2102 = vmul.f32 %v2093, 1.442695
        %v2103 = vpow.pop %v2102
        %v2104 = vmul.f32 %v2094, 1.442695
        %v2105 = vpow.pop %v2104
        %v2106 = vmul.f32 %v2095, 1.442695
        %v2107 = vpow.pop %v2106
        %v2108 = vmul.f32 %v2096, 1.442695
        %v2109 = vpow.pop %v2108
        %v2110 = vmul.f32 %v2097, 1.442695
        %v2111 = vpow.pop %v2110
        %v2112 = vmul.f32 %v2098, 1.442695
        %v2113 = vpow.pop %v2112
        %v2114 = vmul.f32 %v2099, 1.442695
        %v2115 = vpow.pop %v2114
        %v2116 = vsel %vm2067, %v2101, 0.0
        %2117 = vadd.xlane.f32.xlu0 %v2116
        %v2118 = vpop.xlane.xlu0 %2117
        %v2119 = vsel %vm2067, %v2103, 0.0
        %2120 = vadd.xlane.f32.xlu0 %v2119
        %v2121 = vpop.xlane.xlu0 %2120
        %v2122 = vsel %vm2067, %v2105, 0.0
        %2123 = vadd.xlane.f32.xlu0 %v2122
        %v2124 = vpop.xlane.xlu0 %2123
        %v2125 = vsel %vm2067, %v2107, 0.0
        %2126 = vadd.xlane.f32.xlu0 %v2125
        %v2127 = vpop.xlane.xlu0 %2126
        %v2128 = vsel %vm2067, %v2109, 0.0
        %2129 = vadd.xlane.f32.xlu0 %v2128
        %v2130 = vpop.xlane.xlu0 %2129
        %v2131 = vsel %vm2067, %v2111, 0.0
        %2132 = vadd.xlane.f32.xlu0 %v2131
        %v2133 = vpop.xlane.xlu0 %2132
        %v2134 = vsel %vm2067, %v2113, 0.0
        %2135 = vadd.xlane.f32.xlu0 %v2134
        %v2136 = vpop.xlane.xlu0 %2135
        %v2137 = vsel %vm2067, %v2115, 0.0
        %2138 = vadd.xlane.f32.xlu0 %v2137
        %v2139 = vpop.xlane.xlu0 %2138
        %v2140 = vrcp.pop %v2118
        %v2141 = vrcp.pop %v2121
        %v2142 = vrcp.pop %v2124
        %v2143 = vrcp.pop %v2127
        %v2144 = vrcp.pop %v2130
        %v2145 = vrcp.pop %v2133
        %v2146 = vrcp.pop %v2136
        %v2147 = vrcp.pop %v2139
        %v2148 = vmul.f32 %v2101, %v2140
        %v2149 = vmul.f32 %v2103, %v2141
        %v2150 = vmul.f32 %v2105, %v2142
        %v2151 = vmul.f32 %v2107, %v2143
        %v2152 = vmul.f32 %v2109, %v2144
        %v2153 = vmul.f32 %v2111, %v2145
        %v2154 = vmul.f32 %v2113, %v2146
        %v2155 = vmul.f32 %v2115, %v2147
        %2156 = vxpose.xlu0.b32.start [1/16] %v1153, 128
        %2157 = vxpose.xlu0.b32.cont [2/16] 0.0, 128
        %2158 = vxpose.xlu0.b32.cont [3/16] 0.0, 128
        %2159 = vxpose.xlu0.b32.cont [4/16] 0.0, 128
        %2160 = vxpose.xlu0.b32.cont [5/16] 0.0, 128
        %2161 = vxpose.xlu0.b32.cont [6/16] 0.0, 128
        %2162 = vxpose.xlu0.b32.cont [7/16] 0.0, 128
        %2163 = vxpose.xlu0.b32.cont [8/16] 0.0, 128
        %2164 = vxpose.xlu0.b32.cont [9/16] 0.0, 128
        %2165 = vxpose.xlu0.b32.cont [10/16] 0.0, 128
        %2166 = vxpose.xlu0.b32.cont [11/16] 0.0, 128
        %2167 = vxpose.xlu0.b32.cont [12/16] 0.0, 128
        %2168 = vxpose.xlu0.b32.cont [13/16] 0.0, 128
        %2169 = vxpose.xlu0.b32.cont [14/16] 0.0, 128
        %2170 = vxpose.xlu0.b32.cont [15/16] 0.0, 128
        %2171 = vxpose.xlu0.b32.end [16/16] 0.0, 128
        %v2172 = vpop.trf.xlu0
        %v2173 = vpop.trf.xlu0
        %v2174 = vpop.trf.xlu0
        %v2175 = vpop.trf.xlu0
        %v2176 = vpop.trf.xlu0
        %v2177 = vpop.trf.xlu0
        %v2178 = vpop.trf.xlu0
        %v2179 = vpop.trf.xlu0
        %v2180 = vpop.trf.xlu0
        %v2181 = vpop.trf.xlu0
        %v2182 = vpop.trf.xlu0
        %v2183 = vpop.trf.xlu0
        %v2184 = vpop.trf.xlu0
        %v2185 = vpop.trf.xlu0
        %v2186 = vpop.trf.xlu0
        %v2187 = vpop.trf.xlu0
        %2188 = vxpose.xlu0.b32.start [1/16] %v1214, 128
        %2189 = vxpose.xlu0.b32.cont [2/16] 0.0, 128
        %2190 = vxpose.xlu0.b32.cont [3/16] 0.0, 128
        %2191 = vxpose.xlu0.b32.cont [4/16] 0.0, 128
        %2192 = vxpose.xlu0.b32.cont [5/16] 0.0, 128
        %2193 = vxpose.xlu0.b32.cont [6/16] 0.0, 128
        %2194 = vxpose.xlu0.b32.cont [7/16] 0.0, 128
        %2195 = vxpose.xlu0.b32.cont [8/16] 0.0, 128
        %2196 = vxpose.xlu0.b32.cont [9/16] 0.0, 128
        %2197 = vxpose.xlu0.b32.cont [10/16] 0.0, 128
        %2198 = vxpose.xlu0.b32.cont [11/16] 0.0, 128
        %2199 = vxpose.xlu0.b32.cont [12/16] 0.0, 128
        %2200 = vxpose.xlu0.b32.cont [13/16] 0.0, 128
        %2201 = vxpose.xlu0.b32.cont [14/16] 0.0, 128
        %2202 = vxpose.xlu0.b32.cont [15/16] 0.0, 128
        %2203 = vxpose.xlu0.b32.end [16/16] 0.0, 128
        %v2204 = vpop.trf.xlu0
        %v2205 = vpop.trf.xlu0
        %v2206 = vpop.trf.xlu0
        %v2207 = vpop.trf.xlu0
        %v2208 = vpop.trf.xlu0
        %v2209 = vpop.trf.xlu0
        %v2210 = vpop.trf.xlu0
        %v2211 = vpop.trf.xlu0
        %v2212 = vpop.trf.xlu0
        %v2213 = vpop.trf.xlu0
        %v2214 = vpop.trf.xlu0
        %v2215 = vpop.trf.xlu0
        %v2216 = vpop.trf.xlu0
        %v2217 = vpop.trf.xlu0
        %v2218 = vpop.trf.xlu0
        %v2219 = vpop.trf.xlu0
        %2220 = vxpose.xlu0.b32.start [1/16] %v1217, 128
        %2221 = vxpose.xlu0.b32.cont [2/16] 0.0, 128
        %2222 = vxpose.xlu0.b32.cont [3/16] 0.0, 128
        %2223 = vxpose.xlu0.b32.cont [4/16] 0.0, 128
        %2224 = vxpose.xlu0.b32.cont [5/16] 0.0, 128
        %2225 = vxpose.xlu0.b32.cont [6/16] 0.0, 128
        %2226 = vxpose.xlu0.b32.cont [7/16] 0.0, 128
        %2227 = vxpose.xlu0.b32.cont [8/16] 0.0, 128
        %2228 = vxpose.xlu0.b32.cont [9/16] 0.0, 128
        %2229 = vxpose.xlu0.b32.cont [10/16] 0.0, 128
        %2230 = vxpose.xlu0.b32.cont [11/16] 0.0, 128
        %2231 = vxpose.xlu0.b32.cont [12/16] 0.0, 128
        %2232 = vxpose.xlu0.b32.cont [13/16] 0.0, 128
        %2233 = vxpose.xlu0.b32.cont [14/16] 0.0, 128
        %2234 = vxpose.xlu0.b32.cont [15/16] 0.0, 128
        %2235 = vxpose.xlu0.b32.end [16/16] 0.0, 128
        %v2236 = vpop.trf.xlu0
        %v2237 = vpop.trf.xlu0
        %v2238 = vpop.trf.xlu0
        %v2239 = vpop.trf.xlu0
        %v2240 = vpop.trf.xlu0
        %v2241 = vpop.trf.xlu0
        %v2242 = vpop.trf.xlu0
        %v2243 = vpop.trf.xlu0
        %v2244 = vpop.trf.xlu0
        %v2245 = vpop.trf.xlu0
        %v2246 = vpop.trf.xlu0
        %v2247 = vpop.trf.xlu0
        %v2248 = vpop.trf.xlu0
        %v2249 = vpop.trf.xlu0
        %v2250 = vpop.trf.xlu0
        %v2251 = vpop.trf.xlu0
        %2252 = vxpose.xlu0.b32.start [1/16] %v1220, 128
        %2253 = vxpose.xlu0.b32.cont [2/16] 0.0, 128
        %2254 = vxpose.xlu0.b32.cont [3/16] 0.0, 128
        %2255 = vxpose.xlu0.b32.cont [4/16] 0.0, 128
        %2256 = vxpose.xlu0.b32.cont [5/16] 0.0, 128
        %2257 = vxpose.xlu0.b32.cont [6/16] 0.0, 128
        %2258 = vxpose.xlu0.b32.cont [7/16] 0.0, 128
        %2259 = vxpose.xlu0.b32.cont [8/16] 0.0, 128
        %2260 = vxpose.xlu0.b32.cont [9/16] 0.0, 128
        %2261 = vxpose.xlu0.b32.cont [10/16] 0.0, 128
        %2262 = vxpose.xlu0.b32.cont [11/16] 0.0, 128
        %2263 = vxpose.xlu0.b32.cont [12/16] 0.0, 128
        %2264 = vxpose.xlu0.b32.cont [13/16] 0.0, 128
        %2265 = vxpose.xlu0.b32.cont [14/16] 0.0, 128
        %2266 = vxpose.xlu0.b32.cont [15/16] 0.0, 128
        %2267 = vxpose.xlu0.b32.end [16/16] 0.0, 128
        %v2268 = vpop.trf.xlu0
        %v2269 = vpop.trf.xlu0
        %v2270 = vpop.trf.xlu0
        %v2271 = vpop.trf.xlu0
        %v2272 = vpop.trf.xlu0
        %v2273 = vpop.trf.xlu0
        %v2274 = vpop.trf.xlu0
        %v2275 = vpop.trf.xlu0
        %v2276 = vpop.trf.xlu0
        %v2277 = vpop.trf.xlu0
        %v2278 = vpop.trf.xlu0
        %v2279 = vpop.trf.xlu0
        %v2280 = vpop.trf.xlu0
        %v2281 = vpop.trf.xlu0
        %v2282 = vpop.trf.xlu0
        %v2283 = vpop.trf.xlu0
        %2284 = vxpose.xlu0.b32.start [1/16] %v1223, 128
        %2285 = vxpose.xlu0.b32.cont [2/16] 0.0, 128
        %2286 = vxpose.xlu0.b32.cont [3/16] 0.0, 128
        %2287 = vxpose.xlu0.b32.cont [4/16] 0.0, 128
        %2288 = vxpose.xlu0.b32.cont [5/16] 0.0, 128
        %2289 = vxpose.xlu0.b32.cont [6/16] 0.0, 128
        %2290 = vxpose.xlu0.b32.cont [7/16] 0.0, 128
        %2291 = vxpose.xlu0.b32.cont [8/16] 0.0, 128
        %2292 = vxpose.xlu0.b32.cont [9/16] 0.0, 128
        %2293 = vxpose.xlu0.b32.cont [10/16] 0.0, 128
        %2294 = vxpose.xlu0.b32.cont [11/16] 0.0, 128
        %2295 = vxpose.xlu0.b32.cont [12/16] 0.0, 128
        %2296 = vxpose.xlu0.b32.cont [13/16] 0.0, 128
        %2297 = vxpose.xlu0.b32.cont [14/16] 0.0, 128
        %2298 = vxpose.xlu0.b32.cont [15/16] 0.0, 128
        %2299 = vxpose.xlu0.b32.end [16/16] 0.0, 128
        %v2300 = vpop.trf.xlu0
        %v2301 = vpop.trf.xlu0
        %v2302 = vpop.trf.xlu0
        %v2303 = vpop.trf.xlu0
        %v2304 = vpop.trf.xlu0
        %v2305 = vpop.trf.xlu0
        %v2306 = vpop.trf.xlu0
        %v2307 = vpop.trf.xlu0
        %v2308 = vpop.trf.xlu0
        %v2309 = vpop.trf.xlu0
        %v2310 = vpop.trf.xlu0
        %v2311 = vpop.trf.xlu0
        %v2312 = vpop.trf.xlu0
        %v2313 = vpop.trf.xlu0
        %v2314 = vpop.trf.xlu0
        %v2315 = vpop.trf.xlu0
        %2316 = vxpose.xlu0.b32.start [1/16] %v1226, 128
        %2317 = vxpose.xlu0.b32.cont [2/16] 0.0, 128
        %2318 = vxpose.xlu0.b32.cont [3/16] 0.0, 128
        %2319 = vxpose.xlu0.b32.cont [4/16] 0.0, 128
        %2320 = vxpose.xlu0.b32.cont [5/16] 0.0, 128
        %2321 = vxpose.xlu0.b32.cont [6/16] 0.0, 128
        %2322 = vxpose.xlu0.b32.cont [7/16] 0.0, 128
        %2323 = vxpose.xlu0.b32.cont [8/16] 0.0, 128
        %2324 = vxpose.xlu0.b32.cont [9/16] 0.0, 128
        %2325 = vxpose.xlu0.b32.cont [10/16] 0.0, 128
        %2326 = vxpose.xlu0.b32.cont [11/16] 0.0, 128
        %2327 = vxpose.xlu0.b32.cont [12/16] 0.0, 128
        %2328 = vxpose.xlu0.b32.cont [13/16] 0.0, 128
        %2329 = vxpose.xlu0.b32.cont [14/16] 0.0, 128
        %2330 = vxpose.xlu0.b32.cont [15/16] 0.0, 128
        %2331 = vxpose.xlu0.b32.end [16/16] 0.0, 128
        %v2332 = vpop.trf.xlu0
        %v2333 = vpop.trf.xlu0
        %v2334 = vpop.trf.xlu0
        %v2335 = vpop.trf.xlu0
        %v2336 = vpop.trf.xlu0
        %v2337 = vpop.trf.xlu0
        %v2338 = vpop.trf.xlu0
        %v2339 = vpop.trf.xlu0
        %v2340 = vpop.trf.xlu0
        %v2341 = vpop.trf.xlu0
        %v2342 = vpop.trf.xlu0
        %v2343 = vpop.trf.xlu0
        %v2344 = vpop.trf.xlu0
        %v2345 = vpop.trf.xlu0
        %v2346 = vpop.trf.xlu0
        %v2347 = vpop.trf.xlu0
        %2348 = vxpose.xlu0.b32.start [1/16] %v1229, 128
        %2349 = vxpose.xlu0.b32.cont [2/16] 0.0, 128
        %2350 = vxpose.xlu0.b32.cont [3/16] 0.0, 128
        %2351 = vxpose.xlu0.b32.cont [4/16] 0.0, 128
        %2352 = vxpose.xlu0.b32.cont [5/16] 0.0, 128
        %2353 = vxpose.xlu0.b32.cont [6/16] 0.0, 128
        %2354 = vxpose.xlu0.b32.cont [7/16] 0.0, 128
        %2355 = vxpose.xlu0.b32.cont [8/16] 0.0, 128
        %2356 = vxpose.xlu0.b32.cont [9/16] 0.0, 128
        %2357 = vxpose.xlu0.b32.cont [10/16] 0.0, 128
        %2358 = vxpose.xlu0.b32.cont [11/16] 0.0, 128
        %2359 = vxpose.xlu0.b32.cont [12/16] 0.0, 128
        %2360 = vxpose.xlu0.b32.cont [13/16] 0.0, 128
        %2361 = vxpose.xlu0.b32.cont [14/16] 0.0, 128
        %2362 = vxpose.xlu0.b32.cont [15/16] 0.0, 128
        %2363 = vxpose.xlu0.b32.end [16/16] 0.0, 128
        %v2364 = vpop.trf.xlu0
        %v2365 = vpop.trf.xlu0
        %v2366 = vpop.trf.xlu0
        %v2367 = vpop.trf.xlu0
        %v2368 = vpop.trf.xlu0
        %v2369 = vpop.trf.xlu0
        %v2370 = vpop.trf.xlu0
        %v2371 = vpop.trf.xlu0
        %v2372 = vpop.trf.xlu0
        %v2373 = vpop.trf.xlu0
        %v2374 = vpop.trf.xlu0
        %v2375 = vpop.trf.xlu0
        %v2376 = vpop.trf.xlu0
        %v2377 = vpop.trf.xlu0
        %v2378 = vpop.trf.xlu0
        %v2379 = vpop.trf.xlu0
        %2380 = vxpose.xlu0.b32.start [1/16] %v1232, 128
        %2381 = vxpose.xlu0.b32.cont [2/16] 0.0, 128
        %2382 = vxpose.xlu0.b32.cont [3/16] 0.0, 128
        %2383 = vxpose.xlu0.b32.cont [4/16] 0.0, 128
        %2384 = vxpose.xlu0.b32.cont [5/16] 0.0, 128
        %2385 = vxpose.xlu0.b32.cont [6/16] 0.0, 128
        %2386 = vxpose.xlu0.b32.cont [7/16] 0.0, 128
        %2387 = vxpose.xlu0.b32.cont [8/16] 0.0, 128
        %2388 = vxpose.xlu0.b32.cont [9/16] 0.0, 128
        %2389 = vxpose.xlu0.b32.cont [10/16] 0.0, 128
        %2390 = vxpose.xlu0.b32.cont [11/16] 0.0, 128
        %2391 = vxpose.xlu0.b32.cont [12/16] 0.0, 128
        %2392 = vxpose.xlu0.b32.cont [13/16] 0.0, 128
        %2393 = vxpose.xlu0.b32.cont [14/16] 0.0, 128
        %2394 = vxpose.xlu0.b32.cont [15/16] 0.0, 128
        %2395 = vxpose.xlu0.b32.end [16/16] 0.0, 128
        %v2396 = vpop.trf.xlu0
        %v2397 = vpop.trf.xlu0
        %v2398 = vpop.trf.xlu0
        %v2399 = vpop.trf.xlu0
        %v2400 = vpop.trf.xlu0
        %v2401 = vpop.trf.xlu0
        %v2402 = vpop.trf.xlu0
        %v2403 = vpop.trf.xlu0
        %v2404 = vpop.trf.xlu0
        %v2405 = vpop.trf.xlu0
        %v2406 = vpop.trf.xlu0
        %v2407 = vpop.trf.xlu0
        %v2408 = vpop.trf.xlu0
        %v2409 = vpop.trf.xlu0
        %v2410 = vpop.trf.xlu0
        %v2411 = vpop.trf.xlu0
        %v2413 = vsel %vm2067, %v2172, 0
        %v2416 = vsel %vm2067, %v2173, 0
        %v2419 = vsel %vm2067, %v2148, 0
        %2421 = vmatprep.subr.mxu0 0.0
        %2422 = vmatpush1.xpose.msra.mxu0 0.0
        %2423 = vmatprep.subr.mxu0 0.0
        %2424 = vmatpush1.xpose.msra.mxu0 0.0
        %2425 = vmatprep.subr.mxu0 0.0
        %2426 = vmatpush1.xpose.msra.mxu0 0.0
        %2427 = vmatprep.subr.mxu0 0.0
        %2428 = vmatpush1.xpose.msra.mxu0 0.0
        %2429 = vmatprep.subr.mxu0 0.0
        %2430 = vmatpush1.xpose.msra.mxu0 0.0
        %2431 = vmatprep.subr.mxu0 0.0
        %2432 = vmatpush1.xpose.msra.mxu0 0.0
        %2433 = vmatprep.subr.mxu0 0.0
        %2434 = vmatpush1.xpose.msra.mxu0 0.0
        %2435 = vmatprep.subr.mxu0 0.0
        %2436 = vmatpush1.xpose.msra.mxu0 0.0
        %2437 = vmatprep.subr.mxu0 0.0
        %2438 = vmatpush1.xpose.msra.mxu0 0.0
        %2439 = vmatprep.subr.mxu0 0.0
        %2440 = vmatpush1.xpose.msra.mxu0 0.0
        %2441 = vmatprep.subr.mxu0 0.0
        %2442 = vmatpush1.xpose.msra.mxu0 0.0
        %2443 = vmatprep.subr.mxu0 0.0
        %2444 = vmatpush1.xpose.msra.mxu0 0.0
        %2445 = vmatprep.subr.mxu0 0.0
        %2446 = vmatpush1.xpose.msra.mxu0 0.0
        %2447 = vmatprep.subr.mxu0 0.0
        %2448 = vmatpush1.xpose.msra.mxu0 0.0
        %2449 = vmatprep.subr.mxu0 0.0
        %2450 = vmatpush1.xpose.msra.mxu0 0.0
        %2451 = vmatprep.subr.mxu0 0.0
        %2452 = vmatpush1.xpose.msra.mxu0 %v2419
        %2453 = vmatprep.subr.mxu0 0.0
        %2454 = vmatpush2.xpose.msra.mxu0 0.0
        %2455 = vmatprep.subr.mxu0 0.0
        %2456 = vmatpush2.xpose.msra.mxu0 0.0
        %2457 = vmatprep.subr.mxu0 0.0
        %2458 = vmatpush2.xpose.msra.mxu0 0.0
        %2459 = vmatprep.subr.mxu0 0.0
        %2460 = vmatpush2.xpose.msra.mxu0 0.0
        %2461 = vmatprep.subr.mxu0 0.0
        %2462 = vmatpush2.xpose.msra.mxu0 0.0
        %2463 = vmatprep.subr.mxu0 0.0
        %2464 = vmatpush2.xpose.msra.mxu0 0.0
        %2465 = vmatprep.subr.mxu0 0.0
        %2466 = vmatpush2.xpose.msra.mxu0 0.0
        %2467 = vmatprep.subr.mxu0 0.0
        %2468 = vmatpush2.xpose.msra.mxu0 0.0
        %2469 = vmatprep.subr.mxu0 0.0
        %2470 = vmatpush2.xpose.msra.mxu0 0.0
        %2471 = vmatprep.subr.mxu0 0.0
        %2472 = vmatpush2.xpose.msra.mxu0 0.0
        %2473 = vmatprep.subr.mxu0 0.0
        %2474 = vmatpush2.xpose.msra.mxu0 0.0
        %2475 = vmatprep.subr.mxu0 0.0
        %2476 = vmatpush2.xpose.msra.mxu0 0.0
        %2477 = vmatprep.subr.mxu0 0.0
        %2478 = vmatpush2.xpose.msra.mxu0 0.0
        %2479 = vmatprep.subr.mxu0 0.0
        %2480 = vmatpush2.xpose.msra.mxu0 0.0
        %2481 = vmatprep.subr.mxu0 0.0
        %2482 = vmatpush2.xpose.msra.mxu0 0.0
        %2483 = vmatprep.subr.mxu0 0.0
        %2484 = vmatpush2.xpose.msra.mxu0 0.0
        %2485 = vmatprep.mubr.f32.mxu0 0.0
        %2486 = vmatmul.mubr.f32.gmra.mxu0 %v2413
        %v2487 = vpop.f32.mrf.mxu0
        %v2488 = vadd.f32 0.0, %v2487
        %v2489 = vpop.f32.mrf.mxu0
        %2490 = vmatprep.mubr.f32.mxu0 0.0
        %2491 = vmatmul.mubr.f32.gmra.mxu0 %v2416
        %v2492 = vpop.f32.mrf.mxu0
        %v2493 = vadd.f32 0.0, %v2492
        %v2494 = vpop.f32.mrf.mxu0
        %2495 = vdwg.mxu0
        %v2497 = vsel %vm2067, %v2204, 0
        %v2500 = vsel %vm2067, %v2205, 0
        %v2503 = vsel %vm2067, %v2149, 0
        %2505 = vmatprep.subr.mxu0 0.0
        %2506 = vmatpush1.xpose.msra.mxu0 0.0
        %2507 = vmatprep.subr.mxu0 0.0
        %2508 = vmatpush1.xpose.msra.mxu0 0.0
        %2509 = vmatprep.subr.mxu0 0.0
        %2510 = vmatpush1.xpose.msra.mxu0 0.0
        %2511 = vmatprep.subr.mxu0 0.0
        %2512 = vmatpush1.xpose.msra.mxu0 0.0
        %2513 = vmatprep.subr.mxu0 0.0
        %2514 = vmatpush1.xpose.msra.mxu0 0.0
        %2515 = vmatprep.subr.mxu0 0.0
        %2516 = vmatpush1.xpose.msra.mxu0 0.0
        %2517 = vmatprep.subr.mxu0 0.0
        %2518 = vmatpush1.xpose.msra.mxu0 0.0
        %2519 = vmatprep.subr.mxu0 0.0
        %2520 = vmatpush1.xpose.msra.mxu0 0.0
        %2521 = vmatprep.subr.mxu0 0.0
        %2522 = vmatpush1.xpose.msra.mxu0 0.0
        %2523 = vmatprep.subr.mxu0 0.0
        %2524 = vmatpush1.xpose.msra.mxu0 0.0
        %2525 = vmatprep.subr.mxu0 0.0
        %2526 = vmatpush1.xpose.msra.mxu0 0.0
        %2527 = vmatprep.subr.mxu0 0.0
        %2528 = vmatpush1.xpose.msra.mxu0 0.0
        %2529 = vmatprep.subr.mxu0 0.0
        %2530 = vmatpush1.xpose.msra.mxu0 0.0
        %2531 = vmatprep.subr.mxu0 0.0
        %2532 = vmatpush1.xpose.msra.mxu0 0.0
        %2533 = vmatprep.subr.mxu0 0.0
        %2534 = vmatpush1.xpose.msra.mxu0 0.0
        %2535 = vmatprep.subr.mxu0 0.0
        %2536 = vmatpush1.xpose.msra.mxu0 %v2503
        %2537 = vmatprep.subr.mxu0 0.0
        %2538 = vmatpush2.xpose.msra.mxu0 0.0
        %2539 = vmatprep.subr.mxu0 0.0
        %2540 = vmatpush2.xpose.msra.mxu0 0.0
        %2541 = vmatprep.subr.mxu0 0.0
        %2542 = vmatpush2.xpose.msra.mxu0 0.0
        %2543 = vmatprep.subr.mxu0 0.0
        %2544 = vmatpush2.xpose.msra.mxu0 0.0
        %2545 = vmatprep.subr.mxu0 0.0
        %2546 = vmatpush2.xpose.msra.mxu0 0.0
        %2547 = vmatprep.subr.mxu0 0.0
        %2548 = vmatpush2.xpose.msra.mxu0 0.0
        %2549 = vmatprep.subr.mxu0 0.0
        %2550 = vmatpush2.xpose.msra.mxu0 0.0
        %2551 = vmatprep.subr.mxu0 0.0
        %2552 = vmatpush2.xpose.msra.mxu0 0.0
        %2553 = vmatprep.subr.mxu0 0.0
        %2554 = vmatpush2.xpose.msra.mxu0 0.0
        %2555 = vmatprep.subr.mxu0 0.0
        %2556 = vmatpush2.xpose.msra.mxu0 0.0
        %2557 = vmatprep.subr.mxu0 0.0
        %2558 = vmatpush2.xpose.msra.mxu0 0.0
        %2559 = vmatprep.subr.mxu0 0.0
        %2560 = vmatpush2.xpose.msra.mxu0 0.0
        %2561 = vmatprep.subr.mxu0 0.0
        %2562 = vmatpush2.xpose.msra.mxu0 0.0
        %2563 = vmatprep.subr.mxu0 0.0
        %2564 = vmatpush2.xpose.msra.mxu0 0.0
        %2565 = vmatprep.subr.mxu0 0.0
        %2566 = vmatpush2.xpose.msra.mxu0 0.0
        %2567 = vmatprep.subr.mxu0 0.0
        %2568 = vmatpush2.xpose.msra.mxu0 0.0
        %2569 = vmatprep.mubr.f32.mxu0 0.0
        %2570 = vmatmul.mubr.f32.gmra.mxu0 %v2497
        %v2571 = vpop.f32.mrf.mxu0
        %v2572 = vadd.f32 0.0, %v2571
        %v2573 = vpop.f32.mrf.mxu0
        %2574 = vmatprep.mubr.f32.mxu0 0.0
        %2575 = vmatmul.mubr.f32.gmra.mxu0 %v2500
        %v2576 = vpop.f32.mrf.mxu0
        %v2577 = vadd.f32 0.0, %v2576
        %v2578 = vpop.f32.mrf.mxu0
        %2579 = vdwg.mxu0
        %v2581 = vsel %vm2067, %v2236, 0
        %v2584 = vsel %vm2067, %v2237, 0
        %v2587 = vsel %vm2067, %v2150, 0
        %2589 = vmatprep.subr.mxu0 0.0
        %2590 = vmatpush1.xpose.msra.mxu0 0.0
        %2591 = vmatprep.subr.mxu0 0.0
        %2592 = vmatpush1.xpose.msra.mxu0 0.0
        %2593 = vmatprep.subr.mxu0 0.0
        %2594 = vmatpush1.xpose.msra.mxu0 0.0
        %2595 = vmatprep.subr.mxu0 0.0
        %2596 = vmatpush1.xpose.msra.mxu0 0.0
        %2597 = vmatprep.subr.mxu0 0.0
        %2598 = vmatpush1.xpose.msra.mxu0 0.0
        %2599 = vmatprep.subr.mxu0 0.0
        %2600 = vmatpush1.xpose.msra.mxu0 0.0
        %2601 = vmatprep.subr.mxu0 0.0
        %2602 = vmatpush1.xpose.msra.mxu0 0.0
        %2603 = vmatprep.subr.mxu0 0.0
        %2604 = vmatpush1.xpose.msra.mxu0 0.0
        %2605 = vmatprep.subr.mxu0 0.0
        %2606 = vmatpush1.xpose.msra.mxu0 0.0
        %2607 = vmatprep.subr.mxu0 0.0
        %2608 = vmatpush1.xpose.msra.mxu0 0.0
        %2609 = vmatprep.subr.mxu0 0.0
        %2610 = vmatpush1.xpose.msra.mxu0 0.0
        %2611 = vmatprep.subr.mxu0 0.0
        %2612 = vmatpush1.xpose.msra.mxu0 0.0
        %2613 = vmatprep.subr.mxu0 0.0
        %2614 = vmatpush1.xpose.msra.mxu0 0.0
        %2615 = vmatprep.subr.mxu0 0.0
        %2616 = vmatpush1.xpose.msra.mxu0 0.0
        %2617 = vmatprep.subr.mxu0 0.0
        %2618 = vmatpush1.xpose.msra.mxu0 0.0
        %2619 = vmatprep.subr.mxu0 0.0
        %2620 = vmatpush1.xpose.msra.mxu0 %v2587
        %2621 = vmatprep.subr.mxu0 0.0
        %2622 = vmatpush2.xpose.msra.mxu0 0.0
        %2623 = vmatprep.subr.mxu0 0.0
        %2624 = vmatpush2.xpose.msra.mxu0 0.0
        %2625 = vmatprep.subr.mxu0 0.0
        %2626 = vmatpush2.xpose.msra.mxu0 0.0
        %2627 = vmatprep.subr.mxu0 0.0
        %2628 = vmatpush2.xpose.msra.mxu0 0.0
        %2629 = vmatprep.subr.mxu0 0.0
        %2630 = vmatpush2.xpose.msra.mxu0 0.0
        %2631 = vmatprep.subr.mxu0 0.0
        %2632 = vmatpush2.xpose.msra.mxu0 0.0
        %2633 = vmatprep.subr.mxu0 0.0
        %2634 = vmatpush2.xpose.msra.mxu0 0.0
        %2635 = vmatprep.subr.mxu0 0.0
        %2636 = vmatpush2.xpose.msra.mxu0 0.0
        %2637 = vmatprep.subr.mxu0 0.0
        %2638 = vmatpush2.xpose.msra.mxu0 0.0
        %2639 = vmatprep.subr.mxu0 0.0
        %2640 = vmatpush2.xpose.msra.mxu0 0.0
        %2641 = vmatprep.subr.mxu0 0.0
        %2642 = vmatpush2.xpose.msra.mxu0 0.0
        %2643 = vmatprep.subr.mxu0 0.0
        %2644 = vmatpush2.xpose.msra.mxu0 0.0
        %2645 = vmatprep.subr.mxu0 0.0
        %2646 = vmatpush2.xpose.msra.mxu0 0.0
        %2647 = vmatprep.subr.mxu0 0.0
        %2648 = vmatpush2.xpose.msra.mxu0 0.0
        %2649 = vmatprep.subr.mxu0 0.0
        %2650 = vmatpush2.xpose.msra.mxu0 0.0
        %2651 = vmatprep.subr.mxu0 0.0
        %2652 = vmatpush2.xpose.msra.mxu0 0.0
        %2653 = vmatprep.mubr.f32.mxu0 0.0
        %2654 = vmatmul.mubr.f32.gmra.mxu0 %v2581
        %v2655 = vpop.f32.mrf.mxu0
        %v2656 = vadd.f32 0.0, %v2655
        %v2657 = vpop.f32.mrf.mxu0
        %2658 = vmatprep.mubr.f32.mxu0 0.0
        %2659 = vmatmul.mubr.f32.gmra.mxu0 %v2584
        %v2660 = vpop.f32.mrf.mxu0
        %v2661 = vadd.f32 0.0, %v2660
        %v2662 = vpop.f32.mrf.mxu0
        %2663 = vdwg.mxu0
        %v2665 = vsel %vm2067, %v2268, 0
        %v2668 = vsel %vm2067, %v2269, 0
        %v2671 = vsel %vm2067, %v2151, 0
        %2673 = vmatprep.subr.mxu0 0.0
        %2674 = vmatpush1.xpose.msra.mxu0 0.0
        %2675 = vmatprep.subr.mxu0 0.0
        %2676 = vmatpush1.xpose.msra.mxu0 0.0
        %2677 = vmatprep.subr.mxu0 0.0
        %2678 = vmatpush1.xpose.msra.mxu0 0.0
        %2679 = vmatprep.subr.mxu0 0.0
        %2680 = vmatpush1.xpose.msra.mxu0 0.0
        %2681 = vmatprep.subr.mxu0 0.0
        %2682 = vmatpush1.xpose.msra.mxu0 0.0
        %2683 = vmatprep.subr.mxu0 0.0
        %2684 = vmatpush1.xpose.msra.mxu0 0.0
        %2685 = vmatprep.subr.mxu0 0.0
        %2686 = vmatpush1.xpose.msra.mxu0 0.0
        %2687 = vmatprep.subr.mxu0 0.0
        %2688 = vmatpush1.xpose.msra.mxu0 0.0
        %2689 = vmatprep.subr.mxu0 0.0
        %2690 = vmatpush1.xpose.msra.mxu0 0.0
        %2691 = vmatprep.subr.mxu0 0.0
        %2692 = vmatpush1.xpose.msra.mxu0 0.0
        %2693 = vmatprep.subr.mxu0 0.0
        %2694 = vmatpush1.xpose.msra.mxu0 0.0
        %2695 = vmatprep.subr.mxu0 0.0
        %2696 = vmatpush1.xpose.msra.mxu0 0.0
        %2697 = vmatprep.subr.mxu0 0.0
        %2698 = vmatpush1.xpose.msra.mxu0 0.0
        %2699 = vmatprep.subr.mxu0 0.0
        %2700 = vmatpush1.xpose.msra.mxu0 0.0
        %2701 = vmatprep.subr.mxu0 0.0
        %2702 = vmatpush1.xpose.msra.mxu0 0.0
        %2703 = vmatprep.subr.mxu0 0.0
        %2704 = vmatpush1.xpose.msra.mxu0 %v2671
        %2705 = vmatprep.subr.mxu0 0.0
        %2706 = vmatpush2.xpose.msra.mxu0 0.0
        %2707 = vmatprep.subr.mxu0 0.0
        %2708 = vmatpush2.xpose.msra.mxu0 0.0
        %2709 = vmatprep.subr.mxu0 0.0
        %2710 = vmatpush2.xpose.msra.mxu0 0.0
        %2711 = vmatprep.subr.mxu0 0.0
        %2712 = vmatpush2.xpose.msra.mxu0 0.0
        %2713 = vmatprep.subr.mxu0 0.0
        %2714 = vmatpush2.xpose.msra.mxu0 0.0
        %2715 = vmatprep.subr.mxu0 0.0
        %2716 = vmatpush2.xpose.msra.mxu0 0.0
        %2717 = vmatprep.subr.mxu0 0.0
        %2718 = vmatpush2.xpose.msra.mxu0 0.0
        %2719 = vmatprep.subr.mxu0 0.0
        %2720 = vmatpush2.xpose.msra.mxu0 0.0
        %2721 = vmatprep.subr.mxu0 0.0
        %2722 = vmatpush2.xpose.msra.mxu0 0.0
        %2723 = vmatprep.subr.mxu0 0.0
        %2724 = vmatpush2.xpose.msra.mxu0 0.0
        %2725 = vmatprep.subr.mxu0 0.0
        %2726 = vmatpush2.xpose.msra.mxu0 0.0
        %2727 = vmatprep.subr.mxu0 0.0
        %2728 = vmatpush2.xpose.msra.mxu0 0.0
        %2729 = vmatprep.subr.mxu0 0.0
        %2730 = vmatpush2.xpose.msra.mxu0 0.0
        %2731 = vmatprep.subr.mxu0 0.0
        %2732 = vmatpush2.xpose.msra.mxu0 0.0
        %2733 = vmatprep.subr.mxu0 0.0
        %2734 = vmatpush2.xpose.msra.mxu0 0.0
        %2735 = vmatprep.subr.mxu0 0.0
        %2736 = vmatpush2.xpose.msra.mxu0 0.0
        %2737 = vmatprep.mubr.f32.mxu0 0.0
        %2738 = vmatmul.mubr.f32.gmra.mxu0 %v2665
        %v2739 = vpop.f32.mrf.mxu0
        %v2740 = vadd.f32 0.0, %v2739
        %v2741 = vpop.f32.mrf.mxu0
        %2742 = vmatprep.mubr.f32.mxu0 0.0
        %2743 = vmatmul.mubr.f32.gmra.mxu0 %v2668
        %v2744 = vpop.f32.mrf.mxu0
        %v2745 = vadd.f32 0.0, %v2744
        %v2746 = vpop.f32.mrf.mxu0
        %2747 = vdwg.mxu0
        %v2749 = vsel %vm2067, %v2300, 0
        %v2752 = vsel %vm2067, %v2301, 0
        %v2755 = vsel %vm2067, %v2152, 0
        %2757 = vmatprep.subr.mxu0 0.0
        %2758 = vmatpush1.xpose.msra.mxu0 0.0
        %2759 = vmatprep.subr.mxu0 0.0
        %2760 = vmatpush1.xpose.msra.mxu0 0.0
        %2761 = vmatprep.subr.mxu0 0.0
        %2762 = vmatpush1.xpose.msra.mxu0 0.0
        %2763 = vmatprep.subr.mxu0 0.0
        %2764 = vmatpush1.xpose.msra.mxu0 0.0
        %2765 = vmatprep.subr.mxu0 0.0
        %2766 = vmatpush1.xpose.msra.mxu0 0.0
        %2767 = vmatprep.subr.mxu0 0.0
        %2768 = vmatpush1.xpose.msra.mxu0 0.0
        %2769 = vmatprep.subr.mxu0 0.0
        %2770 = vmatpush1.xpose.msra.mxu0 0.0
        %2771 = vmatprep.subr.mxu0 0.0
        %2772 = vmatpush1.xpose.msra.mxu0 0.0
        %2773 = vmatprep.subr.mxu0 0.0
        %2774 = vmatpush1.xpose.msra.mxu0 0.0
        %2775 = vmatprep.subr.mxu0 0.0
        %2776 = vmatpush1.xpose.msra.mxu0 0.0
        %2777 = vmatprep.subr.mxu0 0.0
        %2778 = vmatpush1.xpose.msra.mxu0 0.0
        %2779 = vmatprep.subr.mxu0 0.0
        %2780 = vmatpush1.xpose.msra.mxu0 0.0
        %2781 = vmatprep.subr.mxu0 0.0
        %2782 = vmatpush1.xpose.msra.mxu0 0.0
        %2783 = vmatprep.subr.mxu0 0.0
        %2784 = vmatpush1.xpose.msra.mxu0 0.0
        %2785 = vmatprep.subr.mxu0 0.0
        %2786 = vmatpush1.xpose.msra.mxu0 0.0
        %2787 = vmatprep.subr.mxu0 0.0
        %2788 = vmatpush1.xpose.msra.mxu0 %v2755
        %2789 = vmatprep.subr.mxu0 0.0
        %2790 = vmatpush2.xpose.msra.mxu0 0.0
        %2791 = vmatprep.subr.mxu0 0.0
        %2792 = vmatpush2.xpose.msra.mxu0 0.0
        %2793 = vmatprep.subr.mxu0 0.0
        %2794 = vmatpush2.xpose.msra.mxu0 0.0
        %2795 = vmatprep.subr.mxu0 0.0
        %2796 = vmatpush2.xpose.msra.mxu0 0.0
        %2797 = vmatprep.subr.mxu0 0.0
        %2798 = vmatpush2.xpose.msra.mxu0 0.0
        %2799 = vmatprep.subr.mxu0 0.0
        %2800 = vmatpush2.xpose.msra.mxu0 0.0
        %2801 = vmatprep.subr.mxu0 0.0
        %2802 = vmatpush2.xpose.msra.mxu0 0.0
        %2803 = vmatprep.subr.mxu0 0.0
        %2804 = vmatpush2.xpose.msra.mxu0 0.0
        %2805 = vmatprep.subr.mxu0 0.0
        %2806 = vmatpush2.xpose.msra.mxu0 0.0
        %2807 = vmatprep.subr.mxu0 0.0
        %2808 = vmatpush2.xpose.msra.mxu0 0.0
        %2809 = vmatprep.subr.mxu0 0.0
        %2810 = vmatpush2.xpose.msra.mxu0 0.0
        %2811 = vmatprep.subr.mxu0 0.0
        %2812 = vmatpush2.xpose.msra.mxu0 0.0
        %2813 = vmatprep.subr.mxu0 0.0
        %2814 = vmatpush2.xpose.msra.mxu0 0.0
        %2815 = vmatprep.subr.mxu0 0.0
        %2816 = vmatpush2.xpose.msra.mxu0 0.0
        %2817 = vmatprep.subr.mxu0 0.0
        %2818 = vmatpush2.xpose.msra.mxu0 0.0
        %2819 = vmatprep.subr.mxu0 0.0
        %2820 = vmatpush2.xpose.msra.mxu0 0.0
        %2821 = vmatprep.mubr.f32.mxu0 0.0
        %2822 = vmatmul.mubr.f32.gmra.mxu0 %v2749
        %v2823 = vpop.f32.mrf.mxu0
        %v2824 = vadd.f32 0.0, %v2823
        %v2825 = vpop.f32.mrf.mxu0
        %2826 = vmatprep.mubr.f32.mxu0 0.0
        %2827 = vmatmul.mubr.f32.gmra.mxu0 %v2752
        %v2828 = vpop.f32.mrf.mxu0
        %v2829 = vadd.f32 0.0, %v2828
        %v2830 = vpop.f32.mrf.mxu0
        %2831 = vdwg.mxu0
        %v2833 = vsel %vm2067, %v2332, 0
        %v2836 = vsel %vm2067, %v2333, 0
        %v2839 = vsel %vm2067, %v2153, 0
        %2841 = vmatprep.subr.mxu0 0.0
        %2842 = vmatpush1.xpose.msra.mxu0 0.0
        %2843 = vmatprep.subr.mxu0 0.0
        %2844 = vmatpush1.xpose.msra.mxu0 0.0
        %2845 = vmatprep.subr.mxu0 0.0
        %2846 = vmatpush1.xpose.msra.mxu0 0.0
        %2847 = vmatprep.subr.mxu0 0.0
        %2848 = vmatpush1.xpose.msra.mxu0 0.0
        %2849 = vmatprep.subr.mxu0 0.0
        %2850 = vmatpush1.xpose.msra.mxu0 0.0
        %2851 = vmatprep.subr.mxu0 0.0
        %2852 = vmatpush1.xpose.msra.mxu0 0.0
        %2853 = vmatprep.subr.mxu0 0.0
        %2854 = vmatpush1.xpose.msra.mxu0 0.0
        %2855 = vmatprep.subr.mxu0 0.0
        %2856 = vmatpush1.xpose.msra.mxu0 0.0
        %2857 = vmatprep.subr.mxu0 0.0
        %2858 = vmatpush1.xpose.msra.mxu0 0.0
        %2859 = vmatprep.subr.mxu0 0.0
        %2860 = vmatpush1.xpose.msra.mxu0 0.0
        %2861 = vmatprep.subr.mxu0 0.0
        %2862 = vmatpush1.xpose.msra.mxu0 0.0
        %2863 = vmatprep.subr.mxu0 0.0
        %2864 = vmatpush1.xpose.msra.mxu0 0.0
        %2865 = vmatprep.subr.mxu0 0.0
        %2866 = vmatpush1.xpose.msra.mxu0 0.0
        %2867 = vmatprep.subr.mxu0 0.0
        %2868 = vmatpush1.xpose.msra.mxu0 0.0
        %2869 = vmatprep.subr.mxu0 0.0
        %2870 = vmatpush1.xpose.msra.mxu0 0.0
        %2871 = vmatprep.subr.mxu0 0.0
        %2872 = vmatpush1.xpose.msra.mxu0 %v2839
        %2873 = vmatprep.subr.mxu0 0.0
        %2874 = vmatpush2.xpose.msra.mxu0 0.0
        %2875 = vmatprep.subr.mxu0 0.0
        %2876 = vmatpush2.xpose.msra.mxu0 0.0
        %2877 = vmatprep.subr.mxu0 0.0
        %2878 = vmatpush2.xpose.msra.mxu0 0.0
        %2879 = vmatprep.subr.mxu0 0.0
        %2880 = vmatpush2.xpose.msra.mxu0 0.0
        %2881 = vmatprep.subr.mxu0 0.0
        %2882 = vmatpush2.xpose.msra.mxu0 0.0
        %2883 = vmatprep.subr.mxu0 0.0
        %2884 = vmatpush2.xpose.msra.mxu0 0.0
        %2885 = vmatprep.subr.mxu0 0.0
        %2886 = vmatpush2.xpose.msra.mxu0 0.0
        %2887 = vmatprep.subr.mxu0 0.0
        %2888 = vmatpush2.xpose.msra.mxu0 0.0
        %2889 = vmatprep.subr.mxu0 0.0
        %2890 = vmatpush2.xpose.msra.mxu0 0.0
        %2891 = vmatprep.subr.mxu0 0.0
        %2892 = vmatpush2.xpose.msra.mxu0 0.0
        %2893 = vmatprep.subr.mxu0 0.0
        %2894 = vmatpush2.xpose.msra.mxu0 0.0
        %2895 = vmatprep.subr.mxu0 0.0
        %2896 = vmatpush2.xpose.msra.mxu0 0.0
        %2897 = vmatprep.subr.mxu0 0.0
        %2898 = vmatpush2.xpose.msra.mxu0 0.0
        %2899 = vmatprep.subr.mxu0 0.0
        %2900 = vmatpush2.xpose.msra.mxu0 0.0
        %2901 = vmatprep.subr.mxu0 0.0
        %2902 = vmatpush2.xpose.msra.mxu0 0.0
        %2903 = vmatprep.subr.mxu0 0.0
        %2904 = vmatpush2.xpose.msra.mxu0 0.0
        %2905 = vmatprep.mubr.f32.mxu0 0.0
        %2906 = vmatmul.mubr.f32.gmra.mxu0 %v2833
        %v2907 = vpop.f32.mrf.mxu0
        %v2908 = vadd.f32 0.0, %v2907
        %v2909 = vpop.f32.mrf.mxu0
        %2910 = vmatprep.mubr.f32.mxu0 0.0
        %2911 = vmatmul.mubr.f32.gmra.mxu0 %v2836
        %v2912 = vpop.f32.mrf.mxu0
        %v2913 = vadd.f32 0.0, %v2912
        %v2914 = vpop.f32.mrf.mxu0
        %2915 = vdwg.mxu0
        %v2917 = vsel %vm2067, %v2364, 0
        %v2920 = vsel %vm2067, %v2365, 0
        %v2923 = vsel %vm2067, %v2154, 0
        %2925 = vmatprep.subr.mxu0 0.0
        %2926 = vmatpush1.xpose.msra.mxu0 0.0
        %2927 = vmatprep.subr.mxu0 0.0
        %2928 = vmatpush1.xpose.msra.mxu0 0.0
        %2929 = vmatprep.subr.mxu0 0.0
        %2930 = vmatpush1.xpose.msra.mxu0 0.0
        %2931 = vmatprep.subr.mxu0 0.0
        %2932 = vmatpush1.xpose.msra.mxu0 0.0
        %2933 = vmatprep.subr.mxu0 0.0
        %2934 = vmatpush1.xpose.msra.mxu0 0.0
        %2935 = vmatprep.subr.mxu0 0.0
        %2936 = vmatpush1.xpose.msra.mxu0 0.0
        %2937 = vmatprep.subr.mxu0 0.0
        %2938 = vmatpush1.xpose.msra.mxu0 0.0
        %2939 = vmatprep.subr.mxu0 0.0
        %2940 = vmatpush1.xpose.msra.mxu0 0.0
        %2941 = vmatprep.subr.mxu0 0.0
        %2942 = vmatpush1.xpose.msra.mxu0 0.0
        %2943 = vmatprep.subr.mxu0 0.0
        %2944 = vmatpush1.xpose.msra.mxu0 0.0
        %2945 = vmatprep.subr.mxu0 0.0
        %2946 = vmatpush1.xpose.msra.mxu0 0.0
        %2947 = vmatprep.subr.mxu0 0.0
        %2948 = vmatpush1.xpose.msra.mxu0 0.0
        %2949 = vmatprep.subr.mxu0 0.0
        %2950 = vmatpush1.xpose.msra.mxu0 0.0
        %2951 = vmatprep.subr.mxu0 0.0
        %2952 = vmatpush1.xpose.msra.mxu0 0.0
        %2953 = vmatprep.subr.mxu0 0.0
        %2954 = vmatpush1.xpose.msra.mxu0 0.0
        %2955 = vmatprep.subr.mxu0 0.0
        %2956 = vmatpush1.xpose.msra.mxu0 %v2923
        %2957 = vmatprep.subr.mxu0 0.0
        %2958 = vmatpush2.xpose.msra.mxu0 0.0
        %2959 = vmatprep.subr.mxu0 0.0
        %2960 = vmatpush2.xpose.msra.mxu0 0.0
        %2961 = vmatprep.subr.mxu0 0.0
        %2962 = vmatpush2.xpose.msra.mxu0 0.0
        %2963 = vmatprep.subr.mxu0 0.0
        %2964 = vmatpush2.xpose.msra.mxu0 0.0
        %2965 = vmatprep.subr.mxu0 0.0
        %2966 = vmatpush2.xpose.msra.mxu0 0.0
        %2967 = vmatprep.subr.mxu0 0.0
        %2968 = vmatpush2.xpose.msra.mxu0 0.0
        %2969 = vmatprep.subr.mxu0 0.0
        %2970 = vmatpush2.xpose.msra.mxu0 0.0
        %2971 = vmatprep.subr.mxu0 0.0
        %2972 = vmatpush2.xpose.msra.mxu0 0.0
        %2973 = vmatprep.subr.mxu0 0.0
        %2974 = vmatpush2.xpose.msra.mxu0 0.0
        %2975 = vmatprep.subr.mxu0 0.0
        %2976 = vmatpush2.xpose.msra.mxu0 0.0
        %2977 = vmatprep.subr.mxu0 0.0
        %2978 = vmatpush2.xpose.msra.mxu0 0.0
        %2979 = vmatprep.subr.mxu0 0.0
        %2980 = vmatpush2.xpose.msra.mxu0 0.0
        %2981 = vmatprep.subr.mxu0 0.0
        %2982 = vmatpush2.xpose.msra.mxu0 0.0
        %2983 = vmatprep.subr.mxu0 0.0
        %2984 = vmatpush2.xpose.msra.mxu0 0.0
        %2985 = vmatprep.subr.mxu0 0.0
        %2986 = vmatpush2.xpose.msra.mxu0 0.0
        %2987 = vmatprep.subr.mxu0 0.0
        %2988 = vmatpush2.xpose.msra.mxu0 0.0
        %2989 = vmatprep.mubr.f32.mxu0 0.0
        %2990 = vmatmul.mubr.f32.gmra.mxu0 %v2917
        %v2991 = vpop.f32.mrf.mxu0
        %v2992 = vadd.f32 0.0, %v2991
        %v2993 = vpop.f32.mrf.mxu0
        %2994 = vmatprep.mubr.f32.mxu0 0.0
        %2995 = vmatmul.mubr.f32.gmra.mxu0 %v2920
        %v2996 = vpop.f32.mrf.mxu0
        %v2997 = vadd.f32 0.0, %v2996
        %v2998 = vpop.f32.mrf.mxu0
        %2999 = vdwg.mxu0
        %v3001 = vsel %vm2067, %v2396, 0
        %v3004 = vsel %vm2067, %v2397, 0
        %v3007 = vsel %vm2067, %v2155, 0
        %3009 = vmatprep.subr.mxu0 0.0
        %3010 = vmatpush1.xpose.msra.mxu0 0.0
        %3011 = vmatprep.subr.mxu0 0.0
        %3012 = vmatpush1.xpose.msra.mxu0 0.0
        %3013 = vmatprep.subr.mxu0 0.0
        %3014 = vmatpush1.xpose.msra.mxu0 0.0
        %3015 = vmatprep.subr.mxu0 0.0
        %3016 = vmatpush1.xpose.msra.mxu0 0.0
        %3017 = vmatprep.subr.mxu0 0.0
        %3018 = vmatpush1.xpose.msra.mxu0 0.0
        %3019 = vmatprep.subr.mxu0 0.0
        %3020 = vmatpush1.xpose.msra.mxu0 0.0
        %3021 = vmatprep.subr.mxu0 0.0
        %3022 = vmatpush1.xpose.msra.mxu0 0.0
        %3023 = vmatprep.subr.mxu0 0.0
        %3024 = vmatpush1.xpose.msra.mxu0 0.0
        %3025 = vmatprep.subr.mxu0 0.0
        %3026 = vmatpush1.xpose.msra.mxu0 0.0
        %3027 = vmatprep.subr.mxu0 0.0
        %3028 = vmatpush1.xpose.msra.mxu0 0.0
        %3029 = vmatprep.subr.mxu0 0.0
        %3030 = vmatpush1.xpose.msra.mxu0 0.0
        %3031 = vmatprep.subr.mxu0 0.0
        %3032 = vmatpush1.xpose.msra.mxu0 0.0
        %3033 = vmatprep.subr.mxu0 0.0
        %3034 = vmatpush1.xpose.msra.mxu0 0.0
        %3035 = vmatprep.subr.mxu0 0.0
        %3036 = vmatpush1.xpose.msra.mxu0 0.0
        %3037 = vmatprep.subr.mxu0 0.0
        %3038 = vmatpush1.xpose.msra.mxu0 0.0
        %3039 = vmatprep.subr.mxu0 0.0
        %3040 = vmatpush1.xpose.msra.mxu0 %v3007
        %3041 = vmatprep.subr.mxu0 0.0
        %3042 = vmatpush2.xpose.msra.mxu0 0.0
        %3043 = vmatprep.subr.mxu0 0.0
        %3044 = vmatpush2.xpose.msra.mxu0 0.0
        %3045 = vmatprep.subr.mxu0 0.0
        %3046 = vmatpush2.xpose.msra.mxu0 0.0
        %3047 = vmatprep.subr.mxu0 0.0
        %3048 = vmatpush2.xpose.msra.mxu0 0.0
        %3049 = vmatprep.subr.mxu0 0.0
        %3050 = vmatpush2.xpose.msra.mxu0 0.0
        %3051 = vmatprep.subr.mxu0 0.0
        %3052 = vmatpush2.xpose.msra.mxu0 0.0
        %3053 = vmatprep.subr.mxu0 0.0
        %3054 = vmatpush2.xpose.msra.mxu0 0.0
        %3055 = vmatprep.subr.mxu0 0.0
        %3056 = vmatpush2.xpose.msra.mxu0 0.0
        %3057 = vmatprep.subr.mxu0 0.0
        %3058 = vmatpush2.xpose.msra.mxu0 0.0
        %3059 = vmatprep.subr.mxu0 0.0
        %3060 = vmatpush2.xpose.msra.mxu0 0.0
        %3061 = vmatprep.subr.mxu0 0.0
        %3062 = vmatpush2.xpose.msra.mxu0 0.0
        %3063 = vmatprep.subr.mxu0 0.0
        %3064 = vmatpush2.xpose.msra.mxu0 0.0
        %3065 = vmatprep.subr.mxu0 0.0
        %3066 = vmatpush2.xpose.msra.mxu0 0.0
        %3067 = vmatprep.subr.mxu0 0.0
        %3068 = vmatpush2.xpose.msra.mxu0 0.0
        %3069 = vmatprep.subr.mxu0 0.0
        %3070 = vmatpush2.xpose.msra.mxu0 0.0
        %3071 = vmatprep.subr.mxu0 0.0
        %3072 = vmatpush2.xpose.msra.mxu0 0.0
        %3073 = vmatprep.mubr.f32.mxu0 0.0
        %3074 = vmatmul.mubr.f32.gmra.mxu0 %v3001
        %v3075 = vpop.f32.mrf.mxu0
        %v3076 = vadd.f32 0.0, %v3075
        %v3077 = vpop.f32.mrf.mxu0
        %3078 = vmatprep.mubr.f32.mxu0 0.0
        %3079 = vmatmul.mubr.f32.gmra.mxu0 %v3004
        %v3080 = vpop.f32.mrf.mxu0
        %v3081 = vadd.f32 0.0, %v3080
        %v3082 = vpop.f32.mrf.mxu0
        %3083 = vdwg.mxu0
        %3084 = vxpose.xlu0.b32.start [1/16] %v2488, 128
        %3085 = vxpose.xlu0.b32.cont [2/16] %v2493, 128
        %3086 = vxpose.xlu0.b32.cont [3/16] 0.0, 128
        %3087 = vxpose.xlu0.b32.cont [4/16] 0.0, 128
        %3088 = vxpose.xlu0.b32.cont [5/16] 0.0, 128
        %3089 = vxpose.xlu0.b32.cont [6/16] 0.0, 128
        %3090 = vxpose.xlu0.b32.cont [7/16] 0.0, 128
        %3091 = vxpose.xlu0.b32.cont [8/16] 0.0, 128
        %3092 = vxpose.xlu0.b32.cont [9/16] 0.0, 128
        %3093 = vxpose.xlu0.b32.cont [10/16] 0.0, 128
        %3094 = vxpose.xlu0.b32.cont [11/16] 0.0, 128
        %3095 = vxpose.xlu0.b32.cont [12/16] 0.0, 128
        %3096 = vxpose.xlu0.b32.cont [13/16] 0.0, 128
        %3097 = vxpose.xlu0.b32.cont [14/16] 0.0, 128
        %3098 = vxpose.xlu0.b32.cont [15/16] 0.0, 128
        %3099 = vxpose.xlu0.b32.end [16/16] 0.0, 128
        %v3100 = vpop.trf.xlu0
        %v3101 = vpop.trf.xlu0
        %v3102 = vpop.trf.xlu0
        %v3103 = vpop.trf.xlu0
        %v3104 = vpop.trf.xlu0
        %v3105 = vpop.trf.xlu0
        %v3106 = vpop.trf.xlu0
        %v3107 = vpop.trf.xlu0
        %v3108 = vpop.trf.xlu0
        %v3109 = vpop.trf.xlu0
        %v3110 = vpop.trf.xlu0
        %v3111 = vpop.trf.xlu0
        %v3112 = vpop.trf.xlu0
        %v3113 = vpop.trf.xlu0
        %v3114 = vpop.trf.xlu0
        %v3115 = vpop.trf.xlu0
        %3116 = vxpose.xlu0.b32.start [1/16] %v2572, 128
        %3117 = vxpose.xlu0.b32.cont [2/16] %v2577, 128
        %3118 = vxpose.xlu0.b32.cont [3/16] 0.0, 128
        %3119 = vxpose.xlu0.b32.cont [4/16] 0.0, 128
        %3120 = vxpose.xlu0.b32.cont [5/16] 0.0, 128
        %3121 = vxpose.xlu0.b32.cont [6/16] 0.0, 128
        %3122 = vxpose.xlu0.b32.cont [7/16] 0.0, 128
        %3123 = vxpose.xlu0.b32.cont [8/16] 0.0, 128
        %3124 = vxpose.xlu0.b32.cont [9/16] 0.0, 128
        %3125 = vxpose.xlu0.b32.cont [10/16] 0.0, 128
        %3126 = vxpose.xlu0.b32.cont [11/16] 0.0, 128
        %3127 = vxpose.xlu0.b32.cont [12/16] 0.0, 128
        %3128 = vxpose.xlu0.b32.cont [13/16] 0.0, 128
        %3129 = vxpose.xlu0.b32.cont [14/16] 0.0, 128
        %3130 = vxpose.xlu0.b32.cont [15/16] 0.0, 128
        %3131 = vxpose.xlu0.b32.end [16/16] 0.0, 128
        %v3132 = vpop.trf.xlu0
        %v3133 = vpop.trf.xlu0
        %v3134 = vpop.trf.xlu0
        %v3135 = vpop.trf.xlu0
        %v3136 = vpop.trf.xlu0
        %v3137 = vpop.trf.xlu0
        %v3138 = vpop.trf.xlu0
        %v3139 = vpop.trf.xlu0
        %v3140 = vpop.trf.xlu0
        %v3141 = vpop.trf.xlu0
        %v3142 = vpop.trf.xlu0
        %v3143 = vpop.trf.xlu0
        %v3144 = vpop.trf.xlu0
        %v3145 = vpop.trf.xlu0
        %v3146 = vpop.trf.xlu0
        %v3147 = vpop.trf.xlu0
        %3148 = vxpose.xlu0.b32.start [1/16] %v2656, 128
        %3149 = vxpose.xlu0.b32.cont [2/16] %v2661, 128
        %3150 = vxpose.xlu0.b32.cont [3/16] 0.0, 128
        %3151 = vxpose.xlu0.b32.cont [4/16] 0.0, 128
        %3152 = vxpose.xlu0.b32.cont [5/16] 0.0, 128
        %3153 = vxpose.xlu0.b32.cont [6/16] 0.0, 128
        %3154 = vxpose.xlu0.b32.cont [7/16] 0.0, 128
        %3155 = vxpose.xlu0.b32.cont [8/16] 0.0, 128
        %3156 = vxpose.xlu0.b32.cont [9/16] 0.0, 128
        %3157 = vxpose.xlu0.b32.cont [10/16] 0.0, 128
        %3158 = vxpose.xlu0.b32.cont [11/16] 0.0, 128
        %3159 = vxpose.xlu0.b32.cont [12/16] 0.0, 128
        %3160 = vxpose.xlu0.b32.cont [13/16] 0.0, 128
        %3161 = vxpose.xlu0.b32.cont [14/16] 0.0, 128
        %3162 = vxpose.xlu0.b32.cont [15/16] 0.0, 128
        %3163 = vxpose.xlu0.b32.end [16/16] 0.0, 128
        %v3164 = vpop.trf.xlu0
        %v3165 = vpop.trf.xlu0
        %v3166 = vpop.trf.xlu0
        %v3167 = vpop.trf.xlu0
        %v3168 = vpop.trf.xlu0
        %v3169 = vpop.trf.xlu0
        %v3170 = vpop.trf.xlu0
        %v3171 = vpop.trf.xlu0
        %v3172 = vpop.trf.xlu0
        %v3173 = vpop.trf.xlu0
        %v3174 = vpop.trf.xlu0
        %v3175 = vpop.trf.xlu0
        %v3176 = vpop.trf.xlu0
        %v3177 = vpop.trf.xlu0
        %v3178 = vpop.trf.xlu0
        %v3179 = vpop.trf.xlu0
        %3180 = vxpose.xlu0.b32.start [1/16] %v2740, 128
        %3181 = vxpose.xlu0.b32.cont [2/16] %v2745, 128
        %3182 = vxpose.xlu0.b32.cont [3/16] 0.0, 128
        %3183 = vxpose.xlu0.b32.cont [4/16] 0.0, 128
        %3184 = vxpose.xlu0.b32.cont [5/16] 0.0, 128
        %3185 = vxpose.xlu0.b32.cont [6/16] 0.0, 128
        %3186 = vxpose.xlu0.b32.cont [7/16] 0.0, 128
        %3187 = vxpose.xlu0.b32.cont [8/16] 0.0, 128
        %3188 = vxpose.xlu0.b32.cont [9/16] 0.0, 128
        %3189 = vxpose.xlu0.b32.cont [10/16] 0.0, 128
        %3190 = vxpose.xlu0.b32.cont [11/16] 0.0, 128
        %3191 = vxpose.xlu0.b32.cont [12/16] 0.0, 128
        %3192 = vxpose.xlu0.b32.cont [13/16] 0.0, 128
        %3193 = vxpose.xlu0.b32.cont [14/16] 0.0, 128
        %3194 = vxpose.xlu0.b32.cont [15/16] 0.0, 128
        %3195 = vxpose.xlu0.b32.end [16/16] 0.0, 128
        %v3196 = vpop.trf.xlu0
        %v3197 = vpop.trf.xlu0
        %v3198 = vpop.trf.xlu0
        %v3199 = vpop.trf.xlu0
        %v3200 = vpop.trf.xlu0
        %v3201 = vpop.trf.xlu0
        %v3202 = vpop.trf.xlu0
        %v3203 = vpop.trf.xlu0
        %v3204 = vpop.trf.xlu0
        %v3205 = vpop.trf.xlu0
        %v3206 = vpop.trf.xlu0
        %v3207 = vpop.trf.xlu0
        %v3208 = vpop.trf.xlu0
        %v3209 = vpop.trf.xlu0
        %v3210 = vpop.trf.xlu0
        %v3211 = vpop.trf.xlu0
        %3212 = vxpose.xlu0.b32.start [1/16] %v2824, 128
        %3213 = vxpose.xlu0.b32.cont [2/16] %v2829, 128
        %3214 = vxpose.xlu0.b32.cont [3/16] 0.0, 128
        %3215 = vxpose.xlu0.b32.cont [4/16] 0.0, 128
        %3216 = vxpose.xlu0.b32.cont [5/16] 0.0, 128
        %3217 = vxpose.xlu0.b32.cont [6/16] 0.0, 128
        %3218 = vxpose.xlu0.b32.cont [7/16] 0.0, 128
        %3219 = vxpose.xlu0.b32.cont [8/16] 0.0, 128
        %3220 = vxpose.xlu0.b32.cont [9/16] 0.0, 128
        %3221 = vxpose.xlu0.b32.cont [10/16] 0.0, 128
        %3222 = vxpose.xlu0.b32.cont [11/16] 0.0, 128
        %3223 = vxpose.xlu0.b32.cont [12/16] 0.0, 128
        %3224 = vxpose.xlu0.b32.cont [13/16] 0.0, 128
        %3225 = vxpose.xlu0.b32.cont [14/16] 0.0, 128
        %3226 = vxpose.xlu0.b32.cont [15/16] 0.0, 128
        %3227 = vxpose.xlu0.b32.end [16/16] 0.0, 128
        %v3228 = vpop.trf.xlu0
        %v3229 = vpop.trf.xlu0
        %v3230 = vpop.trf.xlu0
        %v3231 = vpop.trf.xlu0
        %v3232 = vpop.trf.xlu0
        %v3233 = vpop.trf.xlu0
        %v3234 = vpop.trf.xlu0
        %v3235 = vpop.trf.xlu0
        %v3236 = vpop.trf.xlu0
        %v3237 = vpop.trf.xlu0
        %v3238 = vpop.trf.xlu0
        %v3239 = vpop.trf.xlu0
        %v3240 = vpop.trf.xlu0
        %v3241 = vpop.trf.xlu0
        %v3242 = vpop.trf.xlu0
        %v3243 = vpop.trf.xlu0
        %3244 = vxpose.xlu0.b32.start [1/16] %v2908, 128
        %3245 = vxpose.xlu0.b32.cont [2/16] %v2913, 128
        %3246 = vxpose.xlu0.b32.cont [3/16] 0.0, 128
        %3247 = vxpose.xlu0.b32.cont [4/16] 0.0, 128
        %3248 = vxpose.xlu0.b32.cont [5/16] 0.0, 128
        %3249 = vxpose.xlu0.b32.cont [6/16] 0.0, 128
        %3250 = vxpose.xlu0.b32.cont [7/16] 0.0, 128
        %3251 = vxpose.xlu0.b32.cont [8/16] 0.0, 128
        %3252 = vxpose.xlu0.b32.cont [9/16] 0.0, 128
        %3253 = vxpose.xlu0.b32.cont [10/16] 0.0, 128
        %3254 = vxpose.xlu0.b32.cont [11/16] 0.0, 128
        %3255 = vxpose.xlu0.b32.cont [12/16] 0.0, 128
        %3256 = vxpose.xlu0.b32.cont [13/16] 0.0, 128
        %3257 = vxpose.xlu0.b32.cont [14/16] 0.0, 128
        %3258 = vxpose.xlu0.b32.cont [15/16] 0.0, 128
        %3259 = vxpose.xlu0.b32.end [16/16] 0.0, 128
        %v3260 = vpop.trf.xlu0
        %v3261 = vpop.trf.xlu0
        %v3262 = vpop.trf.xlu0
        %v3263 = vpop.trf.xlu0
        %v3264 = vpop.trf.xlu0
        %v3265 = vpop.trf.xlu0
        %v3266 = vpop.trf.xlu0
        %v3267 = vpop.trf.xlu0
        %v3268 = vpop.trf.xlu0
        %v3269 = vpop.trf.xlu0
        %v3270 = vpop.trf.xlu0
        %v3271 = vpop.trf.xlu0
        %v3272 = vpop.trf.xlu0
        %v3273 = vpop.trf.xlu0
        %v3274 = vpop.trf.xlu0
        %v3275 = vpop.trf.xlu0
        %3276 = vxpose.xlu0.b32.start [1/16] %v2992, 128
        %3277 = vxpose.xlu0.b32.cont [2/16] %v2997, 128
        %3278 = vxpose.xlu0.b32.cont [3/16] 0.0, 128
        %3279 = vxpose.xlu0.b32.cont [4/16] 0.0, 128
        %3280 = vxpose.xlu0.b32.cont [5/16] 0.0, 128
        %3281 = vxpose.xlu0.b32.cont [6/16] 0.0, 128
        %3282 = vxpose.xlu0.b32.cont [7/16] 0.0, 128
        %3283 = vxpose.xlu0.b32.cont [8/16] 0.0, 128
        %3284 = vxpose.xlu0.b32.cont [9/16] 0.0, 128
        %3285 = vxpose.xlu0.b32.cont [10/16] 0.0, 128
        %3286 = vxpose.xlu0.b32.cont [11/16] 0.0, 128
        %3287 = vxpose.xlu0.b32.cont [12/16] 0.0, 128
        %3288 = vxpose.xlu0.b32.cont [13/16] 0.0, 128
        %3289 = vxpose.xlu0.b32.cont [14/16] 0.0, 128
        %3290 = vxpose.xlu0.b32.cont [15/16] 0.0, 128
        %3291 = vxpose.xlu0.b32.end [16/16] 0.0, 128
        %v3292 = vpop.trf.xlu0
        %v3293 = vpop.trf.xlu0
        %v3294 = vpop.trf.xlu0
        %v3295 = vpop.trf.xlu0
        %v3296 = vpop.trf.xlu0
        %v3297 = vpop.trf.xlu0
        %v3298 = vpop.trf.xlu0
        %v3299 = vpop.trf.xlu0
        %v3300 = vpop.trf.xlu0
        %v3301 = vpop.trf.xlu0
        %v3302 = vpop.trf.xlu0
        %v3303 = vpop.trf.xlu0
        %v3304 = vpop.trf.xlu0
        %v3305 = vpop.trf.xlu0
        %v3306 = vpop.trf.xlu0
        %v3307 = vpop.trf.xlu0
        %3308 = vxpose.xlu0.b32.start [1/16] %v3076, 128
        %3309 = vxpose.xlu0.b32.cont [2/16] %v3081, 128
        %3310 = vxpose.xlu0.b32.cont [3/16] 0.0, 128
        %3311 = vxpose.xlu0.b32.cont [4/16] 0.0, 128
        %3312 = vxpose.xlu0.b32.cont [5/16] 0.0, 128
        %3313 = vxpose.xlu0.b32.cont [6/16] 0.0, 128
        %3314 = vxpose.xlu0.b32.cont [7/16] 0.0, 128
        %3315 = vxpose.xlu0.b32.cont [8/16] 0.0, 128
        %3316 = vxpose.xlu0.b32.cont [9/16] 0.0, 128
        %3317 = vxpose.xlu0.b32.cont [10/16] 0.0, 128
        %3318 = vxpose.xlu0.b32.cont [11/16] 0.0, 128
        %3319 = vxpose.xlu0.b32.cont [12/16] 0.0, 128
        %3320 = vxpose.xlu0.b32.cont [13/16] 0.0, 128
        %3321 = vxpose.xlu0.b32.cont [14/16] 0.0, 128
        %3322 = vxpose.xlu0.b32.cont [15/16] 0.0, 128
        %3323 = vxpose.xlu0.b32.end [16/16] 0.0, 128
        %v3324 = vpop.trf.xlu0
        %v3325 = vpop.trf.xlu0
        %v3326 = vpop.trf.xlu0
        %v3327 = vpop.trf.xlu0
        %v3328 = vpop.trf.xlu0
        %v3329 = vpop.trf.xlu0
        %v3330 = vpop.trf.xlu0
        %v3331 = vpop.trf.xlu0
        %v3332 = vpop.trf.xlu0
        %v3333 = vpop.trf.xlu0
        %v3334 = vpop.trf.xlu0
        %v3335 = vpop.trf.xlu0
        %v3336 = vpop.trf.xlu0
        %v3337 = vpop.trf.xlu0
        %v3338 = vpop.trf.xlu0
        %v3339 = vpop.trf.xlu0
        %v3340 = vcombine.low %v3100, %v3164
        %v3341 = vcombine.high %v3100, %v3164
        %v3343 = vunpack.c.l.s4 1983009808
        %v3344 = vunpack.c.0.s8 %v3343
        %v3345 = vlaneseq
        %v3346 = vshrl.u32 %v3345, 7
        %v3347 = vsub.s32 %v3344, %v3346
        %v3348 = vrot.slane %v3340, %v3347
        %v3350 = vunpack.c.l.s4 1983009808
        %v3351 = vunpack.c.0.s8 %v3350
        %v3352 = vlaneseq
        %v3353 = vshrl.u32 %v3352, 7
        %v3354 = vsub.s32 %v3351, %v3353
        %v3355 = vrot.slane %v3341, %v3354
        %v3356 = vcombine.low %v3132, %v3196
        %v3357 = vcombine.high %v3132, %v3196
        %v3359 = vunpack.c.l.s4 1983009808
        %v3360 = vunpack.c.0.s8 %v3359
        %v3361 = vlaneseq
        %v3362 = vshrl.u32 %v3361, 7
        %v3363 = vsub.s32 %v3360, %v3362
        %v3364 = vrot.slane %v3356, %v3363
        %v3366 = vunpack.c.l.s4 1983009808
        %v3367 = vunpack.c.0.s8 %v3366
        %v3368 = vlaneseq
        %v3369 = vshrl.u32 %v3368, 7
        %v3370 = vsub.s32 %v3367, %v3369
        %v3371 = vrot.slane %v3357, %v3370
        %v3372 = vcombine.low %v3228, %v3292
        %v3373 = vcombine.high %v3228, %v3292
        %v3375 = vunpack.c.l.s4 1983009808
        %v3376 = vunpack.c.0.s8 %v3375
        %v3377 = vlaneseq
        %v3378 = vshrl.u32 %v3377, 7
        %v3379 = vsub.s32 %v3376, %v3378
        %v3380 = vrot.slane %v3372, %v3379
        %v3382 = vunpack.c.l.s4 1983009808
        %v3383 = vunpack.c.0.s8 %v3382
        %v3384 = vlaneseq
        %v3385 = vshrl.u32 %v3384, 7
        %v3386 = vsub.s32 %v3383, %v3385
        %v3387 = vrot.slane %v3373, %v3386
        %v3388 = vcombine.low %v3260, %v3324
        %v3389 = vcombine.high %v3260, %v3324
        %v3391 = vunpack.c.l.s4 1983009808
        %v3392 = vunpack.c.0.s8 %v3391
        %v3393 = vlaneseq
        %v3394 = vshrl.u32 %v3393, 7
        %v3395 = vsub.s32 %v3392, %v3394
        %v3396 = vrot.slane %v3388, %v3395
        %v3398 = vunpack.c.l.s4 1983009808
        %v3399 = vunpack.c.0.s8 %v3398
        %v3400 = vlaneseq
        %v3401 = vshrl.u32 %v3400, 7
        %v3402 = vsub.s32 %v3399, %v3401
        %v3403 = vrot.slane %v3389, %v3402
        %v3404 = vcombine.low %v3348, %v3364
        %v3405 = vcombine.high %v3348, %v3364
        %v3407 = vunpack.c.l.s4 1934713408
        %v3408 = vunpack.c.0.s8 %v3407
        %v3409 = vlaneseq
        %v3410 = vshrl.u32 %v3409, 7
        %v3411 = vsub.s32 %v3408, %v3410
        %v3412 = vrot.slane %v3404, %v3411
        %v3414 = vunpack.c.l.s4 1934713408
        %v3415 = vunpack.c.0.s8 %v3414
        %v3416 = vlaneseq
        %v3417 = vshrl.u32 %v3416, 7
        %v3418 = vsub.s32 %v3415, %v3417
        %v3419 = vrot.slane %v3405, %v3418
        %v3420 = vcombine.low %v3355, %v3371
        %v3421 = vcombine.high %v3355, %v3371
        %v3423 = vunpack.c.l.s4 1934713408
        %v3424 = vunpack.c.0.s8 %v3423
        %v3425 = vlaneseq
        %v3426 = vshrl.u32 %v3425, 7
        %v3427 = vsub.s32 %v3424, %v3426
        %v3428 = vrot.slane %v3420, %v3427
        %v3430 = vunpack.c.l.s4 1934713408
        %v3431 = vunpack.c.0.s8 %v3430
        %v3432 = vlaneseq
        %v3433 = vshrl.u32 %v3432, 7
        %v3434 = vsub.s32 %v3431, %v3433
        %v3435 = vrot.slane %v3421, %v3434
        %v3436 = vcombine.low %v3380, %v3396
        %v3437 = vcombine.high %v3380, %v3396
        %v3439 = vunpack.c.l.s4 1934713408
        %v3440 = vunpack.c.0.s8 %v3439
        %v3441 = vlaneseq
        %v3442 = vshrl.u32 %v3441, 7
        %v3443 = vsub.s32 %v3440, %v3442
        %v3444 = vrot.slane %v3436, %v3443
        %v3446 = vunpack.c.l.s4 1934713408
        %v3447 = vunpack.c.0.s8 %v3446
        %v3448 = vlaneseq
        %v3449 = vshrl.u32 %v3448, 7
        %v3450 = vsub.s32 %v3447, %v3449
        %v3451 = vrot.slane %v3437, %v3450
        %v3452 = vcombine.low %v3387, %v3403
        %v3453 = vcombine.high %v3387, %v3403
        %v3455 = vunpack.c.l.s4 1934713408
        %v3456 = vunpack.c.0.s8 %v3455
        %v3457 = vlaneseq
        %v3458 = vshrl.u32 %v3457, 7
        %v3459 = vsub.s32 %v3456, %v3458
        %v3460 = vrot.slane %v3452, %v3459
        %v3462 = vunpack.c.l.s4 1934713408
        %v3463 = vunpack.c.0.s8 %v3462
        %v3464 = vlaneseq
        %v3465 = vshrl.u32 %v3464, 7
        %v3466 = vsub.s32 %v3463, %v3465
        %v3467 = vrot.slane %v3453, %v3466
        %v3468 = vcombine.low %v3412, %v3444
        %v3469 = vcombine.high %v3412, %v3444
        %v3470 = vcombine.low %v3419, %v3451
        %v3471 = vcombine.high %v3419, %v3451
        %v3472 = vcombine.low %v3428, %v3460
        %v3473 = vcombine.high %v3428, %v3460
        %v3474 = vcombine.low %v3435, %v3467
        %v3475 = vcombine.high %v3435, %v3467
        %v3476 = vcombine.low %v3468, %v3470
        %v3477 = vcombine.high %v3468, %v3470
        %v3479 = vunpack.c.l.s4 1983009808
        %v3480 = vunpack.c.0.s8 %v3479
        %v3481 = vlaneseq
        %v3482 = vshrl.u32 %v3481, 7
        %v3483 = vsub.s32 %v3480, %v3482
        %v3484 = vrot.slane %v3476, %v3483
        %v3486 = vunpack.c.l.s4 1983009808
        %v3487 = vunpack.c.0.s8 %v3486
        %v3488 = vlaneseq
        %v3489 = vshrl.u32 %v3488, 7
        %v3490 = vsub.s32 %v3487, %v3489
        %v3491 = vrot.slane %v3477, %v3490
        %v3492 = vcombine.low %v3469, %v3471
        %v3493 = vcombine.high %v3469, %v3471
        %v3495 = vunpack.c.l.s4 1983009808
        %v3496 = vunpack.c.0.s8 %v3495
        %v3497 = vlaneseq
        %v3498 = vshrl.u32 %v3497, 7
        %v3499 = vsub.s32 %v3496, %v3498
        %v3500 = vrot.slane %v3492, %v3499
        %v3502 = vunpack.c.l.s4 1983009808
        %v3503 = vunpack.c.0.s8 %v3502
        %v3504 = vlaneseq
        %v3505 = vshrl.u32 %v3504, 7
        %v3506 = vsub.s32 %v3503, %v3505
        %v3507 = vrot.slane %v3493, %v3506
        %v3508 = vcombine.low %v3472, %v3474
        %v3509 = vcombine.high %v3472, %v3474
        %v3511 = vunpack.c.l.s4 1983009808
        %v3512 = vunpack.c.0.s8 %v3511
        %v3513 = vlaneseq
        %v3514 = vshrl.u32 %v3513, 7
        %v3515 = vsub.s32 %v3512, %v3514
        %v3516 = vrot.slane %v3508, %v3515
        %v3518 = vunpack.c.l.s4 1983009808
        %v3519 = vunpack.c.0.s8 %v3518
        %v3520 = vlaneseq
        %v3521 = vshrl.u32 %v3520, 7
        %v3522 = vsub.s32 %v3519, %v3521
        %v3523 = vrot.slane %v3509, %v3522
        %v3524 = vcombine.low %v3473, %v3475
        %v3525 = vcombine.high %v3473, %v3475
        %v3527 = vunpack.c.l.s4 1983009808
        %v3528 = vunpack.c.0.s8 %v3527
        %v3529 = vlaneseq
        %v3530 = vshrl.u32 %v3529, 7
        %v3531 = vsub.s32 %v3528, %v3530
        %v3532 = vrot.slane %v3524, %v3531
        %v3534 = vunpack.c.l.s4 1983009808
        %v3535 = vunpack.c.0.s8 %v3534
        %v3536 = vlaneseq
        %v3537 = vshrl.u32 %v3536, 7
        %v3538 = vsub.s32 %v3535, %v3537
        %v3539 = vrot.slane %v3525, %v3538
        %v3540 = vcombine.low %v3484, %v3500
        %v3541 = vcombine.high %v3484, %v3500
        %v3543 = vunpack.c.l.s4 1934713408
        %v3544 = vunpack.c.0.s8 %v3543
        %v3545 = vlaneseq
        %v3546 = vshrl.u32 %v3545, 7
        %v3547 = vsub.s32 %v3544, %v3546
        %v3548 = vrot.slane %v3540, %v3547
        %v3550 = vunpack.c.l.s4 1934713408
        %v3551 = vunpack.c.0.s8 %v3550
        %v3552 = vlaneseq
        %v3553 = vshrl.u32 %v3552, 7
        %v3554 = vsub.s32 %v3551, %v3553
        %v3555 = vrot.slane %v3541, %v3554
        %v3556 = vcombine.low %v3491, %v3507
        %v3557 = vcombine.high %v3491, %v3507
        %v3559 = vunpack.c.l.s4 1934713408
        %v3560 = vunpack.c.0.s8 %v3559
        %v3561 = vlaneseq
        %v3562 = vshrl.u32 %v3561, 7
        %v3563 = vsub.s32 %v3560, %v3562
        %v3564 = vrot.slane %v3556, %v3563
        %v3566 = vunpack.c.l.s4 1934713408
        %v3567 = vunpack.c.0.s8 %v3566
        %v3568 = vlaneseq
        %v3569 = vshrl.u32 %v3568, 7
        %v3570 = vsub.s32 %v3567, %v3569
        %v3571 = vrot.slane %v3557, %v3570
        %v3572 = vcombine.low %v3516, %v3532
        %v3573 = vcombine.high %v3516, %v3532
        %v3575 = vunpack.c.l.s4 1934713408
        %v3576 = vunpack.c.0.s8 %v3575
        %v3577 = vlaneseq
        %v3578 = vshrl.u32 %v3577, 7
        %v3579 = vsub.s32 %v3576, %v3578
        %v3580 = vrot.slane %v3572, %v3579
        %v3582 = vunpack.c.l.s4 1934713408
        %v3583 = vunpack.c.0.s8 %v3582
        %v3584 = vlaneseq
        %v3585 = vshrl.u32 %v3584, 7
        %v3586 = vsub.s32 %v3583, %v3585
        %v3587 = vrot.slane %v3573, %v3586
        %v3588 = vcombine.low %v3523, %v3539
        %v3589 = vcombine.high %v3523, %v3539
        %v3591 = vunpack.c.l.s4 1934713408
        %v3592 = vunpack.c.0.s8 %v3591
        %v3593 = vlaneseq
        %v3594 = vshrl.u32 %v3593, 7
        %v3595 = vsub.s32 %v3592, %v3594
        %v3596 = vrot.slane %v3588, %v3595
        %v3598 = vunpack.c.l.s4 1934713408
        %v3599 = vunpack.c.0.s8 %v3598
        %v3600 = vlaneseq
        %v3601 = vshrl.u32 %v3600, 7
        %v3602 = vsub.s32 %v3599, %v3601
        %v3603 = vrot.slane %v3589, %v3602
        %v3604 = vcombine.low %v3548, %v3580
        %v3605 = vcombine.high %v3548, %v3580
        %v3606 = vcombine.low %v3555, %v3587
        %v3607 = vcombine.high %v3555, %v3587
        %v3608 = vcombine.low %v3564, %v3596
        %v3609 = vcombine.high %v3564, %v3596
        %v3610 = vcombine.low %v3571, %v3603
        %v3611 = vcombine.high %v3571, %v3603
        %3613 = vrot.lane.b32.xlu0 %v3605, 16
        %v3614 = vpop.permute.xlu0 %3613
        %3617 = vrot.lane.b32.xlu0 %v3606, 32
        %v3618 = vpop.permute.xlu0 %3617
        %3621 = vrot.lane.b32.xlu0 %v3607, 48
        %v3622 = vpop.permute.xlu0 %3621
        %3625 = vrot.lane.b32.xlu0 %v3608, 64
        %v3626 = vpop.permute.xlu0 %3625
        %3629 = vrot.lane.b32.xlu0 %v3609, 80
        %v3630 = vpop.permute.xlu0 %3629
        %3633 = vrot.lane.b32.xlu0 %v3610, 96
        %v3634 = vpop.permute.xlu0 %3633
        %3637 = vrot.lane.b32.xlu0 %v3611, 112
        %v3638 = vpop.permute.xlu0 %3637
        %v3640 = vsel %vm1490, %v3604, %v3614
        %vm3641 = vcmask 261120
        %v3642 = vsel %vm3641, %v3640, %v3618
        %vm3643 = vcmask 392192
        %v3644 = vsel %vm3643, %v3642, %v3622
        %vm3645 = vcmask 523264
        %v3646 = vsel %vm3645, %v3644, %v3626
        %vm3647 = vcmask 654336
        %v3648 = vsel %vm3647, %v3646, %v3630
        %vm3649 = vcmask 785408
        %v3650 = vsel %vm3649, %v3648, %v3634
        %vm3651 = vcmask 916480
        %v3652 = vsel %vm3651, %v3650, %v3638
        %v3653 = vpack.c.bf16 %v3652, %v3652
        %v3670 = vunpack.c.l.b16 %v1158
        %v3671 = vunpack.c.l.b16 %v1159
        %v3672 = vunpack.c.l.b16 %v1160
        %v3673 = vunpack.c.l.b16 %v1161
        %v3674 = vunpack.c.l.b16 %v1162
        %v3675 = vunpack.c.l.b16 %v1163
        %v3676 = vunpack.c.l.b16 %v1164
        %v3677 = vunpack.c.l.b16 %v1165
        %v3678 = vunpack.c.l.b16 %v1166
        %v3679 = vunpack.c.l.b16 %v1167
        %v3680 = vunpack.c.l.b16 %v1168
        %v3681 = vunpack.c.l.b16 %v1169
        %v3682 = vunpack.c.l.b16 %v1170
        %v3683 = vunpack.c.l.b16 %v1171
        %v3684 = vunpack.c.l.b16 %v1172
        %v3685 = vunpack.c.l.b16 %v1173
        %v3686 = vpack.c.b16 %v3671, %v3670
        %v3687 = vpack.c.b16 %v3673, %v3672
        %v3688 = vpack.c.b16 %v3675, %v3674
        %v3689 = vpack.c.b16 %v3677, %v3676
        %v3690 = vpack.c.b16 %v3679, %v3678
        %v3691 = vpack.c.b16 %v3681, %v3680
        %v3692 = vpack.c.b16 %v3683, %v3682
        %v3693 = vpack.c.b16 %v3685, %v3684
        %3702 = vmatprep.subr.bf16.mxu0 0
        %3703 = vmatpush1.bf16.msra.mxu0 %v3693
        %3704 = vmatprep.subr.bf16.mxu0 0
        %3705 = vmatpush1.bf16.msra.mxu0 %v3692
        %3706 = vmatprep.subr.bf16.mxu0 0
        %3707 = vmatpush1.bf16.msra.mxu0 %v3691
        %3708 = vmatprep.subr.bf16.mxu0 0
        %3709 = vmatpush1.bf16.msra.mxu0 %v3690
        %3710 = vmatprep.subr.bf16.mxu0 0
        %3711 = vmatpush1.bf16.msra.mxu0 %v3689
        %3712 = vmatprep.subr.bf16.mxu0 0
        %3713 = vmatpush1.bf16.msra.mxu0 %v3688
        %3714 = vmatprep.subr.bf16.mxu0 0
        %3715 = vmatpush1.bf16.msra.mxu0 %v3687
        %3716 = vmatprep.subr.bf16.mxu0 0
        %3717 = vmatpush1.bf16.msra.mxu0 %v3686
        %3718 = vmatprep.subr.bf16.mxu0 0
        %3719 = vmatpush2.bf16.msra.mxu0 0
        %3720 = vmatprep.subr.bf16.mxu0 0
        %3721 = vmatpush2.bf16.msra.mxu0 0
        %3722 = vmatprep.subr.bf16.mxu0 0
        %3723 = vmatpush2.bf16.msra.mxu0 0
        %3724 = vmatprep.subr.bf16.mxu0 0
        %3725 = vmatpush2.bf16.msra.mxu0 0
        %3726 = vmatprep.subr.bf16.mxu0 0
        %3727 = vmatpush2.bf16.msra.mxu0 0
        %3728 = vmatprep.subr.bf16.mxu0 0
        %3729 = vmatpush2.bf16.msra.mxu0 0
        %3730 = vmatprep.subr.bf16.mxu0 0
        %3731 = vmatpush2.bf16.msra.mxu0 0
        %3732 = vmatprep.subr.bf16.mxu0 0
        %3733 = vmatpush2.bf16.msra.mxu0 0
        %3734 = vmatprep.mubr.bf16.mxu0 0
        %3735 = vmatmul.mubr.bf16.gmra.mxu0 %v3653
        %v3736 = vpop.f32.mrf.mxu0
        %v3737 = vadd.f32 0.0, %v3736
        %v3738 = vpop.f32.mrf.mxu0
        %v3739 = vpop.f32.mrf.mxu0
        %v3740 = vpop.f32.mrf.mxu0
        %3741 = vdwg.mxu0
        %v3742 = vadd.f32 %v897, %v3737
        %v3743 = vld [vmem:[%s5] sm:$0x1]
        %v3745 = vlaneseq
        %v3746 = vshrl.u32 %v3745, 7
        %v3747 = vsub.s32 0, %v3746
        %v3748 = vrot.slane %v3743, %v3747
        %v3750 = vadd.f32 %v3742, %v3748
        %v3751 = vld [vmem:[#allocation5] sm:$0x1]
        %v3752 = vld [vmem:[#allocation7] sm:$0x1]
        %3753 = vadd.xlane.f32.xlu0 %v3750
        %v3754 = vpop.xlane.xlu0 %3753
        %v3755 = vrcp.pop 128.0
        %v3756 = vmul.f32 %v3754, %v3755
        %v3757 = vsub.f32 %v3750, %v3756
        %v3758 = vmul.f32 %v3757, %v3757
        %3759 = vadd.xlane.f32.xlu0 %v3758
        %v3760 = vpop.xlane.xlu0 %3759
        %v3761 = vmul.f32 %v3760, %v3755
        %v3762 = vadd.f32 %v3761, 1e-05
        %v3763 = vrsqrt.pop %v3762
        %v3764 = vmul.f32 %v3757, %v3763
        %v3766 = vlaneseq
        %v3767 = vshrl.u32 %v3766, 7
        %v3768 = vsub.s32 0, %v3767
        %v3769 = vrot.slane %v3751, %v3768
        %v3771 = vmul.f32 %v3764, %v3769
        %v3773 = vlaneseq
        %v3774 = vshrl.u32 %v3773, 7
        %v3775 = vsub.s32 0, %v3774
        %v3776 = vrot.slane %v3752, %v3775
        %v3778 = vadd.f32 %v3771, %v3776
        %v3779 = vpack.c.bf16 %v3778, %v3778
        %v3780 = vld [vmem:[#allocation8] sm:$0xf]
        %v3781 = vld [vmem:[#allocation8 + $0x4] sm:$0xf]
        %v3782 = vld [vmem:[#allocation8 + $0x8] sm:$0xf]
        %v3783 = vld [vmem:[#allocation8 + $0xc] sm:$0xf]
        %v3784 = vld [vmem:[#allocation8 + $0x10] sm:$0xf]
        %v3785 = vld [vmem:[#allocation8 + $0x14] sm:$0xf]
        %v3786 = vld [vmem:[#allocation8 + $0x18] sm:$0xf]
        %v3787 = vld [vmem:[#allocation8 + $0x1c] sm:$0xf]
        %v3788 = vld [vmem:[#allocation8 + $0x20] sm:$0xf]
        %v3789 = vld [vmem:[#allocation8 + $0x24] sm:$0xf]
        %v3790 = vld [vmem:[#allocation8 + $0x28] sm:$0xf]
        %v3791 = vld [vmem:[#allocation8 + $0x2c] sm:$0xf]
        %v3792 = vld [vmem:[#allocation8 + $0x30] sm:$0xf]
        %v3793 = vld [vmem:[#allocation8 + $0x34] sm:$0xf]
        %v3794 = vld [vmem:[#allocation8 + $0x38] sm:$0xf]
        %v3795 = vld [vmem:[#allocation8 + $0x3c] sm:$0xf]
        %v3796 = vld [vmem:[#allocation10] sm:$0x1]
        %v3798 = vlaneseq
        %v3799 = vshrl.u32 %v3798, 7
        %v3800 = vsub.s32 0, %v3799
        %v3801 = vrot.slane %v3796, %v3800
        %v3819 = vunpack.c.l.b16 %v3780
        %v3820 = vunpack.c.l.b16 %v3781
        %v3821 = vunpack.c.l.b16 %v3782
        %v3822 = vunpack.c.l.b16 %v3783
        %v3823 = vunpack.c.l.b16 %v3784
        %v3824 = vunpack.c.l.b16 %v3785
        %v3825 = vunpack.c.l.b16 %v3786
        %v3826 = vunpack.c.l.b16 %v3787
        %v3827 = vunpack.c.l.b16 %v3788
        %v3828 = vunpack.c.l.b16 %v3789
        %v3829 = vunpack.c.l.b16 %v3790
        %v3830 = vunpack.c.l.b16 %v3791
        %v3831 = vunpack.c.l.b16 %v3792
        %v3832 = vunpack.c.l.b16 %v3793
        %v3833 = vunpack.c.l.b16 %v3794
        %v3834 = vunpack.c.l.b16 %v3795
        %v3835 = vpack.c.b16 %v3820, %v3819
        %v3836 = vpack.c.b16 %v3822, %v3821
        %v3837 = vpack.c.b16 %v3824, %v3823
        %v3838 = vpack.c.b16 %v3826, %v3825
        %v3839 = vpack.c.b16 %v3828, %v3827
        %v3840 = vpack.c.b16 %v3830, %v3829
        %v3841 = vpack.c.b16 %v3832, %v3831
        %v3842 = vpack.c.b16 %v3834, %v3833
        %3851 = vmatprep.subr.bf16.mxu0 0
        %3852 = vmatpush1.bf16.msra.mxu0 %v3842
        %3853 = vmatprep.subr.bf16.mxu0 0
        %3854 = vmatpush1.bf16.msra.mxu0 %v3841
        %3855 = vmatprep.subr.bf16.mxu0 0
        %3856 = vmatpush1.bf16.msra.mxu0 %v3840
        %3857 = vmatprep.subr.bf16.mxu0 0
        %3858 = vmatpush1.bf16.msra.mxu0 %v3839
        %3859 = vmatprep.subr.bf16.mxu0 0
        %3860 = vmatpush1.bf16.msra.mxu0 %v3838
        %3861 = vmatprep.subr.bf16.mxu0 0
        %3862 = vmatpush1.bf16.msra.mxu0 %v3837
        %3863 = vmatprep.subr.bf16.mxu0 0
        %3864 = vmatpush1.bf16.msra.mxu0 %v3836
        %3865 = vmatprep.subr.bf16.mxu0 0
        %3866 = vmatpush1.bf16.msra.mxu0 %v3835
        %3867 = vmatprep.subr.bf16.mxu0 0
        %3868 = vmatpush2.bf16.msra.mxu0 0
        %3869 = vmatprep.subr.bf16.mxu0 0
        %3870 = vmatpush2.bf16.msra.mxu0 0
        %3871 = vmatprep.subr.bf16.mxu0 0
        %3872 = vmatpush2.bf16.msra.mxu0 0
        %3873 = vmatprep.subr.bf16.mxu0 0
        %3874 = vmatpush2.bf16.msra.mxu0 0
        %3875 = vmatprep.subr.bf16.mxu0 0
        %3876 = vmatpush2.bf16.msra.mxu0 0
        %3877 = vmatprep.subr.bf16.mxu0 0
        %3878 = vmatpush2.bf16.msra.mxu0 0
        %3879 = vmatprep.subr.bf16.mxu0 0
        %3880 = vmatpush2.bf16.msra.mxu0 0
        %3881 = vmatprep.subr.bf16.mxu0 0
        %3882 = vmatpush2.bf16.msra.mxu0 0
        %3883 = vmatprep.mubr.bf16.mxu0 0
        %3884 = vmatmul.mubr.bf16.gmra.mxu0 %v3779
        %v3885 = vpop.f32.mrf.mxu0
        %v3886 = vadd.f32 %v3801, %v3885
        %v3887 = vpop.f32.mrf.mxu0
        %v3888 = vpop.f32.mrf.mxu0
        %v3889 = vpop.f32.mrf.mxu0
        %3890 = vdwg.mxu0
        %v3891 = vpack.c.bf16 %v898, %v898
        %v3892 = vld [vmem:[#allocation11] sm:$0xff]
        %v3893 = vld [vmem:[#allocation11 + $0x8] sm:$0xff]
        %v3894 = vld [vmem:[#allocation11 + $0x10] sm:$0xff]
        %v3895 = vld [vmem:[#allocation11 + $0x18] sm:$0xff]
        %v3896 = vld [vmem:[#allocation11 + $0x20] sm:$0xff]
        %v3897 = vld [vmem:[#allocation11 + $0x28] sm:$0xff]
        %v3898 = vld [vmem:[#allocation11 + $0x30] sm:$0xff]
        %v3899 = vld [vmem:[#allocation11 + $0x38] sm:$0xff]
        %v3900 = vld [vmem:[#allocation11 + $0x40] sm:$0xff]
        %v3901 = vld [vmem:[#allocation11 + $0x48] sm:$0xff]
        %v3902 = vld [vmem:[#allocation11 + $0x50] sm:$0xff]
        %v3903 = vld [vmem:[#allocation11 + $0x58] sm:$0xff]
        %v3904 = vld [vmem:[#allocation11 + $0x60] sm:$0xff]
        %v3905 = vld [vmem:[#allocation11 + $0x68] sm:$0xff]
        %v3906 = vld [vmem:[#allocation11 + $0x70] sm:$0xff]
        %v3907 = vld [vmem:[#allocation11 + $0x78] sm:$0xff]
        %v3908 = vld [vmem:[%s11] sm:$0x3]
        %v3910 = vlaneseq
        %v3911 = vshrl.u32 %v3910, 7
        %v3912 = vsub.s32 0, %v3911
        %v3913 = vrot.slane %v3908, %v3912
        %v3914 = vlaneseq
        %v3915 = vshrl.u32 %v3914, 7
        %v3916 = vsub.s32 1, %v3915
        %v3917 = vrot.slane %v3908, %v3916
        %v3936 = vunpack.c.l.b16 %v3892
        %v3937 = vunpack.c.h.b16 %v3892
        %v3938 = vunpack.c.l.b16 %v3893
        %v3939 = vunpack.c.h.b16 %v3893
        %v3940 = vunpack.c.l.b16 %v3894
        %v3941 = vunpack.c.h.b16 %v3894
        %v3942 = vunpack.c.l.b16 %v3895
        %v3943 = vunpack.c.h.b16 %v3895
        %v3944 = vunpack.c.l.b16 %v3896
        %v3945 = vunpack.c.h.b16 %v3896
        %v3946 = vunpack.c.l.b16 %v3897
        %v3947 = vunpack.c.h.b16 %v3897
        %v3948 = vunpack.c.l.b16 %v3898
        %v3949 = vunpack.c.h.b16 %v3898
        %v3950 = vunpack.c.l.b16 %v3899
        %v3951 = vunpack.c.h.b16 %v3899
        %v3952 = vunpack.c.l.b16 %v3900
        %v3953 = vunpack.c.h.b16 %v3900
        %v3954 = vunpack.c.l.b16 %v3901
        %v3955 = vunpack.c.h.b16 %v3901
        %v3956 = vunpack.c.l.b16 %v3902
        %v3957 = vunpack.c.h.b16 %v3902
        %v3958 = vunpack.c.l.b16 %v3903
        %v3959 = vunpack.c.h.b16 %v3903
        %v3960 = vunpack.c.l.b16 %v3904
        %v3961 = vunpack.c.h.b16 %v3904
        %v3962 = vunpack.c.l.b16 %v3905
        %v3963 = vunpack.c.h.b16 %v3905
        %v3964 = vunpack.c.l.b16 %v3906
        %v3965 = vunpack.c.h.b16 %v3906
        %v3966 = vunpack.c.l.b16 %v3907
        %v3967 = vunpack.c.h.b16 %v3907
        %v3968 = vpack.c.b16 %v3938, %v3936
        %v3969 = vpack.c.b16 %v3939, %v3937
        %v3970 = vpack.c.b16 %v3942, %v3940
        %v3971 = vpack.c.b16 %v3943, %v3941
        %v3972 = vpack.c.b16 %v3946, %v3944
        %v3973 = vpack.c.b16 %v3947, %v3945
        %v3974 = vpack.c.b16 %v3950, %v3948
        %v3975 = vpack.c.b16 %v3951, %v3949
        %v3976 = vpack.c.b16 %v3954, %v3952
        %v3977 = vpack.c.b16 %v3955, %v3953
        %v3978 = vpack.c.b16 %v3958, %v3956
        %v3979 = vpack.c.b16 %v3959, %v3957
        %v3980 = vpack.c.b16 %v3962, %v3960
        %v3981 = vpack.c.b16 %v3963, %v3961
        %v3982 = vpack.c.b16 %v3966, %v3964
        %v3983 = vpack.c.b16 %v3967, %v3965
        %4000 = vmatprep.subr.bf16.mxu0 %v3983
        %4001 = vmatpush1.bf16.msra.mxu0 %v3982
        %4002 = vmatprep.subr.bf16.mxu0 %v3981
        %4003 = vmatpush1.bf16.msra.mxu0 %v3980
        %4004 = vmatprep.subr.bf16.mxu0 %v3979
        %4005 = vmatpush1.bf16.msra.mxu0 %v3978
        %4006 = vmatprep.subr.bf16.mxu0 %v3977
        %4007 = vmatpush1.bf16.msra.mxu0 %v3976
        %4008 = vmatprep.subr.bf16.mxu0 %v3975
        %4009 = vmatpush1.bf16.msra.mxu0 %v3974
        %4010 = vmatprep.subr.bf16.mxu0 %v3973
        %4011 = vmatpush1.bf16.msra.mxu0 %v3972
        %4012 = vmatprep.subr.bf16.mxu0 %v3971
        %4013 = vmatpush1.bf16.msra.mxu0 %v3970
        %4014 = vmatprep.subr.bf16.mxu0 %v3969
        %4015 = vmatpush1.bf16.msra.mxu0 %v3968
        %4016 = vmatprep.subr.bf16.mxu0 0
        %4017 = vmatpush2.bf16.msra.mxu0 0
        %4018 = vmatprep.subr.bf16.mxu0 0
        %4019 = vmatpush2.bf16.msra.mxu0 0
        %4020 = vmatprep.subr.bf16.mxu0 0
        %4021 = vmatpush2.bf16.msra.mxu0 0
        %4022 = vmatprep.subr.bf16.mxu0 0
        %4023 = vmatpush2.bf16.msra.mxu0 0
        %4024 = vmatprep.subr.bf16.mxu0 0
        %4025 = vmatpush2.bf16.msra.mxu0 0
        %4026 = vmatprep.subr.bf16.mxu0 0
        %4027 = vmatpush2.bf16.msra.mxu0 0
        %4028 = vmatprep.subr.bf16.mxu0 0
        %4029 = vmatpush2.bf16.msra.mxu0 0
        %4030 = vmatprep.subr.bf16.mxu0 0
        %4031 = vmatpush2.bf16.msra.mxu0 0
        %4032 = vmatprep.mubr.bf16.mxu0 0
        %4033 = vmatmul.mubr.bf16.gmra.mxu0 %v3891
        %v4034 = vpop.f32.mrf.mxu0
        %v4035 = vadd.f32 %v3913, %v4034
        %v4036 = vpop.f32.mrf.mxu0
        %v4037 = vadd.f32 %v3917, %v4036
        %v4038 = vpop.f32.mrf.mxu0
        %v4039 = vpop.f32.mrf.mxu0
        %4040 = vdwg.mxu0
        %v4041 = vld [vmem:[#allocation13] sm:$0xf]
        %v4042 = vld [vmem:[#allocation13 + $0x4] sm:$0xf]
        %v4043 = vld [vmem:[#allocation13 + $0x8] sm:$0xf]
        %v4044 = vld [vmem:[#allocation13 + $0xc] sm:$0xf]
        %v4045 = vld [vmem:[#allocation13 + $0x10] sm:$0xf]
        %v4046 = vld [vmem:[#allocation13 + $0x14] sm:$0xf]
        %v4047 = vld [vmem:[#allocation13 + $0x18] sm:$0xf]
        %v4048 = vld [vmem:[#allocation13 + $0x1c] sm:$0xf]
        %v4049 = vld [vmem:[#allocation13 + $0x20] sm:$0xf]
        %v4050 = vld [vmem:[#allocation13 + $0x24] sm:$0xf]
        %v4051 = vld [vmem:[#allocation13 + $0x28] sm:$0xf]
        %v4052 = vld [vmem:[#allocation13 + $0x2c] sm:$0xf]
        %v4053 = vld [vmem:[#allocation13 + $0x30] sm:$0xf]
        %v4054 = vld [vmem:[#allocation13 + $0x34] sm:$0xf]
        %v4055 = vld [vmem:[#allocation13 + $0x38] sm:$0xf]
        %v4056 = vld [vmem:[#allocation13 + $0x3c] sm:$0xf]
        %v4057 = vmul.f32 %v3886, 0.25
        %4059 = vrot.lane.b32.xlu0 %v4057, 112
        %v4060 = vpop.permute.xlu0 %4059
        %4061 = vrot.lane.b32.xlu0 %v4057, 96
        %v4062 = vpop.permute.xlu0 %4061
        %4063 = vrot.lane.b32.xlu0 %v4057, 80
        %v4064 = vpop.permute.xlu0 %4063
        %4065 = vrot.lane.b32.xlu0 %v4057, 64
        %v4066 = vpop.permute.xlu0 %4065
        %4067 = vrot.lane.b32.xlu0 %v4057, 48
        %v4068 = vpop.permute.xlu0 %4067
        %4069 = vrot.lane.b32.xlu0 %v4057, 32
        %v4070 = vpop.permute.xlu0 %4069
        %4071 = vrot.lane.b32.xlu0 %v4057, 16
        %v4072 = vpop.permute.xlu0 %4071
        %4074 = vrot.lane.b32.xlu0 %v4035, 112
        %v4075 = vpop.permute.xlu0 %4074
        %4077 = vrot.lane.b32.xlu0 %v4035, 96
        %v4078 = vpop.permute.xlu0 %4077
        %4080 = vrot.lane.b32.xlu0 %v4035, 80
        %v4081 = vpop.permute.xlu0 %4080
        %4083 = vrot.lane.b32.xlu0 %v4035, 64
        %v4084 = vpop.permute.xlu0 %4083
        %4086 = vrot.lane.b32.xlu0 %v4035, 48
        %v4087 = vpop.permute.xlu0 %4086
        %4089 = vrot.lane.b32.xlu0 %v4035, 32
        %v4090 = vpop.permute.xlu0 %4089
        %4092 = vrot.lane.b32.xlu0 %v4035, 16
        %v4093 = vpop.permute.xlu0 %4092
        %4096 = vrot.lane.b32.xlu0 %v4037, 112
        %v4097 = vpop.permute.xlu0 %4096
        %4099 = vrot.lane.b32.xlu0 %v4037, 96
        %v4100 = vpop.permute.xlu0 %4099
        %4102 = vrot.lane.b32.xlu0 %v4037, 80
        %v4103 = vpop.permute.xlu0 %4102
        %4105 = vrot.lane.b32.xlu0 %v4037, 64
        %v4106 = vpop.permute.xlu0 %4105
        %4108 = vrot.lane.b32.xlu0 %v4037, 48
        %v4109 = vpop.permute.xlu0 %4108
        %4111 = vrot.lane.b32.xlu0 %v4037, 32
        %v4112 = vpop.permute.xlu0 %4111
        %4114 = vrot.lane.b32.xlu0 %v4037, 16
        %v4115 = vpop.permute.xlu0 %4114
        %4117 = vxpose.xlu0.b32.start [1/16] %v4035, 128
        %4118 = vxpose.xlu0.b32.cont [2/16] 0.0, 128
        %4119 = vxpose.xlu0.b32.cont [3/16] 0.0, 128
        %4120 = vxpose.xlu0.b32.cont [4/16] 0.0, 128
        %4121 = vxpose.xlu0.b32.cont [5/16] 0.0, 128
        %4122 = vxpose.xlu0.b32.cont [6/16] 0.0, 128
        %4123 = vxpose.xlu0.b32.cont [7/16] 0.0, 128
        %4124 = vxpose.xlu0.b32.cont [8/16] 0.0, 128
        %4125 = vxpose.xlu0.b32.cont [9/16] 0.0, 128
        %4126 = vxpose.xlu0.b32.cont [10/16] 0.0, 128
        %4127 = vxpose.xlu0.b32.cont [11/16] 0.0, 128
        %4128 = vxpose.xlu0.b32.cont [12/16] 0.0, 128
        %4129 = vxpose.xlu0.b32.cont [13/16] 0.0, 128
        %4130 = vxpose.xlu0.b32.cont [14/16] 0.0, 128
        %4131 = vxpose.xlu0.b32.cont [15/16] 0.0, 128
        %4132 = vxpose.xlu0.b32.end [16/16] 0.0, 128
        %v4133 = vpop.trf.xlu0
        %v4134 = vpop.trf.xlu0
        %v4135 = vpop.trf.xlu0
        %v4136 = vpop.trf.xlu0
        %v4137 = vpop.trf.xlu0
        %v4138 = vpop.trf.xlu0
        %v4139 = vpop.trf.xlu0
        %v4140 = vpop.trf.xlu0
        %v4141 = vpop.trf.xlu0
        %v4142 = vpop.trf.xlu0
        %v4143 = vpop.trf.xlu0
        %v4144 = vpop.trf.xlu0
        %v4145 = vpop.trf.xlu0
        %v4146 = vpop.trf.xlu0
        %v4147 = vpop.trf.xlu0
        %v4148 = vpop.trf.xlu0
        %4149 = vxpose.xlu0.b32.start [1/16] %v4075, 128
        %4150 = vxpose.xlu0.b32.cont [2/16] 0.0, 128
        %4151 = vxpose.xlu0.b32.cont [3/16] 0.0, 128
        %4152 = vxpose.xlu0.b32.cont [4/16] 0.0, 128
        %4153 = vxpose.xlu0.b32.cont [5/16] 0.0, 128
        %4154 = vxpose.xlu0.b32.cont [6/16] 0.0, 128
        %4155 = vxpose.xlu0.b32.cont [7/16] 0.0, 128
        %4156 = vxpose.xlu0.b32.cont [8/16] 0.0, 128
        %4157 = vxpose.xlu0.b32.cont [9/16] 0.0, 128
        %4158 = vxpose.xlu0.b32.cont [10/16] 0.0, 128
        %4159 = vxpose.xlu0.b32.cont [11/16] 0.0, 128
        %4160 = vxpose.xlu0.b32.cont [12/16] 0.0, 128
        %4161 = vxpose.xlu0.b32.cont [13/16] 0.0, 128
        %4162 = vxpose.xlu0.b32.cont [14/16] 0.0, 128
        %4163 = vxpose.xlu0.b32.cont [15/16] 0.0, 128
        %4164 = vxpose.xlu0.b32.end [16/16] 0.0, 128
        %v4165 = vpop.trf.xlu0
        %v4166 = vpop.trf.xlu0
        %v4167 = vpop.trf.xlu0
        %v4168 = vpop.trf.xlu0
        %v4169 = vpop.trf.xlu0
        %v4170 = vpop.trf.xlu0
        %v4171 = vpop.trf.xlu0
        %v4172 = vpop.trf.xlu0
        %v4173 = vpop.trf.xlu0
        %v4174 = vpop.trf.xlu0
        %v4175 = vpop.trf.xlu0
        %v4176 = vpop.trf.xlu0
        %v4177 = vpop.trf.xlu0
        %v4178 = vpop.trf.xlu0
        %v4179 = vpop.trf.xlu0
        %v4180 = vpop.trf.xlu0
        %4181 = vxpose.xlu0.b32.start [1/16] %v4078, 128
        %4182 = vxpose.xlu0.b32.cont [2/16] 0.0, 128
        %4183 = vxpose.xlu0.b32.cont [3/16] 0.0, 128
        %4184 = vxpose.xlu0.b32.cont [4/16] 0.0, 128
        %4185 = vxpose.xlu0.b32.cont [5/16] 0.0, 128
        %4186 = vxpose.xlu0.b32.cont [6/16] 0.0, 128
        %4187 = vxpose.xlu0.b32.cont [7/16] 0.0, 128
        %4188 = vxpose.xlu0.b32.cont [8/16] 0.0, 128
        %4189 = vxpose.xlu0.b32.cont [9/16] 0.0, 128
        %4190 = vxpose.xlu0.b32.cont [10/16] 0.0, 128
        %4191 = vxpose.xlu0.b32.cont [11/16] 0.0, 128
        %4192 = vxpose.xlu0.b32.cont [12/16] 0.0, 128
        %4193 = vxpose.xlu0.b32.cont [13/16] 0.0, 128
        %4194 = vxpose.xlu0.b32.cont [14/16] 0.0, 128
        %4195 = vxpose.xlu0.b32.cont [15/16] 0.0, 128
        %4196 = vxpose.xlu0.b32.end [16/16] 0.0, 128
        %v4197 = vpop.trf.xlu0
        %v4198 = vpop.trf.xlu0
        %v4199 = vpop.trf.xlu0
        %v4200 = vpop.trf.xlu0
        %v4201 = vpop.trf.xlu0
        %v4202 = vpop.trf.xlu0
        %v4203 = vpop.trf.xlu0
        %v4204 = vpop.trf.xlu0
        %v4205 = vpop.trf.xlu0
        %v4206 = vpop.trf.xlu0
        %v4207 = vpop.trf.xlu0
        %v4208 = vpop.trf.xlu0
        %v4209 = vpop.trf.xlu0
        %v4210 = vpop.trf.xlu0
        %v4211 = vpop.trf.xlu0
        %v4212 = vpop.trf.xlu0
        %4213 = vxpose.xlu0.b32.start [1/16] %v4081, 128
        %4214 = vxpose.xlu0.b32.cont [2/16] 0.0, 128
        %4215 = vxpose.xlu0.b32.cont [3/16] 0.0, 128
        %4216 = vxpose.xlu0.b32.cont [4/16] 0.0, 128
        %4217 = vxpose.xlu0.b32.cont [5/16] 0.0, 128
        %4218 = vxpose.xlu0.b32.cont [6/16] 0.0, 128
        %4219 = vxpose.xlu0.b32.cont [7/16] 0.0, 128
        %4220 = vxpose.xlu0.b32.cont [8/16] 0.0, 128
        %4221 = vxpose.xlu0.b32.cont [9/16] 0.0, 128
        %4222 = vxpose.xlu0.b32.cont [10/16] 0.0, 128
        %4223 = vxpose.xlu0.b32.cont [11/16] 0.0, 128
        %4224 = vxpose.xlu0.b32.cont [12/16] 0.0, 128
        %4225 = vxpose.xlu0.b32.cont [13/16] 0.0, 128
        %4226 = vxpose.xlu0.b32.cont [14/16] 0.0, 128
        %4227 = vxpose.xlu0.b32.cont [15/16] 0.0, 128
        %4228 = vxpose.xlu0.b32.end [16/16] 0.0, 128
        %v4229 = vpop.trf.xlu0
        %v4230 = vpop.trf.xlu0
        %v4231 = vpop.trf.xlu0
        %v4232 = vpop.trf.xlu0
        %v4233 = vpop.trf.xlu0
        %v4234 = vpop.trf.xlu0
        %v4235 = vpop.trf.xlu0
        %v4236 = vpop.trf.xlu0
        %v4237 = vpop.trf.xlu0
        %v4238 = vpop.trf.xlu0
        %v4239 = vpop.trf.xlu0
        %v4240 = vpop.trf.xlu0
        %v4241 = vpop.trf.xlu0
        %v4242 = vpop.trf.xlu0
        %v4243 = vpop.trf.xlu0
        %v4244 = vpop.trf.xlu0
        %4245 = vxpose.xlu0.b32.start [1/16] %v4084, 128
        %4246 = vxpose.xlu0.b32.cont [2/16] 0.0, 128
        %4247 = vxpose.xlu0.b32.cont [3/16] 0.0, 128
        %4248 = vxpose.xlu0.b32.cont [4/16] 0.0, 128
        %4249 = vxpose.xlu0.b32.cont [5/16] 0.0, 128
        %4250 = vxpose.xlu0.b32.cont [6/16] 0.0, 128
        %4251 = vxpose.xlu0.b32.cont [7/16] 0.0, 128
        %4252 = vxpose.xlu0.b32.cont [8/16] 0.0, 128
        %4253 = vxpose.xlu0.b32.cont [9/16] 0.0, 128
        %4254 = vxpose.xlu0.b32.cont [10/16] 0.0, 128
        %4255 = vxpose.xlu0.b32.cont [11/16] 0.0, 128
        %4256 = vxpose.xlu0.b32.cont [12/16] 0.0, 128
        %4257 = vxpose.xlu0.b32.cont [13/16] 0.0, 128
        %4258 = vxpose.xlu0.b32.cont [14/16] 0.0, 128
        %4259 = vxpose.xlu0.b32.cont [15/16] 0.0, 128
        %4260 = vxpose.xlu0.b32.end [16/16] 0.0, 128
        %v4261 = vpop.trf.xlu0
        %v4262 = vpop.trf.xlu0
        %v4263 = vpop.trf.xlu0
        %v4264 = vpop.trf.xlu0
        %v4265 = vpop.trf.xlu0
        %v4266 = vpop.trf.xlu0
        %v4267 = vpop.trf.xlu0
        %v4268 = vpop.trf.xlu0
        %v4269 = vpop.trf.xlu0
        %v4270 = vpop.trf.xlu0
        %v4271 = vpop.trf.xlu0
        %v4272 = vpop.trf.xlu0
        %v4273 = vpop.trf.xlu0
        %v4274 = vpop.trf.xlu0
        %v4275 = vpop.trf.xlu0
        %v4276 = vpop.trf.xlu0
        %4277 = vxpose.xlu0.b32.start [1/16] %v4087, 128
        %4278 = vxpose.xlu0.b32.cont [2/16] 0.0, 128
        %4279 = vxpose.xlu0.b32.cont [3/16] 0.0, 128
        %4280 = vxpose.xlu0.b32.cont [4/16] 0.0, 128
        %4281 = vxpose.xlu0.b32.cont [5/16] 0.0, 128
        %4282 = vxpose.xlu0.b32.cont [6/16] 0.0, 128
        %4283 = vxpose.xlu0.b32.cont [7/16] 0.0, 128
        %4284 = vxpose.xlu0.b32.cont [8/16] 0.0, 128
        %4285 = vxpose.xlu0.b32.cont [9/16] 0.0, 128
        %4286 = vxpose.xlu0.b32.cont [10/16] 0.0, 128
        %4287 = vxpose.xlu0.b32.cont [11/16] 0.0, 128
        %4288 = vxpose.xlu0.b32.cont [12/16] 0.0, 128
        %4289 = vxpose.xlu0.b32.cont [13/16] 0.0, 128
        %4290 = vxpose.xlu0.b32.cont [14/16] 0.0, 128
        %4291 = vxpose.xlu0.b32.cont [15/16] 0.0, 128
        %4292 = vxpose.xlu0.b32.end [16/16] 0.0, 128
        %v4293 = vpop.trf.xlu0
        %v4294 = vpop.trf.xlu0
        %v4295 = vpop.trf.xlu0
        %v4296 = vpop.trf.xlu0
        %v4297 = vpop.trf.xlu0
        %v4298 = vpop.trf.xlu0
        %v4299 = vpop.trf.xlu0
        %v4300 = vpop.trf.xlu0
        %v4301 = vpop.trf.xlu0
        %v4302 = vpop.trf.xlu0
        %v4303 = vpop.trf.xlu0
        %v4304 = vpop.trf.xlu0
        %v4305 = vpop.trf.xlu0
        %v4306 = vpop.trf.xlu0
        %v4307 = vpop.trf.xlu0
        %v4308 = vpop.trf.xlu0
        %4309 = vxpose.xlu0.b32.start [1/16] %v4090, 128
        %4310 = vxpose.xlu0.b32.cont [2/16] 0.0, 128
        %4311 = vxpose.xlu0.b32.cont [3/16] 0.0, 128
        %4312 = vxpose.xlu0.b32.cont [4/16] 0.0, 128
        %4313 = vxpose.xlu0.b32.cont [5/16] 0.0, 128
        %4314 = vxpose.xlu0.b32.cont [6/16] 0.0, 128
        %4315 = vxpose.xlu0.b32.cont [7/16] 0.0, 128
        %4316 = vxpose.xlu0.b32.cont [8/16] 0.0, 128
        %4317 = vxpose.xlu0.b32.cont [9/16] 0.0, 128
        %4318 = vxpose.xlu0.b32.cont [10/16] 0.0, 128
        %4319 = vxpose.xlu0.b32.cont [11/16] 0.0, 128
        %4320 = vxpose.xlu0.b32.cont [12/16] 0.0, 128
        %4321 = vxpose.xlu0.b32.cont [13/16] 0.0, 128
        %4322 = vxpose.xlu0.b32.cont [14/16] 0.0, 128
        %4323 = vxpose.xlu0.b32.cont [15/16] 0.0, 128
        %4324 = vxpose.xlu0.b32.end [16/16] 0.0, 128
        %v4325 = vpop.trf.xlu0
        %v4326 = vpop.trf.xlu0
        %v4327 = vpop.trf.xlu0
        %v4328 = vpop.trf.xlu0
        %v4329 = vpop.trf.xlu0
        %v4330 = vpop.trf.xlu0
        %v4331 = vpop.trf.xlu0
        %v4332 = vpop.trf.xlu0
        %v4333 = vpop.trf.xlu0
        %v4334 = vpop.trf.xlu0
        %v4335 = vpop.trf.xlu0
        %v4336 = vpop.trf.xlu0
        %v4337 = vpop.trf.xlu0
        %v4338 = vpop.trf.xlu0
        %v4339 = vpop.trf.xlu0
        %v4340 = vpop.trf.xlu0
        %4341 = vxpose.xlu0.b32.start [1/16] %v4093, 128
        %4342 = vxpose.xlu0.b32.cont [2/16] 0.0, 128
        %4343 = vxpose.xlu0.b32.cont [3/16] 0.0, 128
        %4344 = vxpose.xlu0.b32.cont [4/16] 0.0, 128
        %4345 = vxpose.xlu0.b32.cont [5/16] 0.0, 128
        %4346 = vxpose.xlu0.b32.cont [6/16] 0.0, 128
        %4347 = vxpose.xlu0.b32.cont [7/16] 0.0, 128
        %4348 = vxpose.xlu0.b32.cont [8/16] 0.0, 128
        %4349 = vxpose.xlu0.b32.cont [9/16] 0.0, 128
        %4350 = vxpose.xlu0.b32.cont [10/16] 0.0, 128
        %4351 = vxpose.xlu0.b32.cont [11/16] 0.0, 128
        %4352 = vxpose.xlu0.b32.cont [12/16] 0.0, 128
        %4353 = vxpose.xlu0.b32.cont [13/16] 0.0, 128
        %4354 = vxpose.xlu0.b32.cont [14/16] 0.0, 128
        %4355 = vxpose.xlu0.b32.cont [15/16] 0.0, 128
        %4356 = vxpose.xlu0.b32.end [16/16] 0.0, 128
        %v4357 = vpop.trf.xlu0
        %v4358 = vpop.trf.xlu0
        %v4359 = vpop.trf.xlu0
        %v4360 = vpop.trf.xlu0
        %v4361 = vpop.trf.xlu0
        %v4362 = vpop.trf.xlu0
        %v4363 = vpop.trf.xlu0
        %v4364 = vpop.trf.xlu0
        %v4365 = vpop.trf.xlu0
        %v4366 = vpop.trf.xlu0
        %v4367 = vpop.trf.xlu0
        %v4368 = vpop.trf.xlu0
        %v4369 = vpop.trf.xlu0
        %v4370 = vpop.trf.xlu0
        %v4371 = vpop.trf.xlu0
        %v4372 = vpop.trf.xlu0
        %v4373 = vsel %vm1490, %v4057, 0
        %4375 = vmatprep.subr.mxu0 0.0
        %4376 = vmatpush1.msra.mxu0 0.0
        %4377 = vmatprep.subr.mxu0 0.0
        %4378 = vmatpush1.msra.mxu0 0.0
        %4379 = vmatprep.subr.mxu0 0.0
        %4380 = vmatpush1.msra.mxu0 0.0
        %4381 = vmatprep.subr.mxu0 0.0
        %4382 = vmatpush1.msra.mxu0 0.0
        %4383 = vmatprep.subr.mxu0 0.0
        %4384 = vmatpush1.msra.mxu0 0.0
        %4385 = vmatprep.subr.mxu0 0.0
        %4386 = vmatpush1.msra.mxu0 0.0
        %4387 = vmatprep.subr.mxu0 0.0
        %4388 = vmatpush1.msra.mxu0 0.0
        %4389 = vmatprep.subr.mxu0 0.0
        %4390 = vmatpush1.msra.mxu0 0.0
        %4391 = vmatprep.subr.mxu0 0.0
        %4392 = vmatpush1.msra.mxu0 0.0
        %4393 = vmatprep.subr.mxu0 0.0
        %4394 = vmatpush1.msra.mxu0 0.0
        %4395 = vmatprep.subr.mxu0 0.0
        %4396 = vmatpush1.msra.mxu0 0.0
        %4397 = vmatprep.subr.mxu0 0.0
        %4398 = vmatpush1.msra.mxu0 0.0
        %4399 = vmatprep.subr.mxu0 0.0
        %4400 = vmatpush1.msra.mxu0 0.0
        %4401 = vmatprep.subr.mxu0 0.0
        %4402 = vmatpush1.msra.mxu0 0.0
        %4403 = vmatprep.subr.mxu0 0.0
        %4404 = vmatpush1.msra.mxu0 %v4134
        %4405 = vmatprep.subr.mxu0 0.0
        %4406 = vmatpush1.msra.mxu0 %v4133
        %4407 = vmatprep.subr.mxu0 0.0
        %4408 = vmatpush2.msra.mxu0 0.0
        %4409 = vmatprep.subr.mxu0 0.0
        %4410 = vmatpush2.msra.mxu0 0.0
        %4411 = vmatprep.subr.mxu0 0.0
        %4412 = vmatpush2.msra.mxu0 0.0
        %4413 = vmatprep.subr.mxu0 0.0
        %4414 = vmatpush2.msra.mxu0 0.0
        %4415 = vmatprep.subr.mxu0 0.0
        %4416 = vmatpush2.msra.mxu0 0.0
        %4417 = vmatprep.subr.mxu0 0.0
        %4418 = vmatpush2.msra.mxu0 0.0
        %4419 = vmatprep.subr.mxu0 0.0
        %4420 = vmatpush2.msra.mxu0 0.0
        %4421 = vmatprep.subr.mxu0 0.0
        %4422 = vmatpush2.msra.mxu0 0.0
        %4423 = vmatprep.subr.mxu0 0.0
        %4424 = vmatpush2.msra.mxu0 0.0
        %4425 = vmatprep.subr.mxu0 0.0
        %4426 = vmatpush2.msra.mxu0 0.0
        %4427 = vmatprep.subr.mxu0 0.0
        %4428 = vmatpush2.msra.mxu0 0.0
        %4429 = vmatprep.subr.mxu0 0.0
        %4430 = vmatpush2.msra.mxu0 0.0
        %4431 = vmatprep.subr.mxu0 0.0
        %4432 = vmatpush2.msra.mxu0 0.0
        %4433 = vmatprep.subr.mxu0 0.0
        %4434 = vmatpush2.msra.mxu0 0.0
        %4435 = vmatprep.subr.mxu0 0.0
        %4436 = vmatpush2.msra.mxu0 0.0
        %4437 = vmatprep.subr.mxu0 0.0
        %4438 = vmatpush2.msra.mxu0 0.0
        %4439 = vmatprep.mubr.f32.mxu0 0.0
        %4440 = vmatmul.mubr.f32.gmra.mxu0 %v4373
        %v4441 = vpop.f32.mrf.mxu0
        %v4442 = vadd.f32 0.0, %v4441
        %v4443 = vpop.f32.mrf.mxu0
        %4444 = vdwg.mxu0
        %v4445 = vsel %vm1490, %v4060, 0
        %4447 = vmatprep.subr.mxu0 0.0
        %4448 = vmatpush1.msra.mxu0 0.0
        %4449 = vmatprep.subr.mxu0 0.0
        %4450 = vmatpush1.msra.mxu0 0.0
        %4451 = vmatprep.subr.mxu0 0.0
        %4452 = vmatpush1.msra.mxu0 0.0
        %4453 = vmatprep.subr.mxu0 0.0
        %4454 = vmatpush1.msra.mxu0 0.0
        %4455 = vmatprep.subr.mxu0 0.0
        %4456 = vmatpush1.msra.mxu0 0.0
        %4457 = vmatprep.subr.mxu0 0.0
        %4458 = vmatpush1.msra.mxu0 0.0
        %4459 = vmatprep.subr.mxu0 0.0
        %4460 = vmatpush1.msra.mxu0 0.0
        %4461 = vmatprep.subr.mxu0 0.0
        %4462 = vmatpush1.msra.mxu0 0.0
        %4463 = vmatprep.subr.mxu0 0.0
        %4464 = vmatpush1.msra.mxu0 0.0
        %4465 = vmatprep.subr.mxu0 0.0
        %4466 = vmatpush1.msra.mxu0 0.0
        %4467 = vmatprep.subr.mxu0 0.0
        %4468 = vmatpush1.msra.mxu0 0.0
        %4469 = vmatprep.subr.mxu0 0.0
        %4470 = vmatpush1.msra.mxu0 0.0
        %4471 = vmatprep.subr.mxu0 0.0
        %4472 = vmatpush1.msra.mxu0 0.0
        %4473 = vmatprep.subr.mxu0 0.0
        %4474 = vmatpush1.msra.mxu0 0.0
        %4475 = vmatprep.subr.mxu0 0.0
        %4476 = vmatpush1.msra.mxu0 %v4166
        %4477 = vmatprep.subr.mxu0 0.0
        %4478 = vmatpush1.msra.mxu0 %v4165
        %4479 = vmatprep.subr.mxu0 0.0
        %4480 = vmatpush2.msra.mxu0 0.0
        %4481 = vmatprep.subr.mxu0 0.0
        %4482 = vmatpush2.msra.mxu0 0.0
        %4483 = vmatprep.subr.mxu0 0.0
        %4484 = vmatpush2.msra.mxu0 0.0
        %4485 = vmatprep.subr.mxu0 0.0
        %4486 = vmatpush2.msra.mxu0 0.0
        %4487 = vmatprep.subr.mxu0 0.0
        %4488 = vmatpush2.msra.mxu0 0.0
        %4489 = vmatprep.subr.mxu0 0.0
        %4490 = vmatpush2.msra.mxu0 0.0
        %4491 = vmatprep.subr.mxu0 0.0
        %4492 = vmatpush2.msra.mxu0 0.0
        %4493 = vmatprep.subr.mxu0 0.0
        %4494 = vmatpush2.msra.mxu0 0.0
        %4495 = vmatprep.subr.mxu0 0.0
        %4496 = vmatpush2.msra.mxu0 0.0
        %4497 = vmatprep.subr.mxu0 0.0
        %4498 = vmatpush2.msra.mxu0 0.0
        %4499 = vmatprep.subr.mxu0 0.0
        %4500 = vmatpush2.msra.mxu0 0.0
        %4501 = vmatprep.subr.mxu0 0.0
        %4502 = vmatpush2.msra.mxu0 0.0
        %4503 = vmatprep.subr.mxu0 0.0
        %4504 = vmatpush2.msra.mxu0 0.0
        %4505 = vmatprep.subr.mxu0 0.0
        %4506 = vmatpush2.msra.mxu0 0.0
        %4507 = vmatprep.subr.mxu0 0.0
        %4508 = vmatpush2.msra.mxu0 0.0
        %4509 = vmatprep.subr.mxu0 0.0
        %4510 = vmatpush2.msra.mxu0 0.0
        %4511 = vmatprep.mubr.f32.mxu0 0.0
        %4512 = vmatmul.mubr.f32.gmra.mxu0 %v4445
        %v4513 = vpop.f32.mrf.mxu0
        %v4514 = vadd.f32 0.0, %v4513
        %v4515 = vpop.f32.mrf.mxu0
        %4516 = vdwg.mxu0
        %v4517 = vsel %vm1490, %v4062, 0
        %4519 = vmatprep.subr.mxu0 0.0
        %4520 = vmatpush1.msra.mxu0 0.0
        %4521 = vmatprep.subr.mxu0 0.0
        %4522 = vmatpush1.msra.mxu0 0.0
        %4523 = vmatprep.subr.mxu0 0.0
        %4524 = vmatpush1.msra.mxu0 0.0
        %4525 = vmatprep.subr.mxu0 0.0
        %4526 = vmatpush1.msra.mxu0 0.0
        %4527 = vmatprep.subr.mxu0 0.0
        %4528 = vmatpush1.msra.mxu0 0.0
        %4529 = vmatprep.subr.mxu0 0.0
        %4530 = vmatpush1.msra.mxu0 0.0
        %4531 = vmatprep.subr.mxu0 0.0
        %4532 = vmatpush1.msra.mxu0 0.0
        %4533 = vmatprep.subr.mxu0 0.0
        %4534 = vmatpush1.msra.mxu0 0.0
        %4535 = vmatprep.subr.mxu0 0.0
        %4536 = vmatpush1.msra.mxu0 0.0
        %4537 = vmatprep.subr.mxu0 0.0
        %4538 = vmatpush1.msra.mxu0 0.0
        %4539 = vmatprep.subr.mxu0 0.0
        %4540 = vmatpush1.msra.mxu0 0.0
        %4541 = vmatprep.subr.mxu0 0.0
        %4542 = vmatpush1.msra.mxu0 0.0
        %4543 = vmatprep.subr.mxu0 0.0
        %4544 = vmatpush1.msra.mxu0 0.0
        %4545 = vmatprep.subr.mxu0 0.0
        %4546 = vmatpush1.msra.mxu0 0.0
        %4547 = vmatprep.subr.mxu0 0.0
        %4548 = vmatpush1.msra.mxu0 %v4198
        %4549 = vmatprep.subr.mxu0 0.0
        %4550 = vmatpush1.msra.mxu0 %v4197
        %4551 = vmatprep.subr.mxu0 0.0
        %4552 = vmatpush2.msra.mxu0 0.0
        %4553 = vmatprep.subr.mxu0 0.0
        %4554 = vmatpush2.msra.mxu0 0.0
        %4555 = vmatprep.subr.mxu0 0.0
        %4556 = vmatpush2.msra.mxu0 0.0
        %4557 = vmatprep.subr.mxu0 0.0
        %4558 = vmatpush2.msra.mxu0 0.0
        %4559 = vmatprep.subr.mxu0 0.0
        %4560 = vmatpush2.msra.mxu0 0.0
        %4561 = vmatprep.subr.mxu0 0.0
        %4562 = vmatpush2.msra.mxu0 0.0
        %4563 = vmatprep.subr.mxu0 0.0
        %4564 = vmatpush2.msra.mxu0 0.0
        %4565 = vmatprep.subr.mxu0 0.0
        %4566 = vmatpush2.msra.mxu0 0.0
        %4567 = vmatprep.subr.mxu0 0.0
        %4568 = vmatpush2.msra.mxu0 0.0
        %4569 = vmatprep.subr.mxu0 0.0
        %4570 = vmatpush2.msra.mxu0 0.0
        %4571 = vmatprep.subr.mxu0 0.0
        %4572 = vmatpush2.msra.mxu0 0.0
        %4573 = vmatprep.subr.mxu0 0.0
        %4574 = vmatpush2.msra.mxu0 0.0
        %4575 = vmatprep.subr.mxu0 0.0
        %4576 = vmatpush2.msra.mxu0 0.0
        %4577 = vmatprep.subr.mxu0 0.0
        %4578 = vmatpush2.msra.mxu0 0.0
        %4579 = vmatprep.subr.mxu0 0.0
        %4580 = vmatpush2.msra.mxu0 0.0
        %4581 = vmatprep.subr.mxu0 0.0
        %4582 = vmatpush2.msra.mxu0 0.0
        %4583 = vmatprep.mubr.f32.mxu0 0.0
        %4584 = vmatmul.mubr.f32.gmra.mxu0 %v4517
        %v4585 = vpop.f32.mrf.mxu0
        %v4586 = vadd.f32 0.0, %v4585
        %v4587 = vpop.f32.mrf.mxu0
        %4588 = vdwg.mxu0
        %v4589 = vsel %vm1490, %v4064, 0
        %4591 = vmatprep.subr.mxu0 0.0
        %4592 = vmatpush1.msra.mxu0 0.0
        %4593 = vmatprep.subr.mxu0 0.0
        %4594 = vmatpush1.msra.mxu0 0.0
        %4595 = vmatprep.subr.mxu0 0.0
        %4596 = vmatpush1.msra.mxu0 0.0
        %4597 = vmatprep.subr.mxu0 0.0
        %4598 = vmatpush1.msra.mxu0 0.0
        %4599 = vmatprep.subr.mxu0 0.0
        %4600 = vmatpush1.msra.mxu0 0.0
        %4601 = vmatprep.subr.mxu0 0.0
        %4602 = vmatpush1.msra.mxu0 0.0
        %4603 = vmatprep.subr.mxu0 0.0
        %4604 = vmatpush1.msra.mxu0 0.0
        %4605 = vmatprep.subr.mxu0 0.0
        %4606 = vmatpush1.msra.mxu0 0.0
        %4607 = vmatprep.subr.mxu0 0.0
        %4608 = vmatpush1.msra.mxu0 0.0
        %4609 = vmatprep.subr.mxu0 0.0
        %4610 = vmatpush1.msra.mxu0 0.0
        %4611 = vmatprep.subr.mxu0 0.0
        %4612 = vmatpush1.msra.mxu0 0.0
        %4613 = vmatprep.subr.mxu0 0.0
        %4614 = vmatpush1.msra.mxu0 0.0
        %4615 = vmatprep.subr.mxu0 0.0
        %4616 = vmatpush1.msra.mxu0 0.0
        %4617 = vmatprep.subr.mxu0 0.0
        %4618 = vmatpush1.msra.mxu0 0.0
        %4619 = vmatprep.subr.mxu0 0.0
        %4620 = vmatpush1.msra.mxu0 %v4230
        %4621 = vmatprep.subr.mxu0 0.0
        %4622 = vmatpush1.msra.mxu0 %v4229
        %4623 = vmatprep.subr.mxu0 0.0
        %4624 = vmatpush2.msra.mxu0 0.0
        %4625 = vmatprep.subr.mxu0 0.0
        %4626 = vmatpush2.msra.mxu0 0.0
        %4627 = vmatprep.subr.mxu0 0.0
        %4628 = vmatpush2.msra.mxu0 0.0
        %4629 = vmatprep.subr.mxu0 0.0
        %4630 = vmatpush2.msra.mxu0 0.0
        %4631 = vmatprep.subr.mxu0 0.0
        %4632 = vmatpush2.msra.mxu0 0.0
        %4633 = vmatprep.subr.mxu0 0.0
        %4634 = vmatpush2.msra.mxu0 0.0
        %4635 = vmatprep.subr.mxu0 0.0
        %4636 = vmatpush2.msra.mxu0 0.0
        %4637 = vmatprep.subr.mxu0 0.0
        %4638 = vmatpush2.msra.mxu0 0.0
        %4639 = vmatprep.subr.mxu0 0.0
        %4640 = vmatpush2.msra.mxu0 0.0
        %4641 = vmatprep.subr.mxu0 0.0
        %4642 = vmatpush2.msra.mxu0 0.0
        %4643 = vmatprep.subr.mxu0 0.0
        %4644 = vmatpush2.msra.mxu0 0.0
        %4645 = vmatprep.subr.mxu0 0.0
        %4646 = vmatpush2.msra.mxu0 0.0
        %4647 = vmatprep.subr.mxu0 0.0
        %4648 = vmatpush2.msra.mxu0 0.0
        %4649 = vmatprep.subr.mxu0 0.0
        %4650 = vmatpush2.msra.mxu0 0.0
        %4651 = vmatprep.subr.mxu0 0.0
        %4652 = vmatpush2.msra.mxu0 0.0
        %4653 = vmatprep.subr.mxu0 0.0
        %4654 = vmatpush2.msra.mxu0 0.0
        %4655 = vmatprep.mubr.f32.mxu0 0.0
        %4656 = vmatmul.mubr.f32.gmra.mxu0 %v4589
        %v4657 = vpop.f32.mrf.mxu0
        %v4658 = vadd.f32 0.0, %v4657
        %v4659 = vpop.f32.mrf.mxu0
        %4660 = vdwg.mxu0
        %v4661 = vsel %vm1490, %v4066, 0
        %4663 = vmatprep.subr.mxu0 0.0
        %4664 = vmatpush1.msra.mxu0 0.0
        %4665 = vmatprep.subr.mxu0 0.0
        %4666 = vmatpush1.msra.mxu0 0.0
        %4667 = vmatprep.subr.mxu0 0.0
        %4668 = vmatpush1.msra.mxu0 0.0
        %4669 = vmatprep.subr.mxu0 0.0
        %4670 = vmatpush1.msra.mxu0 0.0
        %4671 = vmatprep.subr.mxu0 0.0
        %4672 = vmatpush1.msra.mxu0 0.0
        %4673 = vmatprep.subr.mxu0 0.0
        %4674 = vmatpush1.msra.mxu0 0.0
        %4675 = vmatprep.subr.mxu0 0.0
        %4676 = vmatpush1.msra.mxu0 0.0
        %4677 = vmatprep.subr.mxu0 0.0
        %4678 = vmatpush1.msra.mxu0 0.0
        %4679 = vmatprep.subr.mxu0 0.0
        %4680 = vmatpush1.msra.mxu0 0.0
        %4681 = vmatprep.subr.mxu0 0.0
        %4682 = vmatpush1.msra.mxu0 0.0
        %4683 = vmatprep.subr.mxu0 0.0
        %4684 = vmatpush1.msra.mxu0 0.0
        %4685 = vmatprep.subr.mxu0 0.0
        %4686 = vmatpush1.msra.mxu0 0.0
        %4687 = vmatprep.subr.mxu0 0.0
        %4688 = vmatpush1.msra.mxu0 0.0
        %4689 = vmatprep.subr.mxu0 0.0
        %4690 = vmatpush1.msra.mxu0 0.0
        %4691 = vmatprep.subr.mxu0 0.0
        %4692 = vmatpush1.msra.mxu0 %v4262
        %4693 = vmatprep.subr.mxu0 0.0
        %4694 = vmatpush1.msra.mxu0 %v4261
        %4695 = vmatprep.subr.mxu0 0.0
        %4696 = vmatpush2.msra.mxu0 0.0
        %4697 = vmatprep.subr.mxu0 0.0
        %4698 = vmatpush2.msra.mxu0 0.0
        %4699 = vmatprep.subr.mxu0 0.0
        %4700 = vmatpush2.msra.mxu0 0.0
        %4701 = vmatprep.subr.mxu0 0.0
        %4702 = vmatpush2.msra.mxu0 0.0
        %4703 = vmatprep.subr.mxu0 0.0
        %4704 = vmatpush2.msra.mxu0 0.0
        %4705 = vmatprep.subr.mxu0 0.0
        %4706 = vmatpush2.msra.mxu0 0.0
        %4707 = vmatprep.subr.mxu0 0.0
        %4708 = vmatpush2.msra.mxu0 0.0
        %4709 = vmatprep.subr.mxu0 0.0
        %4710 = vmatpush2.msra.mxu0 0.0
        %4711 = vmatprep.subr.mxu0 0.0
        %4712 = vmatpush2.msra.mxu0 0.0
        %4713 = vmatprep.subr.mxu0 0.0
        %4714 = vmatpush2.msra.mxu0 0.0
        %4715 = vmatprep.subr.mxu0 0.0
        %4716 = vmatpush2.msra.mxu0 0.0
        %4717 = vmatprep.subr.mxu0 0.0
        %4718 = vmatpush2.msra.mxu0 0.0
        %4719 = vmatprep.subr.mxu0 0.0
        %4720 = vmatpush2.msra.mxu0 0.0
        %4721 = vmatprep.subr.mxu0 0.0
        %4722 = vmatpush2.msra.mxu0 0.0
        %4723 = vmatprep.subr.mxu0 0.0
        %4724 = vmatpush2.msra.mxu0 0.0
        %4725 = vmatprep.subr.mxu0 0.0
        %4726 = vmatpush2.msra.mxu0 0.0
        %4727 = vmatprep.mubr.f32.mxu0 0.0
        %4728 = vmatmul.mubr.f32.gmra.mxu0 %v4661
        %v4729 = vpop.f32.mrf.mxu0
        %v4730 = vadd.f32 0.0, %v4729
        %v4731 = vpop.f32.mrf.mxu0
        %4732 = vdwg.mxu0
        %v4733 = vsel %vm1490, %v4068, 0
        %4735 = vmatprep.subr.mxu0 0.0
        %4736 = vmatpush1.msra.mxu0 0.0
        %4737 = vmatprep.subr.mxu0 0.0
        %4738 = vmatpush1.msra.mxu0 0.0
        %4739 = vmatprep.subr.mxu0 0.0
        %4740 = vmatpush1.msra.mxu0 0.0
        %4741 = vmatprep.subr.mxu0 0.0
        %4742 = vmatpush1.msra.mxu0 0.0
        %4743 = vmatprep.subr.mxu0 0.0
        %4744 = vmatpush1.msra.mxu0 0.0
        %4745 = vmatprep.subr.mxu0 0.0
        %4746 = vmatpush1.msra.mxu0 0.0
        %4747 = vmatprep.subr.mxu0 0.0
        %4748 = vmatpush1.msra.mxu0 0.0
        %4749 = vmatprep.subr.mxu0 0.0
        %4750 = vmatpush1.msra.mxu0 0.0
        %4751 = vmatprep.subr.mxu0 0.0
        %4752 = vmatpush1.msra.mxu0 0.0
        %4753 = vmatprep.subr.mxu0 0.0
        %4754 = vmatpush1.msra.mxu0 0.0
        %4755 = vmatprep.subr.mxu0 0.0
        %4756 = vmatpush1.msra.mxu0 0.0
        %4757 = vmatprep.subr.mxu0 0.0
        %4758 = vmatpush1.msra.mxu0 0.0
        %4759 = vmatprep.subr.mxu0 0.0
        %4760 = vmatpush1.msra.mxu0 0.0
        %4761 = vmatprep.subr.mxu0 0.0
        %4762 = vmatpush1.msra.mxu0 0.0
        %4763 = vmatprep.subr.mxu0 0.0
        %4764 = vmatpush1.msra.mxu0 %v4294
        %4765 = vmatprep.subr.mxu0 0.0
        %4766 = vmatpush1.msra.mxu0 %v4293
        %4767 = vmatprep.subr.mxu0 0.0
        %4768 = vmatpush2.msra.mxu0 0.0
        %4769 = vmatprep.subr.mxu0 0.0
        %4770 = vmatpush2.msra.mxu0 0.0
        %4771 = vmatprep.subr.mxu0 0.0
        %4772 = vmatpush2.msra.mxu0 0.0
        %4773 = vmatprep.subr.mxu0 0.0
        %4774 = vmatpush2.msra.mxu0 0.0
        %4775 = vmatprep.subr.mxu0 0.0
        %4776 = vmatpush2.msra.mxu0 0.0
        %4777 = vmatprep.subr.mxu0 0.0
        %4778 = vmatpush2.msra.mxu0 0.0
        %4779 = vmatprep.subr.mxu0 0.0
        %4780 = vmatpush2.msra.mxu0 0.0
        %4781 = vmatprep.subr.mxu0 0.0
        %4782 = vmatpush2.msra.mxu0 0.0
        %4783 = vmatprep.subr.mxu0 0.0
        %4784 = vmatpush2.msra.mxu0 0.0
        %4785 = vmatprep.subr.mxu0 0.0
        %4786 = vmatpush2.msra.mxu0 0.0
        %4787 = vmatprep.subr.mxu0 0.0
        %4788 = vmatpush2.msra.mxu0 0.0
        %4789 = vmatprep.subr.mxu0 0.0
        %4790 = vmatpush2.msra.mxu0 0.0
        %4791 = vmatprep.subr.mxu0 0.0
        %4792 = vmatpush2.msra.mxu0 0.0
        %4793 = vmatprep.subr.mxu0 0.0
        %4794 = vmatpush2.msra.mxu0 0.0
        %4795 = vmatprep.subr.mxu0 0.0
        %4796 = vmatpush2.msra.mxu0 0.0
        %4797 = vmatprep.subr.mxu0 0.0
        %4798 = vmatpush2.msra.mxu0 0.0
        %4799 = vmatprep.mubr.f32.mxu0 0.0
        %4800 = vmatmul.mubr.f32.gmra.mxu0 %v4733
        %v4801 = vpop.f32.mrf.mxu0
        %v4802 = vadd.f32 0.0, %v4801
        %v4803 = vpop.f32.mrf.mxu0
        %4804 = vdwg.mxu0
        %v4805 = vsel %vm1490, %v4070, 0
        %4807 = vmatprep.subr.mxu0 0.0
        %4808 = vmatpush1.msra.mxu0 0.0
        %4809 = vmatprep.subr.mxu0 0.0
        %4810 = vmatpush1.msra.mxu0 0.0
        %4811 = vmatprep.subr.mxu0 0.0
        %4812 = vmatpush1.msra.mxu0 0.0
        %4813 = vmatprep.subr.mxu0 0.0
        %4814 = vmatpush1.msra.mxu0 0.0
        %4815 = vmatprep.subr.mxu0 0.0
        %4816 = vmatpush1.msra.mxu0 0.0
        %4817 = vmatprep.subr.mxu0 0.0
        %4818 = vmatpush1.msra.mxu0 0.0
        %4819 = vmatprep.subr.mxu0 0.0
        %4820 = vmatpush1.msra.mxu0 0.0
        %4821 = vmatprep.subr.mxu0 0.0
        %4822 = vmatpush1.msra.mxu0 0.0
        %4823 = vmatprep.subr.mxu0 0.0
        %4824 = vmatpush1.msra.mxu0 0.0
        %4825 = vmatprep.subr.mxu0 0.0
        %4826 = vmatpush1.msra.mxu0 0.0
        %4827 = vmatprep.subr.mxu0 0.0
        %4828 = vmatpush1.msra.mxu0 0.0
        %4829 = vmatprep.subr.mxu0 0.0
        %4830 = vmatpush1.msra.mxu0 0.0
        %4831 = vmatprep.subr.mxu0 0.0
        %4832 = vmatpush1.msra.mxu0 0.0
        %4833 = vmatprep.subr.mxu0 0.0
        %4834 = vmatpush1.msra.mxu0 0.0
        %4835 = vmatprep.subr.mxu0 0.0
        %4836 = vmatpush1.msra.mxu0 %v4326
        %4837 = vmatprep.subr.mxu0 0.0
        %4838 = vmatpush1.msra.mxu0 %v4325
        %4839 = vmatprep.subr.mxu0 0.0
        %4840 = vmatpush2.msra.mxu0 0.0
        %4841 = vmatprep.subr.mxu0 0.0
        %4842 = vmatpush2.msra.mxu0 0.0
        %4843 = vmatprep.subr.mxu0 0.0
        %4844 = vmatpush2.msra.mxu0 0.0
        %4845 = vmatprep.subr.mxu0 0.0
        %4846 = vmatpush2.msra.mxu0 0.0
        %4847 = vmatprep.subr.mxu0 0.0
        %4848 = vmatpush2.msra.mxu0 0.0
        %4849 = vmatprep.subr.mxu0 0.0
        %4850 = vmatpush2.msra.mxu0 0.0
        %4851 = vmatprep.subr.mxu0 0.0
        %4852 = vmatpush2.msra.mxu0 0.0
        %4853 = vmatprep.subr.mxu0 0.0
        %4854 = vmatpush2.msra.mxu0 0.0
        %4855 = vmatprep.subr.mxu0 0.0
        %4856 = vmatpush2.msra.mxu0 0.0
        %4857 = vmatprep.subr.mxu0 0.0
        %4858 = vmatpush2.msra.mxu0 0.0
        %4859 = vmatprep.subr.mxu0 0.0
        %4860 = vmatpush2.msra.mxu0 0.0
        %4861 = vmatprep.subr.mxu0 0.0
        %4862 = vmatpush2.msra.mxu0 0.0
        %4863 = vmatprep.subr.mxu0 0.0
        %4864 = vmatpush2.msra.mxu0 0.0
        %4865 = vmatprep.subr.mxu0 0.0
        %4866 = vmatpush2.msra.mxu0 0.0
        %4867 = vmatprep.subr.mxu0 0.0
        %4868 = vmatpush2.msra.mxu0 0.0
        %4869 = vmatprep.subr.mxu0 0.0
        %4870 = vmatpush2.msra.mxu0 0.0
        %4871 = vmatprep.mubr.f32.mxu0 0.0
        %4872 = vmatmul.mubr.f32.gmra.mxu0 %v4805
        %v4873 = vpop.f32.mrf.mxu0
        %v4874 = vadd.f32 0.0, %v4873
        %v4875 = vpop.f32.mrf.mxu0
        %4876 = vdwg.mxu0
        %v4877 = vsel %vm1490, %v4072, 0
        %4879 = vmatprep.subr.mxu0 0.0
        %4880 = vmatpush1.msra.mxu0 0.0
        %4881 = vmatprep.subr.mxu0 0.0
        %4882 = vmatpush1.msra.mxu0 0.0
        %4883 = vmatprep.subr.mxu0 0.0
        %4884 = vmatpush1.msra.mxu0 0.0
        %4885 = vmatprep.subr.mxu0 0.0
        %4886 = vmatpush1.msra.mxu0 0.0
        %4887 = vmatprep.subr.mxu0 0.0
        %4888 = vmatpush1.msra.mxu0 0.0
        %4889 = vmatprep.subr.mxu0 0.0
        %4890 = vmatpush1.msra.mxu0 0.0
        %4891 = vmatprep.subr.mxu0 0.0
        %4892 = vmatpush1.msra.mxu0 0.0
        %4893 = vmatprep.subr.mxu0 0.0
        %4894 = vmatpush1.msra.mxu0 0.0
        %4895 = vmatprep.subr.mxu0 0.0
        %4896 = vmatpush1.msra.mxu0 0.0
        %4897 = vmatprep.subr.mxu0 0.0
        %4898 = vmatpush1.msra.mxu0 0.0
        %4899 = vmatprep.subr.mxu0 0.0
        %4900 = vmatpush1.msra.mxu0 0.0
        %4901 = vmatprep.subr.mxu0 0.0
        %4902 = vmatpush1.msra.mxu0 0.0
        %4903 = vmatprep.subr.mxu0 0.0
        %4904 = vmatpush1.msra.mxu0 0.0
        %4905 = vmatprep.subr.mxu0 0.0
        %4906 = vmatpush1.msra.mxu0 0.0
        %4907 = vmatprep.subr.mxu0 0.0
        %4908 = vmatpush1.msra.mxu0 %v4358
        %4909 = vmatprep.subr.mxu0 0.0
        %4910 = vmatpush1.msra.mxu0 %v4357
        %4911 = vmatprep.subr.mxu0 0.0
        %4912 = vmatpush2.msra.mxu0 0.0
        %4913 = vmatprep.subr.mxu0 0.0
        %4914 = vmatpush2.msra.mxu0 0.0
        %4915 = vmatprep.subr.mxu0 0.0
        %4916 = vmatpush2.msra.mxu0 0.0
        %4917 = vmatprep.subr.mxu0 0.0
        %4918 = vmatpush2.msra.mxu0 0.0
        %4919 = vmatprep.subr.mxu0 0.0
        %4920 = vmatpush2.msra.mxu0 0.0
        %4921 = vmatprep.subr.mxu0 0.0
        %4922 = vmatpush2.msra.mxu0 0.0
        %4923 = vmatprep.subr.mxu0 0.0
        %4924 = vmatpush2.msra.mxu0 0.0
        %4925 = vmatprep.subr.mxu0 0.0
        %4926 = vmatpush2.msra.mxu0 0.0
        %4927 = vmatprep.subr.mxu0 0.0
        %4928 = vmatpush2.msra.mxu0 0.0
        %4929 = vmatprep.subr.mxu0 0.0
        %4930 = vmatpush2.msra.mxu0 0.0
        %4931 = vmatprep.subr.mxu0 0.0
        %4932 = vmatpush2.msra.mxu0 0.0
        %4933 = vmatprep.subr.mxu0 0.0
        %4934 = vmatpush2.msra.mxu0 0.0
        %4935 = vmatprep.subr.mxu0 0.0
        %4936 = vmatpush2.msra.mxu0 0.0
        %4937 = vmatprep.subr.mxu0 0.0
        %4938 = vmatpush2.msra.mxu0 0.0
        %4939 = vmatprep.subr.mxu0 0.0
        %4940 = vmatpush2.msra.mxu0 0.0
        %4941 = vmatprep.subr.mxu0 0.0
        %4942 = vmatpush2.msra.mxu0 0.0
        %4943 = vmatprep.mubr.f32.mxu0 0.0
        %4944 = vmatmul.mubr.f32.gmra.mxu0 %v4877
        %v4945 = vpop.f32.mrf.mxu0
        %v4946 = vadd.f32 0.0, %v4945
        %v4947 = vpop.f32.mrf.mxu0
        %4948 = vdwg.mxu0
        %v4949 = vsel %vm2067, %v4442, -inf
        %4950 = vmax.xlane.f32.xlu0 %v4949
        %v4951 = vpop.xlane.xlu0 %4950
        %v4952 = vsel %vm2067, %v4514, -inf
        %4953 = vmax.xlane.f32.xlu0 %v4952
        %v4954 = vpop.xlane.xlu0 %4953
        %v4955 = vsel %vm2067, %v4586, -inf
        %4956 = vmax.xlane.f32.xlu0 %v4955
        %v4957 = vpop.xlane.xlu0 %4956
        %v4958 = vsel %vm2067, %v4658, -inf
        %4959 = vmax.xlane.f32.xlu0 %v4958
        %v4960 = vpop.xlane.xlu0 %4959
        %v4961 = vsel %vm2067, %v4730, -inf
        %4962 = vmax.xlane.f32.xlu0 %v4961
        %v4963 = vpop.xlane.xlu0 %4962
        %v4964 = vsel %vm2067, %v4802, -inf
        %4965 = vmax.xlane.f32.xlu0 %v4964
        %v4966 = vpop.xlane.xlu0 %4965
        %v4967 = vsel %vm2067, %v4874, -inf
        %4968 = vmax.xlane.f32.xlu0 %v4967
        %v4969 = vpop.xlane.xlu0 %4968
        %v4970 = vsel %vm2067, %v4946, -inf
        %4971 = vmax.xlane.f32.xlu0 %v4970
        %v4972 = vpop.xlane.xlu0 %4971
        %v4973 = vsub.f32 %v4442, %v4951
        %v4974 = vsub.f32 %v4514, %v4954
        %v4975 = vsub.f32 %v4586, %v4957
        %v4976 = vsub.f32 %v4658, %v4960
        %v4977 = vsub.f32 %v4730, %v4963
        %v4978 = vsub.f32 %v4802, %v4966
        %v4979 = vsub.f32 %v4874, %v4969
        %v4980 = vsub.f32 %v4946, %v4972
        %v4981 = vmul.f32 %v4973, 1.442695
        %v4982 = vpow.pop %v4981
        %v4983 = vmul.f32 %v4974, 1.442695
        %v4984 = vpow.pop %v4983
        %v4985 = vmul.f32 %v4975, 1.442695
        %v4986 = vpow.pop %v4985
        %v4987 = vmul.f32 %v4976, 1.442695
        %v4988 = vpow.pop %v4987
        %v4989 = vmul.f32 %v4977, 1.442695
        %v4990 = vpow.pop %v4989
        %v4991 = vmul.f32 %v4978, 1.442695
        %v4992 = vpow.pop %v4991
        %v4993 = vmul.f32 %v4979, 1.442695
        %v4994 = vpow.pop %v4993
        %v4995 = vmul.f32 %v4980, 1.442695
        %v4996 = vpow.pop %v4995
        %v4997 = vsel %vm2067, %v4982, 0.0
        %4998 = vadd.xlane.f32.xlu0 %v4997
        %v4999 = vpop.xlane.xlu0 %4998
        %v5000 = vsel %vm2067, %v4984, 0.0
        %5001 = vadd.xlane.f32.xlu0 %v5000
        %v5002 = vpop.xlane.xlu0 %5001
        %v5003 = vsel %vm2067, %v4986, 0.0
        %5004 = vadd.xlane.f32.xlu0 %v5003
        %v5005 = vpop.xlane.xlu0 %5004
        %v5006 = vsel %vm2067, %v4988, 0.0
        %5007 = vadd.xlane.f32.xlu0 %v5006
        %v5008 = vpop.xlane.xlu0 %5007
        %v5009 = vsel %vm2067, %v4990, 0.0
        %5010 = vadd.xlane.f32.xlu0 %v5009
        %v5011 = vpop.xlane.xlu0 %5010
        %v5012 = vsel %vm2067, %v4992, 0.0
        %5013 = vadd.xlane.f32.xlu0 %v5012
        %v5014 = vpop.xlane.xlu0 %5013
        %v5015 = vsel %vm2067, %v4994, 0.0
        %5016 = vadd.xlane.f32.xlu0 %v5015
        %v5017 = vpop.xlane.xlu0 %5016
        %v5018 = vsel %vm2067, %v4996, 0.0
        %5019 = vadd.xlane.f32.xlu0 %v5018
        %v5020 = vpop.xlane.xlu0 %5019
        %v5021 = vrcp.pop %v4999
        %v5022 = vrcp.pop %v5002
        %v5023 = vrcp.pop %v5005
        %v5024 = vrcp.pop %v5008
        %v5025 = vrcp.pop %v5011
        %v5026 = vrcp.pop %v5014
        %v5027 = vrcp.pop %v5017
        %v5028 = vrcp.pop %v5020
        %v5029 = vmul.f32 %v4982, %v5021
        %v5030 = vmul.f32 %v4984, %v5022
        %v5031 = vmul.f32 %v4986, %v5023
        %v5032 = vmul.f32 %v4988, %v5024
        %v5033 = vmul.f32 %v4990, %v5025
        %v5034 = vmul.f32 %v4992, %v5026
        %v5035 = vmul.f32 %v4994, %v5027
        %v5036 = vmul.f32 %v4996, %v5028
        %5037 = vxpose.xlu0.b32.start [1/16] %v4037, 128
        %5038 = vxpose.xlu0.b32.cont [2/16] 0.0, 128
        %5039 = vxpose.xlu0.b32.cont [3/16] 0.0, 128
        %5040 = vxpose.xlu0.b32.cont [4/16] 0.0, 128
        %5041 = vxpose.xlu0.b32.cont [5/16] 0.0, 128
        %5042 = vxpose.xlu0.b32.cont [6/16] 0.0, 128
        %5043 = vxpose.xlu0.b32.cont [7/16] 0.0, 128
        %5044 = vxpose.xlu0.b32.cont [8/16] 0.0, 128
        %5045 = vxpose.xlu0.b32.cont [9/16] 0.0, 128
        %5046 = vxpose.xlu0.b32.cont [10/16] 0.0, 128
        %5047 = vxpose.xlu0.b32.cont [11/16] 0.0, 128
        %5048 = vxpose.xlu0.b32.cont [12/16] 0.0, 128
        %5049 = vxpose.xlu0.b32.cont [13/16] 0.0, 128
        %5050 = vxpose.xlu0.b32.cont [14/16] 0.0, 128
        %5051 = vxpose.xlu0.b32.cont [15/16] 0.0, 128
        %5052 = vxpose.xlu0.b32.end [16/16] 0.0, 128
        %v5053 = vpop.trf.xlu0
        %v5054 = vpop.trf.xlu0
        %v5055 = vpop.trf.xlu0
        %v5056 = vpop.trf.xlu0
        %v5057 = vpop.trf.xlu0
        %v5058 = vpop.trf.xlu0
        %v5059 = vpop.trf.xlu0
        %v5060 = vpop.trf.xlu0
        %v5061 = vpop.trf.xlu0
        %v5062 = vpop.trf.xlu0
        %v5063 = vpop.trf.xlu0
        %v5064 = vpop.trf.xlu0
        %v5065 = vpop.trf.xlu0
        %v5066 = vpop.trf.xlu0
        %v5067 = vpop.trf.xlu0
        %v5068 = vpop.trf.xlu0
        %5069 = vxpose.xlu0.b32.start [1/16] %v4097, 128
        %5070 = vxpose.xlu0.b32.cont [2/16] 0.0, 128
        %5071 = vxpose.xlu0.b32.cont [3/16] 0.0, 128
        %5072 = vxpose.xlu0.b32.cont [4/16] 0.0, 128
        %5073 = vxpose.xlu0.b32.cont [5/16] 0.0, 128
        %5074 = vxpose.xlu0.b32.cont [6/16] 0.0, 128
        %5075 = vxpose.xlu0.b32.cont [7/16] 0.0, 128
        %5076 = vxpose.xlu0.b32.cont [8/16] 0.0, 128
        %5077 = vxpose.xlu0.b32.cont [9/16] 0.0, 128
        %5078 = vxpose.xlu0.b32.cont [10/16] 0.0, 128
        %5079 = vxpose.xlu0.b32.cont [11/16] 0.0, 128
        %5080 = vxpose.xlu0.b32.cont [12/16] 0.0, 128
        %5081 = vxpose.xlu0.b32.cont [13/16] 0.0, 128
        %5082 = vxpose.xlu0.b32.cont [14/16] 0.0, 128
        %5083 = vxpose.xlu0.b32.cont [15/16] 0.0, 128
        %5084 = vxpose.xlu0.b32.end [16/16] 0.0, 128
        %v5085 = vpop.trf.xlu0
        %v5086 = vpop.trf.xlu0
        %v5087 = vpop.trf.xlu0
        %v5088 = vpop.trf.xlu0
        %v5089 = vpop.trf.xlu0
        %v5090 = vpop.trf.xlu0
        %v5091 = vpop.trf.xlu0
        %v5092 = vpop.trf.xlu0
        %v5093 = vpop.trf.xlu0
        %v5094 = vpop.trf.xlu0
        %v5095 = vpop.trf.xlu0
        %v5096 = vpop.trf.xlu0
        %v5097 = vpop.trf.xlu0
        %v5098 = vpop.trf.xlu0
        %v5099 = vpop.trf.xlu0
        %v5100 = vpop.trf.xlu0
        %5101 = vxpose.xlu0.b32.start [1/16] %v4100, 128
        %5102 = vxpose.xlu0.b32.cont [2/16] 0.0, 128
        %5103 = vxpose.xlu0.b32.cont [3/16] 0.0, 128
        %5104 = vxpose.xlu0.b32.cont [4/16] 0.0, 128
        %5105 = vxpose.xlu0.b32.cont [5/16] 0.0, 128
        %5106 = vxpose.xlu0.b32.cont [6/16] 0.0, 128
        %5107 = vxpose.xlu0.b32.cont [7/16] 0.0, 128
        %5108 = vxpose.xlu0.b32.cont [8/16] 0.0, 128
        %5109 = vxpose.xlu0.b32.cont [9/16] 0.0, 128
        %5110 = vxpose.xlu0.b32.cont [10/16] 0.0, 128
        %5111 = vxpose.xlu0.b32.cont [11/16] 0.0, 128
        %5112 = vxpose.xlu0.b32.cont [12/16] 0.0, 128
        %5113 = vxpose.xlu0.b32.cont [13/16] 0.0, 128
        %5114 = vxpose.xlu0.b32.cont [14/16] 0.0, 128
        %5115 = vxpose.xlu0.b32.cont [15/16] 0.0, 128
        %5116 = vxpose.xlu0.b32.end [16/16] 0.0, 128
        %v5117 = vpop.trf.xlu0
        %v5118 = vpop.trf.xlu0
        %v5119 = vpop.trf.xlu0
        %v5120 = vpop.trf.xlu0
        %v5121 = vpop.trf.xlu0
        %v5122 = vpop.trf.xlu0
        %v5123 = vpop.trf.xlu0
        %v5124 = vpop.trf.xlu0
        %v5125 = vpop.trf.xlu0
        %v5126 = vpop.trf.xlu0
        %v5127 = vpop.trf.xlu0
        %v5128 = vpop.trf.xlu0
        %v5129 = vpop.trf.xlu0
        %v5130 = vpop.trf.xlu0
        %v5131 = vpop.trf.xlu0
        %v5132 = vpop.trf.xlu0
        %5133 = vxpose.xlu0.b32.start [1/16] %v4103, 128
        %5134 = vxpose.xlu0.b32.cont [2/16] 0.0, 128
        %5135 = vxpose.xlu0.b32.cont [3/16] 0.0, 128
        %5136 = vxpose.xlu0.b32.cont [4/16] 0.0, 128
        %5137 = vxpose.xlu0.b32.cont [5/16] 0.0, 128
        %5138 = vxpose.xlu0.b32.cont [6/16] 0.0, 128
        %5139 = vxpose.xlu0.b32.cont [7/16] 0.0, 128
        %5140 = vxpose.xlu0.b32.cont [8/16] 0.0, 128
        %5141 = vxpose.xlu0.b32.cont [9/16] 0.0, 128
        %5142 = vxpose.xlu0.b32.cont [10/16] 0.0, 128
        %5143 = vxpose.xlu0.b32.cont [11/16] 0.0, 128
        %5144 = vxpose.xlu0.b32.cont [12/16] 0.0, 128
        %5145 = vxpose.xlu0.b32.cont [13/16] 0.0, 128
        %5146 = vxpose.xlu0.b32.cont [14/16] 0.0, 128
        %5147 = vxpose.xlu0.b32.cont [15/16] 0.0, 128
        %5148 = vxpose.xlu0.b32.end [16/16] 0.0, 128
        %v5149 = vpop.trf.xlu0
        %v5150 = vpop.trf.xlu0
        %v5151 = vpop.trf.xlu0
        %v5152 = vpop.trf.xlu0
        %v5153 = vpop.trf.xlu0
        %v5154 = vpop.trf.xlu0
        %v5155 = vpop.trf.xlu0
        %v5156 = vpop.trf.xlu0
        %v5157 = vpop.trf.xlu0
        %v5158 = vpop.trf.xlu0
        %v5159 = vpop.trf.xlu0
        %v5160 = vpop.trf.xlu0
        %v5161 = vpop.trf.xlu0
        %v5162 = vpop.trf.xlu0
        %v5163 = vpop.trf.xlu0
        %v5164 = vpop.trf.xlu0
        %5165 = vxpose.xlu0.b32.start [1/16] %v4106, 128
        %5166 = vxpose.xlu0.b32.cont [2/16] 0.0, 128
        %5167 = vxpose.xlu0.b32.cont [3/16] 0.0, 128
        %5168 = vxpose.xlu0.b32.cont [4/16] 0.0, 128
        %5169 = vxpose.xlu0.b32.cont [5/16] 0.0, 128
        %5170 = vxpose.xlu0.b32.cont [6/16] 0.0, 128
        %5171 = vxpose.xlu0.b32.cont [7/16] 0.0, 128
        %5172 = vxpose.xlu0.b32.cont [8/16] 0.0, 128
        %5173 = vxpose.xlu0.b32.cont [9/16] 0.0, 128
        %5174 = vxpose.xlu0.b32.cont [10/16] 0.0, 128
        %5175 = vxpose.xlu0.b32.cont [11/16] 0.0, 128
        %5176 = vxpose.xlu0.b32.cont [12/16] 0.0, 128
        %5177 = vxpose.xlu0.b32.cont [13/16] 0.0, 128
        %5178 = vxpose.xlu0.b32.cont [14/16] 0.0, 128
        %5179 = vxpose.xlu0.b32.cont [15/16] 0.0, 128
        %5180 = vxpose.xlu0.b32.end [16/16] 0.0, 128
        %v5181 = vpop.trf.xlu0
        %v5182 = vpop.trf.xlu0
        %v5183 = vpop.trf.xlu0
        %v5184 = vpop.trf.xlu0
        %v5185 = vpop.trf.xlu0
        %v5186 = vpop.trf.xlu0
        %v5187 = vpop.trf.xlu0
        %v5188 = vpop.trf.xlu0
        %v5189 = vpop.trf.xlu0
        %v5190 = vpop.trf.xlu0
        %v5191 = vpop.trf.xlu0
        %v5192 = vpop.trf.xlu0
        %v5193 = vpop.trf.xlu0
        %v5194 = vpop.trf.xlu0
        %v5195 = vpop.trf.xlu0
        %v5196 = vpop.trf.xlu0
        %5197 = vxpose.xlu0.b32.start [1/16] %v4109, 128
        %5198 = vxpose.xlu0.b32.cont [2/16] 0.0, 128
        %5199 = vxpose.xlu0.b32.cont [3/16] 0.0, 128
        %5200 = vxpose.xlu0.b32.cont [4/16] 0.0, 128
        %5201 = vxpose.xlu0.b32.cont [5/16] 0.0, 128
        %5202 = vxpose.xlu0.b32.cont [6/16] 0.0, 128
        %5203 = vxpose.xlu0.b32.cont [7/16] 0.0, 128
        %5204 = vxpose.xlu0.b32.cont [8/16] 0.0, 128
        %5205 = vxpose.xlu0.b32.cont [9/16] 0.0, 128
        %5206 = vxpose.xlu0.b32.cont [10/16] 0.0, 128
        %5207 = vxpose.xlu0.b32.cont [11/16] 0.0, 128
        %5208 = vxpose.xlu0.b32.cont [12/16] 0.0, 128
        %5209 = vxpose.xlu0.b32.cont [13/16] 0.0, 128
        %5210 = vxpose.xlu0.b32.cont [14/16] 0.0, 128
        %5211 = vxpose.xlu0.b32.cont [15/16] 0.0, 128
        %5212 = vxpose.xlu0.b32.end [16/16] 0.0, 128
        %v5213 = vpop.trf.xlu0
        %v5214 = vpop.trf.xlu0
        %v5215 = vpop.trf.xlu0
        %v5216 = vpop.trf.xlu0
        %v5217 = vpop.trf.xlu0
        %v5218 = vpop.trf.xlu0
        %v5219 = vpop.trf.xlu0
        %v5220 = vpop.trf.xlu0
        %v5221 = vpop.trf.xlu0
        %v5222 = vpop.trf.xlu0
        %v5223 = vpop.trf.xlu0
        %v5224 = vpop.trf.xlu0
        %v5225 = vpop.trf.xlu0
        %v5226 = vpop.trf.xlu0
        %v5227 = vpop.trf.xlu0
        %v5228 = vpop.trf.xlu0
        %5229 = vxpose.xlu0.b32.start [1/16] %v4112, 128
        %5230 = vxpose.xlu0.b32.cont [2/16] 0.0, 128
        %5231 = vxpose.xlu0.b32.cont [3/16] 0.0, 128
        %5232 = vxpose.xlu0.b32.cont [4/16] 0.0, 128
        %5233 = vxpose.xlu0.b32.cont [5/16] 0.0, 128
        %5234 = vxpose.xlu0.b32.cont [6/16] 0.0, 128
        %5235 = vxpose.xlu0.b32.cont [7/16] 0.0, 128
        %5236 = vxpose.xlu0.b32.cont [8/16] 0.0, 128
        %5237 = vxpose.xlu0.b32.cont [9/16] 0.0, 128
        %5238 = vxpose.xlu0.b32.cont [10/16] 0.0, 128
        %5239 = vxpose.xlu0.b32.cont [11/16] 0.0, 128
        %5240 = vxpose.xlu0.b32.cont [12/16] 0.0, 128
        %5241 = vxpose.xlu0.b32.cont [13/16] 0.0, 128
        %5242 = vxpose.xlu0.b32.cont [14/16] 0.0, 128
        %5243 = vxpose.xlu0.b32.cont [15/16] 0.0, 128
        %5244 = vxpose.xlu0.b32.end [16/16] 0.0, 128
        %v5245 = vpop.trf.xlu0
        %v5246 = vpop.trf.xlu0
        %v5247 = vpop.trf.xlu0
        %v5248 = vpop.trf.xlu0
        %v5249 = vpop.trf.xlu0
        %v5250 = vpop.trf.xlu0
        %v5251 = vpop.trf.xlu0
        %v5252 = vpop.trf.xlu0
        %v5253 = vpop.trf.xlu0
        %v5254 = vpop.trf.xlu0
        %v5255 = vpop.trf.xlu0
        %v5256 = vpop.trf.xlu0
        %v5257 = vpop.trf.xlu0
        %v5258 = vpop.trf.xlu0
        %v5259 = vpop.trf.xlu0
        %v5260 = vpop.trf.xlu0
        %5261 = vxpose.xlu0.b32.start [1/16] %v4115, 128
        %5262 = vxpose.xlu0.b32.cont [2/16] 0.0, 128
        %5263 = vxpose.xlu0.b32.cont [3/16] 0.0, 128
        %5264 = vxpose.xlu0.b32.cont [4/16] 0.0, 128
        %5265 = vxpose.xlu0.b32.cont [5/16] 0.0, 128
        %5266 = vxpose.xlu0.b32.cont [6/16] 0.0, 128
        %5267 = vxpose.xlu0.b32.cont [7/16] 0.0, 128
        %5268 = vxpose.xlu0.b32.cont [8/16] 0.0, 128
        %5269 = vxpose.xlu0.b32.cont [9/16] 0.0, 128
        %5270 = vxpose.xlu0.b32.cont [10/16] 0.0, 128
        %5271 = vxpose.xlu0.b32.cont [11/16] 0.0, 128
        %5272 = vxpose.xlu0.b32.cont [12/16] 0.0, 128
        %5273 = vxpose.xlu0.b32.cont [13/16] 0.0, 128
        %5274 = vxpose.xlu0.b32.cont [14/16] 0.0, 128
        %5275 = vxpose.xlu0.b32.cont [15/16] 0.0, 128
        %5276 = vxpose.xlu0.b32.end [16/16] 0.0, 128
        %v5277 = vpop.trf.xlu0
        %v5278 = vpop.trf.xlu0
        %v5279 = vpop.trf.xlu0
        %v5280 = vpop.trf.xlu0
        %v5281 = vpop.trf.xlu0
        %v5282 = vpop.trf.xlu0
        %v5283 = vpop.trf.xlu0
        %v5284 = vpop.trf.xlu0
        %v5285 = vpop.trf.xlu0
        %v5286 = vpop.trf.xlu0
        %v5287 = vpop.trf.xlu0
        %v5288 = vpop.trf.xlu0
        %v5289 = vpop.trf.xlu0
        %v5290 = vpop.trf.xlu0
        %v5291 = vpop.trf.xlu0
        %v5292 = vpop.trf.xlu0
        %v5294 = vsel %vm2067, %v5053, 0
        %v5297 = vsel %vm2067, %v5054, 0
        %v5300 = vsel %vm2067, %v5029, 0
        %5302 = vmatprep.subr.mxu0 0.0
        %5303 = vmatpush1.xpose.msra.mxu0 0.0
        %5304 = vmatprep.subr.mxu0 0.0
        %5305 = vmatpush1.xpose.msra.mxu0 0.0
        %5306 = vmatprep.subr.mxu0 0.0
        %5307 = vmatpush1.xpose.msra.mxu0 0.0
        %5308 = vmatprep.subr.mxu0 0.0
        %5309 = vmatpush1.xpose.msra.mxu0 0.0
        %5310 = vmatprep.subr.mxu0 0.0
        %5311 = vmatpush1.xpose.msra.mxu0 0.0
        %5312 = vmatprep.subr.mxu0 0.0
        %5313 = vmatpush1.xpose.msra.mxu0 0.0
        %5314 = vmatprep.subr.mxu0 0.0
        %5315 = vmatpush1.xpose.msra.mxu0 0.0
        %5316 = vmatprep.subr.mxu0 0.0
        %5317 = vmatpush1.xpose.msra.mxu0 0.0
        %5318 = vmatprep.subr.mxu0 0.0
        %5319 = vmatpush1.xpose.msra.mxu0 0.0
        %5320 = vmatprep.subr.mxu0 0.0
        %5321 = vmatpush1.xpose.msra.mxu0 0.0
        %5322 = vmatprep.subr.mxu0 0.0
        %5323 = vmatpush1.xpose.msra.mxu0 0.0
        %5324 = vmatprep.subr.mxu0 0.0
        %5325 = vmatpush1.xpose.msra.mxu0 0.0
        %5326 = vmatprep.subr.mxu0 0.0
        %5327 = vmatpush1.xpose.msra.mxu0 0.0
        %5328 = vmatprep.subr.mxu0 0.0
        %5329 = vmatpush1.xpose.msra.mxu0 0.0
        %5330 = vmatprep.subr.mxu0 0.0
        %5331 = vmatpush1.xpose.msra.mxu0 0.0
        %5332 = vmatprep.subr.mxu0 0.0
        %5333 = vmatpush1.xpose.msra.mxu0 %v5300
        %5334 = vmatprep.subr.mxu0 0.0
        %5335 = vmatpush2.xpose.msra.mxu0 0.0
        %5336 = vmatprep.subr.mxu0 0.0
        %5337 = vmatpush2.xpose.msra.mxu0 0.0
        %5338 = vmatprep.subr.mxu0 0.0
        %5339 = vmatpush2.xpose.msra.mxu0 0.0
        %5340 = vmatprep.subr.mxu0 0.0
        %5341 = vmatpush2.xpose.msra.mxu0 0.0
        %5342 = vmatprep.subr.mxu0 0.0
        %5343 = vmatpush2.xpose.msra.mxu0 0.0
        %5344 = vmatprep.subr.mxu0 0.0
        %5345 = vmatpush2.xpose.msra.mxu0 0.0
        %5346 = vmatprep.subr.mxu0 0.0
        %5347 = vmatpush2.xpose.msra.mxu0 0.0
        %5348 = vmatprep.subr.mxu0 0.0
        %5349 = vmatpush2.xpose.msra.mxu0 0.0
        %5350 = vmatprep.subr.mxu0 0.0
        %5351 = vmatpush2.xpose.msra.mxu0 0.0
        %5352 = vmatprep.subr.mxu0 0.0
        %5353 = vmatpush2.xpose.msra.mxu0 0.0
        %5354 = vmatprep.subr.mxu0 0.0
        %5355 = vmatpush2.xpose.msra.mxu0 0.0
        %5356 = vmatprep.subr.mxu0 0.0
        %5357 = vmatpush2.xpose.msra.mxu0 0.0
        %5358 = vmatprep.subr.mxu0 0.0
        %5359 = vmatpush2.xpose.msra.mxu0 0.0
        %5360 = vmatprep.subr.mxu0 0.0
        %5361 = vmatpush2.xpose.msra.mxu0 0.0
        %5362 = vmatprep.subr.mxu0 0.0
        %5363 = vmatpush2.xpose.msra.mxu0 0.0
        %5364 = vmatprep.subr.mxu0 0.0
        %5365 = vmatpush2.xpose.msra.mxu0 0.0
        %5366 = vmatprep.mubr.f32.mxu0 0.0
        %5367 = vmatmul.mubr.f32.gmra.mxu0 %v5294
        %v5368 = vpop.f32.mrf.mxu0
        %v5369 = vadd.f32 0.0, %v5368
        %v5370 = vpop.f32.mrf.mxu0
        %5371 = vmatprep.mubr.f32.mxu0 0.0
        %5372 = vmatmul.mubr.f32.gmra.mxu0 %v5297
        %v5373 = vpop.f32.mrf.mxu0
        %v5374 = vadd.f32 0.0, %v5373
        %v5375 = vpop.f32.mrf.mxu0
        %5376 = vdwg.mxu0
        %v5378 = vsel %vm2067, %v5085, 0
        %v5381 = vsel %vm2067, %v5086, 0
        %v5384 = vsel %vm2067, %v5030, 0
        %5386 = vmatprep.subr.mxu0 0.0
        %5387 = vmatpush1.xpose.msra.mxu0 0.0
        %5388 = vmatprep.subr.mxu0 0.0
        %5389 = vmatpush1.xpose.msra.mxu0 0.0
        %5390 = vmatprep.subr.mxu0 0.0
        %5391 = vmatpush1.xpose.msra.mxu0 0.0
        %5392 = vmatprep.subr.mxu0 0.0
        %5393 = vmatpush1.xpose.msra.mxu0 0.0
        %5394 = vmatprep.subr.mxu0 0.0
        %5395 = vmatpush1.xpose.msra.mxu0 0.0
        %5396 = vmatprep.subr.mxu0 0.0
        %5397 = vmatpush1.xpose.msra.mxu0 0.0
        %5398 = vmatprep.subr.mxu0 0.0
        %5399 = vmatpush1.xpose.msra.mxu0 0.0
        %5400 = vmatprep.subr.mxu0 0.0
        %5401 = vmatpush1.xpose.msra.mxu0 0.0
        %5402 = vmatprep.subr.mxu0 0.0
        %5403 = vmatpush1.xpose.msra.mxu0 0.0
        %5404 = vmatprep.subr.mxu0 0.0
        %5405 = vmatpush1.xpose.msra.mxu0 0.0
        %5406 = vmatprep.subr.mxu0 0.0
        %5407 = vmatpush1.xpose.msra.mxu0 0.0
        %5408 = vmatprep.subr.mxu0 0.0
        %5409 = vmatpush1.xpose.msra.mxu0 0.0
        %5410 = vmatprep.subr.mxu0 0.0
        %5411 = vmatpush1.xpose.msra.mxu0 0.0
        %5412 = vmatprep.subr.mxu0 0.0
        %5413 = vmatpush1.xpose.msra.mxu0 0.0
        %5414 = vmatprep.subr.mxu0 0.0
        %5415 = vmatpush1.xpose.msra.mxu0 0.0
        %5416 = vmatprep.subr.mxu0 0.0
        %5417 = vmatpush1.xpose.msra.mxu0 %v5384
        %5418 = vmatprep.subr.mxu0 0.0
        %5419 = vmatpush2.xpose.msra.mxu0 0.0
        %5420 = vmatprep.subr.mxu0 0.0
        %5421 = vmatpush2.xpose.msra.mxu0 0.0
        %5422 = vmatprep.subr.mxu0 0.0
        %5423 = vmatpush2.xpose.msra.mxu0 0.0
        %5424 = vmatprep.subr.mxu0 0.0
        %5425 = vmatpush2.xpose.msra.mxu0 0.0
        %5426 = vmatprep.subr.mxu0 0.0
        %5427 = vmatpush2.xpose.msra.mxu0 0.0
        %5428 = vmatprep.subr.mxu0 0.0
        %5429 = vmatpush2.xpose.msra.mxu0 0.0
        %5430 = vmatprep.subr.mxu0 0.0
        %5431 = vmatpush2.xpose.msra.mxu0 0.0
        %5432 = vmatprep.subr.mxu0 0.0
        %5433 = vmatpush2.xpose.msra.mxu0 0.0
        %5434 = vmatprep.subr.mxu0 0.0
        %5435 = vmatpush2.xpose.msra.mxu0 0.0
        %5436 = vmatprep.subr.mxu0 0.0
        %5437 = vmatpush2.xpose.msra.mxu0 0.0
        %5438 = vmatprep.subr.mxu0 0.0
        %5439 = vmatpush2.xpose.msra.mxu0 0.0
        %5440 = vmatprep.subr.mxu0 0.0
        %5441 = vmatpush2.xpose.msra.mxu0 0.0
        %5442 = vmatprep.subr.mxu0 0.0
        %5443 = vmatpush2.xpose.msra.mxu0 0.0
        %5444 = vmatprep.subr.mxu0 0.0
        %5445 = vmatpush2.xpose.msra.mxu0 0.0
        %5446 = vmatprep.subr.mxu0 0.0
        %5447 = vmatpush2.xpose.msra.mxu0 0.0
        %5448 = vmatprep.subr.mxu0 0.0
        %5449 = vmatpush2.xpose.msra.mxu0 0.0
        %5450 = vmatprep.mubr.f32.mxu0 0.0
        %5451 = vmatmul.mubr.f32.gmra.mxu0 %v5378
        %v5452 = vpop.f32.mrf.mxu0
        %v5453 = vadd.f32 0.0, %v5452
        %v5454 = vpop.f32.mrf.mxu0
        %5455 = vmatprep.mubr.f32.mxu0 0.0
        %5456 = vmatmul.mubr.f32.gmra.mxu0 %v5381
        %v5457 = vpop.f32.mrf.mxu0
        %v5458 = vadd.f32 0.0, %v5457
        %v5459 = vpop.f32.mrf.mxu0
        %5460 = vdwg.mxu0
        %v5462 = vsel %vm2067, %v5117, 0
        %v5465 = vsel %vm2067, %v5118, 0
        %v5468 = vsel %vm2067, %v5031, 0
        %5470 = vmatprep.subr.mxu0 0.0
        %5471 = vmatpush1.xpose.msra.mxu0 0.0
        %5472 = vmatprep.subr.mxu0 0.0
        %5473 = vmatpush1.xpose.msra.mxu0 0.0
        %5474 = vmatprep.subr.mxu0 0.0
        %5475 = vmatpush1.xpose.msra.mxu0 0.0
        %5476 = vmatprep.subr.mxu0 0.0
        %5477 = vmatpush1.xpose.msra.mxu0 0.0
        %5478 = vmatprep.subr.mxu0 0.0
        %5479 = vmatpush1.xpose.msra.mxu0 0.0
        %5480 = vmatprep.subr.mxu0 0.0
        %5481 = vmatpush1.xpose.msra.mxu0 0.0
        %5482 = vmatprep.subr.mxu0 0.0
        %5483 = vmatpush1.xpose.msra.mxu0 0.0
        %5484 = vmatprep.subr.mxu0 0.0
        %5485 = vmatpush1.xpose.msra.mxu0 0.0
        %5486 = vmatprep.subr.mxu0 0.0
        %5487 = vmatpush1.xpose.msra.mxu0 0.0
        %5488 = vmatprep.subr.mxu0 0.0
        %5489 = vmatpush1.xpose.msra.mxu0 0.0
        %5490 = vmatprep.subr.mxu0 0.0
        %5491 = vmatpush1.xpose.msra.mxu0 0.0
        %5492 = vmatprep.subr.mxu0 0.0
        %5493 = vmatpush1.xpose.msra.mxu0 0.0
        %5494 = vmatprep.subr.mxu0 0.0
        %5495 = vmatpush1.xpose.msra.mxu0 0.0
        %5496 = vmatprep.subr.mxu0 0.0
        %5497 = vmatpush1.xpose.msra.mxu0 0.0
        %5498 = vmatprep.subr.mxu0 0.0
        %5499 = vmatpush1.xpose.msra.mxu0 0.0
        %5500 = vmatprep.subr.mxu0 0.0
        %5501 = vmatpush1.xpose.msra.mxu0 %v5468
        %5502 = vmatprep.subr.mxu0 0.0
        %5503 = vmatpush2.xpose.msra.mxu0 0.0
        %5504 = vmatprep.subr.mxu0 0.0
        %5505 = vmatpush2.xpose.msra.mxu0 0.0
        %5506 = vmatprep.subr.mxu0 0.0
        %5507 = vmatpush2.xpose.msra.mxu0 0.0
        %5508 = vmatprep.subr.mxu0 0.0
        %5509 = vmatpush2.xpose.msra.mxu0 0.0
        %5510 = vmatprep.subr.mxu0 0.0
        %5511 = vmatpush2.xpose.msra.mxu0 0.0
        %5512 = vmatprep.subr.mxu0 0.0
        %5513 = vmatpush2.xpose.msra.mxu0 0.0
        %5514 = vmatprep.subr.mxu0 0.0
        %5515 = vmatpush2.xpose.msra.mxu0 0.0
        %5516 = vmatprep.subr.mxu0 0.0
        %5517 = vmatpush2.xpose.msra.mxu0 0.0
        %5518 = vmatprep.subr.mxu0 0.0
        %5519 = vmatpush2.xpose.msra.mxu0 0.0
        %5520 = vmatprep.subr.mxu0 0.0
        %5521 = vmatpush2.xpose.msra.mxu0 0.0
        %5522 = vmatprep.subr.mxu0 0.0
        %5523 = vmatpush2.xpose.msra.mxu0 0.0
        %5524 = vmatprep.subr.mxu0 0.0
        %5525 = vmatpush2.xpose.msra.mxu0 0.0
        %5526 = vmatprep.subr.mxu0 0.0
        %5527 = vmatpush2.xpose.msra.mxu0 0.0
        %5528 = vmatprep.subr.mxu0 0.0
        %5529 = vmatpush2.xpose.msra.mxu0 0.0
        %5530 = vmatprep.subr.mxu0 0.0
        %5531 = vmatpush2.xpose.msra.mxu0 0.0
        %5532 = vmatprep.subr.mxu0 0.0
        %5533 = vmatpush2.xpose.msra.mxu0 0.0
        %5534 = vmatprep.mubr.f32.mxu0 0.0
        %5535 = vmatmul.mubr.f32.gmra.mxu0 %v5462
        %v5536 = vpop.f32.mrf.mxu0
        %v5537 = vadd.f32 0.0, %v5536
        %v5538 = vpop.f32.mrf.mxu0
        %5539 = vmatprep.mubr.f32.mxu0 0.0
        %5540 = vmatmul.mubr.f32.gmra.mxu0 %v5465
        %v5541 = vpop.f32.mrf.mxu0
        %v5542 = vadd.f32 0.0, %v5541
        %v5543 = vpop.f32.mrf.mxu0
        %5544 = vdwg.mxu0
        %v5546 = vsel %vm2067, %v5149, 0
        %v5549 = vsel %vm2067, %v5150, 0
        %v5552 = vsel %vm2067, %v5032, 0
        %5554 = vmatprep.subr.mxu0 0.0
        %5555 = vmatpush1.xpose.msra.mxu0 0.0
        %5556 = vmatprep.subr.mxu0 0.0
        %5557 = vmatpush1.xpose.msra.mxu0 0.0
        %5558 = vmatprep.subr.mxu0 0.0
        %5559 = vmatpush1.xpose.msra.mxu0 0.0
        %5560 = vmatprep.subr.mxu0 0.0
        %5561 = vmatpush1.xpose.msra.mxu0 0.0
        %5562 = vmatprep.subr.mxu0 0.0
        %5563 = vmatpush1.xpose.msra.mxu0 0.0
        %5564 = vmatprep.subr.mxu0 0.0
        %5565 = vmatpush1.xpose.msra.mxu0 0.0
        %5566 = vmatprep.subr.mxu0 0.0
        %5567 = vmatpush1.xpose.msra.mxu0 0.0
        %5568 = vmatprep.subr.mxu0 0.0
        %5569 = vmatpush1.xpose.msra.mxu0 0.0
        %5570 = vmatprep.subr.mxu0 0.0
        %5571 = vmatpush1.xpose.msra.mxu0 0.0
        %5572 = vmatprep.subr.mxu0 0.0
        %5573 = vmatpush1.xpose.msra.mxu0 0.0
        %5574 = vmatprep.subr.mxu0 0.0
        %5575 = vmatpush1.xpose.msra.mxu0 0.0
        %5576 = vmatprep.subr.mxu0 0.0
        %5577 = vmatpush1.xpose.msra.mxu0 0.0
        %5578 = vmatprep.subr.mxu0 0.0
        %5579 = vmatpush1.xpose.msra.mxu0 0.0
        %5580 = vmatprep.subr.mxu0 0.0
        %5581 = vmatpush1.xpose.msra.mxu0 0.0
        %5582 = vmatprep.subr.mxu0 0.0
        %5583 = vmatpush1.xpose.msra.mxu0 0.0
        %5584 = vmatprep.subr.mxu0 0.0
        %5585 = vmatpush1.xpose.msra.mxu0 %v5552
        %5586 = vmatprep.subr.mxu0 0.0
        %5587 = vmatpush2.xpose.msra.mxu0 0.0
        %5588 = vmatprep.subr.mxu0 0.0
        %5589 = vmatpush2.xpose.msra.mxu0 0.0
        %5590 = vmatprep.subr.mxu0 0.0
        %5591 = vmatpush2.xpose.msra.mxu0 0.0
        %5592 = vmatprep.subr.mxu0 0.0
        %5593 = vmatpush2.xpose.msra.mxu0 0.0
        %5594 = vmatprep.subr.mxu0 0.0
        %5595 = vmatpush2.xpose.msra.mxu0 0.0
        %5596 = vmatprep.subr.mxu0 0.0
        %5597 = vmatpush2.xpose.msra.mxu0 0.0
        %5598 = vmatprep.subr.mxu0 0.0
        %5599 = vmatpush2.xpose.msra.mxu0 0.0
        %5600 = vmatprep.subr.mxu0 0.0
        %5601 = vmatpush2.xpose.msra.mxu0 0.0
        %5602 = vmatprep.subr.mxu0 0.0
        %5603 = vmatpush2.xpose.msra.mxu0 0.0
        %5604 = vmatprep.subr.mxu0 0.0
        %5605 = vmatpush2.xpose.msra.mxu0 0.0
        %5606 = vmatprep.subr.mxu0 0.0
        %5607 = vmatpush2.xpose.msra.mxu0 0.0
        %5608 = vmatprep.subr.mxu0 0.0
        %5609 = vmatpush2.xpose.msra.mxu0 0.0
        %5610 = vmatprep.subr.mxu0 0.0
        %5611 = vmatpush2.xpose.msra.mxu0 0.0
        %5612 = vmatprep.subr.mxu0 0.0
        %5613 = vmatpush2.xpose.msra.mxu0 0.0
        %5614 = vmatprep.subr.mxu0 0.0
        %5615 = vmatpush2.xpose.msra.mxu0 0.0
        %5616 = vmatprep.subr.mxu0 0.0
        %5617 = vmatpush2.xpose.msra.mxu0 0.0
        %5618 = vmatprep.mubr.f32.mxu0 0.0
        %5619 = vmatmul.mubr.f32.gmra.mxu0 %v5546
        %v5620 = vpop.f32.mrf.mxu0
        %v5621 = vadd.f32 0.0, %v5620
        %v5622 = vpop.f32.mrf.mxu0
        %5623 = vmatprep.mubr.f32.mxu0 0.0
        %5624 = vmatmul.mubr.f32.gmra.mxu0 %v5549
        %v5625 = vpop.f32.mrf.mxu0
        %v5626 = vadd.f32 0.0, %v5625
        %v5627 = vpop.f32.mrf.mxu0
        %5628 = vdwg.mxu0
        %v5630 = vsel %vm2067, %v5181, 0
        %v5633 = vsel %vm2067, %v5182, 0
        %v5636 = vsel %vm2067, %v5033, 0
        %5638 = vmatprep.subr.mxu0 0.0
        %5639 = vmatpush1.xpose.msra.mxu0 0.0
        %5640 = vmatprep.subr.mxu0 0.0
        %5641 = vmatpush1.xpose.msra.mxu0 0.0
        %5642 = vmatprep.subr.mxu0 0.0
        %5643 = vmatpush1.xpose.msra.mxu0 0.0
        %5644 = vmatprep.subr.mxu0 0.0
        %5645 = vmatpush1.xpose.msra.mxu0 0.0
        %5646 = vmatprep.subr.mxu0 0.0
        %5647 = vmatpush1.xpose.msra.mxu0 0.0
        %5648 = vmatprep.subr.mxu0 0.0
        %5649 = vmatpush1.xpose.msra.mxu0 0.0
        %5650 = vmatprep.subr.mxu0 0.0
        %5651 = vmatpush1.xpose.msra.mxu0 0.0
        %5652 = vmatprep.subr.mxu0 0.0
        %5653 = vmatpush1.xpose.msra.mxu0 0.0
        %5654 = vmatprep.subr.mxu0 0.0
        %5655 = vmatpush1.xpose.msra.mxu0 0.0
        %5656 = vmatprep.subr.mxu0 0.0
        %5657 = vmatpush1.xpose.msra.mxu0 0.0
        %5658 = vmatprep.subr.mxu0 0.0
        %5659 = vmatpush1.xpose.msra.mxu0 0.0
        %5660 = vmatprep.subr.mxu0 0.0
        %5661 = vmatpush1.xpose.msra.mxu0 0.0
        %5662 = vmatprep.subr.mxu0 0.0
        %5663 = vmatpush1.xpose.msra.mxu0 0.0
        %5664 = vmatprep.subr.mxu0 0.0
        %5665 = vmatpush1.xpose.msra.mxu0 0.0
        %5666 = vmatprep.subr.mxu0 0.0
        %5667 = vmatpush1.xpose.msra.mxu0 0.0
        %5668 = vmatprep.subr.mxu0 0.0
        %5669 = vmatpush1.xpose.msra.mxu0 %v5636
        %5670 = vmatprep.subr.mxu0 0.0
        %5671 = vmatpush2.xpose.msra.mxu0 0.0
        %5672 = vmatprep.subr.mxu0 0.0
        %5673 = vmatpush2.xpose.msra.mxu0 0.0
        %5674 = vmatprep.subr.mxu0 0.0
        %5675 = vmatpush2.xpose.msra.mxu0 0.0
        %5676 = vmatprep.subr.mxu0 0.0
        %5677 = vmatpush2.xpose.msra.mxu0 0.0
        %5678 = vmatprep.subr.mxu0 0.0
        %5679 = vmatpush2.xpose.msra.mxu0 0.0
        %5680 = vmatprep.subr.mxu0 0.0
        %5681 = vmatpush2.xpose.msra.mxu0 0.0
        %5682 = vmatprep.subr.mxu0 0.0
        %5683 = vmatpush2.xpose.msra.mxu0 0.0
        %5684 = vmatprep.subr.mxu0 0.0
        %5685 = vmatpush2.xpose.msra.mxu0 0.0
        %5686 = vmatprep.subr.mxu0 0.0
        %5687 = vmatpush2.xpose.msra.mxu0 0.0
        %5688 = vmatprep.subr.mxu0 0.0
        %5689 = vmatpush2.xpose.msra.mxu0 0.0
        %5690 = vmatprep.subr.mxu0 0.0
        %5691 = vmatpush2.xpose.msra.mxu0 0.0
        %5692 = vmatprep.subr.mxu0 0.0
        %5693 = vmatpush2.xpose.msra.mxu0 0.0
        %5694 = vmatprep.subr.mxu0 0.0
        %5695 = vmatpush2.xpose.msra.mxu0 0.0
        %5696 = vmatprep.subr.mxu0 0.0
        %5697 = vmatpush2.xpose.msra.mxu0 0.0
        %5698 = vmatprep.subr.mxu0 0.0
        %5699 = vmatpush2.xpose.msra.mxu0 0.0
        %5700 = vmatprep.subr.mxu0 0.0
        %5701 = vmatpush2.xpose.msra.mxu0 0.0
        %5702 = vmatprep.mubr.f32.mxu0 0.0
        %5703 = vmatmul.mubr.f32.gmra.mxu0 %v5630
        %v5704 = vpop.f32.mrf.mxu0
        %v5705 = vadd.f32 0.0, %v5704
        %v5706 = vpop.f32.mrf.mxu0
        %5707 = vmatprep.mubr.f32.mxu0 0.0
        %5708 = vmatmul.mubr.f32.gmra.mxu0 %v5633
        %v5709 = vpop.f32.mrf.mxu0
        %v5710 = vadd.f32 0.0, %v5709
        %v5711 = vpop.f32.mrf.mxu0
        %5712 = vdwg.mxu0
        %v5714 = vsel %vm2067, %v5213, 0
        %v5717 = vsel %vm2067, %v5214, 0
        %v5720 = vsel %vm2067, %v5034, 0
        %5722 = vmatprep.subr.mxu0 0.0
        %5723 = vmatpush1.xpose.msra.mxu0 0.0
        %5724 = vmatprep.subr.mxu0 0.0
        %5725 = vmatpush1.xpose.msra.mxu0 0.0
        %5726 = vmatprep.subr.mxu0 0.0
        %5727 = vmatpush1.xpose.msra.mxu0 0.0
        %5728 = vmatprep.subr.mxu0 0.0
        %5729 = vmatpush1.xpose.msra.mxu0 0.0
        %5730 = vmatprep.subr.mxu0 0.0
        %5731 = vmatpush1.xpose.msra.mxu0 0.0
        %5732 = vmatprep.subr.mxu0 0.0
        %5733 = vmatpush1.xpose.msra.mxu0 0.0
        %5734 = vmatprep.subr.mxu0 0.0
        %5735 = vmatpush1.xpose.msra.mxu0 0.0
        %5736 = vmatprep.subr.mxu0 0.0
        %5737 = vmatpush1.xpose.msra.mxu0 0.0
        %5738 = vmatprep.subr.mxu0 0.0
        %5739 = vmatpush1.xpose.msra.mxu0 0.0
        %5740 = vmatprep.subr.mxu0 0.0
        %5741 = vmatpush1.xpose.msra.mxu0 0.0
        %5742 = vmatprep.subr.mxu0 0.0
        %5743 = vmatpush1.xpose.msra.mxu0 0.0
        %5744 = vmatprep.subr.mxu0 0.0
        %5745 = vmatpush1.xpose.msra.mxu0 0.0
        %5746 = vmatprep.subr.mxu0 0.0
        %5747 = vmatpush1.xpose.msra.mxu0 0.0
        %5748 = vmatprep.subr.mxu0 0.0
        %5749 = vmatpush1.xpose.msra.mxu0 0.0
        %5750 = vmatprep.subr.mxu0 0.0
        %5751 = vmatpush1.xpose.msra.mxu0 0.0
        %5752 = vmatprep.subr.mxu0 0.0
        %5753 = vmatpush1.xpose.msra.mxu0 %v5720
        %5754 = vmatprep.subr.mxu0 0.0
        %5755 = vmatpush2.xpose.msra.mxu0 0.0
        %5756 = vmatprep.subr.mxu0 0.0
        %5757 = vmatpush2.xpose.msra.mxu0 0.0
        %5758 = vmatprep.subr.mxu0 0.0
        %5759 = vmatpush2.xpose.msra.mxu0 0.0
        %5760 = vmatprep.subr.mxu0 0.0
        %5761 = vmatpush2.xpose.msra.mxu0 0.0
        %5762 = vmatprep.subr.mxu0 0.0
        %5763 = vmatpush2.xpose.msra.mxu0 0.0
        %5764 = vmatprep.subr.mxu0 0.0
        %5765 = vmatpush2.xpose.msra.mxu0 0.0
        %5766 = vmatprep.subr.mxu0 0.0
        %5767 = vmatpush2.xpose.msra.mxu0 0.0
        %5768 = vmatprep.subr.mxu0 0.0
        %5769 = vmatpush2.xpose.msra.mxu0 0.0
        %5770 = vmatprep.subr.mxu0 0.0
        %5771 = vmatpush2.xpose.msra.mxu0 0.0
        %5772 = vmatprep.subr.mxu0 0.0
        %5773 = vmatpush2.xpose.msra.mxu0 0.0
        %5774 = vmatprep.subr.mxu0 0.0
        %5775 = vmatpush2.xpose.msra.mxu0 0.0
        %5776 = vmatprep.subr.mxu0 0.0
        %5777 = vmatpush2.xpose.msra.mxu0 0.0
        %5778 = vmatprep.subr.mxu0 0.0
        %5779 = vmatpush2.xpose.msra.mxu0 0.0
        %5780 = vmatprep.subr.mxu0 0.0
        %5781 = vmatpush2.xpose.msra.mxu0 0.0
        %5782 = vmatprep.subr.mxu0 0.0
        %5783 = vmatpush2.xpose.msra.mxu0 0.0
        %5784 = vmatprep.subr.mxu0 0.0
        %5785 = vmatpush2.xpose.msra.mxu0 0.0
        %5786 = vmatprep.mubr.f32.mxu0 0.0
        %5787 = vmatmul.mubr.f32.gmra.mxu0 %v5714
        %v5788 = vpop.f32.mrf.mxu0
        %v5789 = vadd.f32 0.0, %v5788
        %v5790 = vpop.f32.mrf.mxu0
        %5791 = vmatprep.mubr.f32.mxu0 0.0
        %5792 = vmatmul.mubr.f32.gmra.mxu0 %v5717
        %v5793 = vpop.f32.mrf.mxu0
        %v5794 = vadd.f32 0.0, %v5793
        %v5795 = vpop.f32.mrf.mxu0
        %5796 = vdwg.mxu0
        %v5798 = vsel %vm2067, %v5245, 0
        %v5801 = vsel %vm2067, %v5246, 0
        %v5804 = vsel %vm2067, %v5035, 0
        %5806 = vmatprep.subr.mxu0 0.0
        %5807 = vmatpush1.xpose.msra.mxu0 0.0
        %5808 = vmatprep.subr.mxu0 0.0
        %5809 = vmatpush1.xpose.msra.mxu0 0.0
        %5810 = vmatprep.subr.mxu0 0.0
        %5811 = vmatpush1.xpose.msra.mxu0 0.0
        %5812 = vmatprep.subr.mxu0 0.0
        %5813 = vmatpush1.xpose.msra.mxu0 0.0
        %5814 = vmatprep.subr.mxu0 0.0
        %5815 = vmatpush1.xpose.msra.mxu0 0.0
        %5816 = vmatprep.subr.mxu0 0.0
        %5817 = vmatpush1.xpose.msra.mxu0 0.0
        %5818 = vmatprep.subr.mxu0 0.0
        %5819 = vmatpush1.xpose.msra.mxu0 0.0
        %5820 = vmatprep.subr.mxu0 0.0
        %5821 = vmatpush1.xpose.msra.mxu0 0.0
        %5822 = vmatprep.subr.mxu0 0.0
        %5823 = vmatpush1.xpose.msra.mxu0 0.0
        %5824 = vmatprep.subr.mxu0 0.0
        %5825 = vmatpush1.xpose.msra.mxu0 0.0
        %5826 = vmatprep.subr.mxu0 0.0
        %5827 = vmatpush1.xpose.msra.mxu0 0.0
        %5828 = vmatprep.subr.mxu0 0.0
        %5829 = vmatpush1.xpose.msra.mxu0 0.0
        %5830 = vmatprep.subr.mxu0 0.0
        %5831 = vmatpush1.xpose.msra.mxu0 0.0
        %5832 = vmatprep.subr.mxu0 0.0
        %5833 = vmatpush1.xpose.msra.mxu0 0.0
        %5834 = vmatprep.subr.mxu0 0.0
        %5835 = vmatpush1.xpose.msra.mxu0 0.0
        %5836 = vmatprep.subr.mxu0 0.0
        %5837 = vmatpush1.xpose.msra.mxu0 %v5804
        %5838 = vmatprep.subr.mxu0 0.0
        %5839 = vmatpush2.xpose.msra.mxu0 0.0
        %5840 = vmatprep.subr.mxu0 0.0
        %5841 = vmatpush2.xpose.msra.mxu0 0.0
        %5842 = vmatprep.subr.mxu0 0.0
        %5843 = vmatpush2.xpose.msra.mxu0 0.0
        %5844 = vmatprep.subr.mxu0 0.0
        %5845 = vmatpush2.xpose.msra.mxu0 0.0
        %5846 = vmatprep.subr.mxu0 0.0
        %5847 = vmatpush2.xpose.msra.mxu0 0.0
        %5848 = vmatprep.subr.mxu0 0.0
        %5849 = vmatpush2.xpose.msra.mxu0 0.0
        %5850 = vmatprep.subr.mxu0 0.0
        %5851 = vmatpush2.xpose.msra.mxu0 0.0
        %5852 = vmatprep.subr.mxu0 0.0
        %5853 = vmatpush2.xpose.msra.mxu0 0.0
        %5854 = vmatprep.subr.mxu0 0.0
        %5855 = vmatpush2.xpose.msra.mxu0 0.0
        %5856 = vmatprep.subr.mxu0 0.0
        %5857 = vmatpush2.xpose.msra.mxu0 0.0
        %5858 = vmatprep.subr.mxu0 0.0
        %5859 = vmatpush2.xpose.msra.mxu0 0.0
        %5860 = vmatprep.subr.mxu0 0.0
        %5861 = vmatpush2.xpose.msra.mxu0 0.0
        %5862 = vmatprep.subr.mxu0 0.0
        %5863 = vmatpush2.xpose.msra.mxu0 0.0
        %5864 = vmatprep.subr.mxu0 0.0
        %5865 = vmatpush2.xpose.msra.mxu0 0.0
        %5866 = vmatprep.subr.mxu0 0.0
        %5867 = vmatpush2.xpose.msra.mxu0 0.0
        %5868 = vmatprep.subr.mxu0 0.0
        %5869 = vmatpush2.xpose.msra.mxu0 0.0
        %5870 = vmatprep.mubr.f32.mxu0 0.0
        %5871 = vmatmul.mubr.f32.gmra.mxu0 %v5798
        %v5872 = vpop.f32.mrf.mxu0
        %v5873 = vadd.f32 0.0, %v5872
        %v5874 = vpop.f32.mrf.mxu0
        %5875 = vmatprep.mubr.f32.mxu0 0.0
        %5876 = vmatmul.mubr.f32.gmra.mxu0 %v5801
        %v5877 = vpop.f32.mrf.mxu0
        %v5878 = vadd.f32 0.0, %v5877
        %v5879 = vpop.f32.mrf.mxu0
        %5880 = vdwg.mxu0
        %v5882 = vsel %vm2067, %v5277, 0
        %v5885 = vsel %vm2067, %v5278, 0
        %v5888 = vsel %vm2067, %v5036, 0
        %5890 = vmatprep.subr.mxu0 0.0
        %5891 = vmatpush1.xpose.msra.mxu0 0.0
        %5892 = vmatprep.subr.mxu0 0.0
        %5893 = vmatpush1.xpose.msra.mxu0 0.0
        %5894 = vmatprep.subr.mxu0 0.0
        %5895 = vmatpush1.xpose.msra.mxu0 0.0
        %5896 = vmatprep.subr.mxu0 0.0
        %5897 = vmatpush1.xpose.msra.mxu0 0.0
        %5898 = vmatprep.subr.mxu0 0.0
        %5899 = vmatpush1.xpose.msra.mxu0 0.0
        %5900 = vmatprep.subr.mxu0 0.0
        %5901 = vmatpush1.xpose.msra.mxu0 0.0
        %5902 = vmatprep.subr.mxu0 0.0
        %5903 = vmatpush1.xpose.msra.mxu0 0.0
        %5904 = vmatprep.subr.mxu0 0.0
        %5905 = vmatpush1.xpose.msra.mxu0 0.0
        %5906 = vmatprep.subr.mxu0 0.0
        %5907 = vmatpush1.xpose.msra.mxu0 0.0
        %5908 = vmatprep.subr.mxu0 0.0
        %5909 = vmatpush1.xpose.msra.mxu0 0.0
        %5910 = vmatprep.subr.mxu0 0.0
        %5911 = vmatpush1.xpose.msra.mxu0 0.0
        %5912 = vmatprep.subr.mxu0 0.0
        %5913 = vmatpush1.xpose.msra.mxu0 0.0
        %5914 = vmatprep.subr.mxu0 0.0
        %5915 = vmatpush1.xpose.msra.mxu0 0.0
        %5916 = vmatprep.subr.mxu0 0.0
        %5917 = vmatpush1.xpose.msra.mxu0 0.0
        %5918 = vmatprep.subr.mxu0 0.0
        %5919 = vmatpush1.xpose.msra.mxu0 0.0
        %5920 = vmatprep.subr.mxu0 0.0
        %5921 = vmatpush1.xpose.msra.mxu0 %v5888
        %5922 = vmatprep.subr.mxu0 0.0
        %5923 = vmatpush2.xpose.msra.mxu0 0.0
        %5924 = vmatprep.subr.mxu0 0.0
        %5925 = vmatpush2.xpose.msra.mxu0 0.0
        %5926 = vmatprep.subr.mxu0 0.0
        %5927 = vmatpush2.xpose.msra.mxu0 0.0
        %5928 = vmatprep.subr.mxu0 0.0
        %5929 = vmatpush2.xpose.msra.mxu0 0.0
        %5930 = vmatprep.subr.mxu0 0.0
        %5931 = vmatpush2.xpose.msra.mxu0 0.0
        %5932 = vmatprep.subr.mxu0 0.0
        %5933 = vmatpush2.xpose.msra.mxu0 0.0
        %5934 = vmatprep.subr.mxu0 0.0
        %5935 = vmatpush2.xpose.msra.mxu0 0.0
        %5936 = vmatprep.subr.mxu0 0.0
        %5937 = vmatpush2.xpose.msra.mxu0 0.0
        %5938 = vmatprep.subr.mxu0 0.0
        %5939 = vmatpush2.xpose.msra.mxu0 0.0
        %5940 = vmatprep.subr.mxu0 0.0
        %5941 = vmatpush2.xpose.msra.mxu0 0.0
        %5942 = vmatprep.subr.mxu0 0.0
        %5943 = vmatpush2.xpose.msra.mxu0 0.0
        %5944 = vmatprep.subr.mxu0 0.0
        %5945 = vmatpush2.xpose.msra.mxu0 0.0
        %5946 = vmatprep.subr.mxu0 0.0
        %5947 = vmatpush2.xpose.msra.mxu0 0.0
        %5948 = vmatprep.subr.mxu0 0.0
        %5949 = vmatpush2.xpose.msra.mxu0 0.0
        %5950 = vmatprep.subr.mxu0 0.0
        %5951 = vmatpush2.xpose.msra.mxu0 0.0
        %5952 = vmatprep.subr.mxu0 0.0
        %5953 = vmatpush2.xpose.msra.mxu0 0.0
        %5954 = vmatprep.mubr.f32.mxu0 0.0
        %5955 = vmatmul.mubr.f32.gmra.mxu0 %v5882
        %v5956 = vpop.f32.mrf.mxu0
        %v5957 = vadd.f32 0.0, %v5956
        %v5958 = vpop.f32.mrf.mxu0
        %5959 = vmatprep.mubr.f32.mxu0 0.0
        %5960 = vmatmul.mubr.f32.gmra.mxu0 %v5885
        %v5961 = vpop.f32.mrf.mxu0
        %v5962 = vadd.f32 0.0, %v5961
        %v5963 = vpop.f32.mrf.mxu0
        %5964 = vdwg.mxu0
        %5965 = vxpose.xlu0.b32.start [1/16] %v5369, 128
        %5966 = vxpose.xlu0.b32.cont [2/16] %v5374, 128
        %5967 = vxpose.xlu0.b32.cont [3/16] 0.0, 128
        %5968 = vxpose.xlu0.b32.cont [4/16] 0.0, 128
        %5969 = vxpose.xlu0.b32.cont [5/16] 0.0, 128
        %5970 = vxpose.xlu0.b32.cont [6/16] 0.0, 128
        %5971 = vxpose.xlu0.b32.cont [7/16] 0.0, 128
        %5972 = vxpose.xlu0.b32.cont [8/16] 0.0, 128
        %5973 = vxpose.xlu0.b32.cont [9/16] 0.0, 128
        %5974 = vxpose.xlu0.b32.cont [10/16] 0.0, 128
        %5975 = vxpose.xlu0.b32.cont [11/16] 0.0, 128
        %5976 = vxpose.xlu0.b32.cont [12/16] 0.0, 128
        %5977 = vxpose.xlu0.b32.cont [13/16] 0.0, 128
        %5978 = vxpose.xlu0.b32.cont [14/16] 0.0, 128
        %5979 = vxpose.xlu0.b32.cont [15/16] 0.0, 128
        %5980 = vxpose.xlu0.b32.end [16/16] 0.0, 128
        %v5981 = vpop.trf.xlu0
        %v5982 = vpop.trf.xlu0
        %v5983 = vpop.trf.xlu0
        %v5984 = vpop.trf.xlu0
        %v5985 = vpop.trf.xlu0
        %v5986 = vpop.trf.xlu0
        %v5987 = vpop.trf.xlu0
        %v5988 = vpop.trf.xlu0
        %v5989 = vpop.trf.xlu0
        %v5990 = vpop.trf.xlu0
        %v5991 = vpop.trf.xlu0
        %v5992 = vpop.trf.xlu0
        %v5993 = vpop.trf.xlu0
        %v5994 = vpop.trf.xlu0
        %v5995 = vpop.trf.xlu0
        %v5996 = vpop.trf.xlu0
        %5997 = vxpose.xlu0.b32.start [1/16] %v5453, 128
        %5998 = vxpose.xlu0.b32.cont [2/16] %v5458, 128
        %5999 = vxpose.xlu0.b32.cont [3/16] 0.0, 128
        %6000 = vxpose.xlu0.b32.cont [4/16] 0.0, 128
        %6001 = vxpose.xlu0.b32.cont [5/16] 0.0, 128
        %6002 = vxpose.xlu0.b32.cont [6/16] 0.0, 128
        %6003 = vxpose.xlu0.b32.cont [7/16] 0.0, 128
        %6004 = vxpose.xlu0.b32.cont [8/16] 0.0, 128
        %6005 = vxpose.xlu0.b32.cont [9/16] 0.0, 128
        %6006 = vxpose.xlu0.b32.cont [10/16] 0.0, 128
        %6007 = vxpose.xlu0.b32.cont [11/16] 0.0, 128
        %6008 = vxpose.xlu0.b32.cont [12/16] 0.0, 128
        %6009 = vxpose.xlu0.b32.cont [13/16] 0.0, 128
        %6010 = vxpose.xlu0.b32.cont [14/16] 0.0, 128
        %6011 = vxpose.xlu0.b32.cont [15/16] 0.0, 128
        %6012 = vxpose.xlu0.b32.end [16/16] 0.0, 128
        %v6013 = vpop.trf.xlu0
        %v6014 = vpop.trf.xlu0
        %v6015 = vpop.trf.xlu0
        %v6016 = vpop.trf.xlu0
        %v6017 = vpop.trf.xlu0
        %v6018 = vpop.trf.xlu0
        %v6019 = vpop.trf.xlu0
        %v6020 = vpop.trf.xlu0
        %v6021 = vpop.trf.xlu0
        %v6022 = vpop.trf.xlu0
        %v6023 = vpop.trf.xlu0
        %v6024 = vpop.trf.xlu0
        %v6025 = vpop.trf.xlu0
        %v6026 = vpop.trf.xlu0
        %v6027 = vpop.trf.xlu0
        %v6028 = vpop.trf.xlu0
        %6029 = vxpose.xlu0.b32.start [1/16] %v5537, 128
        %6030 = vxpose.xlu0.b32.cont [2/16] %v5542, 128
        %6031 = vxpose.xlu0.b32.cont [3/16] 0.0, 128
        %6032 = vxpose.xlu0.b32.cont [4/16] 0.0, 128
        %6033 = vxpose.xlu0.b32.cont [5/16] 0.0, 128
        %6034 = vxpose.xlu0.b32.cont [6/16] 0.0, 128
        %6035 = vxpose.xlu0.b32.cont [7/16] 0.0, 128
        %6036 = vxpose.xlu0.b32.cont [8/16] 0.0, 128
        %6037 = vxpose.xlu0.b32.cont [9/16] 0.0, 128
        %6038 = vxpose.xlu0.b32.cont [10/16] 0.0, 128
        %6039 = vxpose.xlu0.b32.cont [11/16] 0.0, 128
        %6040 = vxpose.xlu0.b32.cont [12/16] 0.0, 128
        %6041 = vxpose.xlu0.b32.cont [13/16] 0.0, 128
        %6042 = vxpose.xlu0.b32.cont [14/16] 0.0, 128
        %6043 = vxpose.xlu0.b32.cont [15/16] 0.0, 128
        %6044 = vxpose.xlu0.b32.end [16/16] 0.0, 128
        %v6045 = vpop.trf.xlu0
        %v6046 = vpop.trf.xlu0
        %v6047 = vpop.trf.xlu0
        %v6048 = vpop.trf.xlu0
        %v6049 = vpop.trf.xlu0
        %v6050 = vpop.trf.xlu0
        %v6051 = vpop.trf.xlu0
        %v6052 = vpop.trf.xlu0
        %v6053 = vpop.trf.xlu0
        %v6054 = vpop.trf.xlu0
        %v6055 = vpop.trf.xlu0
        %v6056 = vpop.trf.xlu0
        %v6057 = vpop.trf.xlu0
        %v6058 = vpop.trf.xlu0
        %v6059 = vpop.trf.xlu0
        %v6060 = vpop.trf.xlu0
        %6061 = vxpose.xlu0.b32.start [1/16] %v5621, 128
        %6062 = vxpose.xlu0.b32.cont [2/16] %v5626, 128
        %6063 = vxpose.xlu0.b32.cont [3/16] 0.0, 128
        %6064 = vxpose.xlu0.b32.cont [4/16] 0.0, 128
        %6065 = vxpose.xlu0.b32.cont [5/16] 0.0, 128
        %6066 = vxpose.xlu0.b32.cont [6/16] 0.0, 128
        %6067 = vxpose.xlu0.b32.cont [7/16] 0.0, 128
        %6068 = vxpose.xlu0.b32.cont [8/16] 0.0, 128
        %6069 = vxpose.xlu0.b32.cont [9/16] 0.0, 128
        %6070 = vxpose.xlu0.b32.cont [10/16] 0.0, 128
        %6071 = vxpose.xlu0.b32.cont [11/16] 0.0, 128
        %6072 = vxpose.xlu0.b32.cont [12/16] 0.0, 128
        %6073 = vxpose.xlu0.b32.cont [13/16] 0.0, 128
        %6074 = vxpose.xlu0.b32.cont [14/16] 0.0, 128
        %6075 = vxpose.xlu0.b32.cont [15/16] 0.0, 128
        %6076 = vxpose.xlu0.b32.end [16/16] 0.0, 128
        %v6077 = vpop.trf.xlu0
        %v6078 = vpop.trf.xlu0
        %v6079 = vpop.trf.xlu0
        %v6080 = vpop.trf.xlu0
        %v6081 = vpop.trf.xlu0
        %v6082 = vpop.trf.xlu0
        %v6083 = vpop.trf.xlu0
        %v6084 = vpop.trf.xlu0
        %v6085 = vpop.trf.xlu0
        %v6086 = vpop.trf.xlu0
        %v6087 = vpop.trf.xlu0
        %v6088 = vpop.trf.xlu0
        %v6089 = vpop.trf.xlu0
        %v6090 = vpop.trf.xlu0
        %v6091 = vpop.trf.xlu0
        %v6092 = vpop.trf.xlu0
        %6093 = vxpose.xlu0.b32.start [1/16] %v5705, 128
        %6094 = vxpose.xlu0.b32.cont [2/16] %v5710, 128
        %6095 = vxpose.xlu0.b32.cont [3/16] 0.0, 128
        %6096 = vxpose.xlu0.b32.cont [4/16] 0.0, 128
        %6097 = vxpose.xlu0.b32.cont [5/16] 0.0, 128
        %6098 = vxpose.xlu0.b32.cont [6/16] 0.0, 128
        %6099 = vxpose.xlu0.b32.cont [7/16] 0.0, 128
        %6100 = vxpose.xlu0.b32.cont [8/16] 0.0, 128
        %6101 = vxpose.xlu0.b32.cont [9/16] 0.0, 128
        %6102 = vxpose.xlu0.b32.cont [10/16] 0.0, 128
        %6103 = vxpose.xlu0.b32.cont [11/16] 0.0, 128
        %6104 = vxpose.xlu0.b32.cont [12/16] 0.0, 128
        %6105 = vxpose.xlu0.b32.cont [13/16] 0.0, 128
        %6106 = vxpose.xlu0.b32.cont [14/16] 0.0, 128
        %6107 = vxpose.xlu0.b32.cont [15/16] 0.0, 128
        %6108 = vxpose.xlu0.b32.end [16/16] 0.0, 128
        %v6109 = vpop.trf.xlu0
        %v6110 = vpop.trf.xlu0
        %v6111 = vpop.trf.xlu0
        %v6112 = vpop.trf.xlu0
        %v6113 = vpop.trf.xlu0
        %v6114 = vpop.trf.xlu0
        %v6115 = vpop.trf.xlu0
        %v6116 = vpop.trf.xlu0
        %v6117 = vpop.trf.xlu0
        %v6118 = vpop.trf.xlu0
        %v6119 = vpop.trf.xlu0
        %v6120 = vpop.trf.xlu0
        %v6121 = vpop.trf.xlu0
        %v6122 = vpop.trf.xlu0
        %v6123 = vpop.trf.xlu0
        %v6124 = vpop.trf.xlu0
        %6125 = vxpose.xlu0.b32.start [1/16] %v5789, 128
        %6126 = vxpose.xlu0.b32.cont [2/16] %v5794, 128
        %6127 = vxpose.xlu0.b32.cont [3/16] 0.0, 128
        %6128 = vxpose.xlu0.b32.cont [4/16] 0.0, 128
        %6129 = vxpose.xlu0.b32.cont [5/16] 0.0, 128
        %6130 = vxpose.xlu0.b32.cont [6/16] 0.0, 128
        %6131 = vxpose.xlu0.b32.cont [7/16] 0.0, 128
        %6132 = vxpose.xlu0.b32.cont [8/16] 0.0, 128
        %6133 = vxpose.xlu0.b32.cont [9/16] 0.0, 128
        %6134 = vxpose.xlu0.b32.cont [10/16] 0.0, 128
        %6135 = vxpose.xlu0.b32.cont [11/16] 0.0, 128
        %6136 = vxpose.xlu0.b32.cont [12/16] 0.0, 128
        %6137 = vxpose.xlu0.b32.cont [13/16] 0.0, 128
        %6138 = vxpose.xlu0.b32.cont [14/16] 0.0, 128
        %6139 = vxpose.xlu0.b32.cont [15/16] 0.0, 128
        %6140 = vxpose.xlu0.b32.end [16/16] 0.0, 128
        %v6141 = vpop.trf.xlu0
        %v6142 = vpop.trf.xlu0
        %v6143 = vpop.trf.xlu0
        %v6144 = vpop.trf.xlu0
        %v6145 = vpop.trf.xlu0
        %v6146 = vpop.trf.xlu0
        %v6147 = vpop.trf.xlu0
        %v6148 = vpop.trf.xlu0
        %v6149 = vpop.trf.xlu0
        %v6150 = vpop.trf.xlu0
        %v6151 = vpop.trf.xlu0
        %v6152 = vpop.trf.xlu0
        %v6153 = vpop.trf.xlu0
        %v6154 = vpop.trf.xlu0
        %v6155 = vpop.trf.xlu0
        %v6156 = vpop.trf.xlu0
        %6157 = vxpose.xlu0.b32.start [1/16] %v5873, 128
        %6158 = vxpose.xlu0.b32.cont [2/16] %v5878, 128
        %6159 = vxpose.xlu0.b32.cont [3/16] 0.0, 128
        %6160 = vxpose.xlu0.b32.cont [4/16] 0.0, 128
        %6161 = vxpose.xlu0.b32.cont [5/16] 0.0, 128
        %6162 = vxpose.xlu0.b32.cont [6/16] 0.0, 128
        %6163 = vxpose.xlu0.b32.cont [7/16] 0.0, 128
        %6164 = vxpose.xlu0.b32.cont [8/16] 0.0, 128
        %6165 = vxpose.xlu0.b32.cont [9/16] 0.0, 128
        %6166 = vxpose.xlu0.b32.cont [10/16] 0.0, 128
        %6167 = vxpose.xlu0.b32.cont [11/16] 0.0, 128
        %6168 = vxpose.xlu0.b32.cont [12/16] 0.0, 128
        %6169 = vxpose.xlu0.b32.cont [13/16] 0.0, 128
        %6170 = vxpose.xlu0.b32.cont [14/16] 0.0, 128
        %6171 = vxpose.xlu0.b32.cont [15/16] 0.0, 128
        %6172 = vxpose.xlu0.b32.end [16/16] 0.0, 128
        %v6173 = vpop.trf.xlu0
        %v6174 = vpop.trf.xlu0
        %v6175 = vpop.trf.xlu0
        %v6176 = vpop.trf.xlu0
        %v6177 = vpop.trf.xlu0
        %v6178 = vpop.trf.xlu0
        %v6179 = vpop.trf.xlu0
        %v6180 = vpop.trf.xlu0
        %v6181 = vpop.trf.xlu0
        %v6182 = vpop.trf.xlu0
        %v6183 = vpop.trf.xlu0
        %v6184 = vpop.trf.xlu0
        %v6185 = vpop.trf.xlu0
        %v6186 = vpop.trf.xlu0
        %v6187 = vpop.trf.xlu0
        %v6188 = vpop.trf.xlu0
        %6189 = vxpose.xlu0.b32.start [1/16] %v5957, 128
        %6190 = vxpose.xlu0.b32.cont [2/16] %v5962, 128
        %6191 = vxpose.xlu0.b32.cont [3/16] 0.0, 128
        %6192 = vxpose.xlu0.b32.cont [4/16] 0.0, 128
        %6193 = vxpose.xlu0.b32.cont [5/16] 0.0, 128
        %6194 = vxpose.xlu0.b32.cont [6/16] 0.0, 128
        %6195 = vxpose.xlu0.b32.cont [7/16] 0.0, 128
        %6196 = vxpose.xlu0.b32.cont [8/16] 0.0, 128
        %6197 = vxpose.xlu0.b32.cont [9/16] 0.0, 128
        %6198 = vxpose.xlu0.b32.cont [10/16] 0.0, 128
        %6199 = vxpose.xlu0.b32.cont [11/16] 0.0, 128
        %6200 = vxpose.xlu0.b32.cont [12/16] 0.0, 128
        %6201 = vxpose.xlu0.b32.cont [13/16] 0.0, 128
        %6202 = vxpose.xlu0.b32.cont [14/16] 0.0, 128
        %6203 = vxpose.xlu0.b32.cont [15/16] 0.0, 128
        %6204 = vxpose.xlu0.b32.end [16/16] 0.0, 128
        %v6205 = vpop.trf.xlu0
        %v6206 = vpop.trf.xlu0
        %v6207 = vpop.trf.xlu0
        %v6208 = vpop.trf.xlu0
        %v6209 = vpop.trf.xlu0
        %v6210 = vpop.trf.xlu0
        %v6211 = vpop.trf.xlu0
        %v6212 = vpop.trf.xlu0
        %v6213 = vpop.trf.xlu0
        %v6214 = vpop.trf.xlu0
        %v6215 = vpop.trf.xlu0
        %v6216 = vpop.trf.xlu0
        %v6217 = vpop.trf.xlu0
        %v6218 = vpop.trf.xlu0
        %v6219 = vpop.trf.xlu0
        %v6220 = vpop.trf.xlu0
        %v6221 = vcombine.low %v5981, %v6045
        %v6222 = vcombine.high %v5981, %v6045
        %v6224 = vunpack.c.l.s4 1983009808
        %v6225 = vunpack.c.0.s8 %v6224
        %v6226 = vlaneseq
        %v6227 = vshrl.u32 %v6226, 7
        %v6228 = vsub.s32 %v6225, %v6227
        %v6229 = vrot.slane %v6221, %v6228
        %v6231 = vunpack.c.l.s4 1983009808
        %v6232 = vunpack.c.0.s8 %v6231
        %v6233 = vlaneseq
        %v6234 = vshrl.u32 %v6233, 7
        %v6235 = vsub.s32 %v6232, %v6234
        %v6236 = vrot.slane %v6222, %v6235
        %v6237 = vcombine.low %v6013, %v6077
        %v6238 = vcombine.high %v6013, %v6077
        %v6240 = vunpack.c.l.s4 1983009808
        %v6241 = vunpack.c.0.s8 %v6240
        %v6242 = vlaneseq
        %v6243 = vshrl.u32 %v6242, 7
        %v6244 = vsub.s32 %v6241, %v6243
        %v6245 = vrot.slane %v6237, %v6244
        %v6247 = vunpack.c.l.s4 1983009808
        %v6248 = vunpack.c.0.s8 %v6247
        %v6249 = vlaneseq
        %v6250 = vshrl.u32 %v6249, 7
        %v6251 = vsub.s32 %v6248, %v6250
        %v6252 = vrot.slane %v6238, %v6251
        %v6253 = vcombine.low %v6109, %v6173
        %v6254 = vcombine.high %v6109, %v6173
        %v6256 = vunpack.c.l.s4 1983009808
        %v6257 = vunpack.c.0.s8 %v6256
        %v6258 = vlaneseq
        %v6259 = vshrl.u32 %v6258, 7
        %v6260 = vsub.s32 %v6257, %v6259
        %v6261 = vrot.slane %v6253, %v6260
        %v6263 = vunpack.c.l.s4 1983009808
        %v6264 = vunpack.c.0.s8 %v6263
        %v6265 = vlaneseq
        %v6266 = vshrl.u32 %v6265, 7
        %v6267 = vsub.s32 %v6264, %v6266
        %v6268 = vrot.slane %v6254, %v6267
        %v6269 = vcombine.low %v6141, %v6205
        %v6270 = vcombine.high %v6141, %v6205
        %v6272 = vunpack.c.l.s4 1983009808
        %v6273 = vunpack.c.0.s8 %v6272
        %v6274 = vlaneseq
        %v6275 = vshrl.u32 %v6274, 7
        %v6276 = vsub.s32 %v6273, %v6275
        %v6277 = vrot.slane %v6269, %v6276
        %v6279 = vunpack.c.l.s4 1983009808
        %v6280 = vunpack.c.0.s8 %v6279
        %v6281 = vlaneseq
        %v6282 = vshrl.u32 %v6281, 7
        %v6283 = vsub.s32 %v6280, %v6282
        %v6284 = vrot.slane %v6270, %v6283
        %v6285 = vcombine.low %v6229, %v6245
        %v6286 = vcombine.high %v6229, %v6245
        %v6288 = vunpack.c.l.s4 1934713408
        %v6289 = vunpack.c.0.s8 %v6288
        %v6290 = vlaneseq
        %v6291 = vshrl.u32 %v6290, 7
        %v6292 = vsub.s32 %v6289, %v6291
        %v6293 = vrot.slane %v6285, %v6292
        %v6295 = vunpack.c.l.s4 1934713408
        %v6296 = vunpack.c.0.s8 %v6295
        %v6297 = vlaneseq
        %v6298 = vshrl.u32 %v6297, 7
        %v6299 = vsub.s32 %v6296, %v6298
        %v6300 = vrot.slane %v6286, %v6299
        %v6301 = vcombine.low %v6236, %v6252
        %v6302 = vcombine.high %v6236, %v6252
        %v6304 = vunpack.c.l.s4 1934713408
        %v6305 = vunpack.c.0.s8 %v6304
        %v6306 = vlaneseq
        %v6307 = vshrl.u32 %v6306, 7
        %v6308 = vsub.s32 %v6305, %v6307
        %v6309 = vrot.slane %v6301, %v6308
        %v6311 = vunpack.c.l.s4 1934713408
        %v6312 = vunpack.c.0.s8 %v6311
        %v6313 = vlaneseq
        %v6314 = vshrl.u32 %v6313, 7
        %v6315 = vsub.s32 %v6312, %v6314
        %v6316 = vrot.slane %v6302, %v6315
        %v6317 = vcombine.low %v6261, %v6277
        %v6318 = vcombine.high %v6261, %v6277
        %v6320 = vunpack.c.l.s4 1934713408
        %v6321 = vunpack.c.0.s8 %v6320
        %v6322 = vlaneseq
        %v6323 = vshrl.u32 %v6322, 7
        %v6324 = vsub.s32 %v6321, %v6323
        %v6325 = vrot.slane %v6317, %v6324
        %v6327 = vunpack.c.l.s4 1934713408
        %v6328 = vunpack.c.0.s8 %v6327
        %v6329 = vlaneseq
        %v6330 = vshrl.u32 %v6329, 7
        %v6331 = vsub.s32 %v6328, %v6330
        %v6332 = vrot.slane %v6318, %v6331
        %v6333 = vcombine.low %v6268, %v6284
        %v6334 = vcombine.high %v6268, %v6284
        %v6336 = vunpack.c.l.s4 1934713408
        %v6337 = vunpack.c.0.s8 %v6336
        %v6338 = vlaneseq
        %v6339 = vshrl.u32 %v6338, 7
        %v6340 = vsub.s32 %v6337, %v6339
        %v6341 = vrot.slane %v6333, %v6340
        %v6343 = vunpack.c.l.s4 1934713408
        %v6344 = vunpack.c.0.s8 %v6343
        %v6345 = vlaneseq
        %v6346 = vshrl.u32 %v6345, 7
        %v6347 = vsub.s32 %v6344, %v6346
        %v6348 = vrot.slane %v6334, %v6347
        %v6349 = vcombine.low %v6293, %v6325
        %v6350 = vcombine.high %v6293, %v6325
        %v6351 = vcombine.low %v6300, %v6332
        %v6352 = vcombine.high %v6300, %v6332
        %v6353 = vcombine.low %v6309, %v6341
        %v6354 = vcombine.high %v6309, %v6341
        %v6355 = vcombine.low %v6316, %v6348
        %v6356 = vcombine.high %v6316, %v6348
        %v6357 = vcombine.low %v6349, %v6351
        %v6358 = vcombine.high %v6349, %v6351
        %v6360 = vunpack.c.l.s4 1983009808
        %v6361 = vunpack.c.0.s8 %v6360
        %v6362 = vlaneseq
        %v6363 = vshrl.u32 %v6362, 7
        %v6364 = vsub.s32 %v6361, %v6363
        %v6365 = vrot.slane %v6357, %v6364
        %v6367 = vunpack.c.l.s4 1983009808
        %v6368 = vunpack.c.0.s8 %v6367
        %v6369 = vlaneseq
        %v6370 = vshrl.u32 %v6369, 7
        %v6371 = vsub.s32 %v6368, %v6370
        %v6372 = vrot.slane %v6358, %v6371
        %v6373 = vcombine.low %v6350, %v6352
        %v6374 = vcombine.high %v6350, %v6352
        %v6376 = vunpack.c.l.s4 1983009808
        %v6377 = vunpack.c.0.s8 %v6376
        %v6378 = vlaneseq
        %v6379 = vshrl.u32 %v6378, 7
        %v6380 = vsub.s32 %v6377, %v6379
        %v6381 = vrot.slane %v6373, %v6380
        %v6383 = vunpack.c.l.s4 1983009808
        %v6384 = vunpack.c.0.s8 %v6383
        %v6385 = vlaneseq
        %v6386 = vshrl.u32 %v6385, 7
        %v6387 = vsub.s32 %v6384, %v6386
        %v6388 = vrot.slane %v6374, %v6387
        %v6389 = vcombine.low %v6353, %v6355
        %v6390 = vcombine.high %v6353, %v6355
        %v6392 = vunpack.c.l.s4 1983009808
        %v6393 = vunpack.c.0.s8 %v6392
        %v6394 = vlaneseq
        %v6395 = vshrl.u32 %v6394, 7
        %v6396 = vsub.s32 %v6393, %v6395
        %v6397 = vrot.slane %v6389, %v6396
        %v6399 = vunpack.c.l.s4 1983009808
        %v6400 = vunpack.c.0.s8 %v6399
        %v6401 = vlaneseq
        %v6402 = vshrl.u32 %v6401, 7
        %v6403 = vsub.s32 %v6400, %v6402
        %v6404 = vrot.slane %v6390, %v6403
        %v6405 = vcombine.low %v6354, %v6356
        %v6406 = vcombine.high %v6354, %v6356
        %v6408 = vunpack.c.l.s4 1983009808
        %v6409 = vunpack.c.0.s8 %v6408
        %v6410 = vlaneseq
        %v6411 = vshrl.u32 %v6410, 7
        %v6412 = vsub.s32 %v6409, %v6411
        %v6413 = vrot.slane %v6405, %v6412
        %v6415 = vunpack.c.l.s4 1983009808
        %v6416 = vunpack.c.0.s8 %v6415
        %v6417 = vlaneseq
        %v6418 = vshrl.u32 %v6417, 7
        %v6419 = vsub.s32 %v6416, %v6418
        %v6420 = vrot.slane %v6406, %v6419
        %v6421 = vcombine.low %v6365, %v6381
        %v6422 = vcombine.high %v6365, %v6381
        %v6424 = vunpack.c.l.s4 1934713408
        %v6425 = vunpack.c.0.s8 %v6424
        %v6426 = vlaneseq
        %v6427 = vshrl.u32 %v6426, 7
        %v6428 = vsub.s32 %v6425, %v6427
        %v6429 = vrot.slane %v6421, %v6428
        %v6431 = vunpack.c.l.s4 1934713408
        %v6432 = vunpack.c.0.s8 %v6431
        %v6433 = vlaneseq
        %v6434 = vshrl.u32 %v6433, 7
        %v6435 = vsub.s32 %v6432, %v6434
        %v6436 = vrot.slane %v6422, %v6435
        %v6437 = vcombine.low %v6372, %v6388
        %v6438 = vcombine.high %v6372, %v6388
        %v6440 = vunpack.c.l.s4 1934713408
        %v6441 = vunpack.c.0.s8 %v6440
        %v6442 = vlaneseq
        %v6443 = vshrl.u32 %v6442, 7
        %v6444 = vsub.s32 %v6441, %v6443
        %v6445 = vrot.slane %v6437, %v6444
        %v6447 = vunpack.c.l.s4 1934713408
        %v6448 = vunpack.c.0.s8 %v6447
        %v6449 = vlaneseq
        %v6450 = vshrl.u32 %v6449, 7
        %v6451 = vsub.s32 %v6448, %v6450
        %v6452 = vrot.slane %v6438, %v6451
        %v6453 = vcombine.low %v6397, %v6413
        %v6454 = vcombine.high %v6397, %v6413
        %v6456 = vunpack.c.l.s4 1934713408
        %v6457 = vunpack.c.0.s8 %v6456
        %v6458 = vlaneseq
        %v6459 = vshrl.u32 %v6458, 7
        %v6460 = vsub.s32 %v6457, %v6459
        %v6461 = vrot.slane %v6453, %v6460
        %v6463 = vunpack.c.l.s4 1934713408
        %v6464 = vunpack.c.0.s8 %v6463
        %v6465 = vlaneseq
        %v6466 = vshrl.u32 %v6465, 7
        %v6467 = vsub.s32 %v6464, %v6466
        %v6468 = vrot.slane %v6454, %v6467
        %v6469 = vcombine.low %v6404, %v6420
        %v6470 = vcombine.high %v6404, %v6420
        %v6472 = vunpack.c.l.s4 1934713408
        %v6473 = vunpack.c.0.s8 %v6472
        %v6474 = vlaneseq
        %v6475 = vshrl.u32 %v6474, 7
        %v6476 = vsub.s32 %v6473, %v6475
        %v6477 = vrot.slane %v6469, %v6476
        %v6479 = vunpack.c.l.s4 1934713408
        %v6480 = vunpack.c.0.s8 %v6479
        %v6481 = vlaneseq
        %v6482 = vshrl.u32 %v6481, 7
        %v6483 = vsub.s32 %v6480, %v6482
        %v6484 = vrot.slane %v6470, %v6483
        %v6485 = vcombine.low %v6429, %v6461
        %v6486 = vcombine.high %v6429, %v6461
        %v6487 = vcombine.low %v6436, %v6468
        %v6488 = vcombine.high %v6436, %v6468
        %v6489 = vcombine.low %v6445, %v6477
        %v6490 = vcombine.high %v6445, %v6477
        %v6491 = vcombine.low %v6452, %v6484
        %v6492 = vcombine.high %v6452, %v6484
        %6494 = vrot.lane.b32.xlu0 %v6486, 16
        %v6495 = vpop.permute.xlu0 %6494
        %6498 = vrot.lane.b32.xlu0 %v6487, 32
        %v6499 = vpop.permute.xlu0 %6498
        %6502 = vrot.lane.b32.xlu0 %v6488, 48
        %v6503 = vpop.permute.xlu0 %6502
        %6506 = vrot.lane.b32.xlu0 %v6489, 64
        %v6507 = vpop.permute.xlu0 %6506
        %6510 = vrot.lane.b32.xlu0 %v6490, 80
        %v6511 = vpop.permute.xlu0 %6510
        %6514 = vrot.lane.b32.xlu0 %v6491, 96
        %v6515 = vpop.permute.xlu0 %6514
        %6518 = vrot.lane.b32.xlu0 %v6492, 112
        %v6519 = vpop.permute.xlu0 %6518
        %v6521 = vsel %vm1490, %v6485, %v6495
        %v6522 = vsel %vm3641, %v6521, %v6499
        %v6523 = vsel %vm3643, %v6522, %v6503
        %v6524 = vsel %vm3645, %v6523, %v6507
        %v6525 = vsel %vm3647, %v6524, %v6511
        %v6526 = vsel %vm3649, %v6525, %v6515
        %v6527 = vsel %vm3651, %v6526, %v6519
        %v6528 = vpack.c.bf16 %v6527, %v6527
        %v6545 = vunpack.c.l.b16 %v4041
        %v6546 = vunpack.c.l.b16 %v4042
        %v6547 = vunpack.c.l.b16 %v4043
        %v6548 = vunpack.c.l.b16 %v4044
        %v6549 = vunpack.c.l.b16 %v4045
        %v6550 = vunpack.c.l.b16 %v4046
        %v6551 = vunpack.c.l.b16 %v4047
        %v6552 = vunpack.c.l.b16 %v4048
        %v6553 = vunpack.c.l.b16 %v4049
        %v6554 = vunpack.c.l.b16 %v4050
        %v6555 = vunpack.c.l.b16 %v4051
        %v6556 = vunpack.c.l.b16 %v4052
        %v6557 = vunpack.c.l.b16 %v4053
        %v6558 = vunpack.c.l.b16 %v4054
        %v6559 = vunpack.c.l.b16 %v4055
        %v6560 = vunpack.c.l.b16 %v4056
        %v6561 = vpack.c.b16 %v6546, %v6545
        %v6562 = vpack.c.b16 %v6548, %v6547
        %v6563 = vpack.c.b16 %v6550, %v6549
        %v6564 = vpack.c.b16 %v6552, %v6551
        %v6565 = vpack.c.b16 %v6554, %v6553
        %v6566 = vpack.c.b16 %v6556, %v6555
        %v6567 = vpack.c.b16 %v6558, %v6557
        %v6568 = vpack.c.b16 %v6560, %v6559
        %6577 = vmatprep.subr.bf16.mxu0 0
        %6578 = vmatpush1.bf16.msra.mxu0 %v6568
        %6579 = vmatprep.subr.bf16.mxu0 0
        %6580 = vmatpush1.bf16.msra.mxu0 %v6567
        %6581 = vmatprep.subr.bf16.mxu0 0
        %6582 = vmatpush1.bf16.msra.mxu0 %v6566
        %6583 = vmatprep.subr.bf16.mxu0 0
        %6584 = vmatpush1.bf16.msra.mxu0 %v6565
        %6585 = vmatprep.subr.bf16.mxu0 0
        %6586 = vmatpush1.bf16.msra.mxu0 %v6564
        %6587 = vmatprep.subr.bf16.mxu0 0
        %6588 = vmatpush1.bf16.msra.mxu0 %v6563
        %6589 = vmatprep.subr.bf16.mxu0 0
        %6590 = vmatpush1.bf16.msra.mxu0 %v6562
        %6591 = vmatprep.subr.bf16.mxu0 0
        %6592 = vmatpush1.bf16.msra.mxu0 %v6561
        %6593 = vmatprep.subr.bf16.mxu0 0
        %6594 = vmatpush2.bf16.msra.mxu0 0
        %6595 = vmatprep.subr.bf16.mxu0 0
        %6596 = vmatpush2.bf16.msra.mxu0 0
        %6597 = vmatprep.subr.bf16.mxu0 0
        %6598 = vmatpush2.bf16.msra.mxu0 0
        %6599 = vmatprep.subr.bf16.mxu0 0
        %6600 = vmatpush2.bf16.msra.mxu0 0
        %6601 = vmatprep.subr.bf16.mxu0 0
        %6602 = vmatpush2.bf16.msra.mxu0 0
        %6603 = vmatprep.subr.bf16.mxu0 0
        %6604 = vmatpush2.bf16.msra.mxu0 0
        %6605 = vmatprep.subr.bf16.mxu0 0
        %6606 = vmatpush2.bf16.msra.mxu0 0
        %6607 = vmatprep.subr.bf16.mxu0 0
        %6608 = vmatpush2.bf16.msra.mxu0 0
        %6609 = vmatprep.mubr.bf16.mxu0 0
        %6610 = vmatmul.mubr.bf16.gmra.mxu0 %v6528
        %v6611 = vpop.f32.mrf.mxu0
        %v6612 = vadd.f32 0.0, %v6611
        %v6613 = vpop.f32.mrf.mxu0
        %v6614 = vpop.f32.mrf.mxu0
        %v6615 = vpop.f32.mrf.mxu0
        %6616 = vdwg.mxu0
        %v6617 = vadd.f32 %v3778, %v6612
        %v6618 = vld [vmem:[#allocation14] sm:$0x1]
        %v6620 = vlaneseq
        %v6621 = vshrl.u32 %v6620, 7
        %v6622 = vsub.s32 0, %v6621
        %v6623 = vrot.slane %v6618, %v6622
        %v6625 = vadd.f32 %v6617, %v6623
        %v6626 = vld [vmem:[#allocation16] sm:$0x1]
        %v6627 = vld [vmem:[#allocation17] sm:$0x1]
        %6628 = vadd.xlane.f32.xlu0 %v6625
        %v6629 = vpop.xlane.xlu0 %6628
        %v6630 = vmul.f32 %v6629, %v3755
        %v6631 = vsub.f32 %v6625, %v6630
        %v6632 = vmul.f32 %v6631, %v6631
        %6633 = vadd.xlane.f32.xlu0 %v6632
        %v6634 = vpop.xlane.xlu0 %6633
        %v6635 = vmul.f32 %v6634, %v3755
        %v6636 = vadd.f32 %v6635, 1e-05
        %v6637 = vrsqrt.pop %v6636
        %v6638 = vmul.f32 %v6631, %v6637
        %v6640 = vlaneseq
        %v6641 = vshrl.u32 %v6640, 7
        %v6642 = vsub.s32 0, %v6641
        %v6643 = vrot.slane %v6626, %v6642
        %v6645 = vmul.f32 %v6638, %v6643
        %v6647 = vlaneseq
        %v6648 = vshrl.u32 %v6647, 7
        %v6649 = vsub.s32 0, %v6648
        %v6650 = vrot.slane %v6627, %v6649
        %v6652 = vadd.f32 %v6645, %v6650
        %v6653 = vpack.c.bf16 %v6652, %v6652
        %v6654 = vld [vmem:[#allocation19] sm:$0xff]
        %v6655 = vld [vmem:[#allocation19 + $0x8] sm:$0xff]
        %v6656 = vld [vmem:[#allocation19 + $0x10] sm:$0xff]
        %v6657 = vld [vmem:[#allocation19 + $0x18] sm:$0xff]
        %v6658 = vld [vmem:[#allocation19 + $0x20] sm:$0xff]
        %v6659 = vld [vmem:[#allocation19 + $0x28] sm:$0xff]
        %v6660 = vld [vmem:[#allocation19 + $0x30] sm:$0xff]
        %v6661 = vld [vmem:[#allocation19 + $0x38] sm:$0xff]
        %v6662 = vld [vmem:[#allocation19 + $0x40] sm:$0xff]
        %v6663 = vld [vmem:[#allocation19 + $0x48] sm:$0xff]
        %v6664 = vld [vmem:[#allocation19 + $0x50] sm:$0xff]
        %v6665 = vld [vmem:[#allocation19 + $0x58] sm:$0xff]
        %v6666 = vld [vmem:[#allocation19 + $0x60] sm:$0xff]
        %v6667 = vld [vmem:[#allocation19 + $0x68] sm:$0xff]
        %v6668 = vld [vmem:[#allocation19 + $0x70] sm:$0xff]
        %v6669 = vld [vmem:[#allocation19 + $0x78] sm:$0xff]
        %v6670 = vld [vmem:[#allocation19 + $0x80] sm:$0xff]
        %v6671 = vld [vmem:[#allocation19 + $0x88] sm:$0xff]
        %v6672 = vld [vmem:[#allocation19 + $0x90] sm:$0xff]
        %v6673 = vld [vmem:[#allocation19 + $0x98] sm:$0xff]
        %v6674 = vld [vmem:[#allocation19 + $0xa0] sm:$0xff]
        %v6675 = vld [vmem:[#allocation19 + $0xa8] sm:$0xff]
        %v6676 = vld [vmem:[#allocation19 + $0xb0] sm:$0xff]
        %v6677 = vld [vmem:[#allocation19 + $0xb8] sm:$0xff]
        %v6678 = vld [vmem:[#allocation19 + $0xc0] sm:$0xff]
        %v6679 = vld [vmem:[#allocation19 + $0xc8] sm:$0xff]
        %v6680 = vld [vmem:[#allocation19 + $0xd0] sm:$0xff]
        %v6681 = vld [vmem:[#allocation19 + $0xd8] sm:$0xff]
        %v6682 = vld [vmem:[#allocation19 + $0xe0] sm:$0xff]
        %v6683 = vld [vmem:[#allocation19 + $0xe8] sm:$0xff]
        %v6684 = vld [vmem:[#allocation19 + $0xf0] sm:$0xff]
        %v6685 = vld [vmem:[#allocation19 + $0xf8] sm:$0xff]
        %v6686 = vld [vmem:[#allocation19 + $0x100] sm:$0xff]
        %v6687 = vld [vmem:[#allocation19 + $0x108] sm:$0xff]
        %v6688 = vld [vmem:[#allocation19 + $0x110] sm:$0xff]
        %v6689 = vld [vmem:[#allocation19 + $0x118] sm:$0xff]
        %v6690 = vld [vmem:[#allocation19 + $0x120] sm:$0xff]
        %v6691 = vld [vmem:[#allocation19 + $0x128] sm:$0xff]
        %v6692 = vld [vmem:[#allocation19 + $0x130] sm:$0xff]
        %v6693 = vld [vmem:[#allocation19 + $0x138] sm:$0xff]
        %v6694 = vld [vmem:[#allocation19 + $0x140] sm:$0xff]
        %v6695 = vld [vmem:[#allocation19 + $0x148] sm:$0xff]
        %v6696 = vld [vmem:[#allocation19 + $0x150] sm:$0xff]
        %v6697 = vld [vmem:[#allocation19 + $0x158] sm:$0xff]
        %v6698 = vld [vmem:[#allocation19 + $0x160] sm:$0xff]
        %v6699 = vld [vmem:[#allocation19 + $0x168] sm:$0xff]
        %v6700 = vld [vmem:[#allocation19 + $0x170] sm:$0xff]
        %v6701 = vld [vmem:[#allocation19 + $0x178] sm:$0xff]
        %v6702 = vld [vmem:[#allocation19 + $0x180] sm:$0xff]
        %v6703 = vld [vmem:[#allocation19 + $0x188] sm:$0xff]
        %v6704 = vld [vmem:[#allocation19 + $0x190] sm:$0xff]
        %v6705 = vld [vmem:[#allocation19 + $0x198] sm:$0xff]
        %v6706 = vld [vmem:[#allocation19 + $0x1a0] sm:$0xff]
        %v6707 = vld [vmem:[#allocation19 + $0x1a8] sm:$0xff]
        %v6708 = vld [vmem:[#allocation19 + $0x1b0] sm:$0xff]
        %v6709 = vld [vmem:[#allocation19 + $0x1b8] sm:$0xff]
        %v6710 = vld [vmem:[#allocation19 + $0x1c0] sm:$0xff]
        %v6711 = vld [vmem:[#allocation19 + $0x1c8] sm:$0xff]
        %v6712 = vld [vmem:[#allocation19 + $0x1d0] sm:$0xff]
        %v6713 = vld [vmem:[#allocation19 + $0x1d8] sm:$0xff]
        %v6714 = vld [vmem:[#allocation19 + $0x1e0] sm:$0xff]
        %v6715 = vld [vmem:[#allocation19 + $0x1e8] sm:$0xff]
        %v6716 = vld [vmem:[#allocation19 + $0x1f0] sm:$0xff]
        %v6717 = vld [vmem:[#allocation19 + $0x1f8] sm:$0xff]
        %v6718 = vld [vmem:[#allocation19 + $0x200] sm:$0xff]
        %v6719 = vld [vmem:[#allocation19 + $0x208] sm:$0xff]
        %v6720 = vld [vmem:[#allocation19 + $0x210] sm:$0xff]
        %v6721 = vld [vmem:[#allocation19 + $0x218] sm:$0xff]
        %v6722 = vld [vmem:[#allocation19 + $0x220] sm:$0xff]
        %v6723 = vld [vmem:[#allocation19 + $0x228] sm:$0xff]
        %v6724 = vld [vmem:[#allocation19 + $0x230] sm:$0xff]
        %v6725 = vld [vmem:[#allocation19 + $0x238] sm:$0xff]
        %v6726 = vld [vmem:[#allocation19 + $0x240] sm:$0xff]
        %v6727 = vld [vmem:[#allocation19 + $0x248] sm:$0xff]
        %v6728 = vld [vmem:[#allocation19 + $0x250] sm:$0xff]
        %v6729 = vld [vmem:[#allocation19 + $0x258] sm:$0xff]
        %v6730 = vld [vmem:[#allocation19 + $0x260] sm:$0xff]
        %v6731 = vld [vmem:[#allocation19 + $0x268] sm:$0xff]
        %v6732 = vld [vmem:[#allocation19 + $0x270] sm:$0xff]
        %v6733 = vld [vmem:[#allocation19 + $0x278] sm:$0xff]
        %v6734 = vld [vmem:[#allocation19 + $0x280] sm:$0xff]
        %v6735 = vld [vmem:[#allocation19 + $0x288] sm:$0xff]
        %v6736 = vld [vmem:[#allocation19 + $0x290] sm:$0xff]
        %v6737 = vld [vmem:[#allocation19 + $0x298] sm:$0xff]
        %v6738 = vld [vmem:[#allocation19 + $0x2a0] sm:$0xff]
        %v6739 = vld [vmem:[#allocation19 + $0x2a8] sm:$0xff]
        %v6740 = vld [vmem:[#allocation19 + $0x2b0] sm:$0xff]
        %v6741 = vld [vmem:[#allocation19 + $0x2b8] sm:$0xff]
        %v6742 = vld [vmem:[#allocation19 + $0x2c0] sm:$0xff]
        %v6743 = vld [vmem:[#allocation19 + $0x2c8] sm:$0xff]
        %v6744 = vld [vmem:[#allocation19 + $0x2d0] sm:$0xff]
        %v6745 = vld [vmem:[#allocation19 + $0x2d8] sm:$0xff]
        %v6746 = vld [vmem:[#allocation19 + $0x2e0] sm:$0xff]
        %v6747 = vld [vmem:[#allocation19 + $0x2e8] sm:$0xff]
        %v6748 = vld [vmem:[#allocation19 + $0x2f0] sm:$0xff]
        %v6749 = vld [vmem:[#allocation19 + $0x2f8] sm:$0xff]
        %v6750 = vld [vmem:[#allocation19 + $0x300] sm:$0xff]
        %v6751 = vld [vmem:[#allocation19 + $0x308] sm:$0xff]
        %v6752 = vld [vmem:[#allocation19 + $0x310] sm:$0xff]
        %v6753 = vld [vmem:[#allocation19 + $0x318] sm:$0xff]
        %v6754 = vld [vmem:[#allocation19 + $0x320] sm:$0xff]
        %v6755 = vld [vmem:[#allocation19 + $0x328] sm:$0xff]
        %v6756 = vld [vmem:[#allocation19 + $0x330] sm:$0xff]
        %v6757 = vld [vmem:[#allocation19 + $0x338] sm:$0xff]
        %v6758 = vld [vmem:[#allocation19 + $0x340] sm:$0xff]
        %v6759 = vld [vmem:[#allocation19 + $0x348] sm:$0xff]
        %v6760 = vld [vmem:[#allocation19 + $0x350] sm:$0xff]
        %v6761 = vld [vmem:[#allocation19 + $0x358] sm:$0xff]
        %v6762 = vld [vmem:[#allocation19 + $0x360] sm:$0xff]
        %v6763 = vld [vmem:[#allocation19 + $0x368] sm:$0xff]
        %v6764 = vld [vmem:[#allocation19 + $0x370] sm:$0xff]
        %v6765 = vld [vmem:[#allocation19 + $0x378] sm:$0xff]
        %v6766 = vld [vmem:[#allocation19 + $0x380] sm:$0xff]
        %v6767 = vld [vmem:[#allocation19 + $0x388] sm:$0xff]
        %v6768 = vld [vmem:[#allocation19 + $0x390] sm:$0xff]
        %v6769 = vld [vmem:[#allocation19 + $0x398] sm:$0xff]
        %v6770 = vld [vmem:[#allocation19 + $0x3a0] sm:$0xff]
        %v6771 = vld [vmem:[#allocation19 + $0x3a8] sm:$0xff]
        %v6772 = vld [vmem:[#allocation19 + $0x3b0] sm:$0xff]
        %v6773 = vld [vmem:[#allocation19 + $0x3b8] sm:$0xff]
        %v6774 = vld [vmem:[#allocation19 + $0x3c0] sm:$0xff]
        %v6775 = vld [vmem:[#allocation19 + $0x3c8] sm:$0xff]
        %v6776 = vld [vmem:[#allocation19 + $0x3d0] sm:$0xff]
        %v6777 = vld [vmem:[#allocation19 + $0x3d8] sm:$0xff]
        %v6778 = vld [vmem:[#allocation19 + $0x3e0] sm:$0xff]
        %v6779 = vld [vmem:[#allocation19 + $0x3e8] sm:$0xff]
        %v6780 = vld [vmem:[#allocation19 + $0x3f0] sm:$0xff]
        %v6781 = vld [vmem:[#allocation19 + $0x3f8] sm:$0xff]
        %v6782 = vld [vmem:[%s17] sm:$0xff]
        %v6783 = vld [vmem:[%s17 + $0x8] sm:$0xff]
        %v6786 = vlaneseq
        %v6787 = vshrl.u32 %v6786, 7
        %v6788 = vsub.s32 0, %v6787
        %v6789 = vrot.slane %v6782, %v6788
        %v6790 = vlaneseq
        %v6791 = vshrl.u32 %v6790, 7
        %v6792 = vsub.s32 1, %v6791
        %v6793 = vrot.slane %v6782, %v6792
        %v6794 = vlaneseq
        %v6795 = vshrl.u32 %v6794, 7
        %v6796 = vsub.s32 2, %v6795
        %v6797 = vrot.slane %v6782, %v6796
        %v6798 = vlaneseq
        %v6799 = vshrl.u32 %v6798, 7
        %v6800 = vsub.s32 3, %v6799
        %v6801 = vrot.slane %v6782, %v6800
        %v6802 = vlaneseq
        %v6803 = vshrl.u32 %v6802, 7
        %v6804 = vsub.s32 4, %v6803
        %v6805 = vrot.slane %v6782, %v6804
        %v6806 = vlaneseq
        %v6807 = vshrl.u32 %v6806, 7
        %v6808 = vsub.s32 5, %v6807
        %v6809 = vrot.slane %v6782, %v6808
        %v6810 = vlaneseq
        %v6811 = vshrl.u32 %v6810, 7
        %v6812 = vsub.s32 6, %v6811
        %v6813 = vrot.slane %v6782, %v6812
        %v6814 = vlaneseq
        %v6815 = vshrl.u32 %v6814, 7
        %v6816 = vsub.s32 7, %v6815
        %v6817 = vrot.slane %v6782, %v6816
        %v6818 = vlaneseq
        %v6819 = vshrl.u32 %v6818, 7
        %v6820 = vsub.s32 0, %v6819
        %v6821 = vrot.slane %v6783, %v6820
        %v6822 = vlaneseq
        %v6823 = vshrl.u32 %v6822, 7
        %v6824 = vsub.s32 1, %v6823
        %v6825 = vrot.slane %v6783, %v6824
        %v6826 = vlaneseq
        %v6827 = vshrl.u32 %v6826, 7
        %v6828 = vsub.s32 2, %v6827
        %v6829 = vrot.slane %v6783, %v6828
        %v6830 = vlaneseq
        %v6831 = vshrl.u32 %v6830, 7
        %v6832 = vsub.s32 3, %v6831
        %v6833 = vrot.slane %v6783, %v6832
        %v6834 = vlaneseq
        %v6835 = vshrl.u32 %v6834, 7
        %v6836 = vsub.s32 4, %v6835
        %v6837 = vrot.slane %v6783, %v6836
        %v6838 = vlaneseq
        %v6839 = vshrl.u32 %v6838, 7
        %v6840 = vsub.s32 5, %v6839
        %v6841 = vrot.slane %v6783, %v6840
        %v6842 = vlaneseq
        %v6843 = vshrl.u32 %v6842, 7
        %v6844 = vsub.s32 6, %v6843
        %v6845 = vrot.slane %v6783, %v6844
        %v6846 = vlaneseq
        %v6847 = vshrl.u32 %v6846, 7
        %v6848 = vsub.s32 7, %v6847
        %v6849 = vrot.slane %v6783, %v6848
        %v6994 = vunpack.c.l.b16 %v6654
        %v6995 = vunpack.c.h.b16 %v6654
        %v6996 = vunpack.c.l.b16 %v6655
        %v6997 = vunpack.c.h.b16 %v6655
        %v6998 = vunpack.c.l.b16 %v6656
        %v6999 = vunpack.c.h.b16 %v6656
        %v7000 = vunpack.c.l.b16 %v6657
        %v7001 = vunpack.c.h.b16 %v6657
        %v7002 = vunpack.c.l.b16 %v6658
        %v7003 = vunpack.c.h.b16 %v6658
        %v7004 = vunpack.c.l.b16 %v6659
        %v7005 = vunpack.c.h.b16 %v6659
        %v7006 = vunpack.c.l.b16 %v6660
        %v7007 = vunpack.c.h.b16 %v6660
        %v7008 = vunpack.c.l.b16 %v6661
        %v7009 = vunpack.c.h.b16 %v6661
        %v7010 = vunpack.c.l.b16 %v6662
        %v7011 = vunpack.c.h.b16 %v6662
        %v7012 = vunpack.c.l.b16 %v6663
        %v7013 = vunpack.c.h.b16 %v6663
        %v7014 = vunpack.c.l.b16 %v6664
        %v7015 = vunpack.c.h.b16 %v6664
        %v7016 = vunpack.c.l.b16 %v6665
        %v7017 = vunpack.c.h.b16 %v6665
        %v7018 = vunpack.c.l.b16 %v6666
        %v7019 = vunpack.c.h.b16 %v6666
        %v7020 = vunpack.c.l.b16 %v6667
        %v7021 = vunpack.c.h.b16 %v6667
        %v7022 = vunpack.c.l.b16 %v6668
        %v7023 = vunpack.c.h.b16 %v6668
        %v7024 = vunpack.c.l.b16 %v6669
        %v7025 = vunpack.c.h.b16 %v6669
        %v7026 = vunpack.c.l.b16 %v6670
        %v7027 = vunpack.c.h.b16 %v6670
        %v7028 = vunpack.c.l.b16 %v6671
        %v7029 = vunpack.c.h.b16 %v6671
        %v7030 = vunpack.c.l.b16 %v6672
        %v7031 = vunpack.c.h.b16 %v6672
        %v7032 = vunpack.c.l.b16 %v6673
        %v7033 = vunpack.c.h.b16 %v6673
        %v7034 = vunpack.c.l.b16 %v6674
        %v7035 = vunpack.c.h.b16 %v6674
        %v7036 = vunpack.c.l.b16 %v6675
        %v7037 = vunpack.c.h.b16 %v6675
        %v7038 = vunpack.c.l.b16 %v6676
        %v7039 = vunpack.c.h.b16 %v6676
        %v7040 = vunpack.c.l.b16 %v6677
        %v7041 = vunpack.c.h.b16 %v6677
        %v7042 = vunpack.c.l.b16 %v6678
        %v7043 = vunpack.c.h.b16 %v6678
        %v7044 = vunpack.c.l.b16 %v6679
        %v7045 = vunpack.c.h.b16 %v6679
        %v7046 = vunpack.c.l.b16 %v6680
        %v7047 = vunpack.c.h.b16 %v6680
        %v7048 = vunpack.c.l.b16 %v6681
        %v7049 = vunpack.c.h.b16 %v6681
        %v7050 = vunpack.c.l.b16 %v6682
        %v7051 = vunpack.c.h.b16 %v6682
        %v7052 = vunpack.c.l.b16 %v6683
        %v7053 = vunpack.c.h.b16 %v6683
        %v7054 = vunpack.c.l.b16 %v6684
        %v7055 = vunpack.c.h.b16 %v6684
        %v7056 = vunpack.c.l.b16 %v6685
        %v7057 = vunpack.c.h.b16 %v6685
        %v7058 = vunpack.c.l.b16 %v6686
        %v7059 = vunpack.c.h.b16 %v6686
        %v7060 = vunpack.c.l.b16 %v6687
        %v7061 = vunpack.c.h.b16 %v6687
        %v7062 = vunpack.c.l.b16 %v6688
        %v7063 = vunpack.c.h.b16 %v6688
        %v7064 = vunpack.c.l.b16 %v6689
        %v7065 = vunpack.c.h.b16 %v6689
        %v7066 = vunpack.c.l.b16 %v6690
        %v7067 = vunpack.c.h.b16 %v6690
        %v7068 = vunpack.c.l.b16 %v6691
        %v7069 = vunpack.c.h.b16 %v6691
        %v7070 = vunpack.c.l.b16 %v6692
        %v7071 = vunpack.c.h.b16 %v6692
        %v7072 = vunpack.c.l.b16 %v6693
        %v7073 = vunpack.c.h.b16 %v6693
        %v7074 = vunpack.c.l.b16 %v6694
        %v7075 = vunpack.c.h.b16 %v6694
        %v7076 = vunpack.c.l.b16 %v6695
        %v7077 = vunpack.c.h.b16 %v6695
        %v7078 = vunpack.c.l.b16 %v6696
        %v7079 = vunpack.c.h.b16 %v6696
        %v7080 = vunpack.c.l.b16 %v6697
        %v7081 = vunpack.c.h.b16 %v6697
        %v7082 = vunpack.c.l.b16 %v6698
        %v7083 = vunpack.c.h.b16 %v6698
        %v7084 = vunpack.c.l.b16 %v6699
        %v7085 = vunpack.c.h.b16 %v6699
        %v7086 = vunpack.c.l.b16 %v6700
        %v7087 = vunpack.c.h.b16 %v6700
        %v7088 = vunpack.c.l.b16 %v6701
        %v7089 = vunpack.c.h.b16 %v6701
        %v7090 = vunpack.c.l.b16 %v6702
        %v7091 = vunpack.c.h.b16 %v6702
        %v7092 = vunpack.c.l.b16 %v6703
        %v7093 = vunpack.c.h.b16 %v6703
        %v7094 = vunpack.c.l.b16 %v6704
        %v7095 = vunpack.c.h.b16 %v6704
        %v7096 = vunpack.c.l.b16 %v6705
        %v7097 = vunpack.c.h.b16 %v6705
        %v7098 = vunpack.c.l.b16 %v6706
        %v7099 = vunpack.c.h.b16 %v6706
        %v7100 = vunpack.c.l.b16 %v6707
        %v7101 = vunpack.c.h.b16 %v6707
        %v7102 = vunpack.c.l.b16 %v6708
        %v7103 = vunpack.c.h.b16 %v6708
        %v7104 = vunpack.c.l.b16 %v6709
        %v7105 = vunpack.c.h.b16 %v6709
        %v7106 = vunpack.c.l.b16 %v6710
        %v7107 = vunpack.c.h.b16 %v6710
        %v7108 = vunpack.c.l.b16 %v6711
        %v7109 = vunpack.c.h.b16 %v6711
        %v7110 = vunpack.c.l.b16 %v6712
        %v7111 = vunpack.c.h.b16 %v6712
        %v7112 = vunpack.c.l.b16 %v6713
        %v7113 = vunpack.c.h.b16 %v6713
        %v7114 = vunpack.c.l.b16 %v6714
        %v7115 = vunpack.c.h.b16 %v6714
        %v7116 = vunpack.c.l.b16 %v6715
        %v7117 = vunpack.c.h.b16 %v6715
        %v7118 = vunpack.c.l.b16 %v6716
        %v7119 = vunpack.c.h.b16 %v6716
        %v7120 = vunpack.c.l.b16 %v6717
        %v7121 = vunpack.c.h.b16 %v6717
        %v7122 = vunpack.c.l.b16 %v6718
        %v7123 = vunpack.c.h.b16 %v6718
        %v7124 = vunpack.c.l.b16 %v6719
        %v7125 = vunpack.c.h.b16 %v6719
        %v7126 = vunpack.c.l.b16 %v6720
        %v7127 = vunpack.c.h.b16 %v6720
        %v7128 = vunpack.c.l.b16 %v6721
        %v7129 = vunpack.c.h.b16 %v6721
        %v7130 = vunpack.c.l.b16 %v6722
        %v7131 = vunpack.c.h.b16 %v6722
        %v7132 = vunpack.c.l.b16 %v6723
        %v7133 = vunpack.c.h.b16 %v6723
        %v7134 = vunpack.c.l.b16 %v6724
        %v7135 = vunpack.c.h.b16 %v6724
        %v7136 = vunpack.c.l.b16 %v6725
        %v7137 = vunpack.c.h.b16 %v6725
        %v7138 = vunpack.c.l.b16 %v6726
        %v7139 = vunpack.c.h.b16 %v6726
        %v7140 = vunpack.c.l.b16 %v6727
        %v7141 = vunpack.c.h.b16 %v6727
        %v7142 = vunpack.c.l.b16 %v6728
        %v7143 = vunpack.c.h.b16 %v6728
        %v7144 = vunpack.c.l.b16 %v6729
        %v7145 = vunpack.c.h.b16 %v6729
        %v7146 = vunpack.c.l.b16 %v6730
        %v7147 = vunpack.c.h.b16 %v6730
        %v7148 = vunpack.c.l.b16 %v6731
        %v7149 = vunpack.c.h.b16 %v6731
        %v7150 = vunpack.c.l.b16 %v6732
        %v7151 = vunpack.c.h.b16 %v6732
        %v7152 = vunpack.c.l.b16 %v6733
        %v7153 = vunpack.c.h.b16 %v6733
        %v7154 = vunpack.c.l.b16 %v6734
        %v7155 = vunpack.c.h.b16 %v6734
        %v7156 = vunpack.c.l.b16 %v6735
        %v7157 = vunpack.c.h.b16 %v6735
        %v7158 = vunpack.c.l.b16 %v6736
        %v7159 = vunpack.c.h.b16 %v6736
        %v7160 = vunpack.c.l.b16 %v6737
        %v7161 = vunpack.c.h.b16 %v6737
        %v7162 = vunpack.c.l.b16 %v6738
        %v7163 = vunpack.c.h.b16 %v6738
        %v7164 = vunpack.c.l.b16 %v6739
        %v7165 = vunpack.c.h.b16 %v6739
        %v7166 = vunpack.c.l.b16 %v6740
        %v7167 = vunpack.c.h.b16 %v6740
        %v7168 = vunpack.c.l.b16 %v6741
        %v7169 = vunpack.c.h.b16 %v6741
        %v7170 = vunpack.c.l.b16 %v6742
        %v7171 = vunpack.c.h.b16 %v6742
        %v7172 = vunpack.c.l.b16 %v6743
        %v7173 = vunpack.c.h.b16 %v6743
        %v7174 = vunpack.c.l.b16 %v6744
        %v7175 = vunpack.c.h.b16 %v6744
        %v7176 = vunpack.c.l.b16 %v6745
        %v7177 = vunpack.c.h.b16 %v6745
        %v7178 = vunpack.c.l.b16 %v6746
        %v7179 = vunpack.c.h.b16 %v6746
        %v7180 = vunpack.c.l.b16 %v6747
        %v7181 = vunpack.c.h.b16 %v6747
        %v7182 = vunpack.c.l.b16 %v6748
        %v7183 = vunpack.c.h.b16 %v6748
        %v7184 = vunpack.c.l.b16 %v6749
        %v7185 = vunpack.c.h.b16 %v6749
        %v7186 = vunpack.c.l.b16 %v6750
        %v7187 = vunpack.c.h.b16 %v6750
        %v7188 = vunpack.c.l.b16 %v6751
        %v7189 = vunpack.c.h.b16 %v6751
        %v7190 = vunpack.c.l.b16 %v6752
        %v7191 = vunpack.c.h.b16 %v6752
        %v7192 = vunpack.c.l.b16 %v6753
        %v7193 = vunpack.c.h.b16 %v6753
        %v7194 = vunpack.c.l.b16 %v6754
        %v7195 = vunpack.c.h.b16 %v6754
        %v7196 = vunpack.c.l.b16 %v6755
        %v7197 = vunpack.c.h.b16 %v6755
        %v7198 = vunpack.c.l.b16 %v6756
        %v7199 = vunpack.c.h.b16 %v6756
        %v7200 = vunpack.c.l.b16 %v6757
        %v7201 = vunpack.c.h.b16 %v6757
        %v7202 = vunpack.c.l.b16 %v6758
        %v7203 = vunpack.c.h.b16 %v6758
        %v7204 = vunpack.c.l.b16 %v6759
        %v7205 = vunpack.c.h.b16 %v6759
        %v7206 = vunpack.c.l.b16 %v6760
        %v7207 = vunpack.c.h.b16 %v6760
        %v7208 = vunpack.c.l.b16 %v6761
        %v7209 = vunpack.c.h.b16 %v6761
        %v7210 = vunpack.c.l.b16 %v6762
        %v7211 = vunpack.c.h.b16 %v6762
        %v7212 = vunpack.c.l.b16 %v6763
        %v7213 = vunpack.c.h.b16 %v6763
        %v7214 = vunpack.c.l.b16 %v6764
        %v7215 = vunpack.c.h.b16 %v6764
        %v7216 = vunpack.c.l.b16 %v6765
        %v7217 = vunpack.c.h.b16 %v6765
        %v7218 = vunpack.c.l.b16 %v6766
        %v7219 = vunpack.c.h.b16 %v6766
        %v7220 = vunpack.c.l.b16 %v6767
        %v7221 = vunpack.c.h.b16 %v6767
        %v7222 = vunpack.c.l.b16 %v6768
        %v7223 = vunpack.c.h.b16 %v6768
        %v7224 = vunpack.c.l.b16 %v6769
        %v7225 = vunpack.c.h.b16 %v6769
        %v7226 = vunpack.c.l.b16 %v6770
        %v7227 = vunpack.c.h.b16 %v6770
        %v7228 = vunpack.c.l.b16 %v6771
        %v7229 = vunpack.c.h.b16 %v6771
        %v7230 = vunpack.c.l.b16 %v6772
        %v7231 = vunpack.c.h.b16 %v6772
        %v7232 = vunpack.c.l.b16 %v6773
        %v7233 = vunpack.c.h.b16 %v6773
        %v7234 = vunpack.c.l.b16 %v6774
        %v7235 = vunpack.c.h.b16 %v6774
        %v7236 = vunpack.c.l.b16 %v6775
        %v7237 = vunpack.c.h.b16 %v6775
        %v7238 = vunpack.c.l.b16 %v6776
        %v7239 = vunpack.c.h.b16 %v6776
        %v7240 = vunpack.c.l.b16 %v6777
        %v7241 = vunpack.c.h.b16 %v6777
        %v7242 = vunpack.c.l.b16 %v6778
        %v7243 = vunpack.c.h.b16 %v6778
        %v7244 = vunpack.c.l.b16 %v6779
        %v7245 = vunpack.c.h.b16 %v6779
        %v7246 = vunpack.c.l.b16 %v6780
        %v7247 = vunpack.c.h.b16 %v6780
        %v7248 = vunpack.c.l.b16 %v6781
        %v7249 = vunpack.c.h.b16 %v6781
        %v7250 = vpack.c.b16 %v7010, %v6994
        %v7251 = vpack.c.b16 %v7011, %v6995
        %v7252 = vpack.c.b16 %v7012, %v6996
        %v7253 = vpack.c.b16 %v7013, %v6997
        %v7254 = vpack.c.b16 %v7014, %v6998
        %v7255 = vpack.c.b16 %v7015, %v6999
        %v7256 = vpack.c.b16 %v7016, %v7000
        %v7257 = vpack.c.b16 %v7017, %v7001
        %v7258 = vpack.c.b16 %v7018, %v7002
        %v7259 = vpack.c.b16 %v7019, %v7003
        %v7260 = vpack.c.b16 %v7020, %v7004
        %v7261 = vpack.c.b16 %v7021, %v7005
        %v7262 = vpack.c.b16 %v7022, %v7006
        %v7263 = vpack.c.b16 %v7023, %v7007
        %v7264 = vpack.c.b16 %v7024, %v7008
        %v7265 = vpack.c.b16 %v7025, %v7009
        %v7266 = vpack.c.b16 %v7042, %v7026
        %v7267 = vpack.c.b16 %v7043, %v7027
        %v7268 = vpack.c.b16 %v7044, %v7028
        %v7269 = vpack.c.b16 %v7045, %v7029
        %v7270 = vpack.c.b16 %v7046, %v7030
        %v7271 = vpack.c.b16 %v7047, %v7031
        %v7272 = vpack.c.b16 %v7048, %v7032
        %v7273 = vpack.c.b16 %v7049, %v7033
        %v7274 = vpack.c.b16 %v7050, %v7034
        %v7275 = vpack.c.b16 %v7051, %v7035
        %v7276 = vpack.c.b16 %v7052, %v7036
        %v7277 = vpack.c.b16 %v7053, %v7037
        %v7278 = vpack.c.b16 %v7054, %v7038
        %v7279 = vpack.c.b16 %v7055, %v7039
        %v7280 = vpack.c.b16 %v7056, %v7040
        %v7281 = vpack.c.b16 %v7057, %v7041
        %v7282 = vpack.c.b16 %v7074, %v7058
        %v7283 = vpack.c.b16 %v7075, %v7059
        %v7284 = vpack.c.b16 %v7076, %v7060
        %v7285 = vpack.c.b16 %v7077, %v7061
        %v7286 = vpack.c.b16 %v7078, %v7062
        %v7287 = vpack.c.b16 %v7079, %v7063
        %v7288 = vpack.c.b16 %v7080, %v7064
        %v7289 = vpack.c.b16 %v7081, %v7065
        %v7290 = vpack.c.b16 %v7082, %v7066
        %v7291 = vpack.c.b16 %v7083, %v7067
        %v7292 = vpack.c.b16 %v7084, %v7068
        %v7293 = vpack.c.b16 %v7085, %v7069
        %v7294 = vpack.c.b16 %v7086, %v7070
        %v7295 = vpack.c.b16 %v7087, %v7071
        %v7296 = vpack.c.b16 %v7088, %v7072
        %v7297 = vpack.c.b16 %v7089, %v7073
        %v7298 = vpack.c.b16 %v7106, %v7090
        %v7299 = vpack.c.b16 %v7107, %v7091
        %v7300 = vpack.c.b16 %v7108, %v7092
        %v7301 = vpack.c.b16 %v7109, %v7093
        %v7302 = vpack.c.b16 %v7110, %v7094
        %v7303 = vpack.c.b16 %v7111, %v7095
        %v7304 = vpack.c.b16 %v7112, %v7096
        %v7305 = vpack.c.b16 %v7113, %v7097
        %v7306 = vpack.c.b16 %v7114, %v7098
        %v7307 = vpack.c.b16 %v7115, %v7099
        %v7308 = vpack.c.b16 %v7116, %v7100
        %v7309 = vpack.c.b16 %v7117, %v7101
        %v7310 = vpack.c.b16 %v7118, %v7102
        %v7311 = vpack.c.b16 %v7119, %v7103
        %v7312 = vpack.c.b16 %v7120, %v7104
        %v7313 = vpack.c.b16 %v7121, %v7105
        %v7314 = vpack.c.b16 %v7138, %v7122
        %v7315 = vpack.c.b16 %v7139, %v7123
        %v7316 = vpack.c.b16 %v7140, %v7124
        %v7317 = vpack.c.b16 %v7141, %v7125
        %v7318 = vpack.c.b16 %v7142, %v7126
        %v7319 = vpack.c.b16 %v7143, %v7127
        %v7320 = vpack.c.b16 %v7144, %v7128
        %v7321 = vpack.c.b16 %v7145, %v7129
        %v7322 = vpack.c.b16 %v7146, %v7130
        %v7323 = vpack.c.b16 %v7147, %v7131
        %v7324 = vpack.c.b16 %v7148, %v7132
        %v7325 = vpack.c.b16 %v7149, %v7133
        %v7326 = vpack.c.b16 %v7150, %v7134
        %v7327 = vpack.c.b16 %v7151, %v7135
        %v7328 = vpack.c.b16 %v7152, %v7136
        %v7329 = vpack.c.b16 %v7153, %v7137
        %v7330 = vpack.c.b16 %v7170, %v7154
        %v7331 = vpack.c.b16 %v7171, %v7155
        %v7332 = vpack.c.b16 %v7172, %v7156
        %v7333 = vpack.c.b16 %v7173, %v7157
        %v7334 = vpack.c.b16 %v7174, %v7158
        %v7335 = vpack.c.b16 %v7175, %v7159
        %v7336 = vpack.c.b16 %v7176, %v7160
        %v7337 = vpack.c.b16 %v7177, %v7161
        %v7338 = vpack.c.b16 %v7178, %v7162
        %v7339 = vpack.c.b16 %v7179, %v7163
        %v7340 = vpack.c.b16 %v7180, %v7164
        %v7341 = vpack.c.b16 %v7181, %v7165
        %v7342 = vpack.c.b16 %v7182, %v7166
        %v7343 = vpack.c.b16 %v7183, %v7167
        %v7344 = vpack.c.b16 %v7184, %v7168
        %v7345 = vpack.c.b16 %v7185, %v7169
        %v7346 = vpack.c.b16 %v7202, %v7186
        %v7347 = vpack.c.b16 %v7203, %v7187
        %v7348 = vpack.c.b16 %v7204, %v7188
        %v7349 = vpack.c.b16 %v7205, %v7189
        %v7350 = vpack.c.b16 %v7206, %v7190
        %v7351 = vpack.c.b16 %v7207, %v7191
        %v7352 = vpack.c.b16 %v7208, %v7192
        %v7353 = vpack.c.b16 %v7209, %v7193
        %v7354 = vpack.c.b16 %v7210, %v7194
        %v7355 = vpack.c.b16 %v7211, %v7195
        %v7356 = vpack.c.b16 %v7212, %v7196
        %v7357 = vpack.c.b16 %v7213, %v7197
        %v7358 = vpack.c.b16 %v7214, %v7198
        %v7359 = vpack.c.b16 %v7215, %v7199
        %v7360 = vpack.c.b16 %v7216, %v7200
        %v7361 = vpack.c.b16 %v7217, %v7201
        %v7362 = vpack.c.b16 %v7234, %v7218
        %v7363 = vpack.c.b16 %v7235, %v7219
        %v7364 = vpack.c.b16 %v7236, %v7220
        %v7365 = vpack.c.b16 %v7237, %v7221
        %v7366 = vpack.c.b16 %v7238, %v7222
        %v7367 = vpack.c.b16 %v7239, %v7223
        %v7368 = vpack.c.b16 %v7240, %v7224
        %v7369 = vpack.c.b16 %v7241, %v7225
        %v7370 = vpack.c.b16 %v7242, %v7226
        %v7371 = vpack.c.b16 %v7243, %v7227
        %v7372 = vpack.c.b16 %v7244, %v7228
        %v7373 = vpack.c.b16 %v7245, %v7229
        %v7374 = vpack.c.b16 %v7246, %v7230
        %v7375 = vpack.c.b16 %v7247, %v7231
        %v7376 = vpack.c.b16 %v7248, %v7232
        %v7377 = vpack.c.b16 %v7249, %v7233
        %7506 = vmatprep.subr.bf16.mxu0 %v7363
        %7507 = vmatpush1.bf16.msra.mxu0 %v7362
        %7508 = vmatprep.subr.bf16.mxu0 %v7347
        %7509 = vmatpush1.bf16.msra.mxu0 %v7346
        %7510 = vmatprep.subr.bf16.mxu0 %v7331
        %7511 = vmatpush1.bf16.msra.mxu0 %v7330
        %7512 = vmatprep.subr.bf16.mxu0 %v7315
        %7513 = vmatpush1.bf16.msra.mxu0 %v7314
        %7514 = vmatprep.subr.bf16.mxu0 %v7299
        %7515 = vmatpush1.bf16.msra.mxu0 %v7298
        %7516 = vmatprep.subr.bf16.mxu0 %v7283
        %7517 = vmatpush1.bf16.msra.mxu0 %v7282
        %7518 = vmatprep.subr.bf16.mxu0 %v7267
        %7519 = vmatpush1.bf16.msra.mxu0 %v7266
        %7520 = vmatprep.subr.bf16.mxu0 %v7251
        %7521 = vmatpush1.bf16.msra.mxu0 %v7250
        %7522 = vmatprep.subr.bf16.mxu0 0
        %7523 = vmatpush2.bf16.msra.mxu0 0
        %7524 = vmatprep.subr.bf16.mxu0 0
        %7525 = vmatpush2.bf16.msra.mxu0 0
        %7526 = vmatprep.subr.bf16.mxu0 0
        %7527 = vmatpush2.bf16.msra.mxu0 0
        %7528 = vmatprep.subr.bf16.mxu0 0
        %7529 = vmatpush2.bf16.msra.mxu0 0
        %7530 = vmatprep.subr.bf16.mxu0 0
        %7531 = vmatpush2.bf16.msra.mxu0 0
        %7532 = vmatprep.subr.bf16.mxu0 0
        %7533 = vmatpush2.bf16.msra.mxu0 0
        %7534 = vmatprep.subr.bf16.mxu0 0
        %7535 = vmatpush2.bf16.msra.mxu0 0
        %7536 = vmatprep.subr.bf16.mxu0 0
        %7537 = vmatpush2.bf16.msra.mxu0 0
        %7538 = vmatprep.mubr.bf16.mxu0 0
        %7539 = vmatmul.mubr.bf16.gmra.mxu0 %v6653
        %v7540 = vpop.f32.mrf.mxu0
        %v7541 = vadd.f32 %v6789, %v7540
        %v7542 = vpop.f32.mrf.mxu0
        %v7543 = vadd.f32 %v6793, %v7542
        %v7544 = vpop.f32.mrf.mxu0
        %v7545 = vpop.f32.mrf.mxu0
        %7546 = vdwg.mxu0
        %7547 = vmatprep.subr.bf16.mxu0 %v7365
        %7548 = vmatpush1.bf16.msra.mxu0 %v7364
        %7549 = vmatprep.subr.bf16.mxu0 %v7349
        %7550 = vmatpush1.bf16.msra.mxu0 %v7348
        %7551 = vmatprep.subr.bf16.mxu0 %v7333
        %7552 = vmatpush1.bf16.msra.mxu0 %v7332
        %7553 = vmatprep.subr.bf16.mxu0 %v7317
        %7554 = vmatpush1.bf16.msra.mxu0 %v7316
        %7555 = vmatprep.subr.bf16.mxu0 %v7301
        %7556 = vmatpush1.bf16.msra.mxu0 %v7300
        %7557 = vmatprep.subr.bf16.mxu0 %v7285
        %7558 = vmatpush1.bf16.msra.mxu0 %v7284
        %7559 = vmatprep.subr.bf16.mxu0 %v7269
        %7560 = vmatpush1.bf16.msra.mxu0 %v7268
        %7561 = vmatprep.subr.bf16.mxu0 %v7253
        %7562 = vmatpush1.bf16.msra.mxu0 %v7252
        %7563 = vmatprep.subr.bf16.mxu0 0
        %7564 = vmatpush2.bf16.msra.mxu0 0
        %7565 = vmatprep.subr.bf16.mxu0 0
        %7566 = vmatpush2.bf16.msra.mxu0 0
        %7567 = vmatprep.subr.bf16.mxu0 0
        %7568 = vmatpush2.bf16.msra.mxu0 0
        %7569 = vmatprep.subr.bf16.mxu0 0
        %7570 = vmatpush2.bf16.msra.mxu0 0
        %7571 = vmatprep.subr.bf16.mxu0 0
        %7572 = vmatpush2.bf16.msra.mxu0 0
        %7573 = vmatprep.subr.bf16.mxu0 0
        %7574 = vmatpush2.bf16.msra.mxu0 0
        %7575 = vmatprep.subr.bf16.mxu0 0
        %7576 = vmatpush2.bf16.msra.mxu0 0
        %7577 = vmatprep.subr.bf16.mxu0 0
        %7578 = vmatpush2.bf16.msra.mxu0 0
        %7579 = vmatprep.mubr.bf16.mxu0 0
        %7580 = vmatmul.mubr.bf16.gmra.mxu0 %v6653
        %v7581 = vpop.f32.mrf.mxu0
        %v7582 = vadd.f32 %v6797, %v7581
        %v7583 = vpop.f32.mrf.mxu0
        %v7584 = vadd.f32 %v6801, %v7583
        %v7585 = vpop.f32.mrf.mxu0
        %v7586 = vpop.f32.mrf.mxu0
        %7587 = vdwg.mxu0
        %7588 = vmatprep.subr.bf16.mxu0 %v7367
        %7589 = vmatpush1.bf16.msra.mxu0 %v7366
        %7590 = vmatprep.subr.bf16.mxu0 %v7351
        %7591 = vmatpush1.bf16.msra.mxu0 %v7350
        %7592 = vmatprep.subr.bf16.mxu0 %v7335
        %7593 = vmatpush1.bf16.msra.mxu0 %v7334
        %7594 = vmatprep.subr.bf16.mxu0 %v7319
        %7595 = vmatpush1.bf16.msra.mxu0 %v7318
        %7596 = vmatprep.subr.bf16.mxu0 %v7303
        %7597 = vmatpush1.bf16.msra.mxu0 %v7302
        %7598 = vmatprep.subr.bf16.mxu0 %v7287
        %7599 = vmatpush1.bf16.msra.mxu0 %v7286
        %7600 = vmatprep.subr.bf16.mxu0 %v7271
        %7601 = vmatpush1.bf16.msra.mxu0 %v7270
        %7602 = vmatprep.subr.bf16.mxu0 %v7255
        %7603 = vmatpush1.bf16.msra.mxu0 %v7254
        %7604 = vmatprep.subr.bf16.mxu0 0
        %7605 = vmatpush2.bf16.msra.mxu0 0
        %7606 = vmatprep.subr.bf16.mxu0 0
        %7607 = vmatpush2.bf16.msra.mxu0 0
        %7608 = vmatprep.subr.bf16.mxu0 0
        %7609 = vmatpush2.bf16.msra.mxu0 0
        %7610 = vmatprep.subr.bf16.mxu0 0
        %7611 = vmatpush2.bf16.msra.mxu0 0
        %7612 = vmatprep.subr.bf16.mxu0 0
        %7613 = vmatpush2.bf16.msra.mxu0 0
        %7614 = vmatprep.subr.bf16.mxu0 0
        %7615 = vmatpush2.bf16.msra.mxu0 0
        %7616 = vmatprep.subr.bf16.mxu0 0
        %7617 = vmatpush2.bf16.msra.mxu0 0
        %7618 = vmatprep.subr.bf16.mxu0 0
        %7619 = vmatpush2.bf16.msra.mxu0 0
        %7620 = vmatprep.mubr.bf16.mxu0 0
        %7621 = vmatmul.mubr.bf16.gmra.mxu0 %v6653
        %v7622 = vpop.f32.mrf.mxu0
        %v7623 = vadd.f32 %v6805, %v7622
        %v7624 = vpop.f32.mrf.mxu0
        %v7625 = vadd.f32 %v6809, %v7624
        %v7626 = vpop.f32.mrf.mxu0
        %v7627 = vpop.f32.mrf.mxu0
        %7628 = vdwg.mxu0
        %7629 = vmatprep.subr.bf16.mxu0 %v7369
        %7630 = vmatpush1.bf16.msra.mxu0 %v7368
        %7631 = vmatprep.subr.bf16.mxu0 %v7353
        %7632 = vmatpush1.bf16.msra.mxu0 %v7352
        %7633 = vmatprep.subr.bf16.mxu0 %v7337
        %7634 = vmatpush1.bf16.msra.mxu0 %v7336
        %7635 = vmatprep.subr.bf16.mxu0 %v7321
        %7636 = vmatpush1.bf16.msra.mxu0 %v7320
        %7637 = vmatprep.subr.bf16.mxu0 %v7305
        %7638 = vmatpush1.bf16.msra.mxu0 %v7304
        %7639 = vmatprep.subr.bf16.mxu0 %v7289
        %7640 = vmatpush1.bf16.msra.mxu0 %v7288
        %7641 = vmatprep.subr.bf16.mxu0 %v7273
        %7642 = vmatpush1.bf16.msra.mxu0 %v7272
        %7643 = vmatprep.subr.bf16.mxu0 %v7257
        %7644 = vmatpush1.bf16.msra.mxu0 %v7256
        %7645 = vmatprep.subr.bf16.mxu0 0
        %7646 = vmatpush2.bf16.msra.mxu0 0
        %7647 = vmatprep.subr.bf16.mxu0 0
        %7648 = vmatpush2.bf16.msra.mxu0 0
        %7649 = vmatprep.subr.bf16.mxu0 0
        %7650 = vmatpush2.bf16.msra.mxu0 0
        %7651 = vmatprep.subr.bf16.mxu0 0
        %7652 = vmatpush2.bf16.msra.mxu0 0
        %7653 = vmatprep.subr.bf16.mxu0 0
        %7654 = vmatpush2.bf16.msra.mxu0 0
        %7655 = vmatprep.subr.bf16.mxu0 0
        %7656 = vmatpush2.bf16.msra.mxu0 0
        %7657 = vmatprep.subr.bf16.mxu0 0
        %7658 = vmatpush2.bf16.msra.mxu0 0
        %7659 = vmatprep.subr.bf16.mxu0 0
        %7660 = vmatpush2.bf16.msra.mxu0 0
        %7661 = vmatprep.mubr.bf16.mxu0 0
        %7662 = vmatmul.mubr.bf16.gmra.mxu0 %v6653
        %v7663 = vpop.f32.mrf.mxu0
        %v7664 = vadd.f32 %v6813, %v7663
        %v7665 = vpop.f32.mrf.mxu0
        %v7666 = vadd.f32 %v6817, %v7665
        %v7667 = vpop.f32.mrf.mxu0
        %v7668 = vpop.f32.mrf.mxu0
        %7669 = vdwg.mxu0
        %7670 = vmatprep.subr.bf16.mxu0 %v7371
        %7671 = vmatpush1.bf16.msra.mxu0 %v7370
        %7672 = vmatprep.subr.bf16.mxu0 %v7355
        %7673 = vmatpush1.bf16.msra.mxu0 %v7354
        %7674 = vmatprep.subr.bf16.mxu0 %v7339
        %7675 = vmatpush1.bf16.msra.mxu0 %v7338
        %7676 = vmatprep.subr.bf16.mxu0 %v7323
        %7677 = vmatpush1.bf16.msra.mxu0 %v7322
        %7678 = vmatprep.subr.bf16.mxu0 %v7307
        %7679 = vmatpush1.bf16.msra.mxu0 %v7306
        %7680 = vmatprep.subr.bf16.mxu0 %v7291
        %7681 = vmatpush1.bf16.msra.mxu0 %v7290
        %7682 = vmatprep.subr.bf16.mxu0 %v7275
        %7683 = vmatpush1.bf16.msra.mxu0 %v7274
        %7684 = vmatprep.subr.bf16.mxu0 %v7259
        %7685 = vmatpush1.bf16.msra.mxu0 %v7258
        %7686 = vmatprep.subr.bf16.mxu0 0
        %7687 = vmatpush2.bf16.msra.mxu0 0
        %7688 = vmatprep.subr.bf16.mxu0 0
        %7689 = vmatpush2.bf16.msra.mxu0 0
        %7690 = vmatprep.subr.bf16.mxu0 0
        %7691 = vmatpush2.bf16.msra.mxu0 0
        %7692 = vmatprep.subr.bf16.mxu0 0
        %7693 = vmatpush2.bf16.msra.mxu0 0
        %7694 = vmatprep.subr.bf16.mxu0 0
        %7695 = vmatpush2.bf16.msra.mxu0 0
        %7696 = vmatprep.subr.bf16.mxu0 0
        %7697 = vmatpush2.bf16.msra.mxu0 0
        %7698 = vmatprep.subr.bf16.mxu0 0
        %7699 = vmatpush2.bf16.msra.mxu0 0
        %7700 = vmatprep.subr.bf16.mxu0 0
        %7701 = vmatpush2.bf16.msra.mxu0 0
        %7702 = vmatprep.mubr.bf16.mxu0 0
        %7703 = vmatmul.mubr.bf16.gmra.mxu0 %v6653
        %v7704 = vpop.f32.mrf.mxu0
        %v7705 = vadd.f32 %v6821, %v7704
        %v7706 = vpop.f32.mrf.mxu0
        %v7707 = vadd.f32 %v6825, %v7706
        %v7708 = vpop.f32.mrf.mxu0
        %v7709 = vpop.f32.mrf.mxu0
        %7710 = vdwg.mxu0
        %7711 = vmatprep.subr.bf16.mxu0 %v7373
        %7712 = vmatpush1.bf16.msra.mxu0 %v7372
        %7713 = vmatprep.subr.bf16.mxu0 %v7357
        %7714 = vmatpush1.bf16.msra.mxu0 %v7356
        %7715 = vmatprep.subr.bf16.mxu0 %v7341
        %7716 = vmatpush1.bf16.msra.mxu0 %v7340
        %7717 = vmatprep.subr.bf16.mxu0 %v7325
        %7718 = vmatpush1.bf16.msra.mxu0 %v7324
        %7719 = vmatprep.subr.bf16.mxu0 %v7309
        %7720 = vmatpush1.bf16.msra.mxu0 %v7308
        %7721 = vmatprep.subr.bf16.mxu0 %v7293
        %7722 = vmatpush1.bf16.msra.mxu0 %v7292
        %7723 = vmatprep.subr.bf16.mxu0 %v7277
        %7724 = vmatpush1.bf16.msra.mxu0 %v7276
        %7725 = vmatprep.subr.bf16.mxu0 %v7261
        %7726 = vmatpush1.bf16.msra.mxu0 %v7260
        %7727 = vmatprep.subr.bf16.mxu0 0
        %7728 = vmatpush2.bf16.msra.mxu0 0
        %7729 = vmatprep.subr.bf16.mxu0 0
        %7730 = vmatpush2.bf16.msra.mxu0 0
        %7731 = vmatprep.subr.bf16.mxu0 0
        %7732 = vmatpush2.bf16.msra.mxu0 0
        %7733 = vmatprep.subr.bf16.mxu0 0
        %7734 = vmatpush2.bf16.msra.mxu0 0
        %7735 = vmatprep.subr.bf16.mxu0 0
        %7736 = vmatpush2.bf16.msra.mxu0 0
        %7737 = vmatprep.subr.bf16.mxu0 0
        %7738 = vmatpush2.bf16.msra.mxu0 0
        %7739 = vmatprep.subr.bf16.mxu0 0
        %7740 = vmatpush2.bf16.msra.mxu0 0
        %7741 = vmatprep.subr.bf16.mxu0 0
        %7742 = vmatpush2.bf16.msra.mxu0 0
        %7743 = vmatprep.mubr.bf16.mxu0 0
        %7744 = vmatmul.mubr.bf16.gmra.mxu0 %v6653
        %v7745 = vpop.f32.mrf.mxu0
        %v7746 = vadd.f32 %v6829, %v7745
        %v7747 = vpop.f32.mrf.mxu0
        %v7748 = vadd.f32 %v6833, %v7747
        %v7749 = vpop.f32.mrf.mxu0
        %v7750 = vpop.f32.mrf.mxu0
        %7751 = vdwg.mxu0
        %7752 = vmatprep.subr.bf16.mxu0 %v7375
        %7753 = vmatpush1.bf16.msra.mxu0 %v7374
        %7754 = vmatprep.subr.bf16.mxu0 %v7359
        %7755 = vmatpush1.bf16.msra.mxu0 %v7358
        %7756 = vmatprep.subr.bf16.mxu0 %v7343
        %7757 = vmatpush1.bf16.msra.mxu0 %v7342
        %7758 = vmatprep.subr.bf16.mxu0 %v7327
        %7759 = vmatpush1.bf16.msra.mxu0 %v7326
        %7760 = vmatprep.subr.bf16.mxu0 %v7311
        %7761 = vmatpush1.bf16.msra.mxu0 %v7310
        %7762 = vmatprep.subr.bf16.mxu0 %v7295
        %7763 = vmatpush1.bf16.msra.mxu0 %v7294
        %7764 = vmatprep.subr.bf16.mxu0 %v7279
        %7765 = vmatpush1.bf16.msra.mxu0 %v7278
        %7766 = vmatprep.subr.bf16.mxu0 %v7263
        %7767 = vmatpush1.bf16.msra.mxu0 %v7262
        %7768 = vmatprep.subr.bf16.mxu0 0
        %7769 = vmatpush2.bf16.msra.mxu0 0
        %7770 = vmatprep.subr.bf16.mxu0 0
        %7771 = vmatpush2.bf16.msra.mxu0 0
        %7772 = vmatprep.subr.bf16.mxu0 0
        %7773 = vmatpush2.bf16.msra.mxu0 0
        %7774 = vmatprep.subr.bf16.mxu0 0
        %7775 = vmatpush2.bf16.msra.mxu0 0
        %7776 = vmatprep.subr.bf16.mxu0 0
        %7777 = vmatpush2.bf16.msra.mxu0 0
        %7778 = vmatprep.subr.bf16.mxu0 0
        %7779 = vmatpush2.bf16.msra.mxu0 0
        %7780 = vmatprep.subr.bf16.mxu0 0
        %7781 = vmatpush2.bf16.msra.mxu0 0
        %7782 = vmatprep.subr.bf16.mxu0 0
        %7783 = vmatpush2.bf16.msra.mxu0 0
        %7784 = vmatprep.mubr.bf16.mxu0 0
        %7785 = vmatmul.mubr.bf16.gmra.mxu0 %v6653
        %v7786 = vpop.f32.mrf.mxu0
        %v7787 = vadd.f32 %v6837, %v7786
        %v7788 = vpop.f32.mrf.mxu0
        %v7789 = vadd.f32 %v6841, %v7788
        %v7790 = vpop.f32.mrf.mxu0
        %v7791 = vpop.f32.mrf.mxu0
        %7792 = vdwg.mxu0
        %7793 = vmatprep.subr.bf16.mxu0 %v7377
        %7794 = vmatpush1.bf16.msra.mxu0 %v7376
        %7795 = vmatprep.subr.bf16.mxu0 %v7361
        %7796 = vmatpush1.bf16.msra.mxu0 %v7360
        %7797 = vmatprep.subr.bf16.mxu0 %v7345
        %7798 = vmatpush1.bf16.msra.mxu0 %v7344
        %7799 = vmatprep.subr.bf16.mxu0 %v7329
        %7800 = vmatpush1.bf16.msra.mxu0 %v7328
        %7801 = vmatprep.subr.bf16.mxu0 %v7313
        %7802 = vmatpush1.bf16.msra.mxu0 %v7312
        %7803 = vmatprep.subr.bf16.mxu0 %v7297
        %7804 = vmatpush1.bf16.msra.mxu0 %v7296
        %7805 = vmatprep.subr.bf16.mxu0 %v7281
        %7806 = vmatpush1.bf16.msra.mxu0 %v7280
        %7807 = vmatprep.subr.bf16.mxu0 %v7265
        %7808 = vmatpush1.bf16.msra.mxu0 %v7264
        %7809 = vmatprep.subr.bf16.mxu0 0
        %7810 = vmatpush2.bf16.msra.mxu0 0
        %7811 = vmatprep.subr.bf16.mxu0 0
        %7812 = vmatpush2.bf16.msra.mxu0 0
        %7813 = vmatprep.subr.bf16.mxu0 0
        %7814 = vmatpush2.bf16.msra.mxu0 0
        %7815 = vmatprep.subr.bf16.mxu0 0
        %7816 = vmatpush2.bf16.msra.mxu0 0
        %7817 = vmatprep.subr.bf16.mxu0 0
        %7818 = vmatpush2.bf16.msra.mxu0 0
        %7819 = vmatprep.subr.bf16.mxu0 0
        %7820 = vmatpush2.bf16.msra.mxu0 0
        %7821 = vmatprep.subr.bf16.mxu0 0
        %7822 = vmatpush2.bf16.msra.mxu0 0
        %7823 = vmatprep.subr.bf16.mxu0 0
        %7824 = vmatpush2.bf16.msra.mxu0 0
        %7825 = vmatprep.mubr.bf16.mxu0 0
        %7826 = vmatmul.mubr.bf16.gmra.mxu0 %v6653
        %v7827 = vpop.f32.mrf.mxu0
        %v7828 = vadd.f32 %v6845, %v7827
        %v7829 = vpop.f32.mrf.mxu0
        %v7830 = vadd.f32 %v6849, %v7829
        %v7831 = vpop.f32.mrf.mxu0
        %v7832 = vpop.f32.mrf.mxu0
        %7833 = vdwg.mxu0
        %v7834 = vmax.f32 %v7541, 0.0
        %v7835 = vmax.f32 %v7543, 0.0
        %v7836 = vmax.f32 %v7582, 0.0
        %v7837 = vmax.f32 %v7584, 0.0
        %v7838 = vmax.f32 %v7623, 0.0
        %v7839 = vmax.f32 %v7625, 0.0
        %v7840 = vmax.f32 %v7664, 0.0
        %v7841 = vmax.f32 %v7666, 0.0
        %v7842 = vmax.f32 %v7705, 0.0
        %v7843 = vmax.f32 %v7707, 0.0
        %v7844 = vmax.f32 %v7746, 0.0
        %v7845 = vmax.f32 %v7748, 0.0
        %v7846 = vmax.f32 %v7787, 0.0
        %v7847 = vmax.f32 %v7789, 0.0
        %v7848 = vmax.f32 %v7828, 0.0
        %v7849 = vmax.f32 %v7830, 0.0
        %v7850 = vpack.c.bf16 %v7834, %v7834
        %v7851 = vpack.c.bf16 %v7835, %v7835
        %v7852 = vpack.c.bf16 %v7836, %v7836
        %v7853 = vpack.c.bf16 %v7837, %v7837
        %v7854 = vpack.c.bf16 %v7838, %v7838
        %v7855 = vpack.c.bf16 %v7839, %v7839
        %v7856 = vpack.c.bf16 %v7840, %v7840
        %v7857 = vpack.c.bf16 %v7841, %v7841
        %v7858 = vpack.c.bf16 %v7842, %v7842
        %v7859 = vpack.c.bf16 %v7843, %v7843
        %v7860 = vpack.c.bf16 %v7844, %v7844
        %v7861 = vpack.c.bf16 %v7845, %v7845
        %v7862 = vpack.c.bf16 %v7846, %v7846
        %v7863 = vpack.c.bf16 %v7847, %v7847
        %v7864 = vpack.c.bf16 %v7848, %v7848
        %v7865 = vpack.c.bf16 %v7849, %v7849
        %v7866 = vld [vmem:[#allocation20] sm:$0xf]
        %v7867 = vld [vmem:[#allocation20 + $0x4] sm:$0xf]
        %v7868 = vld [vmem:[#allocation20 + $0x8] sm:$0xf]
        %v7869 = vld [vmem:[#allocation20 + $0xc] sm:$0xf]
        %v7870 = vld [vmem:[#allocation20 + $0x10] sm:$0xf]
        %v7871 = vld [vmem:[#allocation20 + $0x14] sm:$0xf]
        %v7872 = vld [vmem:[#allocation20 + $0x18] sm:$0xf]
        %v7873 = vld [vmem:[#allocation20 + $0x1c] sm:$0xf]
        %v7874 = vld [vmem:[#allocation20 + $0x20] sm:$0xf]
        %v7875 = vld [vmem:[#allocation20 + $0x24] sm:$0xf]
        %v7876 = vld [vmem:[#allocation20 + $0x28] sm:$0xf]
        %v7877 = vld [vmem:[#allocation20 + $0x2c] sm:$0xf]
        %v7878 = vld [vmem:[#allocation20 + $0x30] sm:$0xf]
        %v7879 = vld [vmem:[#allocation20 + $0x34] sm:$0xf]
        %v7880 = vld [vmem:[#allocation20 + $0x38] sm:$0xf]
        %v7881 = vld [vmem:[#allocation20 + $0x3c] sm:$0xf]
        %v7882 = vld [vmem:[#allocation20 + $0x40] sm:$0xf]
        %v7883 = vld [vmem:[#allocation20 + $0x44] sm:$0xf]
        %v7884 = vld [vmem:[#allocation20 + $0x48] sm:$0xf]
        %v7885 = vld [vmem:[#allocation20 + $0x4c] sm:$0xf]
        %v7886 = vld [vmem:[#allocation20 + $0x50] sm:$0xf]
        %v7887 = vld [vmem:[#allocation20 + $0x54] sm:$0xf]
        %v7888 = vld [vmem:[#allocation20 + $0x58] sm:$0xf]
        %v7889 = vld [vmem:[#allocation20 + $0x5c] sm:$0xf]
        %v7890 = vld [vmem:[#allocation20 + $0x60] sm:$0xf]
        %v7891 = vld [vmem:[#allocation20 + $0x64] sm:$0xf]
        %v7892 = vld [vmem:[#allocation20 + $0x68] sm:$0xf]
        %v7893 = vld [vmem:[#allocation20 + $0x6c] sm:$0xf]
        %v7894 = vld [vmem:[#allocation20 + $0x70] sm:$0xf]
        %v7895 = vld [vmem:[#allocation20 + $0x74] sm:$0xf]
        %v7896 = vld [vmem:[#allocation20 + $0x78] sm:$0xf]
        %v7897 = vld [vmem:[#allocation20 + $0x7c] sm:$0xf]
        %v7898 = vld [vmem:[#allocation20 + $0x80] sm:$0xf]
        %v7899 = vld [vmem:[#allocation20 + $0x84] sm:$0xf]
        %v7900 = vld [vmem:[#allocation20 + $0x88] sm:$0xf]
        %v7901 = vld [vmem:[#allocation20 + $0x8c] sm:$0xf]
        %v7902 = vld [vmem:[#allocation20 + $0x90] sm:$0xf]
        %v7903 = vld [vmem:[#allocation20 + $0x94] sm:$0xf]
        %v7904 = vld [vmem:[#allocation20 + $0x98] sm:$0xf]
        %v7905 = vld [vmem:[#allocation20 + $0x9c] sm:$0xf]
        %v7906 = vld [vmem:[#allocation20 + $0xa0] sm:$0xf]
        %v7907 = vld [vmem:[#allocation20 + $0xa4] sm:$0xf]
        %v7908 = vld [vmem:[#allocation20 + $0xa8] sm:$0xf]
        %v7909 = vld [vmem:[#allocation20 + $0xac] sm:$0xf]
        %v7910 = vld [vmem:[#allocation20 + $0xb0] sm:$0xf]
        %v7911 = vld [vmem:[#allocation20 + $0xb4] sm:$0xf]
        %v7912 = vld [vmem:[#allocation20 + $0xb8] sm:$0xf]
        %v7913 = vld [vmem:[#allocation20 + $0xbc] sm:$0xf]
        %v7914 = vld [vmem:[#allocation20 + $0xc0] sm:$0xf]
        %v7915 = vld [vmem:[#allocation20 + $0xc4] sm:$0xf]
        %v7916 = vld [vmem:[#allocation20 + $0xc8] sm:$0xf]
        %v7917 = vld [vmem:[#allocation20 + $0xcc] sm:$0xf]
        %v7918 = vld [vmem:[#allocation20 + $0xd0] sm:$0xf]
        %v7919 = vld [vmem:[#allocation20 + $0xd4] sm:$0xf]
        %v7920 = vld [vmem:[#allocation20 + $0xd8] sm:$0xf]
        %v7921 = vld [vmem:[#allocation20 + $0xdc] sm:$0xf]
        %v7922 = vld [vmem:[#allocation20 + $0xe0] sm:$0xf]
        %v7923 = vld [vmem:[#allocation20 + $0xe4] sm:$0xf]
        %v7924 = vld [vmem:[#allocation20 + $0xe8] sm:$0xf]
        %v7925 = vld [vmem:[#allocation20 + $0xec] sm:$0xf]
        %v7926 = vld [vmem:[#allocation20 + $0xf0] sm:$0xf]
        %v7927 = vld [vmem:[#allocation20 + $0xf4] sm:$0xf]
        %v7928 = vld [vmem:[#allocation20 + $0xf8] sm:$0xf]
        %v7929 = vld [vmem:[#allocation20 + $0xfc] sm:$0xf]
        %v7930 = vld [vmem:[#allocation20 + $0x100] sm:$0xf]
        %v7931 = vld [vmem:[#allocation20 + $0x104] sm:$0xf]
        %v7932 = vld [vmem:[#allocation20 + $0x108] sm:$0xf]
        %v7933 = vld [vmem:[#allocation20 + $0x10c] sm:$0xf]
        %v7934 = vld [vmem:[#allocation20 + $0x110] sm:$0xf]
        %v7935 = vld [vmem:[#allocation20 + $0x114] sm:$0xf]
        %v7936 = vld [vmem:[#allocation20 + $0x118] sm:$0xf]
        %v7937 = vld [vmem:[#allocation20 + $0x11c] sm:$0xf]
        %v7938 = vld [vmem:[#allocation20 + $0x120] sm:$0xf]
        %v7939 = vld [vmem:[#allocation20 + $0x124] sm:$0xf]
        %v7940 = vld [vmem:[#allocation20 + $0x128] sm:$0xf]
        %v7941 = vld [vmem:[#allocation20 + $0x12c] sm:$0xf]
        %v7942 = vld [vmem:[#allocation20 + $0x130] sm:$0xf]
        %v7943 = vld [vmem:[#allocation20 + $0x134] sm:$0xf]
        %v7944 = vld [vmem:[#allocation20 + $0x138] sm:$0xf]
        %v7945 = vld [vmem:[#allocation20 + $0x13c] sm:$0xf]
        %v7946 = vld [vmem:[#allocation20 + $0x140] sm:$0xf]
        %v7947 = vld [vmem:[#allocation20 + $0x144] sm:$0xf]
        %v7948 = vld [vmem:[#allocation20 + $0x148] sm:$0xf]
        %v7949 = vld [vmem:[#allocation20 + $0x14c] sm:$0xf]
        %v7950 = vld [vmem:[#allocation20 + $0x150] sm:$0xf]
        %v7951 = vld [vmem:[#allocation20 + $0x154] sm:$0xf]
        %v7952 = vld [vmem:[#allocation20 + $0x158] sm:$0xf]
        %v7953 = vld [vmem:[#allocation20 + $0x15c] sm:$0xf]
        %v7954 = vld [vmem:[#allocation20 + $0x160] sm:$0xf]
        %v7955 = vld [vmem:[#allocation20 + $0x164] sm:$0xf]
        %v7956 = vld [vmem:[#allocation20 + $0x168] sm:$0xf]
        %v7957 = vld [vmem:[#allocation20 + $0x16c] sm:$0xf]
        %v7958 = vld [vmem:[#allocation20 + $0x170] sm:$0xf]
        %v7959 = vld [vmem:[#allocation20 + $0x174] sm:$0xf]
        %v7960 = vld [vmem:[#allocation20 + $0x178] sm:$0xf]
        %v7961 = vld [vmem:[#allocation20 + $0x17c] sm:$0xf]
        %v7962 = vld [vmem:[#allocation20 + $0x180] sm:$0xf]
        %v7963 = vld [vmem:[#allocation20 + $0x184] sm:$0xf]
        %v7964 = vld [vmem:[#allocation20 + $0x188] sm:$0xf]
        %v7965 = vld [vmem:[#allocation20 + $0x18c] sm:$0xf]
        %v7966 = vld [vmem:[#allocation20 + $0x190] sm:$0xf]
        %v7967 = vld [vmem:[#allocation20 + $0x194] sm:$0xf]
        %v7968 = vld [vmem:[#allocation20 + $0x198] sm:$0xf]
        %v7969 = vld [vmem:[#allocation20 + $0x19c] sm:$0xf]
        %v7970 = vld [vmem:[#allocation20 + $0x1a0] sm:$0xf]
        %v7971 = vld [vmem:[#allocation20 + $0x1a4] sm:$0xf]
        %v7972 = vld [vmem:[#allocation20 + $0x1a8] sm:$0xf]
        %v7973 = vld [vmem:[#allocation20 + $0x1ac] sm:$0xf]
        %v7974 = vld [vmem:[#allocation20 + $0x1b0] sm:$0xf]
        %v7975 = vld [vmem:[#allocation20 + $0x1b4] sm:$0xf]
        %v7976 = vld [vmem:[#allocation20 + $0x1b8] sm:$0xf]
        %v7977 = vld [vmem:[#allocation20 + $0x1bc] sm:$0xf]
        %v7978 = vld [vmem:[#allocation20 + $0x1c0] sm:$0xf]
        %v7979 = vld [vmem:[#allocation20 + $0x1c4] sm:$0xf]
        %v7980 = vld [vmem:[#allocation20 + $0x1c8] sm:$0xf]
        %v7981 = vld [vmem:[#allocation20 + $0x1cc] sm:$0xf]
        %v7982 = vld [vmem:[#allocation20 + $0x1d0] sm:$0xf]
        %v7983 = vld [vmem:[#allocation20 + $0x1d4] sm:$0xf]
        %v7984 = vld [vmem:[#allocation20 + $0x1d8] sm:$0xf]
        %v7985 = vld [vmem:[#allocation20 + $0x1dc] sm:$0xf]
        %v7986 = vld [vmem:[#allocation20 + $0x1e0] sm:$0xf]
        %v7987 = vld [vmem:[#allocation20 + $0x1e4] sm:$0xf]
        %v7988 = vld [vmem:[#allocation20 + $0x1e8] sm:$0xf]
        %v7989 = vld [vmem:[#allocation20 + $0x1ec] sm:$0xf]
        %v7990 = vld [vmem:[#allocation20 + $0x1f0] sm:$0xf]
        %v7991 = vld [vmem:[#allocation20 + $0x1f4] sm:$0xf]
        %v7992 = vld [vmem:[#allocation20 + $0x1f8] sm:$0xf]
        %v7993 = vld [vmem:[#allocation20 + $0x1fc] sm:$0xf]
        %v7994 = vld [vmem:[#allocation20 + $0x200] sm:$0xf]
        %v7995 = vld [vmem:[#allocation20 + $0x204] sm:$0xf]
        %v7996 = vld [vmem:[#allocation20 + $0x208] sm:$0xf]
        %v7997 = vld [vmem:[#allocation20 + $0x20c] sm:$0xf]
        %v7998 = vld [vmem:[#allocation20 + $0x210] sm:$0xf]
        %v7999 = vld [vmem:[#allocation20 + $0x214] sm:$0xf]
        %v8000 = vld [vmem:[#allocation20 + $0x218] sm:$0xf]
        %v8001 = vld [vmem:[#allocation20 + $0x21c] sm:$0xf]
        %v8002 = vld [vmem:[#allocation20 + $0x220] sm:$0xf]
        %v8003 = vld [vmem:[#allocation20 + $0x224] sm:$0xf]
        %v8004 = vld [vmem:[#allocation20 + $0x228] sm:$0xf]
        %v8005 = vld [vmem:[#allocation20 + $0x22c] sm:$0xf]
        %v8006 = vld [vmem:[#allocation20 + $0x230] sm:$0xf]
        %v8007 = vld [vmem:[#allocation20 + $0x234] sm:$0xf]
        %v8008 = vld [vmem:[#allocation20 + $0x238] sm:$0xf]
        %v8009 = vld [vmem:[#allocation20 + $0x23c] sm:$0xf]
        %v8010 = vld [vmem:[#allocation20 + $0x240] sm:$0xf]
        %v8011 = vld [vmem:[#allocation20 + $0x244] sm:$0xf]
        %v8012 = vld [vmem:[#allocation20 + $0x248] sm:$0xf]
        %v8013 = vld [vmem:[#allocation20 + $0x24c] sm:$0xf]
        %v8014 = vld [vmem:[#allocation20 + $0x250] sm:$0xf]
        %v8015 = vld [vmem:[#allocation20 + $0x254] sm:$0xf]
        %v8016 = vld [vmem:[#allocation20 + $0x258] sm:$0xf]
        %v8017 = vld [vmem:[#allocation20 + $0x25c] sm:$0xf]
        %v8018 = vld [vmem:[#allocation20 + $0x260] sm:$0xf]
        %v8019 = vld [vmem:[#allocation20 + $0x264] sm:$0xf]
        %v8020 = vld [vmem:[#allocation20 + $0x268] sm:$0xf]
        %v8021 = vld [vmem:[#allocation20 + $0x26c] sm:$0xf]
        %v8022 = vld [vmem:[#allocation20 + $0x270] sm:$0xf]
        %v8023 = vld [vmem:[#allocation20 + $0x274] sm:$0xf]
        %v8024 = vld [vmem:[#allocation20 + $0x278] sm:$0xf]
        %v8025 = vld [vmem:[#allocation20 + $0x27c] sm:$0xf]
        %v8026 = vld [vmem:[#allocation20 + $0x280] sm:$0xf]
        %v8027 = vld [vmem:[#allocation20 + $0x284] sm:$0xf]
        %v8028 = vld [vmem:[#allocation20 + $0x288] sm:$0xf]
        %v8029 = vld [vmem:[#allocation20 + $0x28c] sm:$0xf]
        %v8030 = vld [vmem:[#allocation20 + $0x290] sm:$0xf]
        %v8031 = vld [vmem:[#allocation20 + $0x294] sm:$0xf]
        %v8032 = vld [vmem:[#allocation20 + $0x298] sm:$0xf]
        %v8033 = vld [vmem:[#allocation20 + $0x29c] sm:$0xf]
        %v8034 = vld [vmem:[#allocation20 + $0x2a0] sm:$0xf]
        %v8035 = vld [vmem:[#allocation20 + $0x2a4] sm:$0xf]
        %v8036 = vld [vmem:[#allocation20 + $0x2a8] sm:$0xf]
        %v8037 = vld [vmem:[#allocation20 + $0x2ac] sm:$0xf]
        %v8038 = vld [vmem:[#allocation20 + $0x2b0] sm:$0xf]
        %v8039 = vld [vmem:[#allocation20 + $0x2b4] sm:$0xf]
        %v8040 = vld [vmem:[#allocation20 + $0x2b8] sm:$0xf]
        %v8041 = vld [vmem:[#allocation20 + $0x2bc] sm:$0xf]
        %v8042 = vld [vmem:[#allocation20 + $0x2c0] sm:$0xf]
        %v8043 = vld [vmem:[#allocation20 + $0x2c4] sm:$0xf]
        %v8044 = vld [vmem:[#allocation20 + $0x2c8] sm:$0xf]
        %v8045 = vld [vmem:[#allocation20 + $0x2cc] sm:$0xf]
        %v8046 = vld [vmem:[#allocation20 + $0x2d0] sm:$0xf]
        %v8047 = vld [vmem:[#allocation20 + $0x2d4] sm:$0xf]
        %v8048 = vld [vmem:[#allocation20 + $0x2d8] sm:$0xf]
        %v8049 = vld [vmem:[#allocation20 + $0x2dc] sm:$0xf]
        %v8050 = vld [vmem:[#allocation20 + $0x2e0] sm:$0xf]
        %v8051 = vld [vmem:[#allocation20 + $0x2e4] sm:$0xf]
        %v8052 = vld [vmem:[#allocation20 + $0x2e8] sm:$0xf]
        %v8053 = vld [vmem:[#allocation20 + $0x2ec] sm:$0xf]
        %v8054 = vld [vmem:[#allocation20 + $0x2f0] sm:$0xf]
        %v8055 = vld [vmem:[#allocation20 + $0x2f4] sm:$0xf]
        %v8056 = vld [vmem:[#allocation20 + $0x2f8] sm:$0xf]
        %v8057 = vld [vmem:[#allocation20 + $0x2fc] sm:$0xf]
        %v8058 = vld [vmem:[#allocation20 + $0x300] sm:$0xf]
        %v8059 = vld [vmem:[#allocation20 + $0x304] sm:$0xf]
        %v8060 = vld [vmem:[#allocation20 + $0x308] sm:$0xf]
        %v8061 = vld [vmem:[#allocation20 + $0x30c] sm:$0xf]
        %v8062 = vld [vmem:[#allocation20 + $0x310] sm:$0xf]
        %v8063 = vld [vmem:[#allocation20 + $0x314] sm:$0xf]
        %v8064 = vld [vmem:[#allocation20 + $0x318] sm:$0xf]
        %v8065 = vld [vmem:[#allocation20 + $0x31c] sm:$0xf]
        %v8066 = vld [vmem:[#allocation20 + $0x320] sm:$0xf]
        %v8067 = vld [vmem:[#allocation20 + $0x324] sm:$0xf]
        %v8068 = vld [vmem:[#allocation20 + $0x328] sm:$0xf]
        %v8069 = vld [vmem:[#allocation20 + $0x32c] sm:$0xf]
        %v8070 = vld [vmem:[#allocation20 + $0x330] sm:$0xf]
        %v8071 = vld [vmem:[#allocation20 + $0x334] sm:$0xf]
        %v8072 = vld [vmem:[#allocation20 + $0x338] sm:$0xf]
        %v8073 = vld [vmem:[#allocation20 + $0x33c] sm:$0xf]
        %v8074 = vld [vmem:[#allocation20 + $0x340] sm:$0xf]
        %v8075 = vld [vmem:[#allocation20 + $0x344] sm:$0xf]
        %v8076 = vld [vmem:[#allocation20 + $0x348] sm:$0xf]
        %v8077 = vld [vmem:[#allocation20 + $0x34c] sm:$0xf]
        %v8078 = vld [vmem:[#allocation20 + $0x350] sm:$0xf]
        %v8079 = vld [vmem:[#allocation20 + $0x354] sm:$0xf]
        %v8080 = vld [vmem:[#allocation20 + $0x358] sm:$0xf]
        %v8081 = vld [vmem:[#allocation20 + $0x35c] sm:$0xf]
        %v8082 = vld [vmem:[#allocation20 + $0x360] sm:$0xf]
        %v8083 = vld [vmem:[#allocation20 + $0x364] sm:$0xf]
        %v8084 = vld [vmem:[#allocation20 + $0x368] sm:$0xf]
        %v8085 = vld [vmem:[#allocation20 + $0x36c] sm:$0xf]
        %v8086 = vld [vmem:[#allocation20 + $0x370] sm:$0xf]
        %v8087 = vld [vmem:[#allocation20 + $0x374] sm:$0xf]
        %v8088 = vld [vmem:[#allocation20 + $0x378] sm:$0xf]
        %v8089 = vld [vmem:[#allocation20 + $0x37c] sm:$0xf]
        %v8090 = vld [vmem:[#allocation20 + $0x380] sm:$0xf]
        %v8091 = vld [vmem:[#allocation20 + $0x384] sm:$0xf]
        %v8092 = vld [vmem:[#allocation20 + $0x388] sm:$0xf]
        %v8093 = vld [vmem:[#allocation20 + $0x38c] sm:$0xf]
        %v8094 = vld [vmem:[#allocation20 + $0x390] sm:$0xf]
        %v8095 = vld [vmem:[#allocation20 + $0x394] sm:$0xf]
        %v8096 = vld [vmem:[#allocation20 + $0x398] sm:$0xf]
        %v8097 = vld [vmem:[#allocation20 + $0x39c] sm:$0xf]
        %v8098 = vld [vmem:[#allocation20 + $0x3a0] sm:$0xf]
        %v8099 = vld [vmem:[#allocation20 + $0x3a4] sm:$0xf]
        %v8100 = vld [vmem:[#allocation20 + $0x3a8] sm:$0xf]
        %v8101 = vld [vmem:[#allocation20 + $0x3ac] sm:$0xf]
        %v8102 = vld [vmem:[#allocation20 + $0x3b0] sm:$0xf]
        %v8103 = vld [vmem:[#allocation20 + $0x3b4] sm:$0xf]
        %v8104 = vld [vmem:[#allocation20 + $0x3b8] sm:$0xf]
        %v8105 = vld [vmem:[#allocation20 + $0x3bc] sm:$0xf]
        %v8106 = vld [vmem:[#allocation20 + $0x3c0] sm:$0xf]
        %v8107 = vld [vmem:[#allocation20 + $0x3c4] sm:$0xf]
        %v8108 = vld [vmem:[#allocation20 + $0x3c8] sm:$0xf]
        %v8109 = vld [vmem:[#allocation20 + $0x3cc] sm:$0xf]
        %v8110 = vld [vmem:[#allocation20 + $0x3d0] sm:$0xf]
        %v8111 = vld [vmem:[#allocation20 + $0x3d4] sm:$0xf]
        %v8112 = vld [vmem:[#allocation20 + $0x3d8] sm:$0xf]
        %v8113 = vld [vmem:[#allocation20 + $0x3dc] sm:$0xf]
        %v8114 = vld [vmem:[#allocation20 + $0x3e0] sm:$0xf]
        %v8115 = vld [vmem:[#allocation20 + $0x3e4] sm:$0xf]
        %v8116 = vld [vmem:[#allocation20 + $0x3e8] sm:$0xf]
        %v8117 = vld [vmem:[#allocation20 + $0x3ec] sm:$0xf]
        %v8118 = vld [vmem:[#allocation20 + $0x3f0] sm:$0xf]
        %v8119 = vld [vmem:[#allocation20 + $0x3f4] sm:$0xf]
        %v8120 = vld [vmem:[#allocation20 + $0x3f8] sm:$0xf]
        %v8121 = vld [vmem:[#allocation20 + $0x3fc] sm:$0xf]
        %v8122 = vld [vmem:[#allocation22] sm:$0x1]
        %v8124 = vlaneseq
        %v8125 = vshrl.u32 %v8124, 7
        %v8126 = vsub.s32 0, %v8125
        %v8127 = vrot.slane %v8122, %v8126
        %v8385 = vunpack.c.l.b16 %v7866
        %v8386 = vunpack.c.l.b16 %v7867
        %v8387 = vunpack.c.l.b16 %v7868
        %v8388 = vunpack.c.l.b16 %v7869
        %v8389 = vunpack.c.l.b16 %v7870
        %v8390 = vunpack.c.l.b16 %v7871
        %v8391 = vunpack.c.l.b16 %v7872
        %v8392 = vunpack.c.l.b16 %v7873
        %v8393 = vunpack.c.l.b16 %v7874
        %v8394 = vunpack.c.l.b16 %v7875
        %v8395 = vunpack.c.l.b16 %v7876
        %v8396 = vunpack.c.l.b16 %v7877
        %v8397 = vunpack.c.l.b16 %v7878
        %v8398 = vunpack.c.l.b16 %v7879
        %v8399 = vunpack.c.l.b16 %v7880
        %v8400 = vunpack.c.l.b16 %v7881
        %v8401 = vunpack.c.l.b16 %v7882
        %v8402 = vunpack.c.l.b16 %v7883
        %v8403 = vunpack.c.l.b16 %v7884
        %v8404 = vunpack.c.l.b16 %v7885
        %v8405 = vunpack.c.l.b16 %v7886
        %v8406 = vunpack.c.l.b16 %v7887
        %v8407 = vunpack.c.l.b16 %v7888
        %v8408 = vunpack.c.l.b16 %v7889
        %v8409 = vunpack.c.l.b16 %v7890
        %v8410 = vunpack.c.l.b16 %v7891
        %v8411 = vunpack.c.l.b16 %v7892
        %v8412 = vunpack.c.l.b16 %v7893
        %v8413 = vunpack.c.l.b16 %v7894
        %v8414 = vunpack.c.l.b16 %v7895
        %v8415 = vunpack.c.l.b16 %v7896
        %v8416 = vunpack.c.l.b16 %v7897
        %v8417 = vunpack.c.l.b16 %v7898
        %v8418 = vunpack.c.l.b16 %v7899
        %v8419 = vunpack.c.l.b16 %v7900
        %v8420 = vunpack.c.l.b16 %v7901
        %v8421 = vunpack.c.l.b16 %v7902
        %v8422 = vunpack.c.l.b16 %v7903
        %v8423 = vunpack.c.l.b16 %v7904
        %v8424 = vunpack.c.l.b16 %v7905
        %v8425 = vunpack.c.l.b16 %v7906
        %v8426 = vunpack.c.l.b16 %v7907
        %v8427 = vunpack.c.l.b16 %v7908
        %v8428 = vunpack.c.l.b16 %v7909
        %v8429 = vunpack.c.l.b16 %v7910
        %v8430 = vunpack.c.l.b16 %v7911
        %v8431 = vunpack.c.l.b16 %v7912
        %v8432 = vunpack.c.l.b16 %v7913
        %v8433 = vunpack.c.l.b16 %v7914
        %v8434 = vunpack.c.l.b16 %v7915
        %v8435 = vunpack.c.l.b16 %v7916
        %v8436 = vunpack.c.l.b16 %v7917
        %v8437 = vunpack.c.l.b16 %v7918
        %v8438 = vunpack.c.l.b16 %v7919
        %v8439 = vunpack.c.l.b16 %v7920
        %v8440 = vunpack.c.l.b16 %v7921
        %v8441 = vunpack.c.l.b16 %v7922
        %v8442 = vunpack.c.l.b16 %v7923
        %v8443 = vunpack.c.l.b16 %v7924
        %v8444 = vunpack.c.l.b16 %v7925
        %v8445 = vunpack.c.l.b16 %v7926
        %v8446 = vunpack.c.l.b16 %v7927
        %v8447 = vunpack.c.l.b16 %v7928
        %v8448 = vunpack.c.l.b16 %v7929
        %v8449 = vunpack.c.l.b16 %v7930
        %v8450 = vunpack.c.l.b16 %v7931
        %v8451 = vunpack.c.l.b16 %v7932
        %v8452 = vunpack.c.l.b16 %v7933
        %v8453 = vunpack.c.l.b16 %v7934
        %v8454 = vunpack.c.l.b16 %v7935
        %v8455 = vunpack.c.l.b16 %v7936
        %v8456 = vunpack.c.l.b16 %v7937
        %v8457 = vunpack.c.l.b16 %v7938
        %v8458 = vunpack.c.l.b16 %v7939
        %v8459 = vunpack.c.l.b16 %v7940
        %v8460 = vunpack.c.l.b16 %v7941
        %v8461 = vunpack.c.l.b16 %v7942
        %v8462 = vunpack.c.l.b16 %v7943
        %v8463 = vunpack.c.l.b16 %v7944
        %v8464 = vunpack.c.l.b16 %v7945
        %v8465 = vunpack.c.l.b16 %v7946
        %v8466 = vunpack.c.l.b16 %v7947
        %v8467 = vunpack.c.l.b16 %v7948
        %v8468 = vunpack.c.l.b16 %v7949
        %v8469 = vunpack.c.l.b16 %v7950
        %v8470 = vunpack.c.l.b16 %v7951
        %v8471 = vunpack.c.l.b16 %v7952
        %v8472 = vunpack.c.l.b16 %v7953
        %v8473 = vunpack.c.l.b16 %v7954
        %v8474 = vunpack.c.l.b16 %v7955
        %v8475 = vunpack.c.l.b16 %v7956
        %v8476 = vunpack.c.l.b16 %v7957
        %v8477 = vunpack.c.l.b16 %v7958
        %v8478 = vunpack.c.l.b16 %v7959
        %v8479 = vunpack.c.l.b16 %v7960
        %v8480 = vunpack.c.l.b16 %v7961
        %v8481 = vunpack.c.l.b16 %v7962
        %v8482 = vunpack.c.l.b16 %v7963
        %v8483 = vunpack.c.l.b16 %v7964
        %v8484 = vunpack.c.l.b16 %v7965
        %v8485 = vunpack.c.l.b16 %v7966
        %v8486 = vunpack.c.l.b16 %v7967
        %v8487 = vunpack.c.l.b16 %v7968
        %v8488 = vunpack.c.l.b16 %v7969
        %v8489 = vunpack.c.l.b16 %v7970
        %v8490 = vunpack.c.l.b16 %v7971
        %v8491 = vunpack.c.l.b16 %v7972
        %v8492 = vunpack.c.l.b16 %v7973
        %v8493 = vunpack.c.l.b16 %v7974
        %v8494 = vunpack.c.l.b16 %v7975
        %v8495 = vunpack.c.l.b16 %v7976
        %v8496 = vunpack.c.l.b16 %v7977
        %v8497 = vunpack.c.l.b16 %v7978
        %v8498 = vunpack.c.l.b16 %v7979
        %v8499 = vunpack.c.l.b16 %v7980
        %v8500 = vunpack.c.l.b16 %v7981
        %v8501 = vunpack.c.l.b16 %v7982
        %v8502 = vunpack.c.l.b16 %v7983
        %v8503 = vunpack.c.l.b16 %v7984
        %v8504 = vunpack.c.l.b16 %v7985
        %v8505 = vunpack.c.l.b16 %v7986
        %v8506 = vunpack.c.l.b16 %v7987
        %v8507 = vunpack.c.l.b16 %v7988
        %v8508 = vunpack.c.l.b16 %v7989
        %v8509 = vunpack.c.l.b16 %v7990
        %v8510 = vunpack.c.l.b16 %v7991
        %v8511 = vunpack.c.l.b16 %v7992
        %v8512 = vunpack.c.l.b16 %v7993
        %v8513 = vunpack.c.l.b16 %v7994
        %v8514 = vunpack.c.l.b16 %v7995
        %v8515 = vunpack.c.l.b16 %v7996
        %v8516 = vunpack.c.l.b16 %v7997
        %v8517 = vunpack.c.l.b16 %v7998
        %v8518 = vunpack.c.l.b16 %v7999
        %v8519 = vunpack.c.l.b16 %v8000
        %v8520 = vunpack.c.l.b16 %v8001
        %v8521 = vunpack.c.l.b16 %v8002
        %v8522 = vunpack.c.l.b16 %v8003
        %v8523 = vunpack.c.l.b16 %v8004
        %v8524 = vunpack.c.l.b16 %v8005
        %v8525 = vunpack.c.l.b16 %v8006
        %v8526 = vunpack.c.l.b16 %v8007
        %v8527 = vunpack.c.l.b16 %v8008
        %v8528 = vunpack.c.l.b16 %v8009
        %v8529 = vunpack.c.l.b16 %v8010
        %v8530 = vunpack.c.l.b16 %v8011
        %v8531 = vunpack.c.l.b16 %v8012
        %v8532 = vunpack.c.l.b16 %v8013
        %v8533 = vunpack.c.l.b16 %v8014
        %v8534 = vunpack.c.l.b16 %v8015
        %v8535 = vunpack.c.l.b16 %v8016
        %v8536 = vunpack.c.l.b16 %v8017
        %v8537 = vunpack.c.l.b16 %v8018
        %v8538 = vunpack.c.l.b16 %v8019
        %v8539 = vunpack.c.l.b16 %v8020
        %v8540 = vunpack.c.l.b16 %v8021
        %v8541 = vunpack.c.l.b16 %v8022
        %v8542 = vunpack.c.l.b16 %v8023
        %v8543 = vunpack.c.l.b16 %v8024
        %v8544 = vunpack.c.l.b16 %v8025
        %v8545 = vunpack.c.l.b16 %v8026
        %v8546 = vunpack.c.l.b16 %v8027
        %v8547 = vunpack.c.l.b16 %v8028
        %v8548 = vunpack.c.l.b16 %v8029
        %v8549 = vunpack.c.l.b16 %v8030
        %v8550 = vunpack.c.l.b16 %v8031
        %v8551 = vunpack.c.l.b16 %v8032
        %v8552 = vunpack.c.l.b16 %v8033
        %v8553 = vunpack.c.l.b16 %v8034
        %v8554 = vunpack.c.l.b16 %v8035
        %v8555 = vunpack.c.l.b16 %v8036
        %v8556 = vunpack.c.l.b16 %v8037
        %v8557 = vunpack.c.l.b16 %v8038
        %v8558 = vunpack.c.l.b16 %v8039
        %v8559 = vunpack.c.l.b16 %v8040
        %v8560 = vunpack.c.l.b16 %v8041
        %v8561 = vunpack.c.l.b16 %v8042
        %v8562 = vunpack.c.l.b16 %v8043
        %v8563 = vunpack.c.l.b16 %v8044
        %v8564 = vunpack.c.l.b16 %v8045
        %v8565 = vunpack.c.l.b16 %v8046
        %v8566 = vunpack.c.l.b16 %v8047
        %v8567 = vunpack.c.l.b16 %v8048
        %v8568 = vunpack.c.l.b16 %v8049
        %v8569 = vunpack.c.l.b16 %v8050
        %v8570 = vunpack.c.l.b16 %v8051
        %v8571 = vunpack.c.l.b16 %v8052
        %v8572 = vunpack.c.l.b16 %v8053
        %v8573 = vunpack.c.l.b16 %v8054
        %v8574 = vunpack.c.l.b16 %v8055
        %v8575 = vunpack.c.l.b16 %v8056
        %v8576 = vunpack.c.l.b16 %v8057
        %v8577 = vunpack.c.l.b16 %v8058
        %v8578 = vunpack.c.l.b16 %v8059
        %v8579 = vunpack.c.l.b16 %v8060
        %v8580 = vunpack.c.l.b16 %v8061
        %v8581 = vunpack.c.l.b16 %v8062
        %v8582 = vunpack.c.l.b16 %v8063
        %v8583 = vunpack.c.l.b16 %v8064
        %v8584 = vunpack.c.l.b16 %v8065
        %v8585 = vunpack.c.l.b16 %v8066
        %v8586 = vunpack.c.l.b16 %v8067
        %v8587 = vunpack.c.l.b16 %v8068
        %v8588 = vunpack.c.l.b16 %v8069
        %v8589 = vunpack.c.l.b16 %v8070
        %v8590 = vunpack.c.l.b16 %v8071
        %v8591 = vunpack.c.l.b16 %v8072
        %v8592 = vunpack.c.l.b16 %v8073
        %v8593 = vunpack.c.l.b16 %v8074
        %v8594 = vunpack.c.l.b16 %v8075
        %v8595 = vunpack.c.l.b16 %v8076
        %v8596 = vunpack.c.l.b16 %v8077
        %v8597 = vunpack.c.l.b16 %v8078
        %v8598 = vunpack.c.l.b16 %v8079
        %v8599 = vunpack.c.l.b16 %v8080
        %v8600 = vunpack.c.l.b16 %v8081
        %v8601 = vunpack.c.l.b16 %v8082
        %v8602 = vunpack.c.l.b16 %v8083
        %v8603 = vunpack.c.l.b16 %v8084
        %v8604 = vunpack.c.l.b16 %v8085
        %v8605 = vunpack.c.l.b16 %v8086
        %v8606 = vunpack.c.l.b16 %v8087
        %v8607 = vunpack.c.l.b16 %v8088
        %v8608 = vunpack.c.l.b16 %v8089
        %v8609 = vunpack.c.l.b16 %v8090
        %v8610 = vunpack.c.l.b16 %v8091
        %v8611 = vunpack.c.l.b16 %v8092
        %v8612 = vunpack.c.l.b16 %v8093
        %v8613 = vunpack.c.l.b16 %v8094
        %v8614 = vunpack.c.l.b16 %v8095
        %v8615 = vunpack.c.l.b16 %v8096
        %v8616 = vunpack.c.l.b16 %v8097
        %v8617 = vunpack.c.l.b16 %v8098
        %v8618 = vunpack.c.l.b16 %v8099
        %v8619 = vunpack.c.l.b16 %v8100
        %v8620 = vunpack.c.l.b16 %v8101
        %v8621 = vunpack.c.l.b16 %v8102
        %v8622 = vunpack.c.l.b16 %v8103
        %v8623 = vunpack.c.l.b16 %v8104
        %v8624 = vunpack.c.l.b16 %v8105
        %v8625 = vunpack.c.l.b16 %v8106
        %v8626 = vunpack.c.l.b16 %v8107
        %v8627 = vunpack.c.l.b16 %v8108
        %v8628 = vunpack.c.l.b16 %v8109
        %v8629 = vunpack.c.l.b16 %v8110
        %v8630 = vunpack.c.l.b16 %v8111
        %v8631 = vunpack.c.l.b16 %v8112
        %v8632 = vunpack.c.l.b16 %v8113
        %v8633 = vunpack.c.l.b16 %v8114
        %v8634 = vunpack.c.l.b16 %v8115
        %v8635 = vunpack.c.l.b16 %v8116
        %v8636 = vunpack.c.l.b16 %v8117
        %v8637 = vunpack.c.l.b16 %v8118
        %v8638 = vunpack.c.l.b16 %v8119
        %v8639 = vunpack.c.l.b16 %v8120
        %v8640 = vunpack.c.l.b16 %v8121
        %v8641 = vpack.c.b16 %v8386, %v8385
        %v8642 = vpack.c.b16 %v8388, %v8387
        %v8643 = vpack.c.b16 %v8390, %v8389
        %v8644 = vpack.c.b16 %v8392, %v8391
        %v8645 = vpack.c.b16 %v8394, %v8393
        %v8646 = vpack.c.b16 %v8396, %v8395
        %v8647 = vpack.c.b16 %v8398, %v8397
        %v8648 = vpack.c.b16 %v8400, %v8399
        %v8649 = vpack.c.b16 %v8402, %v8401
        %v8650 = vpack.c.b16 %v8404, %v8403
        %v8651 = vpack.c.b16 %v8406, %v8405
        %v8652 = vpack.c.b16 %v8408, %v8407
        %v8653 = vpack.c.b16 %v8410, %v8409
        %v8654 = vpack.c.b16 %v8412, %v8411
        %v8655 = vpack.c.b16 %v8414, %v8413
        %v8656 = vpack.c.b16 %v8416, %v8415
        %v8657 = vpack.c.b16 %v8418, %v8417
        %v8658 = vpack.c.b16 %v8420, %v8419
        %v8659 = vpack.c.b16 %v8422, %v8421
        %v8660 = vpack.c.b16 %v8424, %v8423
        %v8661 = vpack.c.b16 %v8426, %v8425
        %v8662 = vpack.c.b16 %v8428, %v8427
        %v8663 = vpack.c.b16 %v8430, %v8429
        %v8664 = vpack.c.b16 %v8432, %v8431
        %v8665 = vpack.c.b16 %v8434, %v8433
        %v8666 = vpack.c.b16 %v8436, %v8435
        %v8667 = vpack.c.b16 %v8438, %v8437
        %v8668 = vpack.c.b16 %v8440, %v8439
        %v8669 = vpack.c.b16 %v8442, %v8441
        %v8670 = vpack.c.b16 %v8444, %v8443
        %v8671 = vpack.c.b16 %v8446, %v8445
        %v8672 = vpack.c.b16 %v8448, %v8447
        %v8673 = vpack.c.b16 %v8450, %v8449
        %v8674 = vpack.c.b16 %v8452, %v8451
        %v8675 = vpack.c.b16 %v8454, %v8453
        %v8676 = vpack.c.b16 %v8456, %v8455
        %v8677 = vpack.c.b16 %v8458, %v8457
        %v8678 = vpack.c.b16 %v8460, %v8459
        %v8679 = vpack.c.b16 %v8462, %v8461
        %v8680 = vpack.c.b16 %v8464, %v8463
        %v8681 = vpack.c.b16 %v8466, %v8465
        %v8682 = vpack.c.b16 %v8468, %v8467
        %v8683 = vpack.c.b16 %v8470, %v8469
        %v8684 = vpack.c.b16 %v8472, %v8471
        %v8685 = vpack.c.b16 %v8474, %v8473
        %v8686 = vpack.c.b16 %v8476, %v8475
        %v8687 = vpack.c.b16 %v8478, %v8477
        %v8688 = vpack.c.b16 %v8480, %v8479
        %v8689 = vpack.c.b16 %v8482, %v8481
        %v8690 = vpack.c.b16 %v8484, %v8483
        %v8691 = vpack.c.b16 %v8486, %v8485
        %v8692 = vpack.c.b16 %v8488, %v8487
        %v8693 = vpack.c.b16 %v8490, %v8489
        %v8694 = vpack.c.b16 %v8492, %v8491
        %v8695 = vpack.c.b16 %v8494, %v8493
        %v8696 = vpack.c.b16 %v8496, %v8495
        %v8697 = vpack.c.b16 %v8498, %v8497
        %v8698 = vpack.c.b16 %v8500, %v8499
        %v8699 = vpack.c.b16 %v8502, %v8501
        %v8700 = vpack.c.b16 %v8504, %v8503
        %v8701 = vpack.c.b16 %v8506, %v8505
        %v8702 = vpack.c.b16 %v8508, %v8507
        %v8703 = vpack.c.b16 %v8510, %v8509
        %v8704 = vpack.c.b16 %v8512, %v8511
        %v8705 = vpack.c.b16 %v8514, %v8513
        %v8706 = vpack.c.b16 %v8516, %v8515
        %v8707 = vpack.c.b16 %v8518, %v8517
        %v8708 = vpack.c.b16 %v8520, %v8519
        %v8709 = vpack.c.b16 %v8522, %v8521
        %v8710 = vpack.c.b16 %v8524, %v8523
        %v8711 = vpack.c.b16 %v8526, %v8525
        %v8712 = vpack.c.b16 %v8528, %v8527
        %v8713 = vpack.c.b16 %v8530, %v8529
        %v8714 = vpack.c.b16 %v8532, %v8531
        %v8715 = vpack.c.b16 %v8534, %v8533
        %v8716 = vpack.c.b16 %v8536, %v8535
        %v8717 = vpack.c.b16 %v8538, %v8537
        %v8718 = vpack.c.b16 %v8540, %v8539
        %v8719 = vpack.c.b16 %v8542, %v8541
        %v8720 = vpack.c.b16 %v8544, %v8543
        %v8721 = vpack.c.b16 %v8546, %v8545
        %v8722 = vpack.c.b16 %v8548, %v8547
        %v8723 = vpack.c.b16 %v8550, %v8549
        %v8724 = vpack.c.b16 %v8552, %v8551
        %v8725 = vpack.c.b16 %v8554, %v8553
        %v8726 = vpack.c.b16 %v8556, %v8555
        %v8727 = vpack.c.b16 %v8558, %v8557
        %v8728 = vpack.c.b16 %v8560, %v8559
        %v8729 = vpack.c.b16 %v8562, %v8561
        %v8730 = vpack.c.b16 %v8564, %v8563
        %v8731 = vpack.c.b16 %v8566, %v8565
        %v8732 = vpack.c.b16 %v8568, %v8567
        %v8733 = vpack.c.b16 %v8570, %v8569
        %v8734 = vpack.c.b16 %v8572, %v8571
        %v8735 = vpack.c.b16 %v8574, %v8573
        %v8736 = vpack.c.b16 %v8576, %v8575
        %v8737 = vpack.c.b16 %v8578, %v8577
        %v8738 = vpack.c.b16 %v8580, %v8579
        %v8739 = vpack.c.b16 %v8582, %v8581
        %v8740 = vpack.c.b16 %v8584, %v8583
        %v8741 = vpack.c.b16 %v8586, %v8585
        %v8742 = vpack.c.b16 %v8588, %v8587
        %v8743 = vpack.c.b16 %v8590, %v8589
        %v8744 = vpack.c.b16 %v8592, %v8591
        %v8745 = vpack.c.b16 %v8594, %v8593
        %v8746 = vpack.c.b16 %v8596, %v8595
        %v8747 = vpack.c.b16 %v8598, %v8597
        %v8748 = vpack.c.b16 %v8600, %v8599
        %v8749 = vpack.c.b16 %v8602, %v8601
        %v8750 = vpack.c.b16 %v8604, %v8603
        %v8751 = vpack.c.b16 %v8606, %v8605
        %v8752 = vpack.c.b16 %v8608, %v8607
        %v8753 = vpack.c.b16 %v8610, %v8609
        %v8754 = vpack.c.b16 %v8612, %v8611
        %v8755 = vpack.c.b16 %v8614, %v8613
        %v8756 = vpack.c.b16 %v8616, %v8615
        %v8757 = vpack.c.b16 %v8618, %v8617
        %v8758 = vpack.c.b16 %v8620, %v8619
        %v8759 = vpack.c.b16 %v8622, %v8621
        %v8760 = vpack.c.b16 %v8624, %v8623
        %v8761 = vpack.c.b16 %v8626, %v8625
        %v8762 = vpack.c.b16 %v8628, %v8627
        %v8763 = vpack.c.b16 %v8630, %v8629
        %v8764 = vpack.c.b16 %v8632, %v8631
        %v8765 = vpack.c.b16 %v8634, %v8633
        %v8766 = vpack.c.b16 %v8636, %v8635
        %v8767 = vpack.c.b16 %v8638, %v8637
        %v8768 = vpack.c.b16 %v8640, %v8639
        %8897 = vmatprep.subr.bf16.mxu0 0
        %8898 = vmatpush1.bf16.msra.mxu0 %v8648
        %8899 = vmatprep.subr.bf16.mxu0 0
        %8900 = vmatpush1.bf16.msra.mxu0 %v8647
        %8901 = vmatprep.subr.bf16.mxu0 0
        %8902 = vmatpush1.bf16.msra.mxu0 %v8646
        %8903 = vmatprep.subr.bf16.mxu0 0
        %8904 = vmatpush1.bf16.msra.mxu0 %v8645
        %8905 = vmatprep.subr.bf16.mxu0 0
        %8906 = vmatpush1.bf16.msra.mxu0 %v8644
        %8907 = vmatprep.subr.bf16.mxu0 0
        %8908 = vmatpush1.bf16.msra.mxu0 %v8643
        %8909 = vmatprep.subr.bf16.mxu0 0
        %8910 = vmatpush1.bf16.msra.mxu0 %v8642
        %8911 = vmatprep.subr.bf16.mxu0 0
        %8912 = vmatpush1.bf16.msra.mxu0 %v8641
        %8913 = vmatprep.subr.bf16.mxu0 0
        %8914 = vmatpush2.bf16.msra.mxu0 %v8656
        %8915 = vmatprep.subr.bf16.mxu0 0
        %8916 = vmatpush2.bf16.msra.mxu0 %v8655
        %8917 = vmatprep.subr.bf16.mxu0 0
        %8918 = vmatpush2.bf16.msra.mxu0 %v8654
        %8919 = vmatprep.subr.bf16.mxu0 0
        %8920 = vmatpush2.bf16.msra.mxu0 %v8653
        %8921 = vmatprep.subr.bf16.mxu0 0
        %8922 = vmatpush2.bf16.msra.mxu0 %v8652
        %8923 = vmatprep.subr.bf16.mxu0 0
        %8924 = vmatpush2.bf16.msra.mxu0 %v8651
        %8925 = vmatprep.subr.bf16.mxu0 0
        %8926 = vmatpush2.bf16.msra.mxu0 %v8650
        %8927 = vmatprep.subr.bf16.mxu0 0
        %8928 = vmatpush2.bf16.msra.mxu0 %v8649
        %8929 = vmatprep.mubr.bf16.mxu0 %v7851
        %8930 = vmatmul.mubr.bf16.gmra.mxu0 %v7850
        %v8931 = vpop.f32.mrf.mxu0
        %v8932 = vadd.f32 %v8127, %v8931
        %v8933 = vpop.f32.mrf.mxu0
        %v8934 = vpop.f32.mrf.mxu0
        %v8935 = vpop.f32.mrf.mxu0
        %8936 = vdwg.mxu0
        %8937 = vmatprep.subr.bf16.mxu0 0
        %8938 = vmatpush1.bf16.msra.mxu0 %v8664
        %8939 = vmatprep.subr.bf16.mxu0 0
        %8940 = vmatpush1.bf16.msra.mxu0 %v8663
        %8941 = vmatprep.subr.bf16.mxu0 0
        %8942 = vmatpush1.bf16.msra.mxu0 %v8662
        %8943 = vmatprep.subr.bf16.mxu0 0
        %8944 = vmatpush1.bf16.msra.mxu0 %v8661
        %8945 = vmatprep.subr.bf16.mxu0 0
        %8946 = vmatpush1.bf16.msra.mxu0 %v8660
        %8947 = vmatprep.subr.bf16.mxu0 0
        %8948 = vmatpush1.bf16.msra.mxu0 %v8659
        %8949 = vmatprep.subr.bf16.mxu0 0
        %8950 = vmatpush1.bf16.msra.mxu0 %v8658
        %8951 = vmatprep.subr.bf16.mxu0 0
        %8952 = vmatpush1.bf16.msra.mxu0 %v8657
        %8953 = vmatprep.subr.bf16.mxu0 0
        %8954 = vmatpush2.bf16.msra.mxu0 %v8672
        %8955 = vmatprep.subr.bf16.mxu0 0
        %8956 = vmatpush2.bf16.msra.mxu0 %v8671
        %8957 = vmatprep.subr.bf16.mxu0 0
        %8958 = vmatpush2.bf16.msra.mxu0 %v8670
        %8959 = vmatprep.subr.bf16.mxu0 0
        %8960 = vmatpush2.bf16.msra.mxu0 %v8669
        %8961 = vmatprep.subr.bf16.mxu0 0
        %8962 = vmatpush2.bf16.msra.mxu0 %v8668
        %8963 = vmatprep.subr.bf16.mxu0 0
        %8964 = vmatpush2.bf16.msra.mxu0 %v8667
        %8965 = vmatprep.subr.bf16.mxu0 0
        %8966 = vmatpush2.bf16.msra.mxu0 %v8666
        %8967 = vmatprep.subr.bf16.mxu0 0
        %8968 = vmatpush2.bf16.msra.mxu0 %v8665
        %8969 = vmatprep.mubr.bf16.mxu0 %v7853
        %8970 = vmatmul.mubr.bf16.gmra.mxu0 %v7852
        %v8971 = vpop.f32.mrf.mxu0
        %v8972 = vadd.f32 %v8932, %v8971
        %v8973 = vpop.f32.mrf.mxu0
        %v8974 = vpop.f32.mrf.mxu0
        %v8975 = vpop.f32.mrf.mxu0
        %8976 = vdwg.mxu0
        %8977 = vmatprep.subr.bf16.mxu0 0
        %8978 = vmatpush1.bf16.msra.mxu0 %v8680
        %8979 = vmatprep.subr.bf16.mxu0 0
        %8980 = vmatpush1.bf16.msra.mxu0 %v8679
        %8981 = vmatprep.subr.bf16.mxu0 0
        %8982 = vmatpush1.bf16.msra.mxu0 %v8678
        %8983 = vmatprep.subr.bf16.mxu0 0
        %8984 = vmatpush1.bf16.msra.mxu0 %v8677
        %8985 = vmatprep.subr.bf16.mxu0 0
        %8986 = vmatpush1.bf16.msra.mxu0 %v8676
        %8987 = vmatprep.subr.bf16.mxu0 0
        %8988 = vmatpush1.bf16.msra.mxu0 %v8675
        %8989 = vmatprep.subr.bf16.mxu0 0
        %8990 = vmatpush1.bf16.msra.mxu0 %v8674
        %8991 = vmatprep.subr.bf16.mxu0 0
        %8992 = vmatpush1.bf16.msra.mxu0 %v8673
        %8993 = vmatprep.subr.bf16.mxu0 0
        %8994 = vmatpush2.bf16.msra.mxu0 %v8688
        %8995 = vmatprep.subr.bf16.mxu0 0
        %8996 = vmatpush2.bf16.msra.mxu0 %v8687
        %8997 = vmatprep.subr.bf16.mxu0 0
        %8998 = vmatpush2.bf16.msra.mxu0 %v8686
        %8999 = vmatprep.subr.bf16.mxu0 0
        %9000 = vmatpush2.bf16.msra.mxu0 %v8685
        %9001 = vmatprep.subr.bf16.mxu0 0
        %9002 = vmatpush2.bf16.msra.mxu0 %v8684
        %9003 = vmatprep.subr.bf16.mxu0 0
        %9004 = vmatpush2.bf16.msra.mxu0 %v8683
        %9005 = vmatprep.subr.bf16.mxu0 0
        %9006 = vmatpush2.bf16.msra.mxu0 %v8682
        %9007 = vmatprep.subr.bf16.mxu0 0
        %9008 = vmatpush2.bf16.msra.mxu0 %v8681
        %9009 = vmatprep.mubr.bf16.mxu0 %v7855
        %9010 = vmatmul.mubr.bf16.gmra.mxu0 %v7854
        %v9011 = vpop.f32.mrf.mxu0
        %v9012 = vadd.f32 %v8972, %v9011
        %v9013 = vpop.f32.mrf.mxu0
        %v9014 = vpop.f32.mrf.mxu0
        %v9015 = vpop.f32.mrf.mxu0
        %9016 = vdwg.mxu0
        %9017 = vmatprep.subr.bf16.mxu0 0
        %9018 = vmatpush1.bf16.msra.mxu0 %v8696
        %9019 = vmatprep.subr.bf16.mxu0 0
        %9020 = vmatpush1.bf16.msra.mxu0 %v8695
        %9021 = vmatprep.subr.bf16.mxu0 0
        %9022 = vmatpush1.bf16.msra.mxu0 %v8694
        %9023 = vmatprep.subr.bf16.mxu0 0
        %9024 = vmatpush1.bf16.msra.mxu0 %v8693
        %9025 = vmatprep.subr.bf16.mxu0 0
        %9026 = vmatpush1.bf16.msra.mxu0 %v8692
        %9027 = vmatprep.subr.bf16.mxu0 0
        %9028 = vmatpush1.bf16.msra.mxu0 %v8691
        %9029 = vmatprep.subr.bf16.mxu0 0
        %9030 = vmatpush1.bf16.msra.mxu0 %v8690
        %9031 = vmatprep.subr.bf16.mxu0 0
        %9032 = vmatpush1.bf16.msra.mxu0 %v8689
        %9033 = vmatprep.subr.bf16.mxu0 0
        %9034 = vmatpush2.bf16.msra.mxu0 %v8704
        %9035 = vmatprep.subr.bf16.mxu0 0
        %9036 = vmatpush2.bf16.msra.mxu0 %v8703
        %9037 = vmatprep.subr.bf16.mxu0 0
        %9038 = vmatpush2.bf16.msra.mxu0 %v8702
        %9039 = vmatprep.subr.bf16.mxu0 0
        %9040 = vmatpush2.bf16.msra.mxu0 %v8701
        %9041 = vmatprep.subr.bf16.mxu0 0
        %9042 = vmatpush2.bf16.msra.mxu0 %v8700
        %9043 = vmatprep.subr.bf16.mxu0 0
        %9044 = vmatpush2.bf16.msra.mxu0 %v8699
        %9045 = vmatprep.subr.bf16.mxu0 0
        %9046 = vmatpush2.bf16.msra.mxu0 %v8698
        %9047 = vmatprep.subr.bf16.mxu0 0
        %9048 = vmatpush2.bf16.msra.mxu0 %v8697
        %9049 = vmatprep.mubr.bf16.mxu0 %v7857
        %9050 = vmatmul.mubr.bf16.gmra.mxu0 %v7856
        %v9051 = vpop.f32.mrf.mxu0
        %v9052 = vadd.f32 %v9012, %v9051
        %v9053 = vpop.f32.mrf.mxu0
        %v9054 = vpop.f32.mrf.mxu0
        %v9055 = vpop.f32.mrf.mxu0
        %9056 = vdwg.mxu0
        %9057 = vmatprep.subr.bf16.mxu0 0
        %9058 = vmatpush1.bf16.msra.mxu0 %v8712
        %9059 = vmatprep.subr.bf16.mxu0 0
        %9060 = vmatpush1.bf16.msra.mxu0 %v8711
        %9061 = vmatprep.subr.bf16.mxu0 0
        %9062 = vmatpush1.bf16.msra.mxu0 %v8710
        %9063 = vmatprep.subr.bf16.mxu0 0
        %9064 = vmatpush1.bf16.msra.mxu0 %v8709
        %9065 = vmatprep.subr.bf16.mxu0 0
        %9066 = vmatpush1.bf16.msra.mxu0 %v8708
        %9067 = vmatprep.subr.bf16.mxu0 0
        %9068 = vmatpush1.bf16.msra.mxu0 %v8707
        %9069 = vmatprep.subr.bf16.mxu0 0
        %9070 = vmatpush1.bf16.msra.mxu0 %v8706
        %9071 = vmatprep.subr.bf16.mxu0 0
        %9072 = vmatpush1.bf16.msra.mxu0 %v8705
        %9073 = vmatprep.subr.bf16.mxu0 0
        %9074 = vmatpush2.bf16.msra.mxu0 %v8720
        %9075 = vmatprep.subr.bf16.mxu0 0
        %9076 = vmatpush2.bf16.msra.mxu0 %v8719
        %9077 = vmatprep.subr.bf16.mxu0 0
        %9078 = vmatpush2.bf16.msra.mxu0 %v8718
        %9079 = vmatprep.subr.bf16.mxu0 0
        %9080 = vmatpush2.bf16.msra.mxu0 %v8717
        %9081 = vmatprep.subr.bf16.mxu0 0
        %9082 = vmatpush2.bf16.msra.mxu0 %v8716
        %9083 = vmatprep.subr.bf16.mxu0 0
        %9084 = vmatpush2.bf16.msra.mxu0 %v8715
        %9085 = vmatprep.subr.bf16.mxu0 0
        %9086 = vmatpush2.bf16.msra.mxu0 %v8714
        %9087 = vmatprep.subr.bf16.mxu0 0
        %9088 = vmatpush2.bf16.msra.mxu0 %v8713
        %9089 = vmatprep.mubr.bf16.mxu0 %v7859
        %9090 = vmatmul.mubr.bf16.gmra.mxu0 %v7858
        %v9091 = vpop.f32.mrf.mxu0
        %v9092 = vadd.f32 %v9052, %v9091
        %v9093 = vpop.f32.mrf.mxu0
        %v9094 = vpop.f32.mrf.mxu0
        %v9095 = vpop.f32.mrf.mxu0
        %9096 = vdwg.mxu0
        %9097 = vmatprep.subr.bf16.mxu0 0
        %9098 = vmatpush1.bf16.msra.mxu0 %v8728
        %9099 = vmatprep.subr.bf16.mxu0 0
        %9100 = vmatpush1.bf16.msra.mxu0 %v8727
        %9101 = vmatprep.subr.bf16.mxu0 0
        %9102 = vmatpush1.bf16.msra.mxu0 %v8726
        %9103 = vmatprep.subr.bf16.mxu0 0
        %9104 = vmatpush1.bf16.msra.mxu0 %v8725
        %9105 = vmatprep.subr.bf16.mxu0 0
        %9106 = vmatpush1.bf16.msra.mxu0 %v8724
        %9107 = vmatprep.subr.bf16.mxu0 0
        %9108 = vmatpush1.bf16.msra.mxu0 %v8723
        %9109 = vmatprep.subr.bf16.mxu0 0
        %9110 = vmatpush1.bf16.msra.mxu0 %v8722
        %9111 = vmatprep.subr.bf16.mxu0 0
        %9112 = vmatpush1.bf16.msra.mxu0 %v8721
        %9113 = vmatprep.subr.bf16.mxu0 0
        %9114 = vmatpush2.bf16.msra.mxu0 %v8736
        %9115 = vmatprep.subr.bf16.mxu0 0
        %9116 = vmatpush2.bf16.msra.mxu0 %v8735
        %9117 = vmatprep.subr.bf16.mxu0 0
        %9118 = vmatpush2.bf16.msra.mxu0 %v8734
        %9119 = vmatprep.subr.bf16.mxu0 0
        %9120 = vmatpush2.bf16.msra.mxu0 %v8733
        %9121 = vmatprep.subr.bf16.mxu0 0
        %9122 = vmatpush2.bf16.msra.mxu0 %v8732
        %9123 = vmatprep.subr.bf16.mxu0 0
        %9124 = vmatpush2.bf16.msra.mxu0 %v8731
        %9125 = vmatprep.subr.bf16.mxu0 0
        %9126 = vmatpush2.bf16.msra.mxu0 %v8730
        %9127 = vmatprep.subr.bf16.mxu0 0
        %9128 = vmatpush2.bf16.msra.mxu0 %v8729
        %9129 = vmatprep.mubr.bf16.mxu0 %v7861
        %9130 = vmatmul.mubr.bf16.gmra.mxu0 %v7860
        %v9131 = vpop.f32.mrf.mxu0
        %v9132 = vadd.f32 %v9092, %v9131
        %v9133 = vpop.f32.mrf.mxu0
        %v9134 = vpop.f32.mrf.mxu0
        %v9135 = vpop.f32.mrf.mxu0
        %9136 = vdwg.mxu0
        %9137 = vmatprep.subr.bf16.mxu0 0
        %9138 = vmatpush1.bf16.msra.mxu0 %v8744
        %9139 = vmatprep.subr.bf16.mxu0 0
        %9140 = vmatpush1.bf16.msra.mxu0 %v8743
        %9141 = vmatprep.subr.bf16.mxu0 0
        %9142 = vmatpush1.bf16.msra.mxu0 %v8742
        %9143 = vmatprep.subr.bf16.mxu0 0
        %9144 = vmatpush1.bf16.msra.mxu0 %v8741
        %9145 = vmatprep.subr.bf16.mxu0 0
        %9146 = vmatpush1.bf16.msra.mxu0 %v8740
        %9147 = vmatprep.subr.bf16.mxu0 0
        %9148 = vmatpush1.bf16.msra.mxu0 %v8739
        %9149 = vmatprep.subr.bf16.mxu0 0
        %9150 = vmatpush1.bf16.msra.mxu0 %v8738
        %9151 = vmatprep.subr.bf16.mxu0 0
        %9152 = vmatpush1.bf16.msra.mxu0 %v8737
        %9153 = vmatprep.subr.bf16.mxu0 0
        %9154 = vmatpush2.bf16.msra.mxu0 %v8752
        %9155 = vmatprep.subr.bf16.mxu0 0
        %9156 = vmatpush2.bf16.msra.mxu0 %v8751
        %9157 = vmatprep.subr.bf16.mxu0 0
        %9158 = vmatpush2.bf16.msra.mxu0 %v8750
        %9159 = vmatprep.subr.bf16.mxu0 0
        %9160 = vmatpush2.bf16.msra.mxu0 %v8749
        %9161 = vmatprep.subr.bf16.mxu0 0
        %9162 = vmatpush2.bf16.msra.mxu0 %v8748
        %9163 = vmatprep.subr.bf16.mxu0 0
        %9164 = vmatpush2.bf16.msra.mxu0 %v8747
        %9165 = vmatprep.subr.bf16.mxu0 0
        %9166 = vmatpush2.bf16.msra.mxu0 %v8746
        %9167 = vmatprep.subr.bf16.mxu0 0
        %9168 = vmatpush2.bf16.msra.mxu0 %v8745
        %9169 = vmatprep.mubr.bf16.mxu0 %v7863
        %9170 = vmatmul.mubr.bf16.gmra.mxu0 %v7862
        %v9171 = vpop.f32.mrf.mxu0
        %v9172 = vadd.f32 %v9132, %v9171
        %v9173 = vpop.f32.mrf.mxu0
        %v9174 = vpop.f32.mrf.mxu0
        %v9175 = vpop.f32.mrf.mxu0
        %9176 = vdwg.mxu0
        %9177 = vmatprep.subr.bf16.mxu0 0
        %9178 = vmatpush1.bf16.msra.mxu0 %v8760
        %9179 = vmatprep.subr.bf16.mxu0 0
        %9180 = vmatpush1.bf16.msra.mxu0 %v8759
        %9181 = vmatprep.subr.bf16.mxu0 0
        %9182 = vmatpush1.bf16.msra.mxu0 %v8758
        %9183 = vmatprep.subr.bf16.mxu0 0
        %9184 = vmatpush1.bf16.msra.mxu0 %v8757
        %9185 = vmatprep.subr.bf16.mxu0 0
        %9186 = vmatpush1.bf16.msra.mxu0 %v8756
        %9187 = vmatprep.subr.bf16.mxu0 0
        %9188 = vmatpush1.bf16.msra.mxu0 %v8755
        %9189 = vmatprep.subr.bf16.mxu0 0
        %9190 = vmatpush1.bf16.msra.mxu0 %v8754
        %9191 = vmatprep.subr.bf16.mxu0 0
        %9192 = vmatpush1.bf16.msra.mxu0 %v8753
        %9193 = vmatprep.subr.bf16.mxu0 0
        %9194 = vmatpush2.bf16.msra.mxu0 %v8768
        %9195 = vmatprep.subr.bf16.mxu0 0
        %9196 = vmatpush2.bf16.msra.mxu0 %v8767
        %9197 = vmatprep.subr.bf16.mxu0 0
        %9198 = vmatpush2.bf16.msra.mxu0 %v8766
        %9199 = vmatprep.subr.bf16.mxu0 0
        %9200 = vmatpush2.bf16.msra.mxu0 %v8765
        %9201 = vmatprep.subr.bf16.mxu0 0
        %9202 = vmatpush2.bf16.msra.mxu0 %v8764
        %9203 = vmatprep.subr.bf16.mxu0 0
        %9204 = vmatpush2.bf16.msra.mxu0 %v8763
        %9205 = vmatprep.subr.bf16.mxu0 0
        %9206 = vmatpush2.bf16.msra.mxu0 %v8762
        %9207 = vmatprep.subr.bf16.mxu0 0
        %9208 = vmatpush2.bf16.msra.mxu0 %v8761
        %9209 = vmatprep.mubr.bf16.mxu0 %v7865
        %9210 = vmatmul.mubr.bf16.gmra.mxu0 %v7864
        %v9211 = vpop.f32.mrf.mxu0
        %v9212 = vadd.f32 %v9172, %v9211
        %v9213 = vpop.f32.mrf.mxu0
        %v9214 = vpop.f32.mrf.mxu0
        %v9215 = vpop.f32.mrf.mxu0
        %9216 = vdwg.mxu0
        %v9217 = vadd.f32 %v6652, %v9212
        %v9218 = vld [vmem:[#allocation23] sm:$0x1]
        %v9219 = vld [vmem:[#allocation25] sm:$0x1]
        %9220 = vadd.xlane.f32.xlu0 %v9217
        %v9221 = vpop.xlane.xlu0 %9220
        %v9222 = vmul.f32 %v9221, %v3755
        %v9223 = vsub.f32 %v9217, %v9222
        %v9224 = vmul.f32 %v9223, %v9223
        %9225 = vadd.xlane.f32.xlu0 %v9224
        %v9226 = vpop.xlane.xlu0 %9225
        %v9227 = vmul.f32 %v9226, %v3755
        %v9228 = vadd.f32 %v9227, 1e-05
        %v9229 = vrsqrt.pop %v9228
        %v9230 = vmul.f32 %v9223, %v9229
        %v9232 = vlaneseq
        %v9233 = vshrl.u32 %v9232, 7
        %v9234 = vsub.s32 0, %v9233
        %v9235 = vrot.slane %v9218, %v9234
        %v9237 = vmul.f32 %v9230, %v9235
        %v9239 = vlaneseq
        %v9240 = vshrl.u32 %v9239, 7
        %v9241 = vsub.s32 0, %v9240
        %v9242 = vrot.slane %v9219, %v9241
        %v9244 = vadd.f32 %v9237, %v9242
        %9245 = vst [vmem:[%s887] sm:$0xff] %v9244
        %s9246 = sand.u32 %s524, 1
        %s9247 = scalar_lea.sflag [#allocation4], %s9246
        %s9248 = sand.u32 %s524, 1
        %s9249 = smul.addr %s9248, 8
        %s9250 = scalar_lea.vmem [#allocation26], %s9249
        // Predicated region
        $region169: #{decoder_forward.1} parent=107 // pred_check
          %p9251 = pneg %p534
        $region170: #{decoder_forward.1} parent=107 // pred_check_branch
          %9253 = sbr.rel (%p9251) target = $region172
        $region171: #{decoder_forward.1} parent=107 // pred_region
          %s9255 = ssub.s32 128, 128
          %9256 = vsyncadd %s9247, %s9255
          %s9257 = smul.addr %s44, 128
          %s9258 = scalar_lea.hbm %s22, %s9257
          %s9260 = sshll.u32 %s9250, 4
          %s9261 = int_to_ptr.vmem [resolvable:$true] %s9260
          %9263 = dma.vmem_to_hbm [thread:$0]  %s9261, 128, %s9258, %s9247
        $region172: #{decoder_forward.1} parent=107 // pred_fallthru
          _
      $region108: #{decoder_forward.1} parent=5 // pred_fallthru
        _
      %p9264 = scmp.le.s32.totalorder 2, %s39
      // Predicated region
      $region173: #{decoder_forward.1} parent=5 // pred_check
        %p9265 = pneg %p9264
      $region174: #{decoder_forward.1} parent=5 // pred_check_branch
        %9267 = sbr.rel (%p9265) target = $region176
      $region175: #{decoder_forward.1} parent=5 // pred_region
        %s9268 = ssub.s32 %s39, 2
        // Predicated region
        $region177: #{decoder_forward.1} parent=175 // pred_check
          %p9269 = pneg %p540
        $region178: #{decoder_forward.1} parent=175 // pred_check_branch
          %9271 = sbr.rel (%p9269) target = $region180
        $region179: #{decoder_forward.1} parent=175 // pred_region
          %s9272 = sand.u32 %s525, 1
          %s9273 = scalar_lea.sflag [#allocation4], %s9272
          %s9274 = sand.u32 %s525, 1
          %s9275 = smul.addr %s9274, 8
          %s9276 = scalar_lea.vmem [#allocation26], %s9275
          %9277 = dma.done %s9273, 128
        $region180: #{decoder_forward.1} parent=175 // pred_fallthru
          _
      $region176: #{decoder_forward.1} parent=5 // pred_fallthru
        _
    $region6: #{decoder_forward.1} parent=1 // loop_footer
      %s43 = sadd.s32 1, %s39
    $region7: #{decoder_forward.1} parent=1 // loop_footer_branch
      %38 = sbr.rel target = $region3
    $region8: #{decoder_forward.1} parent=1 // loop_exit
      _
    %9278 = vsyncpa [#allocation3], 1
    %s9279 = scalar_lea.sflag [#allocation3], 1
    %9280 = vsyncpa %s9279, 1
    %9281 = vsyncpa [#allocation6], 1
    %9282 = vsyncpa [#allocation9], 1
    %9283 = vsyncpa [#allocation12], 1
    %9284 = vsyncpa [#allocation15], 1
    %9285 = vsyncpa [#allocation18], 1
    %9286 = vsyncpa [#allocation21], 1
    %9287 = vsyncpa [#allocation24], 1
    %9288 = vsyncpa [#allocation4], 1
    %s9289 = scalar_lea.sflag [#allocation4], 1
    %9290 = vsyncpa %s9289, 1

</llo_original>
